<compile_context>
chip_gen: v6e
topology: v6e:2x2x1
jax: 0.10.0
libtpu: 0.0.40
codegen_flags: <defaults>
</compile_context>

<pallas_src>
import math

import jax
import jax.numpy as jnp
from jax.experimental import pallas as pl
from jax.experimental.pallas import tpu as pltpu

LEAKY_SLOPE = 0.01   # PyTorch nn.LeakyReLU() default (real Encoder/Decoder source unavailable)
BN_EPS = 1e-5


# ----------------------------- tiling helper --------------------------------
def _choose_tm(M):
    """Tile height for the M (rows) grid axis.

    Guarantees: TM divides M exactly, TM is a multiple of 16 (bf16 sublane pack)
    or TM == M, >= 2 grid steps whenever M allows it (v7x has 2 TensorCores),
    and TM <= 512 so per-step overhead is amortized without huge blocks.
    """
    if M % 32 != 0:           # tiny / odd M: single full block (full-dim exemption)
        return M
    tm = M // 2               # at least 2 grid steps
    while tm > 512:
        half = tm // 2
        if half * 2 != tm or half % 16 != 0:
            break
        tm = half
    return tm


# ----------------------------- Pallas kernel --------------------------------
def _make_conv_kernel(n_in, act):
    """Kernel: sum_k dot(a_k, w_k) + bias, then activation.  f32 accumulate."""

    def kernel(*refs):
        a_refs = refs[:n_in]
        w_refs = refs[n_in:2 * n_in]
        b_ref = refs[2 * n_in]
        o_ref = refs[2 * n_in + 1]

        acc = jnp.dot(a_refs[0][...], w_refs[0][...],
                      preferred_element_type=jnp.float32)
        for k in range(1, n_in):
            acc = acc + jnp.dot(a_refs[k][...], w_refs[k][...],
                                preferred_element_type=jnp.float32)

        y = acc + b_ref[...]                       # BN already folded into w/b
        if act == "leaky":
            y = jnp.where(y >= 0.0, y, LEAKY_SLOPE * y)
        elif act == "sigmoid":
            y = jax.nn.sigmoid(y)
        o_ref[...] = y.astype(o_ref.dtype)

    return kernel


def fused_matmul(a_list, w_list, bias, act, out_dtype):
    """act( sum_k a_k @ w_k + bias ).  a_k/w_k are bf16, epilogue f32."""
    M = a_list[0].shape[0]
    N = w_list[0].shape[1]
    TM = _choose_tm(M)
    grid = (M // TM,)
    n_in = len(a_list)

    in_specs = (
        [pl.BlockSpec((TM, a.shape[1]), lambda i: (i, 0)) for a in a_list]
        + [pl.BlockSpec((w.shape[0], N), lambda i: (0, 0)) for w in w_list]
        + [pl.BlockSpec((1, N), lambda i: (0, 0))]
    )

    return pl.pallas_call(
        _make_conv_kernel(n_in, act),
        out_shape=jax.ShapeDtypeStruct((M, N), out_dtype),
        grid_spec=pltpu.PrefetchScalarGridSpec(
            num_scalar_prefetch=0,
            grid=grid,
            in_specs=in_specs,
            out_specs=pl.BlockSpec((TM, N), lambda i: (i, 0)),
        ),
        compiler_params=pltpu.CompilerParams(
            dimension_semantics=("parallel",)),
    )(*a_list, *w_list, bias)


# ------------------------------ glue (JAX) -----------------------------------
def _im2col_3x3(x, stride):
    """x: NHWC (bf16), 3x3 kernel, pad=1 -> (N*Ho*Wo, 9*C), K order = (kh, kw, c)."""
    N, H, W, C = x.shape
    xp = jnp.pad(x, ((0, 0), (1, 1), (1, 1), (0, 0)))
    Ho = (H + 2 - 3) // stride + 1
    Wo = (W + 2 - 3) // stride + 1
    cols = []
    for i in range(3):
        for j in range(3):
            cols.append(xp[:, i:i + stride * Ho:stride, j:j + stride * Wo:stride, :])
    cols = jnp.concatenate(cols, axis=-1)
    return cols.reshape(N * Ho * Wo, 9 * C), (N, Ho, Wo)


def conv_block(xs, params, stride, act, out_dtype=jnp.bfloat16):
    """Conv over the (implicit) channel-concat of xs; weights pre-split per input."""
    w_list, bias = params
    cols_list, info = [], None
    for x in xs:
        cols, info = _im2col_3x3(x.astype(jnp.bfloat16), stride)
        cols_list.append(cols)
    y = fused_matmul(cols_list, w_list, bias, act, out_dtype)
    N, Ho, Wo = info
    return y.reshape(N, Ho, Wo, -1)


def _upsample2(x):
    """x2 nearest upsample via broadcast+reshape (no materialized double repeat)."""
    N, H, W, C = x.shape
    y = jnp.broadcast_to(x[:, :, None, :, None, :], (N, H, 2, W, 2, C))
    return y.reshape(N, 2 * H, 2 * W, C)


def init_conv(key, cin_splits, cout, bn=True):
    """Kaiming-normal(fan_out, leaky_relu) conv (OIHW) -> bf16 matmul weights.

    Eval-mode BN (gamma=1, beta=0, running stats 0/1) is folded into the weights
    and bias.  Weights are K-partitioned along `cin_splits` so convs over a
    channel-concat can be computed as a sum of dots without materializing the
    concat.
    """
    cin = sum(cin_splits)
    fan_out = cout * 9
    std = math.sqrt(2.0) / math.sqrt(fan_out)
    w = jax.random.normal(key, (cout, cin, 3, 3), jnp.float32) * std   # OIHW

    s = 1.0 / math.sqrt(1.0 + BN_EPS) if bn else 1.0                   # folded BN scale
    # K ordering (kh, kw, cin) matches the im2col concatenation order.
    w_mat = jnp.transpose(w, (2, 3, 1, 0)).reshape(9 * cin, cout) * s
    bias = jnp.zeros((1, cout), jnp.float32)                           # (0*s + 0) folded

    w3 = w_mat.reshape(9, cin, cout)
    parts, off = [], 0
    for c in cin_splits:
        parts.append(w3[:, off:off + c, :].reshape(9 * c, cout).astype(jnp.bfloat16))
        off += c
    return parts, bias


@jax.jit
def image_reconstruction_forward(x_nchw, params):
    x = jnp.transpose(x_nchw, (0, 2, 3, 1))                    # NCHW -> NHWC

    # Encoder: conv(3x3, stride 2) + folded BN + LeakyReLU
    e1 = conv_block([x], params["enc1"], 2, "leaky")           # H/2,  16
    ec3 = conv_block([e1], params["enc2"], 2, "leaky")         # H/4,  32
    ec4 = conv_block([ec3], params["enc3"], 2, "leaky")        # H/8,  64
    ec5 = conv_block([ec4], params["enc4"], 2, "leaky")        # H/16, 128

    # Decoder: x2 nearest upsample + (un-materialized) skip-concat + conv + LeakyReLU
    d1 = conv_block([_upsample2(ec5), ec4], params["dec1"], 1, "leaky")   # H/8, 64
    d2 = conv_block([_upsample2(d1), ec3], params["dec2"], 1, "leaky")    # H/4, 32
    d3 = conv_block([_upsample2(d2)], params["dec3"], 1, "leaky")         # H/2, 16
    # Final conv + fused Sigmoid; N=3 output lanes -> masked stores, but the
    # writeback is only a few KB at these shapes so lane-padding would cost more.
    out = conv_block([_upsample2(d3)], params["dec4"], 1, "sigmoid",
                     out_dtype=jnp.float32)                               # H,   3

    return jnp.transpose(out, (0, 3, 1, 2))                    # NHWC -> NCHW


if __name__ == "__main__":
    key = jax.random.PRNGKey(0)
    keys = jax.random.split(key, 9)
    params = {
        "enc1": init_conv(keys[0], [3], 16),
        "enc2": init_conv(keys[1], [16], 32),
        "enc3": init_conv(keys[2], [32], 64),
        "enc4": init_conv(keys[3], [64], 128),
        "dec1": init_conv(keys[4], [128, 64], 64),   # upsampled ec5 || ec4
        "dec2": init_conv(keys[5], [64, 32], 32),    # upsampled d1  || ec3
        "dec3": init_conv(keys[6], [32], 16),
        "dec4": init_conv(keys[7], [16], 3, bn=False),
    }

    x = jax.random.normal(keys[8], (2, 3, 32, 32), jnp.float32)   # NCHW, like PyTorch
    y = image_reconstruction_forward(x, params)
    y = jax.block_until_ready(y)

    assert y.shape == (2, 3, 32, 32), y.shape
    assert bool(jnp.all((y >= 0.0) & (y <= 1.0)))   # sigmoid output range
    assert bool(jnp.all(jnp.isfinite(y)))
    print("KERNEL_OK")
</pallas_src>

<mosaic_0001>
module attributes {stable_mosaic.version = 11 : i64} {
  func.func @kernel(%arg0: i32, %arg1: memref<256x27xbf16, #tpu.memory_space<vmem>>, %arg2: memref<27x16xbf16, #tpu.memory_space<vmem>>, %arg3: memref<1x16xf32, #tpu.memory_space<vmem>>, %arg4: memref<256x16xbf16, #tpu.memory_space<vmem>>) attributes {dimension_semantics = [#tpu.dimension_semantics<parallel>], iteration_bounds = array<i64: 2>, scalar_prefetch = 0 : i64, scratch_operands = 0 : i64, tpu.core_type = #tpu.core_type<tc>, window_params = [{transform_indices = @transform_0, window_bounds = array<i64: 256, 27>}, {pipeline_mode = #tpu.pipeline_mode<synchronous>, transform_indices = @transform_1, window_bounds = array<i64: 27, 16>}, {pipeline_mode = #tpu.pipeline_mode<synchronous>, transform_indices = @transform_2, window_bounds = array<i64: 1, 16>}, {transform_indices = @transform_3, window_bounds = array<i64: 256, 16>}]} {
    %c0 = arith.constant 0 : index
    %c0_0 = arith.constant 0 : index
    %0 = vector.load %arg1[%c0, %c0_0] : memref<256x27xbf16, #tpu.memory_space<vmem>>, vector<256x27xbf16>
    %c0_1 = arith.constant 0 : index
    %c0_2 = arith.constant 0 : index
    %1 = vector.load %arg2[%c0_1, %c0_2] : memref<27x16xbf16, #tpu.memory_space<vmem>>, vector<27x16xbf16>
    %cst = arith.constant dense<0.000000e+00> : vector<256x16xf32>
    %2 = tpu.matmul %0, %1, %cst {dimension_numbers = #tpu.dot_dimension_numbers<[1], [0], [0], [1], [0, 0, 1, 1], [], []>} : vector<256x27xbf16>, vector<27x16xbf16>, vector<256x16xf32> -> vector<256x16xf32>
    %c0_3 = arith.constant 0 : index
    %c0_4 = arith.constant 0 : index
    %3 = vector.load %arg3[%c0_3, %c0_4] : memref<1x16xf32, #tpu.memory_space<vmem>>, vector<1x16xf32>
    %4 = vector.broadcast %3 : vector<1x16xf32> to vector<256x16xf32>
    %5 = arith.addf %2, %4 : vector<256x16xf32>
    %cst_5 = arith.constant 0.000000e+00 : f32
    %6 = vector.broadcast %cst_5 : f32 to vector<256x16xf32>
    %7 = arith.cmpf oge, %5, %6 : vector<256x16xf32>
    %cst_6 = arith.constant 0.00999999977 : f32
    %8 = vector.broadcast %cst_6 : f32 to vector<256x16xf32>
    %9 = arith.mulf %8, %5 : vector<256x16xf32>
    %10 = arith.select %7, %5, %9 : vector<256x16xi1>, vector<256x16xf32>
    %11 = arith.truncf %10 : vector<256x16xf32> to vector<256x16xbf16>
    %c0_7 = arith.constant 0 : index
    %c0_8 = arith.constant 0 : index
    %12 = vector.load %arg4[%c0_7, %c0_8] : memref<256x16xbf16, #tpu.memory_space<vmem>>, vector<256x16xbf16>
    tpu.vector_store %arg4[%c0_7, %c0_8], %11 {strides = array<i32>} : memref<256x16xbf16, #tpu.memory_space<vmem>>, vector<256x16xbf16>,
    return
  }
  func.func @transform_0(%arg0: i32) -> (i32, i32) {
    %c0_i32 = arith.constant 0 : i32
    %c0_i32_0 = arith.constant 0 : i32
    return %arg0, %c0_i32 : i32, i32
  }
  func.func @transform_1(%arg0: i32) -> (i32, i32) {
    %c0_i32 = arith.constant 0 : i32
    %c0_i32_0 = arith.constant 0 : i32
    %c0_i32_1 = arith.constant 0 : i32
    return %c0_i32, %c0_i32_0 : i32, i32
  }
  func.func @transform_2(%arg0: i32) -> (i32, i32) {
    %c0_i32 = arith.constant 0 : i32
    %c0_i32_0 = arith.constant 0 : i32
    %c0_i32_1 = arith.constant 0 : i32
    return %c0_i32, %c0_i32_0 : i32, i32
  }
  func.func @transform_3(%arg0: i32) -> (i32, i32) {
    %c0_i32 = arith.constant 0 : i32
    %c0_i32_0 = arith.constant 0 : i32
    return %arg0, %c0_i32 : i32, i32
  }
}

module attributes {stable_mosaic.version = 11 : i64} {
  func.func @kernel(%arg0: i32, %arg1: memref<64x144xbf16, #tpu.memory_space<vmem>>, %arg2: memref<144x32xbf16, #tpu.memory_space<vmem>>, %arg3: memref<1x32xf32, #tpu.memory_space<vmem>>, %arg4: memref<64x32xbf16, #tpu.memory_space<vmem>>) attributes {dimension_semantics = [#tpu.dimension_semantics<parallel>], iteration_bounds = array<i64: 2>, scalar_prefetch = 0 : i64, scratch_operands = 0 : i64, tpu.core_type = #tpu.core_type<tc>, window_params = [{transform_indices = @transform_0, window_bounds = array<i64: 64, 144>}, {pipeline_mode = #tpu.pipeline_mode<synchronous>, transform_indices = @transform_1, window_bounds = array<i64: 144, 32>}, {pipeline_mode = #tpu.pipeline_mode<synchronous>, transform_indices = @transform_2, window_bounds = array<i64: 1, 32>}, {transform_indices = @transform_3, window_bounds = array<i64: 64, 32>}]} {
    %c0 = arith.constant 0 : index
    %c0_0 = arith.constant 0 : index
    %0 = vector.load %arg1[%c0, %c0_0] : memref<64x144xbf16, #tpu.memory_space<vmem>>, vector<64x144xbf16>
    %c0_1 = arith.constant 0 : index
    %c0_2 = arith.constant 0 : index
    %1 = vector.load %arg2[%c0_1, %c0_2] : memref<144x32xbf16, #tpu.memory_space<vmem>>, vector<144x32xbf16>
    %cst = arith.constant dense<0.000000e+00> : vector<64x32xf32>
    %2 = tpu.matmul %0, %1, %cst {dimension_numbers = #tpu.dot_dimension_numbers<[1], [0], [0], [1], [0, 0, 1, 1], [], []>} : vector<64x144xbf16>, vector<144x32xbf16>, vector<64x32xf32> -> vector<64x32xf32>
    %c0_3 = arith.constant 0 : index
    %c0_4 = arith.constant 0 : index
    %3 = vector.load %arg3[%c0_3, %c0_4] : memref<1x32xf32, #tpu.memory_space<vmem>>, vector<1x32xf32>
    %4 = vector.broadcast %3 : vector<1x32xf32> to vector<64x32xf32>
    %5 = arith.addf %2, %4 : vector<64x32xf32>
    %cst_5 = arith.constant 0.000000e+00 : f32
    %6 = vector.broadcast %cst_5 : f32 to vector<64x32xf32>
    %7 = arith.cmpf oge, %5, %6 : vector<64x32xf32>
    %cst_6 = arith.constant 0.00999999977 : f32
    %8 = vector.broadcast %cst_6 : f32 to vector<64x32xf32>
    %9 = arith.mulf %8, %5 : vector<64x32xf32>
    %10 = arith.select %7, %5, %9 : vector<64x32xi1>, vector<64x32xf32>
    %11 = arith.truncf %10 : vector<64x32xf32> to vector<64x32xbf16>
    %c0_7 = arith.constant 0 : index
    %c0_8 = arith.constant 0 : index
    %12 = vector.load %arg4[%c0_7, %c0_8] : memref<64x32xbf16, #tpu.memory_space<vmem>>, vector<64x32xbf16>
    tpu.vector_store %arg4[%c0_7, %c0_8], %11 {strides = array<i32>} : memref<64x32xbf16, #tpu.memory_space<vmem>>, vector<64x32xbf16>,
    return
  }
  func.func @transform_0(%arg0: i32) -> (i32, i32) {
    %c0_i32 = arith.constant 0 : i32
    %c0_i32_0 = arith.constant 0 : i32
    return %arg0, %c0_i32 : i32, i32
  }
  func.func @transform_1(%arg0: i32) -> (i32, i32) {
    %c0_i32 = arith.constant 0 : i32
    %c0_i32_0 = arith.constant 0 : i32
    %c0_i32_1 = arith.constant 0 : i32
    return %c0_i32, %c0_i32_0 : i32, i32
  }
  func.func @transform_2(%arg0: i32) -> (i32, i32) {
    %c0_i32 = arith.constant 0 : i32
    %c0_i32_0 = arith.constant 0 : i32
    %c0_i32_1 = arith.constant 0 : i32
    return %c0_i32, %c0_i32_0 : i32, i32
  }
  func.func @transform_3(%arg0: i32) -> (i32, i32) {
    %c0_i32 = arith.constant 0 : i32
    %c0_i32_0 = arith.constant 0 : i32
    return %arg0, %c0_i32 : i32, i32
  }
}

module attributes {stable_mosaic.version = 11 : i64} {
  func.func @kernel(%arg0: i32, %arg1: memref<16x288xbf16, #tpu.memory_space<vmem>>, %arg2: memref<288x64xbf16, #tpu.memory_space<vmem>>, %arg3: memref<1x64xf32, #tpu.memory_space<vmem>>, %arg4: memref<16x64xbf16, #tpu.memory_space<vmem>>) attributes {dimension_semantics = [#tpu.dimension_semantics<parallel>], iteration_bounds = array<i64: 2>, scalar_prefetch = 0 : i64, scratch_operands = 0 : i64, tpu.core_type = #tpu.core_type<tc>, window_params = [{transform_indices = @transform_0, window_bounds = array<i64: 16, 288>}, {pipeline_mode = #tpu.pipeline_mode<synchronous>, transform_indices = @transform_1, window_bounds = array<i64: 288, 64>}, {pipeline_mode = #tpu.pipeline_mode<synchronous>, transform_indices = @transform_2, window_bounds = array<i64: 1, 64>}, {transform_indices = @transform_3, window_bounds = array<i64: 16, 64>}]} {
    %c0 = arith.constant 0 : index
    %c0_0 = arith.constant 0 : index
    %0 = vector.load %arg1[%c0, %c0_0] : memref<16x288xbf16, #tpu.memory_space<vmem>>, vector<16x288xbf16>
    %c0_1 = arith.constant 0 : index
    %c0_2 = arith.constant 0 : index
    %1 = vector.load %arg2[%c0_1, %c0_2] : memref<288x64xbf16, #tpu.memory_space<vmem>>, vector<288x64xbf16>
    %cst = arith.constant dense<0.000000e+00> : vector<16x64xf32>
    %2 = tpu.matmul %0, %1, %cst {dimension_numbers = #tpu.dot_dimension_numbers<[1], [0], [0], [1], [0, 0, 1, 1], [], []>} : vector<16x288xbf16>, vector<288x64xbf16>, vector<16x64xf32> -> vector<16x64xf32>
    %c0_3 = arith.constant 0 : index
    %c0_4 = arith.constant 0 : index
    %3 = vector.load %arg3[%c0_3, %c0_4] : memref<1x64xf32, #tpu.memory_space<vmem>>, vector<1x64xf32>
    %4 = vector.broadcast %3 : vector<1x64xf32> to vector<16x64xf32>
    %5 = arith.addf %2, %4 : vector<16x64xf32>
    %cst_5 = arith.constant 0.000000e+00 : f32
    %6 = vector.broadcast %cst_5 : f32 to vector<16x64xf32>
    %7 = arith.cmpf oge, %5, %6 : vector<16x64xf32>
    %cst_6 = arith.constant 0.00999999977 : f32
    %8 = vector.broadcast %cst_6 : f32 to vector<16x64xf32>
    %9 = arith.mulf %8, %5 : vector<16x64xf32>
    %10 = arith.select %7, %5, %9 : vector<16x64xi1>, vector<16x64xf32>
    %11 = arith.truncf %10 : vector<16x64xf32> to vector<16x64xbf16>
    %c0_7 = arith.constant 0 : index
    %c0_8 = arith.constant 0 : index
    %12 = vector.load %arg4[%c0_7, %c0_8] : memref<16x64xbf16, #tpu.memory_space<vmem>>, vector<16x64xbf16>
    tpu.vector_store %arg4[%c0_7, %c0_8], %11 {strides = array<i32>} : memref<16x64xbf16, #tpu.memory_space<vmem>>, vector<16x64xbf16>,
    return
  }
  func.func @transform_0(%arg0: i32) -> (i32, i32) {
    %c0_i32 = arith.constant 0 : i32
    %c0_i32_0 = arith.constant 0 : i32
    return %arg0, %c0_i32 : i32, i32
  }
  func.func @transform_1(%arg0: i32) -> (i32, i32) {
    %c0_i32 = arith.constant 0 : i32
    %c0_i32_0 = arith.constant 0 : i32
    %c0_i32_1 = arith.constant 0 : i32
    return %c0_i32, %c0_i32_0 : i32, i32
  }
  func.func @transform_2(%arg0: i32) -> (i32, i32) {
    %c0_i32 = arith.constant 0 : i32
    %c0_i32_0 = arith.constant 0 : i32
    %c0_i32_1 = arith.constant 0 : i32
    return %c0_i32, %c0_i32_0 : i32, i32
  }
  func.func @transform_3(%arg0: i32) -> (i32, i32) {
    %c0_i32 = arith.constant 0 : i32
    %c0_i32_0 = arith.constant 0 : i32
    return %arg0, %c0_i32 : i32, i32
  }
}

module attributes {stable_mosaic.version = 11 : i64} {
  func.func @kernel(%arg0: i32, %arg1: memref<8x576xbf16, #tpu.memory_space<vmem>>, %arg2: memref<576x128xbf16, #tpu.memory_space<vmem>>, %arg3: memref<1x128xf32, #tpu.memory_space<vmem>>, %arg4: memref<8x128xbf16, #tpu.memory_space<vmem>>) attributes {dimension_semantics = [#tpu.dimension_semantics<parallel>], iteration_bounds = array<i64: 1>, scalar_prefetch = 0 : i64, scratch_operands = 0 : i64, tpu.core_type = #tpu.core_type<tc>, window_params = [{transform_indices = @transform_0, window_bounds = array<i64: 8, 576>}, {pipeline_mode = #tpu.pipeline_mode<synchronous>, transform_indices = @transform_1, window_bounds = array<i64: 576, 128>}, {pipeline_mode = #tpu.pipeline_mode<synchronous>, transform_indices = @transform_2, window_bounds = array<i64: 1, 128>}, {transform_indices = @transform_3, window_bounds = array<i64: 8, 128>}]} {
    %c0 = arith.constant 0 : index
    %c0_0 = arith.constant 0 : index
    %0 = vector.load %arg1[%c0, %c0_0] : memref<8x576xbf16, #tpu.memory_space<vmem>>, vector<8x576xbf16>
    %c0_1 = arith.constant 0 : index
    %c0_2 = arith.constant 0 : index
    %1 = vector.load %arg2[%c0_1, %c0_2] : memref<576x128xbf16, #tpu.memory_space<vmem>>, vector<576x128xbf16>
    %cst = arith.constant dense<0.000000e+00> : vector<8x128xf32>
    %2 = tpu.matmul %0, %1, %cst {dimension_numbers = #tpu.dot_dimension_numbers<[1], [0], [0], [1], [0, 0, 1, 1], [], []>} : vector<8x576xbf16>, vector<576x128xbf16>, vector<8x128xf32> -> vector<8x128xf32>
    %c0_3 = arith.constant 0 : index
    %c0_4 = arith.constant 0 : index
    %3 = vector.load %arg3[%c0_3, %c0_4] : memref<1x128xf32, #tpu.memory_space<vmem>>, vector<1x128xf32>
    %4 = vector.broadcast %3 : vector<1x128xf32> to vector<8x128xf32>
    %5 = arith.addf %2, %4 : vector<8x128xf32>
    %cst_5 = arith.constant 0.000000e+00 : f32
    %6 = vector.broadcast %cst_5 : f32 to vector<8x128xf32>
    %7 = arith.cmpf oge, %5, %6 : vector<8x128xf32>
    %cst_6 = arith.constant 0.00999999977 : f32
    %8 = vector.broadcast %cst_6 : f32 to vector<8x128xf32>
    %9 = arith.mulf %8, %5 : vector<8x128xf32>
    %10 = arith.select %7, %5, %9 : vector<8x128xi1>, vector<8x128xf32>
    %11 = arith.truncf %10 : vector<8x128xf32> to vector<8x128xbf16>
    %c0_7 = arith.constant 0 : index
    %c0_8 = arith.constant 0 : index
    %12 = vector.load %arg4[%c0_7, %c0_8] : memref<8x128xbf16, #tpu.memory_space<vmem>>, vector<8x128xbf16>
    tpu.vector_store %arg4[%c0_7, %c0_8], %11 {strides = array<i32>} : memref<8x128xbf16, #tpu.memory_space<vmem>>, vector<8x128xbf16>,
    return
  }
  func.func @transform_0(%arg0: i32) -> (i32, i32) {
    %c0_i32 = arith.constant 0 : i32
    %c0_i32_0 = arith.constant 0 : i32
    return %arg0, %c0_i32 : i32, i32
  }
  func.func @transform_1(%arg0: i32) -> (i32, i32) {
    %c0_i32 = arith.constant 0 : i32
    %c0_i32_0 = arith.constant 0 : i32
    %c0_i32_1 = arith.constant 0 : i32
    return %c0_i32, %c0_i32_0 : i32, i32
  }
  func.func @transform_2(%arg0: i32) -> (i32, i32) {
    %c0_i32 = arith.constant 0 : i32
    %c0_i32_0 = arith.constant 0 : i32
    %c0_i32_1 = arith.constant 0 : i32
    return %c0_i32, %c0_i32_0 : i32, i32
  }
  func.func @transform_3(%arg0: i32) -> (i32, i32) {
    %c0_i32 = arith.constant 0 : i32
    %c0_i32_0 = arith.constant 0 : i32
    return %arg0, %c0_i32 : i32, i32
  }
}

module attributes {stable_mosaic.version = 11 : i64} {
  func.func @kernel(%arg0: i32, %arg1: memref<16x1152xbf16, #tpu.memory_space<vmem>>, %arg2: memref<16x576xbf16, #tpu.memory_space<vmem>>, %arg3: memref<1152x64xbf16, #tpu.memory_space<vmem>>, %arg4: memref<576x64xbf16, #tpu.memory_space<vmem>>, %arg5: memref<1x64xf32, #tpu.memory_space<vmem>>, %arg6: memref<16x64xbf16, #tpu.memory_space<vmem>>) attributes {dimension_semantics = [#tpu.dimension_semantics<parallel>], iteration_bounds = array<i64: 2>, scalar_prefetch = 0 : i64, scratch_operands = 0 : i64, tpu.core_type = #tpu.core_type<tc>, window_params = [{transform_indices = @transform_0, window_bounds = array<i64: 16, 1152>}, {transform_indices = @transform_1, window_bounds = array<i64: 16, 576>}, {pipeline_mode = #tpu.pipeline_mode<synchronous>, transform_indices = @transform_2, window_bounds = array<i64: 1152, 64>}, {pipeline_mode = #tpu.pipeline_mode<synchronous>, transform_indices = @transform_3, window_bounds = array<i64: 576, 64>}, {pipeline_mode = #tpu.pipeline_mode<synchronous>, transform_indices = @transform_4, window_bounds = array<i64: 1, 64>}, {transform_indices = @transform_5, window_bounds = array<i64: 16, 64>}]} {
    %c0 = arith.constant 0 : index
    %c0_0 = arith.constant 0 : index
    %0 = vector.load %arg1[%c0, %c0_0] : memref<16x1152xbf16, #tpu.memory_space<vmem>>, vector<16x1152xbf16>
    %c0_1 = arith.constant 0 : index
    %c0_2 = arith.constant 0 : index
    %1 = vector.load %arg3[%c0_1, %c0_2] : memref<1152x64xbf16, #tpu.memory_space<vmem>>, vector<1152x64xbf16>
    %cst = arith.constant dense<0.000000e+00> : vector<16x64xf32>
    %2 = tpu.matmul %0, %1, %cst {dimension_numbers = #tpu.dot_dimension_numbers<[1], [0], [0], [1], [0, 0, 1, 1], [], []>} : vector<16x1152xbf16>, vector<1152x64xbf16>, vector<16x64xf32> -> vector<16x64xf32>
    %c0_3 = arith.constant 0 : index
    %c0_4 = arith.constant 0 : index
    %3 = vector.load %arg2[%c0_3, %c0_4] : memref<16x576xbf16, #tpu.memory_space<vmem>>, vector<16x576xbf16>
    %c0_5 = arith.constant 0 : index
    %c0_6 = arith.constant 0 : index
    %4 = vector.load %arg4[%c0_5, %c0_6] : memref<576x64xbf16, #tpu.memory_space<vmem>>, vector<576x64xbf16>
    %cst_7 = arith.constant dense<0.000000e+00> : vector<16x64xf32>
    %5 = tpu.matmul %3, %4, %cst_7 {dimension_numbers = #tpu.dot_dimension_numbers<[1], [0], [0], [1], [0, 0, 1, 1], [], []>} : vector<16x576xbf16>, vector<576x64xbf16>, vector<16x64xf32> -> vector<16x64xf32>
    %6 = arith.addf %2, %5 : vector<16x64xf32>
    %c0_8 = arith.constant 0 : index
    %c0_9 = arith.constant 0 : index
    %7 = vector.load %arg5[%c0_8, %c0_9] : memref<1x64xf32, #tpu.memory_space<vmem>>, vector<1x64xf32>
    %8 = vector.broadcast %7 : vector<1x64xf32> to vector<16x64xf32>
    %9 = arith.addf %6, %8 : vector<16x64xf32>
    %cst_10 = arith.constant 0.000000e+00 : f32
    %10 = vector.broadcast %cst_10 : f32 to vector<16x64xf32>
    %11 = arith.cmpf oge, %9, %10 : vector<16x64xf32>
    %cst_11 = arith.constant 0.00999999977 : f32
    %12 = vector.broadcast %cst_11 : f32 to vector<16x64xf32>
    %13 = arith.mulf %12, %9 : vector<16x64xf32>
    %14 = arith.select %11, %9, %13 : vector<16x64xi1>, vector<16x64xf32>
    %15 = arith.truncf %14 : vector<16x64xf32> to vector<16x64xbf16>
    %c0_12 = arith.constant 0 : index
    %c0_13 = arith.constant 0 : index
    %16 = vector.load %arg6[%c0_12, %c0_13] : memref<16x64xbf16, #tpu.memory_space<vmem>>, vector<16x64xbf16>
    tpu.vector_store %arg6[%c0_12, %c0_13], %15 {strides = array<i32>} : memref<16x64xbf16, #tpu.memory_space<vmem>>, vector<16x64xbf16>,
    return
  }
  func.func @transform_0(%arg0: i32) -> (i32, i32) {
    %c0_i32 = arith.constant 0 : i32
    %c0_i32_0 = arith.constant 0 : i32
    return %arg0, %c0_i32 : i32, i32
  }
  func.func @transform_1(%arg0: i32) -> (i32, i32) {
    %c0_i32 = arith.constant 0 : i32
    %c0_i32_0 = arith.constant 0 : i32
    return %arg0, %c0_i32 : i32, i32
  }
  func.func @transform_2(%arg0: i32) -> (i32, i32) {
    %c0_i32 = arith.constant 0 : i32
    %c0_i32_0 = arith.constant 0 : i32
    %c0_i32_1 = arith.constant 0 : i32
    return %c0_i32, %c0_i32_0 : i32, i32
  }
  func.func @transform_3(%arg0: i32) -> (i32, i32) {
    %c0_i32 = arith.constant 0 : i32
    %c0_i32_0 = arith.constant 0 : i32
    %c0_i32_1 = arith.constant 0 : i32
    return %c0_i32, %c0_i32_0 : i32, i32
  }
  func.func @transform_4(%arg0: i32) -> (i32, i32) {
    %c0_i32 = arith.constant 0 : i32
    %c0_i32_0 = arith.constant 0 : i32
    %c0_i32_1 = arith.constant 0 : i32
    return %c0_i32, %c0_i32_0 : i32, i32
  }
  func.func @transform_5(%arg0: i32) -> (i32, i32) {
    %c0_i32 = arith.constant 0 : i32
    %c0_i32_0 = arith.constant 0 : i32
    return %arg0, %c0_i32 : i32, i32
  }
}

module attributes {stable_mosaic.version = 11 : i64} {
  func.func @kernel(%arg0: i32, %arg1: memref<64x576xbf16, #tpu.memory_space<vmem>>, %arg2: memref<64x288xbf16, #tpu.memory_space<vmem>>, %arg3: memref<576x32xbf16, #tpu.memory_space<vmem>>, %arg4: memref<288x32xbf16, #tpu.memory_space<vmem>>, %arg5: memref<1x32xf32, #tpu.memory_space<vmem>>, %arg6: memref<64x32xbf16, #tpu.memory_space<vmem>>) attributes {dimension_semantics = [#tpu.dimension_semantics<parallel>], iteration_bounds = array<i64: 2>, scalar_prefetch = 0 : i64, scratch_operands = 0 : i64, tpu.core_type = #tpu.core_type<tc>, window_params = [{transform_indices = @transform_0, window_bounds = array<i64: 64, 576>}, {transform_indices = @transform_1, window_bounds = array<i64: 64, 288>}, {pipeline_mode = #tpu.pipeline_mode<synchronous>, transform_indices = @transform_2, window_bounds = array<i64: 576, 32>}, {pipeline_mode = #tpu.pipeline_mode<synchronous>, transform_indices = @transform_3, window_bounds = array<i64: 288, 32>}, {pipeline_mode = #tpu.pipeline_mode<synchronous>, transform_indices = @transform_4, window_bounds = array<i64: 1, 32>}, {transform_indices = @transform_5, window_bounds = array<i64: 64, 32>}]} {
    %c0 = arith.constant 0 : index
    %c0_0 = arith.constant 0 : index
    %0 = vector.load %arg1[%c0, %c0_0] : memref<64x576xbf16, #tpu.memory_space<vmem>>, vector<64x576xbf16>
    %c0_1 = arith.constant 0 : index
    %c0_2 = arith.constant 0 : index
    %1 = vector.load %arg3[%c0_1, %c0_2] : memref<576x32xbf16, #tpu.memory_space<vmem>>, vector<576x32xbf16>
    %cst = arith.constant dense<0.000000e+00> : vector<64x32xf32>
    %2 = tpu.matmul %0, %1, %cst {dimension_numbers = #tpu.dot_dimension_numbers<[1], [0], [0], [1], [0, 0, 1, 1], [], []>} : vector<64x576xbf16>, vector<576x32xbf16>, vector<64x32xf32> -> vector<64x32xf32>
    %c0_3 = arith.constant 0 : index
    %c0_4 = arith.constant 0 : index
    %3 = vector.load %arg2[%c0_3, %c0_4] : memref<64x288xbf16, #tpu.memory_space<vmem>>, vector<64x288xbf16>
    %c0_5 = arith.constant 0 : index
    %c0_6 = arith.constant 0 : index
    %4 = vector.load %arg4[%c0_5, %c0_6] : memref<288x32xbf16, #tpu.memory_space<vmem>>, vector<288x32xbf16>
    %cst_7 = arith.constant dense<0.000000e+00> : vector<64x32xf32>
    %5 = tpu.matmul %3, %4, %cst_7 {dimension_numbers = #tpu.dot_dimension_numbers<[1], [0], [0], [1], [0, 0, 1, 1], [], []>} : vector<64x288xbf16>, vector<288x32xbf16>, vector<64x32xf32> -> vector<64x32xf32>
    %6 = arith.addf %2, %5 : vector<64x32xf32>
    %c0_8 = arith.constant 0 : index
    %c0_9 = arith.constant 0 : index
    %7 = vector.load %arg5[%c0_8, %c0_9] : memref<1x32xf32, #tpu.memory_space<vmem>>, vector<1x32xf32>
    %8 = vector.broadcast %7 : vector<1x32xf32> to vector<64x32xf32>
    %9 = arith.addf %6, %8 : vector<64x32xf32>
    %cst_10 = arith.constant 0.000000e+00 : f32
    %10 = vector.broadcast %cst_10 : f32 to vector<64x32xf32>
    %11 = arith.cmpf oge, %9, %10 : vector<64x32xf32>
    %cst_11 = arith.constant 0.00999999977 : f32
    %12 = vector.broadcast %cst_11 : f32 to vector<64x32xf32>
    %13 = arith.mulf %12, %9 : vector<64x32xf32>
    %14 = arith.select %11, %9, %13 : vector<64x32xi1>, vector<64x32xf32>
    %15 = arith.truncf %14 : vector<64x32xf32> to vector<64x32xbf16>
    %c0_12 = arith.constant 0 : index
    %c0_13 = arith.constant 0 : index
    %16 = vector.load %arg6[%c0_12, %c0_13] : memref<64x32xbf16, #tpu.memory_space<vmem>>, vector<64x32xbf16>
    tpu.vector_store %arg6[%c0_12, %c0_13], %15 {strides = array<i32>} : memref<64x32xbf16, #tpu.memory_space<vmem>>, vector<64x32xbf16>,
    return
  }
  func.func @transform_0(%arg0: i32) -> (i32, i32) {
    %c0_i32 = arith.constant 0 : i32
    %c0_i32_0 = arith.constant 0 : i32
    return %arg0, %c0_i32 : i32, i32
  }
  func.func @transform_1(%arg0: i32) -> (i32, i32) {
    %c0_i32 = arith.constant 0 : i32
    %c0_i32_0 = arith.constant 0 : i32
    return %arg0, %c0_i32 : i32, i32
  }
  func.func @transform_2(%arg0: i32) -> (i32, i32) {
    %c0_i32 = arith.constant 0 : i32
    %c0_i32_0 = arith.constant 0 : i32
    %c0_i32_1 = arith.constant 0 : i32
    return %c0_i32, %c0_i32_0 : i32, i32
  }
  func.func @transform_3(%arg0: i32) -> (i32, i32) {
    %c0_i32 = arith.constant 0 : i32
    %c0_i32_0 = arith.constant 0 : i32
    %c0_i32_1 = arith.constant 0 : i32
    return %c0_i32, %c0_i32_0 : i32, i32
  }
  func.func @transform_4(%arg0: i32) -> (i32, i32) {
    %c0_i32 = arith.constant 0 : i32
    %c0_i32_0 = arith.constant 0 : i32
    %c0_i32_1 = arith.constant 0 : i32
    return %c0_i32, %c0_i32_0 : i32, i32
  }
  func.func @transform_5(%arg0: i32) -> (i32, i32) {
    %c0_i32 = arith.constant 0 : i32
    %c0_i32_0 = arith.constant 0 : i32
    return %arg0, %c0_i32 : i32, i32
  }
}

module attributes {stable_mosaic.version = 11 : i64} {
  func.func @kernel(%arg0: i32, %arg1: memref<256x288xbf16, #tpu.memory_space<vmem>>, %arg2: memref<288x16xbf16, #tpu.memory_space<vmem>>, %arg3: memref<1x16xf32, #tpu.memory_space<vmem>>, %arg4: memref<256x16xbf16, #tpu.memory_space<vmem>>) attributes {dimension_semantics = [#tpu.dimension_semantics<parallel>], iteration_bounds = array<i64: 2>, scalar_prefetch = 0 : i64, scratch_operands = 0 : i64, tpu.core_type = #tpu.core_type<tc>, window_params = [{transform_indices = @transform_0, window_bounds = array<i64: 256, 288>}, {pipeline_mode = #tpu.pipeline_mode<synchronous>, transform_indices = @transform_1, window_bounds = array<i64: 288, 16>}, {pipeline_mode = #tpu.pipeline_mode<synchronous>, transform_indices = @transform_2, window_bounds = array<i64: 1, 16>}, {transform_indices = @transform_3, window_bounds = array<i64: 256, 16>}]} {
    %c0 = arith.constant 0 : index
    %c0_0 = arith.constant 0 : index
    %0 = vector.load %arg1[%c0, %c0_0] : memref<256x288xbf16, #tpu.memory_space<vmem>>, vector<256x288xbf16>
    %c0_1 = arith.constant 0 : index
    %c0_2 = arith.constant 0 : index
    %1 = vector.load %arg2[%c0_1, %c0_2] : memref<288x16xbf16, #tpu.memory_space<vmem>>, vector<288x16xbf16>
    %cst = arith.constant dense<0.000000e+00> : vector<256x16xf32>
    %2 = tpu.matmul %0, %1, %cst {dimension_numbers = #tpu.dot_dimension_numbers<[1], [0], [0], [1], [0, 0, 1, 1], [], []>} : vector<256x288xbf16>, vector<288x16xbf16>, vector<256x16xf32> -> vector<256x16xf32>
    %c0_3 = arith.constant 0 : index
    %c0_4 = arith.constant 0 : index
    %3 = vector.load %arg3[%c0_3, %c0_4] : memref<1x16xf32, #tpu.memory_space<vmem>>, vector<1x16xf32>
    %4 = vector.broadcast %3 : vector<1x16xf32> to vector<256x16xf32>
    %5 = arith.addf %2, %4 : vector<256x16xf32>
    %cst_5 = arith.constant 0.000000e+00 : f32
    %6 = vector.broadcast %cst_5 : f32 to vector<256x16xf32>
    %7 = arith.cmpf oge, %5, %6 : vector<256x16xf32>
    %cst_6 = arith.constant 0.00999999977 : f32
    %8 = vector.broadcast %cst_6 : f32 to vector<256x16xf32>
    %9 = arith.mulf %8, %5 : vector<256x16xf32>
    %10 = arith.select %7, %5, %9 : vector<256x16xi1>, vector<256x16xf32>
    %11 = arith.truncf %10 : vector<256x16xf32> to vector<256x16xbf16>
    %c0_7 = arith.constant 0 : index
    %c0_8 = arith.constant 0 : index
    %12 = vector.load %arg4[%c0_7, %c0_8] : memref<256x16xbf16, #tpu.memory_space<vmem>>, vector<256x16xbf16>
    tpu.vector_store %arg4[%c0_7, %c0_8], %11 {strides = array<i32>} : memref<256x16xbf16, #tpu.memory_space<vmem>>, vector<256x16xbf16>,
    return
  }
  func.func @transform_0(%arg0: i32) -> (i32, i32) {
    %c0_i32 = arith.constant 0 : i32
    %c0_i32_0 = arith.constant 0 : i32
    return %arg0, %c0_i32 : i32, i32
  }
  func.func @transform_1(%arg0: i32) -> (i32, i32) {
    %c0_i32 = arith.constant 0 : i32
    %c0_i32_0 = arith.constant 0 : i32
    %c0_i32_1 = arith.constant 0 : i32
    return %c0_i32, %c0_i32_0 : i32, i32
  }
  func.func @transform_2(%arg0: i32) -> (i32, i32) {
    %c0_i32 = arith.constant 0 : i32
    %c0_i32_0 = arith.constant 0 : i32
    %c0_i32_1 = arith.constant 0 : i32
    return %c0_i32, %c0_i32_0 : i32, i32
  }
  func.func @transform_3(%arg0: i32) -> (i32, i32) {
    %c0_i32 = arith.constant 0 : i32
    %c0_i32_0 = arith.constant 0 : i32
    return %arg0, %c0_i32 : i32, i32
  }
}

module attributes {stable_mosaic.version = 11 : i64} {
  func.func @kernel(%arg0: i32, %arg1: memref<512x144xbf16, #tpu.memory_space<vmem>>, %arg2: memref<144x3xbf16, #tpu.memory_space<vmem>>, %arg3: memref<1x3xf32, #tpu.memory_space<vmem>>, %arg4: memref<512x3xf32, #tpu.memory_space<vmem>>) attributes {dimension_semantics = [#tpu.dimension_semantics<parallel>], iteration_bounds = array<i64: 4>, scalar_prefetch = 0 : i64, scratch_operands = 0 : i64, tpu.core_type = #tpu.core_type<tc>, window_params = [{transform_indices = @transform_0, window_bounds = array<i64: 512, 144>}, {pipeline_mode = #tpu.pipeline_mode<synchronous>, transform_indices = @transform_1, window_bounds = array<i64: 144, 3>}, {pipeline_mode = #tpu.pipeline_mode<synchronous>, transform_indices = @transform_2, window_bounds = array<i64: 1, 3>}, {transform_indices = @transform_3, window_bounds = array<i64: 512, 3>}]} {
    %c0 = arith.constant 0 : index
    %c0_0 = arith.constant 0 : index
    %0 = vector.load %arg1[%c0, %c0_0] : memref<512x144xbf16, #tpu.memory_space<vmem>>, vector<512x144xbf16>
    %c0_1 = arith.constant 0 : index
    %c0_2 = arith.constant 0 : index
    %1 = vector.load %arg2[%c0_1, %c0_2] : memref<144x3xbf16, #tpu.memory_space<vmem>>, vector<144x3xbf16>
    %cst = arith.constant dense<0.000000e+00> : vector<512x3xf32>
    %2 = tpu.matmul %0, %1, %cst {dimension_numbers = #tpu.dot_dimension_numbers<[1], [0], [0], [1], [0, 0, 1, 1], [], []>} : vector<512x144xbf16>, vector<144x3xbf16>, vector<512x3xf32> -> vector<512x3xf32>
    %c0_3 = arith.constant 0 : index
    %c0_4 = arith.constant 0 : index
    %3 = vector.load %arg3[%c0_3, %c0_4] : memref<1x3xf32, #tpu.memory_space<vmem>>, vector<1x3xf32>
    %4 = vector.broadcast %3 : vector<1x3xf32> to vector<512x3xf32>
    %5 = arith.addf %2, %4 : vector<512x3xf32>
    %6 = arith.negf %5 : vector<512x3xf32>
    %7 = math.exp %6 : vector<512x3xf32>
    %cst_5 = arith.constant 1.000000e+00 : f32
    %8 = vector.broadcast %cst_5 : f32 to vector<512x3xf32>
    %9 = arith.addf %8, %7 : vector<512x3xf32>
    %10 = arith.divf %8, %9 : vector<512x3xf32>
    %c0_6 = arith.constant 0 : index
    %c0_7 = arith.constant 0 : index
    %11 = vector.load %arg4[%c0_6, %c0_7] : memref<512x3xf32, #tpu.memory_space<vmem>>, vector<512x3xf32>
    tpu.vector_store %arg4[%c0_6, %c0_7], %10 {strides = array<i32>} : memref<512x3xf32, #tpu.memory_space<vmem>>, vector<512x3xf32>,
    return
  }
  func.func @transform_0(%arg0: i32) -> (i32, i32) {
    %c0_i32 = arith.constant 0 : i32
    %c0_i32_0 = arith.constant 0 : i32
    return %arg0, %c0_i32 : i32, i32
  }
  func.func @transform_1(%arg0: i32) -> (i32, i32) {
    %c0_i32 = arith.constant 0 : i32
    %c0_i32_0 = arith.constant 0 : i32
    %c0_i32_1 = arith.constant 0 : i32
    return %c0_i32, %c0_i32_0 : i32, i32
  }
  func.func @transform_2(%arg0: i32) -> (i32, i32) {
    %c0_i32 = arith.constant 0 : i32
    %c0_i32_0 = arith.constant 0 : i32
    %c0_i32_1 = arith.constant 0 : i32
    return %c0_i32, %c0_i32_0 : i32, i32
  }
  func.func @transform_3(%arg0: i32) -> (i32, i32) {
    %c0_i32 = arith.constant 0 : i32
    %c0_i32_0 = arith.constant 0 : i32
    return %arg0, %c0_i32 : i32, i32
  }
}

</mosaic_0001>

<llo_original>
// kernel: image_reconstruction_forward.8
$region0: #{image_reconstruction_forward.8}
  #allocation0 [shape = 'u32[]', space=smem, size = 0x4, offset = 0x4, fixed_abs, tag = 'smem constant byte address 0x4 - core index']
  #allocation1 [shape = 'u32[144,128]{1,0:T(1,128)}', space=vmem, size = 0x12000, scoped, tag = 'internal scratch']
  %s0 = inlined_call_operand.vmem [shape: bf16[512,27], index: 0, kind: input, shape index: {}]
  %s1 = inlined_call_operand.vmem [shape: bf16[27,16], index: 1, kind: input, shape index: {}]
  %s2 = inlined_call_operand.vmem [shape: f32[1,16], index: 2, kind: input, shape index: {}]
  %s3 = inlined_call_operand.vmem [shape: bf16[512,16], index: 3, kind: output, shape index: {}]
  %s4 = sld [smem:[#allocation0]]
  $region45: #{image_reconstruction_forward.8} parent=0
    _
  %s6 = ssub.s32 1, %s4
  %s7 = scalar_select 0, %s6, %s4
  loop: start=0, step=1, limit=4
  $region2: #{image_reconstruction_forward.8} parent=0 // loop_pre_header
    _
  $region3: #{image_reconstruction_forward.8} parent=0 // loop_header
    %s9 = sphi 0, %s13
    %p10 = scmp.ge.s32.totalorder %s9, 4
    %s19 = sphi 0, %s21
    %s22 = sphi 0, %s19
    %s23 = sphi 0, %s22
    %s39 = sphi 0, %s23
    %s43 = sphi 0, %s43
    %s45 = sphi 0, %s43
    %s46 = sphi 0, %s45
    %s60 = sphi 0, %s46
    %s64 = sphi 0, %s64
    %s66 = sphi 0, %s64
    %s67 = sphi 0, %s66
    %s81 = sphi 0, %s67
    %s87 = sphi 0, %s89
    %s90 = sphi 0, %s87
    %s91 = sphi 0, %s90
    %s107 = sphi 0, %s91
  $region4: #{image_reconstruction_forward.8} parent=0 // loop_header_branch
    %12 = sbr.rel (%p10) target = $region8
  $region5: #{image_reconstruction_forward.8} parent=0 // loop_body
    %s14 = ssub.s32 %s9, 1
    %s15 = ssub.s32 %s9, 2
    %s16 = sadd.s32 %s9, 1
    %s17 = ssub.s32 %s9, %s16
    %p18 = scmp.eq.s32.totalorder %s17, 0
    %s20 = sadd.s32 %s19, 1
    %s21 = scalar_select %p18, %s19, %s20
    %p24 = pneg %p18
    %p25 = scmp.eq.s32.totalorder %s9, 1
    %p26 = por %p24, %p25
    %p27 = scmp.ne.s32.totalorder %s19, %s22
    %p28 = scmp.eq.s32.totalorder %s9, 0
    %p29 = por %p27, %p28
    %p30 = scmp.ne.s32.totalorder %s19, %s22
    %p31 = scmp.eq.s32.totalorder %s14, 1
    %p32 = por %p30, %p31
    %p33 = scmp.ne.s32.totalorder %s22, %s23
    %p34 = scmp.eq.s32.totalorder %s14, 0
    %p35 = por %p33, %p34
    %p36 = scmp.ne.s32.totalorder %s22, %s23
    %p37 = scmp.eq.s32.totalorder %s15, 1
    %p38 = por %p36, %p37
    %p40 = scmp.ne.s32.totalorder %s23, %s39
    %p41 = scmp.eq.s32.totalorder %s15, 0
    %p42 = por %p40, %p41
    %s44 = sadd.s32 %s43, 1
    %p47 = scmp.eq.s32.totalorder %s9, 1
    %p48 = scmp.ne.s32.totalorder %s43, %s45
    %p49 = scmp.eq.s32.totalorder %s9, 0
    %p50 = por %p48, %p49
    %p51 = scmp.ne.s32.totalorder %s43, %s45
    %p52 = scmp.eq.s32.totalorder %s14, 1
    %p53 = por %p51, %p52
    %p54 = scmp.ne.s32.totalorder %s45, %s46
    %p55 = scmp.eq.s32.totalorder %s14, 0
    %p56 = por %p54, %p55
    %p57 = scmp.ne.s32.totalorder %s45, %s46
    %p58 = scmp.eq.s32.totalorder %s15, 1
    %p59 = por %p57, %p58
    %p61 = scmp.ne.s32.totalorder %s46, %s60
    %p62 = scmp.eq.s32.totalorder %s15, 0
    %p63 = por %p61, %p62
    %s65 = sadd.s32 %s64, 1
    %p68 = scmp.eq.s32.totalorder %s9, 1
    %p69 = scmp.ne.s32.totalorder %s64, %s66
    %p70 = scmp.eq.s32.totalorder %s9, 0
    %p71 = por %p69, %p70
    %p72 = scmp.ne.s32.totalorder %s64, %s66
    %p73 = scmp.eq.s32.totalorder %s14, 1
    %p74 = por %p72, %p73
    %p75 = scmp.ne.s32.totalorder %s66, %s67
    %p76 = scmp.eq.s32.totalorder %s14, 0
    %p77 = por %p75, %p76
    %p78 = scmp.ne.s32.totalorder %s66, %s67
    %p79 = scmp.eq.s32.totalorder %s15, 1
    %p80 = por %p78, %p79
    %p82 = scmp.ne.s32.totalorder %s67, %s81
    %p83 = scmp.eq.s32.totalorder %s15, 0
    %p84 = por %p82, %p83
    %s85 = ssub.s32 %s9, %s16
    %p86 = scmp.eq.s32.totalorder %s85, 0
    %s88 = sadd.s32 %s87, 1
    %s89 = scalar_select %p86, %s87, %s88
    %p92 = pneg %p86
    %p93 = scmp.eq.s32.totalorder %s9, 1
    %p94 = por %p92, %p93
    %p95 = scmp.ne.s32.totalorder %s87, %s90
    %p96 = scmp.eq.s32.totalorder %s9, 0
    %p97 = por %p95, %p96
    %p98 = scmp.ne.s32.totalorder %s87, %s90
    %p99 = scmp.eq.s32.totalorder %s14, 1
    %p100 = por %p98, %p99
    %p101 = scmp.ne.s32.totalorder %s90, %s91
    %p102 = scmp.eq.s32.totalorder %s14, 0
    %p103 = por %p101, %p102
    %p104 = scmp.ne.s32.totalorder %s90, %s91
    %p105 = scmp.eq.s32.totalorder %s15, 1
    %p106 = por %p104, %p105
    %p108 = scmp.ne.s32.totalorder %s91, %s107
    %p109 = scmp.eq.s32.totalorder %s15, 0
    %p110 = por %p108, %p109
    %p111 = scmp.le.s32.totalorder 1, %s9
    %p112 = scmp.lt.s32.totalorder %s9, 3
    %p113 = pnand %p111, %p112
    %p114 = pneg %p113
    // Predicated region
    $region9: #{image_reconstruction_forward.8} parent=5 // pred_check
      _
    $region10: #{image_reconstruction_forward.8} parent=5 // pred_check_branch
      %116 = sbr.rel (%p113) target = $region12
    $region11: #{image_reconstruction_forward.8} parent=5 // pred_region
      %s117 = ssub.s32 %s9, 1
      // Predicated region
      $region13: #{image_reconstruction_forward.8} parent=11 // pred_check
        %p118 = pneg %p56
      $region14: #{image_reconstruction_forward.8} parent=11 // pred_check_branch
        %120 = sbr.rel (%p118) target = $region16
      $region15: #{image_reconstruction_forward.8} parent=11 // pred_region
        _
      $region16: #{image_reconstruction_forward.8} parent=11 // pred_fallthru
        _
      // Predicated region
      $region17: #{image_reconstruction_forward.8} parent=11 // pred_check
        %p121 = pneg %p77
      $region18: #{image_reconstruction_forward.8} parent=11 // pred_check_branch
        %123 = sbr.rel (%p121) target = $region20
      $region19: #{image_reconstruction_forward.8} parent=11 // pred_region
        _
      $region20: #{image_reconstruction_forward.8} parent=11 // pred_fallthru
        _
    $region12: #{image_reconstruction_forward.8} parent=5 // pred_fallthru
      _
    %p124 = scmp.lt.s32.totalorder %s9, 2
    // Predicated region
    $region21: #{image_reconstruction_forward.8} parent=5 // pred_check
      %p125 = pneg %p124
    $region22: #{image_reconstruction_forward.8} parent=5 // pred_check_branch
      %127 = sbr.rel (%p125) target = $region24
    $region23: #{image_reconstruction_forward.8} parent=5 // pred_region
      // Predicated region
      $region25: #{image_reconstruction_forward.8} parent=23 // pred_check
        %p128 = pneg %p29
      $region26: #{image_reconstruction_forward.8} parent=23 // pred_check_branch
        %130 = sbr.rel (%p128) target = $region28
      $region27: #{image_reconstruction_forward.8} parent=23 // pred_region
        %s131 = smul.u32 32, %s9
        %p132 = scmp.lt.s32.totalorder %s131, 63
        %s133 = scalar_select %p132, %s131, 63
        %s134 = smul.addr %s133, 4
        %s135 = scalar_lea.vmem %s0, %s134
        %s136 = smul.u32 32, %s9
      $region28: #{image_reconstruction_forward.8} parent=23 // pred_fallthru
        _
    $region24: #{image_reconstruction_forward.8} parent=5 // pred_fallthru
      _
    %p137 = scmp.le.s32.totalorder 1, %s9
    %p138 = scmp.lt.s32.totalorder %s9, 3
    %p139 = pnand %p137, %p138
    %p140 = pneg %p139
    // Predicated region
    $region29: #{image_reconstruction_forward.8} parent=5 // pred_check
      _
    $region30: #{image_reconstruction_forward.8} parent=5 // pred_check_branch
      %142 = sbr.rel (%p139) target = $region32
    $region31: #{image_reconstruction_forward.8} parent=5 // pred_region
      %s143 = ssub.s32 %s9, 1
      %s144 = smul.u32 32, %s14
      %p145 = scmp.lt.s32.totalorder %s144, 63
      %s146 = scalar_select %p145, %s144, 63
      %s147 = smul.addr %s146, 4
      %s148 = scalar_lea.vmem %s0, %s147
      %p149 = pneg %p35
      %p150 = pneg %p32
      %p151 = pneg %p56
      %p152 = pneg %p53
      %p153 = pneg %p77
      %p154 = pneg %p74
      %p155 = pneg %p103
      %p156 = pneg %p100
      %s157 = smul.u32 32, %s14
      %p158 = scmp.lt.s32.totalorder %s157, 63
      %s159 = scalar_select %p158, %s157, 63
      %s160 = smul.addr %s159, 4
      %s161 = scalar_lea.vmem %s3, %s160
      %s162 = smul.u32 32, %s14
      %p163 = scmp.lt.s32.totalorder %s162, 63
      %s164 = scalar_select %p163, %s162, 63
      %s165 = smul.addr %s164, 4
      %s166 = scalar_lea.vmem %s0, %s165
      %s167 = smul.u32 32, %s14
      %s168 = smul.u32 32, %s14
      %p169 = scmp.lt.s32.totalorder %s168, 63
      %s170 = scalar_select %p169, %s168, 63
      %s171 = smul.addr %s170, 4
      %s172 = scalar_lea.vmem %s3, %s171
      %s173 = smul.u32 32, %s14
      %v175 = vld [vmem:[%s166] sm:$0xf]
      %v176 = vld [vmem:[%s166 + $0x4] sm:$0xf]
      %v177 = vld [vmem:[%s166 + $0x8] sm:$0xf]
      %v178 = vld [vmem:[%s166 + $0xc] sm:$0xf]
      %v179 = vld [vmem:[%s166 + $0x10] sm:$0xf]
      %v180 = vld [vmem:[%s166 + $0x14] sm:$0xf]
      %v181 = vld [vmem:[%s166 + $0x18] sm:$0xf]
      %v182 = vld [vmem:[%s166 + $0x1c] sm:$0xf]
      %v183 = vld [vmem:[%s166 + $0x20] sm:$0xf]
      %v184 = vld [vmem:[%s166 + $0x24] sm:$0xf]
      %v185 = vld [vmem:[%s166 + $0x28] sm:$0xf]
      %v186 = vld [vmem:[%s166 + $0x2c] sm:$0xf]
      %v187 = vld [vmem:[%s166 + $0x30] sm:$0xf]
      %v188 = vld [vmem:[%s166 + $0x34] sm:$0xf]
      %v189 = vld [vmem:[%s166 + $0x38] sm:$0xf]
      %v190 = vld [vmem:[%s166 + $0x3c] sm:$0xf]
      %v191 = vld [vmem:[%s166 + $0x40] sm:$0xf]
      %v192 = vld [vmem:[%s166 + $0x44] sm:$0xf]
      %v193 = vld [vmem:[%s166 + $0x48] sm:$0xf]
      %v194 = vld [vmem:[%s166 + $0x4c] sm:$0xf]
      %v195 = vld [vmem:[%s166 + $0x50] sm:$0xf]
      %v196 = vld [vmem:[%s166 + $0x54] sm:$0xf]
      %v197 = vld [vmem:[%s166 + $0x58] sm:$0xf]
      %v198 = vld [vmem:[%s166 + $0x5c] sm:$0xf]
      %v199 = vld [vmem:[%s166 + $0x60] sm:$0xf]
      %v200 = vld [vmem:[%s166 + $0x64] sm:$0xf]
      %v201 = vld [vmem:[%s166 + $0x68] sm:$0xf]
      %v202 = vld [vmem:[%s166 + $0x6c] sm:$0xf]
      %v203 = vld [vmem:[%s166 + $0x70] sm:$0xf]
      %v204 = vld [vmem:[%s166 + $0x74] sm:$0xf]
      %v205 = vld [vmem:[%s166 + $0x78] sm:$0xf]
      %v206 = vld [vmem:[%s166 + $0x7c] sm:$0xf]
      %v207 = vld [vmem:[%s1] sm:$0xf]
      %v208 = vld [vmem:[%s1 + $0x4] sm:$0xf]
      %v209 = vld [vmem:[%s1 + $0x8] sm:$0xf]
      %v210 = vld [vmem:[%s1 + $0xc] sm:$0x3]
      %v211 = vld [vmem:[%s2] sm:$0x1]
      %v213 = vlaneseq
      %v214 = vshrl.u32 %v213, 7
      %v215 = vsub.s32 0, %v214
      %v216 = vrot.slane %v211, %v215
      %v250 = vunpack.c.l.b16 %v175
      %v251 = vunpack.c.l.b16 %v176
      %v252 = vunpack.c.l.b16 %v177
      %v253 = vunpack.c.l.b16 %v178
      %v254 = vunpack.c.l.b16 %v179
      %v255 = vunpack.c.l.b16 %v180
      %v256 = vunpack.c.l.b16 %v181
      %v257 = vunpack.c.l.b16 %v182
      %v258 = vunpack.c.l.b16 %v183
      %v259 = vunpack.c.l.b16 %v184
      %v260 = vunpack.c.l.b16 %v185
      %v261 = vunpack.c.l.b16 %v186
      %v262 = vunpack.c.l.b16 %v187
      %v263 = vunpack.c.l.b16 %v188
      %v264 = vunpack.c.l.b16 %v189
      %v265 = vunpack.c.l.b16 %v190
      %v266 = vunpack.c.l.b16 %v191
      %v267 = vunpack.c.l.b16 %v192
      %v268 = vunpack.c.l.b16 %v193
      %v269 = vunpack.c.l.b16 %v194
      %v270 = vunpack.c.l.b16 %v195
      %v271 = vunpack.c.l.b16 %v196
      %v272 = vunpack.c.l.b16 %v197
      %v273 = vunpack.c.l.b16 %v198
      %v274 = vunpack.c.l.b16 %v199
      %v275 = vunpack.c.l.b16 %v200
      %v276 = vunpack.c.l.b16 %v201
      %v277 = vunpack.c.l.b16 %v202
      %v278 = vunpack.c.l.b16 %v203
      %v279 = vunpack.c.l.b16 %v204
      %v280 = vunpack.c.l.b16 %v205
      %v281 = vunpack.c.l.b16 %v206
      %v282 = vpack.c.b16 %v251, %v250
      %v283 = vpack.c.b16 %v253, %v252
      %v284 = vpack.c.b16 %v255, %v254
      %v285 = vpack.c.b16 %v257, %v256
      %v286 = vpack.c.b16 %v259, %v258
      %v287 = vpack.c.b16 %v261, %v260
      %v288 = vpack.c.b16 %v263, %v262
      %v289 = vpack.c.b16 %v265, %v264
      %v290 = vpack.c.b16 %v267, %v266
      %v291 = vpack.c.b16 %v269, %v268
      %v292 = vpack.c.b16 %v271, %v270
      %v293 = vpack.c.b16 %v273, %v272
      %v294 = vpack.c.b16 %v275, %v274
      %v295 = vpack.c.b16 %v277, %v276
      %v296 = vpack.c.b16 %v279, %v278
      %v297 = vpack.c.b16 %v281, %v280
      %v302 = vunpack.c.l.b16 %v207
      %v303 = vunpack.c.l.b16 %v208
      %v304 = vunpack.c.l.b16 %v209
      %v305 = vunpack.c.l.b16 %v210
      %v306 = vpack.c.b16 %v303, %v302
      %v307 = vpack.c.b16 %v305, %v304
      %vm309 = vcmask 220160
      %v311 = vsel %vm309, %v282, 0
      %v314 = vsel %vm309, %v283, 0
      %v317 = vsel %vm309, %v284, 0
      %v320 = vsel %vm309, %v285, 0
      %v323 = vsel %vm309, %v286, 0
      %v326 = vsel %vm309, %v287, 0
      %v329 = vsel %vm309, %v288, 0
      %v332 = vsel %vm309, %v289, 0
      %v335 = vsel %vm309, %v290, 0
      %v338 = vsel %vm309, %v291, 0
      %v341 = vsel %vm309, %v292, 0
      %v344 = vsel %vm309, %v293, 0
      %v347 = vsel %vm309, %v294, 0
      %v350 = vsel %vm309, %v295, 0
      %v353 = vsel %vm309, %v296, 0
      %v356 = vsel %vm309, %v297, 0
      %vm358 = vcmask 1044480
      %vm359 = vcmask 1045504
      %v360 = vsel %vm358, 4294967295, 65535
      %v361 = vsel %vm359, %v360, 0
      %v363 = vand.u32 %v307, %v361
      %365 = vmatprep.subr.bf16.mxu0 0
      %366 = vmatpush1.bf16.msra.mxu0 0
      %367 = vmatprep.subr.bf16.mxu0 0
      %368 = vmatpush1.bf16.msra.mxu0 0
      %369 = vmatprep.subr.bf16.mxu0 0
      %370 = vmatpush1.bf16.msra.mxu0 0
      %371 = vmatprep.subr.bf16.mxu0 0
      %372 = vmatpush1.bf16.msra.mxu0 0
      %373 = vmatprep.subr.bf16.mxu0 0
      %374 = vmatpush1.bf16.msra.mxu0 0
      %375 = vmatprep.subr.bf16.mxu0 0
      %376 = vmatpush1.bf16.msra.mxu0 0
      %377 = vmatprep.subr.bf16.mxu0 0
      %378 = vmatpush1.bf16.msra.mxu0 %v363
      %379 = vmatprep.subr.bf16.mxu0 0
      %380 = vmatpush1.bf16.msra.mxu0 %v306
      %381 = vmatprep.subr.bf16.mxu0 0
      %382 = vmatpush2.bf16.msra.mxu0 0
      %383 = vmatprep.subr.bf16.mxu0 0
      %384 = vmatpush2.bf16.msra.mxu0 0
      %385 = vmatprep.subr.bf16.mxu0 0
      %386 = vmatpush2.bf16.msra.mxu0 0
      %387 = vmatprep.subr.bf16.mxu0 0
      %388 = vmatpush2.bf16.msra.mxu0 0
      %389 = vmatprep.subr.bf16.mxu0 0
      %390 = vmatpush2.bf16.msra.mxu0 0
      %391 = vmatprep.subr.bf16.mxu0 0
      %392 = vmatpush2.bf16.msra.mxu0 0
      %393 = vmatprep.subr.bf16.mxu0 0
      %394 = vmatpush2.bf16.msra.mxu0 0
      %395 = vmatprep.subr.bf16.mxu0 0
      %396 = vmatpush2.bf16.msra.mxu0 0
      %397 = vmatprep.mubr.bf16.mxu0 0
      %398 = vmatmul.mubr.bf16.gmra.mxu0 %v311
      %v399 = vpop.f32.mrf.mxu0
      %v400 = vadd.f32 %v216, %v399
      %v401 = vpop.f32.mrf.mxu0
      %v402 = vpop.f32.mrf.mxu0
      %v403 = vadd.f32 %v216, %v402
      %v404 = vpop.f32.mrf.mxu0
      %405 = vmatprep.mubr.bf16.mxu0 0
      %406 = vmatmul.mubr.bf16.gmra.mxu0 %v314
      %v407 = vpop.f32.mrf.mxu0
      %v408 = vadd.f32 %v216, %v407
      %v409 = vpop.f32.mrf.mxu0
      %v410 = vpop.f32.mrf.mxu0
      %v411 = vadd.f32 %v216, %v410
      %v412 = vpop.f32.mrf.mxu0
      %413 = vmatprep.mubr.bf16.mxu0 0
      %414 = vmatmul.mubr.bf16.gmra.mxu0 %v317
      %v415 = vpop.f32.mrf.mxu0
      %v416 = vadd.f32 %v216, %v415
      %v417 = vpop.f32.mrf.mxu0
      %v418 = vpop.f32.mrf.mxu0
      %v419 = vadd.f32 %v216, %v418
      %v420 = vpop.f32.mrf.mxu0
      %421 = vmatprep.mubr.bf16.mxu0 0
      %422 = vmatmul.mubr.bf16.gmra.mxu0 %v320
      %v423 = vpop.f32.mrf.mxu0
      %v424 = vadd.f32 %v216, %v423
      %v425 = vpop.f32.mrf.mxu0
      %v426 = vpop.f32.mrf.mxu0
      %v427 = vadd.f32 %v216, %v426
      %v428 = vpop.f32.mrf.mxu0
      %429 = vmatprep.mubr.bf16.mxu0 0
      %430 = vmatmul.mubr.bf16.gmra.mxu0 %v323
      %v431 = vpop.f32.mrf.mxu0
      %v432 = vadd.f32 %v216, %v431
      %v433 = vpop.f32.mrf.mxu0
      %v434 = vpop.f32.mrf.mxu0
      %v435 = vadd.f32 %v216, %v434
      %v436 = vpop.f32.mrf.mxu0
      %437 = vmatprep.mubr.bf16.mxu0 0
      %438 = vmatmul.mubr.bf16.gmra.mxu0 %v326
      %v439 = vpop.f32.mrf.mxu0
      %v440 = vadd.f32 %v216, %v439
      %v441 = vpop.f32.mrf.mxu0
      %v442 = vpop.f32.mrf.mxu0
      %v443 = vadd.f32 %v216, %v442
      %v444 = vpop.f32.mrf.mxu0
      %445 = vmatprep.mubr.bf16.mxu0 0
      %446 = vmatmul.mubr.bf16.gmra.mxu0 %v329
      %v447 = vpop.f32.mrf.mxu0
      %v448 = vadd.f32 %v216, %v447
      %v449 = vpop.f32.mrf.mxu0
      %v450 = vpop.f32.mrf.mxu0
      %v451 = vadd.f32 %v216, %v450
      %v452 = vpop.f32.mrf.mxu0
      %453 = vmatprep.mubr.bf16.mxu0 0
      %454 = vmatmul.mubr.bf16.gmra.mxu0 %v332
      %v455 = vpop.f32.mrf.mxu0
      %v456 = vadd.f32 %v216, %v455
      %v457 = vpop.f32.mrf.mxu0
      %v458 = vpop.f32.mrf.mxu0
      %v459 = vadd.f32 %v216, %v458
      %v460 = vpop.f32.mrf.mxu0
      %461 = vmatprep.mubr.bf16.mxu0 0
      %462 = vmatmul.mubr.bf16.gmra.mxu0 %v335
      %v463 = vpop.f32.mrf.mxu0
      %v464 = vadd.f32 %v216, %v463
      %v465 = vpop.f32.mrf.mxu0
      %v466 = vpop.f32.mrf.mxu0
      %v467 = vadd.f32 %v216, %v466
      %v468 = vpop.f32.mrf.mxu0
      %469 = vmatprep.mubr.bf16.mxu0 0
      %470 = vmatmul.mubr.bf16.gmra.mxu0 %v338
      %v471 = vpop.f32.mrf.mxu0
      %v472 = vadd.f32 %v216, %v471
      %v473 = vpop.f32.mrf.mxu0
      %v474 = vpop.f32.mrf.mxu0
      %v475 = vadd.f32 %v216, %v474
      %v476 = vpop.f32.mrf.mxu0
      %477 = vmatprep.mubr.bf16.mxu0 0
      %478 = vmatmul.mubr.bf16.gmra.mxu0 %v341
      %v479 = vpop.f32.mrf.mxu0
      %v480 = vadd.f32 %v216, %v479
      %v481 = vpop.f32.mrf.mxu0
      %v482 = vpop.f32.mrf.mxu0
      %v483 = vadd.f32 %v216, %v482
      %v484 = vpop.f32.mrf.mxu0
      %485 = vmatprep.mubr.bf16.mxu0 0
      %486 = vmatmul.mubr.bf16.gmra.mxu0 %v344
      %v487 = vpop.f32.mrf.mxu0
      %v488 = vadd.f32 %v216, %v487
      %v489 = vpop.f32.mrf.mxu0
      %v490 = vpop.f32.mrf.mxu0
      %v491 = vadd.f32 %v216, %v490
      %v492 = vpop.f32.mrf.mxu0
      %493 = vmatprep.mubr.bf16.mxu0 0
      %494 = vmatmul.mubr.bf16.gmra.mxu0 %v347
      %v495 = vpop.f32.mrf.mxu0
      %v496 = vadd.f32 %v216, %v495
      %v497 = vpop.f32.mrf.mxu0
      %v498 = vpop.f32.mrf.mxu0
      %v499 = vadd.f32 %v216, %v498
      %v500 = vpop.f32.mrf.mxu0
      %501 = vmatprep.mubr.bf16.mxu0 0
      %502 = vmatmul.mubr.bf16.gmra.mxu0 %v350
      %v503 = vpop.f32.mrf.mxu0
      %v504 = vadd.f32 %v216, %v503
      %v505 = vpop.f32.mrf.mxu0
      %v506 = vpop.f32.mrf.mxu0
      %v507 = vadd.f32 %v216, %v506
      %v508 = vpop.f32.mrf.mxu0
      %509 = vmatprep.mubr.bf16.mxu0 0
      %510 = vmatmul.mubr.bf16.gmra.mxu0 %v353
      %v511 = vpop.f32.mrf.mxu0
      %v512 = vadd.f32 %v216, %v511
      %v513 = vpop.f32.mrf.mxu0
      %v514 = vpop.f32.mrf.mxu0
      %v515 = vadd.f32 %v216, %v514
      %v516 = vpop.f32.mrf.mxu0
      %517 = vmatprep.mubr.bf16.mxu0 0
      %518 = vmatmul.mubr.bf16.gmra.mxu0 %v356
      %v519 = vpop.f32.mrf.mxu0
      %v520 = vadd.f32 %v216, %v519
      %v521 = vpop.f32.mrf.mxu0
      %v522 = vpop.f32.mrf.mxu0
      %v523 = vadd.f32 %v216, %v522
      %v524 = vpop.f32.mrf.mxu0
      %525 = vdwg.mxu0
      %vm526 = vcmp.ge.f32.partialorder %v400, 0.0
      %vm527 = vcmp.ge.f32.partialorder %v403, 0.0
      %vm528 = vcmp.ge.f32.partialorder %v408, 0.0
      %vm529 = vcmp.ge.f32.partialorder %v411, 0.0
      %vm530 = vcmp.ge.f32.partialorder %v416, 0.0
      %vm531 = vcmp.ge.f32.partialorder %v419, 0.0
      %vm532 = vcmp.ge.f32.partialorder %v424, 0.0
      %vm533 = vcmp.ge.f32.partialorder %v427, 0.0
      %vm534 = vcmp.ge.f32.partialorder %v432, 0.0
      %vm535 = vcmp.ge.f32.partialorder %v435, 0.0
      %vm536 = vcmp.ge.f32.partialorder %v440, 0.0
      %vm537 = vcmp.ge.f32.partialorder %v443, 0.0
      %vm538 = vcmp.ge.f32.partialorder %v448, 0.0
      %vm539 = vcmp.ge.f32.partialorder %v451, 0.0
      %vm540 = vcmp.ge.f32.partialorder %v456, 0.0
      %vm541 = vcmp.ge.f32.partialorder %v459, 0.0
      %vm542 = vcmp.ge.f32.partialorder %v464, 0.0
      %vm543 = vcmp.ge.f32.partialorder %v467, 0.0
      %vm544 = vcmp.ge.f32.partialorder %v472, 0.0
      %vm545 = vcmp.ge.f32.partialorder %v475, 0.0
      %vm546 = vcmp.ge.f32.partialorder %v480, 0.0
      %vm547 = vcmp.ge.f32.partialorder %v483, 0.0
      %vm548 = vcmp.ge.f32.partialorder %v488, 0.0
      %vm549 = vcmp.ge.f32.partialorder %v491, 0.0
      %vm550 = vcmp.ge.f32.partialorder %v496, 0.0
      %vm551 = vcmp.ge.f32.partialorder %v499, 0.0
      %vm552 = vcmp.ge.f32.partialorder %v504, 0.0
      %vm553 = vcmp.ge.f32.partialorder %v507, 0.0
      %vm554 = vcmp.ge.f32.partialorder %v512, 0.0
      %vm555 = vcmp.ge.f32.partialorder %v515, 0.0
      %vm556 = vcmp.ge.f32.partialorder %v520, 0.0
      %vm557 = vcmp.ge.f32.partialorder %v523, 0.0
      %v558 = vmul.f32 %v400, 0.01
      %v559 = vmul.f32 %v403, 0.01
      %v560 = vmul.f32 %v408, 0.01
      %v561 = vmul.f32 %v411, 0.01
      %v562 = vmul.f32 %v416, 0.01
      %v563 = vmul.f32 %v419, 0.01
      %v564 = vmul.f32 %v424, 0.01
      %v565 = vmul.f32 %v427, 0.01
      %v566 = vmul.f32 %v432, 0.01
      %v567 = vmul.f32 %v435, 0.01
      %v568 = vmul.f32 %v440, 0.01
      %v569 = vmul.f32 %v443, 0.01
      %v570 = vmul.f32 %v448, 0.01
      %v571 = vmul.f32 %v451, 0.01
      %v572 = vmul.f32 %v456, 0.01
      %v573 = vmul.f32 %v459, 0.01
      %v574 = vmul.f32 %v464, 0.01
      %v575 = vmul.f32 %v467, 0.01
      %v576 = vmul.f32 %v472, 0.01
      %v577 = vmul.f32 %v475, 0.01
      %v578 = vmul.f32 %v480, 0.01
      %v579 = vmul.f32 %v483, 0.01
      %v580 = vmul.f32 %v488, 0.01
      %v581 = vmul.f32 %v491, 0.01
      %v582 = vmul.f32 %v496, 0.01
      %v583 = vmul.f32 %v499, 0.01
      %v584 = vmul.f32 %v504, 0.01
      %v585 = vmul.f32 %v507, 0.01
      %v586 = vmul.f32 %v512, 0.01
      %v587 = vmul.f32 %v515, 0.01
      %v588 = vmul.f32 %v520, 0.01
      %v589 = vmul.f32 %v523, 0.01
      %v590 = vsel %vm526, %v400, %v558
      %v591 = vsel %vm527, %v403, %v559
      %v592 = vsel %vm528, %v408, %v560
      %v593 = vsel %vm529, %v411, %v561
      %v594 = vsel %vm530, %v416, %v562
      %v595 = vsel %vm531, %v419, %v563
      %v596 = vsel %vm532, %v424, %v564
      %v597 = vsel %vm533, %v427, %v565
      %v598 = vsel %vm534, %v432, %v566
      %v599 = vsel %vm535, %v435, %v567
      %v600 = vsel %vm536, %v440, %v568
      %v601 = vsel %vm537, %v443, %v569
      %v602 = vsel %vm538, %v448, %v570
      %v603 = vsel %vm539, %v451, %v571
      %v604 = vsel %vm540, %v456, %v572
      %v605 = vsel %vm541, %v459, %v573
      %v606 = vsel %vm542, %v464, %v574
      %v607 = vsel %vm543, %v467, %v575
      %v608 = vsel %vm544, %v472, %v576
      %v609 = vsel %vm545, %v475, %v577
      %v610 = vsel %vm546, %v480, %v578
      %v611 = vsel %vm547, %v483, %v579
      %v612 = vsel %vm548, %v488, %v580
      %v613 = vsel %vm549, %v491, %v581
      %v614 = vsel %vm550, %v496, %v582
      %v615 = vsel %vm551, %v499, %v583
      %v616 = vsel %vm552, %v504, %v584
      %v617 = vsel %vm553, %v507, %v585
      %v618 = vsel %vm554, %v512, %v586
      %v619 = vsel %vm555, %v515, %v587
      %v620 = vsel %vm556, %v520, %v588
      %v621 = vsel %vm557, %v523, %v589
      %v622 = vpack.c.bf16 %v591, %v590
      %v623 = vpack.c.bf16 %v593, %v592
      %v624 = vpack.c.bf16 %v595, %v594
      %v625 = vpack.c.bf16 %v597, %v596
      %v626 = vpack.c.bf16 %v599, %v598
      %v627 = vpack.c.bf16 %v601, %v600
      %v628 = vpack.c.bf16 %v603, %v602
      %v629 = vpack.c.bf16 %v605, %v604
      %v630 = vpack.c.bf16 %v607, %v606
      %v631 = vpack.c.bf16 %v609, %v608
      %v632 = vpack.c.bf16 %v611, %v610
      %v633 = vpack.c.bf16 %v613, %v612
      %v634 = vpack.c.bf16 %v615, %v614
      %v635 = vpack.c.bf16 %v617, %v616
      %v636 = vpack.c.bf16 %v619, %v618
      %v637 = vpack.c.bf16 %v621, %v620
      %v654 = vunpack.c.l.b16 %v622
      %v655 = vunpack.c.h.b16 %v622
      %v656 = vunpack.c.l.b16 %v623
      %v657 = vunpack.c.h.b16 %v623
      %v658 = vunpack.c.l.b16 %v624
      %v659 = vunpack.c.h.b16 %v624
      %v660 = vunpack.c.l.b16 %v625
      %v661 = vunpack.c.h.b16 %v625
      %v662 = vunpack.c.l.b16 %v626
      %v663 = vunpack.c.h.b16 %v626
      %v664 = vunpack.c.l.b16 %v627
      %v665 = vunpack.c.h.b16 %v627
      %v666 = vunpack.c.l.b16 %v628
      %v667 = vunpack.c.h.b16 %v628
      %v668 = vunpack.c.l.b16 %v629
      %v669 = vunpack.c.h.b16 %v629
      %v670 = vunpack.c.l.b16 %v630
      %v671 = vunpack.c.h.b16 %v630
      %v672 = vunpack.c.l.b16 %v631
      %v673 = vunpack.c.h.b16 %v631
      %v674 = vunpack.c.l.b16 %v632
      %v675 = vunpack.c.h.b16 %v632
      %v676 = vunpack.c.l.b16 %v633
      %v677 = vunpack.c.h.b16 %v633
      %v678 = vunpack.c.l.b16 %v634
      %v679 = vunpack.c.h.b16 %v634
      %v680 = vunpack.c.l.b16 %v635
      %v681 = vunpack.c.h.b16 %v635
      %v682 = vunpack.c.l.b16 %v636
      %v683 = vunpack.c.h.b16 %v636
      %v684 = vunpack.c.l.b16 %v637
      %v685 = vunpack.c.h.b16 %v637
      %v686 = vpack.c.b16 %v654, %v654
      %v687 = vpack.c.b16 %v655, %v655
      %v688 = vpack.c.b16 %v656, %v656
      %v689 = vpack.c.b16 %v657, %v657
      %v690 = vpack.c.b16 %v658, %v658
      %v691 = vpack.c.b16 %v659, %v659
      %v692 = vpack.c.b16 %v660, %v660
      %v693 = vpack.c.b16 %v661, %v661
      %v694 = vpack.c.b16 %v662, %v662
      %v695 = vpack.c.b16 %v663, %v663
      %v696 = vpack.c.b16 %v664, %v664
      %v697 = vpack.c.b16 %v665, %v665
      %v698 = vpack.c.b16 %v666, %v666
      %v699 = vpack.c.b16 %v667, %v667
      %v700 = vpack.c.b16 %v668, %v668
      %v701 = vpack.c.b16 %v669, %v669
      %v702 = vpack.c.b16 %v670, %v670
      %v703 = vpack.c.b16 %v671, %v671
      %v704 = vpack.c.b16 %v672, %v672
      %v705 = vpack.c.b16 %v673, %v673
      %v706 = vpack.c.b16 %v674, %v674
      %v707 = vpack.c.b16 %v675, %v675
      %v708 = vpack.c.b16 %v676, %v676
      %v709 = vpack.c.b16 %v677, %v677
      %v710 = vpack.c.b16 %v678, %v678
      %v711 = vpack.c.b16 %v679, %v679
      %v712 = vpack.c.b16 %v680, %v680
      %v713 = vpack.c.b16 %v681, %v681
      %v714 = vpack.c.b16 %v682, %v682
      %v715 = vpack.c.b16 %v683, %v683
      %v716 = vpack.c.b16 %v684, %v684
      %v717 = vpack.c.b16 %v685, %v685
      %vm750 = vcmask 125952
      %751 = vst.msk [vmem:[%s172] sm:$0xf] %vm750, %v686
      %752 = vst.msk [vmem:[%s172 + $0x4] sm:$0xf] %vm750, %v687
      %753 = vst.msk [vmem:[%s172 + $0x8] sm:$0xf] %vm750, %v688
      %754 = vst.msk [vmem:[%s172 + $0xc] sm:$0xf] %vm750, %v689
      %755 = vst.msk [vmem:[%s172 + $0x10] sm:$0xf] %vm750, %v690
      %756 = vst.msk [vmem:[%s172 + $0x14] sm:$0xf] %vm750, %v691
      %757 = vst.msk [vmem:[%s172 + $0x18] sm:$0xf] %vm750, %v692
      %758 = vst.msk [vmem:[%s172 + $0x1c] sm:$0xf] %vm750, %v693
      %759 = vst.msk [vmem:[%s172 + $0x20] sm:$0xf] %vm750, %v694
      %760 = vst.msk [vmem:[%s172 + $0x24] sm:$0xf] %vm750, %v695
      %761 = vst.msk [vmem:[%s172 + $0x28] sm:$0xf] %vm750, %v696
      %762 = vst.msk [vmem:[%s172 + $0x2c] sm:$0xf] %vm750, %v697
      %763 = vst.msk [vmem:[%s172 + $0x30] sm:$0xf] %vm750, %v698
      %764 = vst.msk [vmem:[%s172 + $0x34] sm:$0xf] %vm750, %v699
      %765 = vst.msk [vmem:[%s172 + $0x38] sm:$0xf] %vm750, %v700
      %766 = vst.msk [vmem:[%s172 + $0x3c] sm:$0xf] %vm750, %v701
      %767 = vst.msk [vmem:[%s172 + $0x40] sm:$0xf] %vm750, %v702
      %768 = vst.msk [vmem:[%s172 + $0x44] sm:$0xf] %vm750, %v703
      %769 = vst.msk [vmem:[%s172 + $0x48] sm:$0xf] %vm750, %v704
      %770 = vst.msk [vmem:[%s172 + $0x4c] sm:$0xf] %vm750, %v705
      %771 = vst.msk [vmem:[%s172 + $0x50] sm:$0xf] %vm750, %v706
      %772 = vst.msk [vmem:[%s172 + $0x54] sm:$0xf] %vm750, %v707
      %773 = vst.msk [vmem:[%s172 + $0x58] sm:$0xf] %vm750, %v708
      %774 = vst.msk [vmem:[%s172 + $0x5c] sm:$0xf] %vm750, %v709
      %775 = vst.msk [vmem:[%s172 + $0x60] sm:$0xf] %vm750, %v710
      %776 = vst.msk [vmem:[%s172 + $0x64] sm:$0xf] %vm750, %v711
      %777 = vst.msk [vmem:[%s172 + $0x68] sm:$0xf] %vm750, %v712
      %778 = vst.msk [vmem:[%s172 + $0x6c] sm:$0xf] %vm750, %v713
      %779 = vst.msk [vmem:[%s172 + $0x70] sm:$0xf] %vm750, %v714
      %780 = vst.msk [vmem:[%s172 + $0x74] sm:$0xf] %vm750, %v715
      %781 = vst.msk [vmem:[%s172 + $0x78] sm:$0xf] %vm750, %v716
      %782 = vst.msk [vmem:[%s172 + $0x7c] sm:$0xf] %vm750, %v717
      %s783 = smul.u32 32, %s14
      %p784 = scmp.lt.s32.totalorder %s783, 63
      %s785 = scalar_select %p784, %s783, 63
      %s786 = smul.addr %s785, 4
      %s787 = scalar_lea.vmem %s3, %s786
      // Predicated region
      $region33: #{image_reconstruction_forward.8} parent=31 // pred_check
        %p788 = pneg %p100
      $region34: #{image_reconstruction_forward.8} parent=31 // pred_check_branch
        %790 = sbr.rel (%p788) target = $region36
      $region35: #{image_reconstruction_forward.8} parent=31 // pred_region
        %s791 = smul.u32 32, %s14
      $region36: #{image_reconstruction_forward.8} parent=31 // pred_fallthru
        _
    $region32: #{image_reconstruction_forward.8} parent=5 // pred_fallthru
      _
    %p792 = scmp.le.s32.totalorder 2, %s9
    // Predicated region
    $region37: #{image_reconstruction_forward.8} parent=5 // pred_check
      %p793 = pneg %p792
    $region38: #{image_reconstruction_forward.8} parent=5 // pred_check_branch
      %795 = sbr.rel (%p793) target = $region40
    $region39: #{image_reconstruction_forward.8} parent=5 // pred_region
      %s796 = ssub.s32 %s9, 2
      // Predicated region
      $region41: #{image_reconstruction_forward.8} parent=39 // pred_check
        %p797 = pneg %p106
      $region42: #{image_reconstruction_forward.8} parent=39 // pred_check_branch
        %799 = sbr.rel (%p797) target = $region44
      $region43: #{image_reconstruction_forward.8} parent=39 // pred_region
        %s800 = smul.u32 32, %s15
        %p801 = scmp.lt.s32.totalorder %s800, 63
        %s802 = scalar_select %p801, %s800, 63
        %s803 = smul.addr %s802, 4
        %s804 = scalar_lea.vmem %s3, %s803
      $region44: #{image_reconstruction_forward.8} parent=39 // pred_fallthru
        _
    $region40: #{image_reconstruction_forward.8} parent=5 // pred_fallthru
      _
  $region6: #{image_reconstruction_forward.8} parent=0 // loop_footer
    %s13 = sadd.s32 1, %s9
  $region7: #{image_reconstruction_forward.8} parent=0 // loop_footer_branch
    %8 = sbr.rel target = $region3
  $region8: #{image_reconstruction_forward.8} parent=0 // loop_exit
    _

// kernel: image_reconstruction_forward.9
$region0: #{image_reconstruction_forward.9}
  #allocation0 [shape = 'u32[]', space=smem, size = 0x4, offset = 0x4, fixed_abs, tag = 'smem constant byte address 0x4 - core index']
  #allocation1 [shape = 'u32[144,128]{1,0:T(1,128)}', space=vmem, size = 0x12000, scoped, tag = 'internal scratch']
  %s0 = inlined_call_operand.vmem [shape: bf16[128,144], index: 0, kind: input, shape index: {}]
  %s1 = inlined_call_operand.vmem [shape: bf16[144,32], index: 1, kind: input, shape index: {}]
  %s2 = inlined_call_operand.vmem [shape: f32[1,32], index: 2, kind: input, shape index: {}]
  %s3 = inlined_call_operand.vmem [shape: bf16[128,32], index: 3, kind: output, shape index: {}]
  %s4 = sld [smem:[#allocation0]]
  $region45: #{image_reconstruction_forward.9} parent=0
    _
  %s6 = ssub.s32 1, %s4
  %s7 = scalar_select 0, %s6, %s4
  loop: start=0, step=1, limit=4
  $region2: #{image_reconstruction_forward.9} parent=0 // loop_pre_header
    _
  $region3: #{image_reconstruction_forward.9} parent=0 // loop_header
    %s9 = sphi 0, %s13
    %p10 = scmp.ge.s32.totalorder %s9, 4
    %s19 = sphi 0, %s21
    %s22 = sphi 0, %s19
    %s23 = sphi 0, %s22
    %s39 = sphi 0, %s23
    %s43 = sphi 0, %s43
    %s45 = sphi 0, %s43
    %s46 = sphi 0, %s45
    %s60 = sphi 0, %s46
    %s64 = sphi 0, %s64
    %s66 = sphi 0, %s64
    %s67 = sphi 0, %s66
    %s81 = sphi 0, %s67
    %s87 = sphi 0, %s89
    %s90 = sphi 0, %s87
    %s91 = sphi 0, %s90
    %s107 = sphi 0, %s91
  $region4: #{image_reconstruction_forward.9} parent=0 // loop_header_branch
    %12 = sbr.rel (%p10) target = $region8
  $region5: #{image_reconstruction_forward.9} parent=0 // loop_body
    %s14 = ssub.s32 %s9, 1
    %s15 = ssub.s32 %s9, 2
    %s16 = sadd.s32 %s9, 1
    %s17 = ssub.s32 %s9, %s16
    %p18 = scmp.eq.s32.totalorder %s17, 0
    %s20 = sadd.s32 %s19, 1
    %s21 = scalar_select %p18, %s19, %s20
    %p24 = pneg %p18
    %p25 = scmp.eq.s32.totalorder %s9, 1
    %p26 = por %p24, %p25
    %p27 = scmp.ne.s32.totalorder %s19, %s22
    %p28 = scmp.eq.s32.totalorder %s9, 0
    %p29 = por %p27, %p28
    %p30 = scmp.ne.s32.totalorder %s19, %s22
    %p31 = scmp.eq.s32.totalorder %s14, 1
    %p32 = por %p30, %p31
    %p33 = scmp.ne.s32.totalorder %s22, %s23
    %p34 = scmp.eq.s32.totalorder %s14, 0
    %p35 = por %p33, %p34
    %p36 = scmp.ne.s32.totalorder %s22, %s23
    %p37 = scmp.eq.s32.totalorder %s15, 1
    %p38 = por %p36, %p37
    %p40 = scmp.ne.s32.totalorder %s23, %s39
    %p41 = scmp.eq.s32.totalorder %s15, 0
    %p42 = por %p40, %p41
    %s44 = sadd.s32 %s43, 1
    %p47 = scmp.eq.s32.totalorder %s9, 1
    %p48 = scmp.ne.s32.totalorder %s43, %s45
    %p49 = scmp.eq.s32.totalorder %s9, 0
    %p50 = por %p48, %p49
    %p51 = scmp.ne.s32.totalorder %s43, %s45
    %p52 = scmp.eq.s32.totalorder %s14, 1
    %p53 = por %p51, %p52
    %p54 = scmp.ne.s32.totalorder %s45, %s46
    %p55 = scmp.eq.s32.totalorder %s14, 0
    %p56 = por %p54, %p55
    %p57 = scmp.ne.s32.totalorder %s45, %s46
    %p58 = scmp.eq.s32.totalorder %s15, 1
    %p59 = por %p57, %p58
    %p61 = scmp.ne.s32.totalorder %s46, %s60
    %p62 = scmp.eq.s32.totalorder %s15, 0
    %p63 = por %p61, %p62
    %s65 = sadd.s32 %s64, 1
    %p68 = scmp.eq.s32.totalorder %s9, 1
    %p69 = scmp.ne.s32.totalorder %s64, %s66
    %p70 = scmp.eq.s32.totalorder %s9, 0
    %p71 = por %p69, %p70
    %p72 = scmp.ne.s32.totalorder %s64, %s66
    %p73 = scmp.eq.s32.totalorder %s14, 1
    %p74 = por %p72, %p73
    %p75 = scmp.ne.s32.totalorder %s66, %s67
    %p76 = scmp.eq.s32.totalorder %s14, 0
    %p77 = por %p75, %p76
    %p78 = scmp.ne.s32.totalorder %s66, %s67
    %p79 = scmp.eq.s32.totalorder %s15, 1
    %p80 = por %p78, %p79
    %p82 = scmp.ne.s32.totalorder %s67, %s81
    %p83 = scmp.eq.s32.totalorder %s15, 0
    %p84 = por %p82, %p83
    %s85 = ssub.s32 %s9, %s16
    %p86 = scmp.eq.s32.totalorder %s85, 0
    %s88 = sadd.s32 %s87, 1
    %s89 = scalar_select %p86, %s87, %s88
    %p92 = pneg %p86
    %p93 = scmp.eq.s32.totalorder %s9, 1
    %p94 = por %p92, %p93
    %p95 = scmp.ne.s32.totalorder %s87, %s90
    %p96 = scmp.eq.s32.totalorder %s9, 0
    %p97 = por %p95, %p96
    %p98 = scmp.ne.s32.totalorder %s87, %s90
    %p99 = scmp.eq.s32.totalorder %s14, 1
    %p100 = por %p98, %p99
    %p101 = scmp.ne.s32.totalorder %s90, %s91
    %p102 = scmp.eq.s32.totalorder %s14, 0
    %p103 = por %p101, %p102
    %p104 = scmp.ne.s32.totalorder %s90, %s91
    %p105 = scmp.eq.s32.totalorder %s15, 1
    %p106 = por %p104, %p105
    %p108 = scmp.ne.s32.totalorder %s91, %s107
    %p109 = scmp.eq.s32.totalorder %s15, 0
    %p110 = por %p108, %p109
    %p111 = scmp.le.s32.totalorder 1, %s9
    %p112 = scmp.lt.s32.totalorder %s9, 3
    %p113 = pnand %p111, %p112
    %p114 = pneg %p113
    // Predicated region
    $region9: #{image_reconstruction_forward.9} parent=5 // pred_check
      _
    $region10: #{image_reconstruction_forward.9} parent=5 // pred_check_branch
      %116 = sbr.rel (%p113) target = $region12
    $region11: #{image_reconstruction_forward.9} parent=5 // pred_region
      %s117 = ssub.s32 %s9, 1
      // Predicated region
      $region13: #{image_reconstruction_forward.9} parent=11 // pred_check
        %p118 = pneg %p56
      $region14: #{image_reconstruction_forward.9} parent=11 // pred_check_branch
        %120 = sbr.rel (%p118) target = $region16
      $region15: #{image_reconstruction_forward.9} parent=11 // pred_region
        _
      $region16: #{image_reconstruction_forward.9} parent=11 // pred_fallthru
        _
      // Predicated region
      $region17: #{image_reconstruction_forward.9} parent=11 // pred_check
        %p121 = pneg %p77
      $region18: #{image_reconstruction_forward.9} parent=11 // pred_check_branch
        %123 = sbr.rel (%p121) target = $region20
      $region19: #{image_reconstruction_forward.9} parent=11 // pred_region
        _
      $region20: #{image_reconstruction_forward.9} parent=11 // pred_fallthru
        _
    $region12: #{image_reconstruction_forward.9} parent=5 // pred_fallthru
      _
    %p124 = scmp.lt.s32.totalorder %s9, 2
    // Predicated region
    $region21: #{image_reconstruction_forward.9} parent=5 // pred_check
      %p125 = pneg %p124
    $region22: #{image_reconstruction_forward.9} parent=5 // pred_check_branch
      %127 = sbr.rel (%p125) target = $region24
    $region23: #{image_reconstruction_forward.9} parent=5 // pred_region
      // Predicated region
      $region25: #{image_reconstruction_forward.9} parent=23 // pred_check
        %p128 = pneg %p29
      $region26: #{image_reconstruction_forward.9} parent=23 // pred_check_branch
        %130 = sbr.rel (%p128) target = $region28
      $region27: #{image_reconstruction_forward.9} parent=23 // pred_region
        %s131 = smul.u32 8, %s9
        %p132 = scmp.lt.s32.totalorder %s131, 15
        %s133 = scalar_select %p132, %s131, 15
        %s134 = smul.addr %s133, 2
        %s135 = smul.addr %s134, 4
        %s136 = scalar_lea.vmem %s0, %s135
        %s137 = smul.u32 8, %s9
      $region28: #{image_reconstruction_forward.9} parent=23 // pred_fallthru
        _
    $region24: #{image_reconstruction_forward.9} parent=5 // pred_fallthru
      _
    %p138 = scmp.le.s32.totalorder 1, %s9
    %p139 = scmp.lt.s32.totalorder %s9, 3
    %p140 = pnand %p138, %p139
    %p141 = pneg %p140
    // Predicated region
    $region29: #{image_reconstruction_forward.9} parent=5 // pred_check
      _
    $region30: #{image_reconstruction_forward.9} parent=5 // pred_check_branch
      %143 = sbr.rel (%p140) target = $region32
    $region31: #{image_reconstruction_forward.9} parent=5 // pred_region
      %s144 = ssub.s32 %s9, 1
      %s145 = smul.u32 8, %s14
      %p146 = scmp.lt.s32.totalorder %s145, 15
      %s147 = scalar_select %p146, %s145, 15
      %s148 = smul.addr %s147, 2
      %s149 = smul.addr %s148, 4
      %s150 = scalar_lea.vmem %s0, %s149
      %p151 = pneg %p35
      %p152 = pneg %p32
      %p153 = pneg %p56
      %p154 = pneg %p53
      %p155 = pneg %p77
      %p156 = pneg %p74
      %p157 = pneg %p103
      %p158 = pneg %p100
      %s159 = smul.u32 8, %s14
      %p160 = scmp.lt.s32.totalorder %s159, 15
      %s161 = scalar_select %p160, %s159, 15
      %s162 = smul.addr %s161, 4
      %s163 = scalar_lea.vmem %s3, %s162
      %s164 = smul.u32 8, %s14
      %p165 = scmp.lt.s32.totalorder %s164, 15
      %s166 = scalar_select %p165, %s164, 15
      %s167 = smul.addr %s166, 2
      %s168 = smul.addr %s167, 4
      %s169 = scalar_lea.vmem %s0, %s168
      %s170 = smul.u32 8, %s14
      %s171 = smul.u32 8, %s14
      %p172 = scmp.lt.s32.totalorder %s171, 15
      %s173 = scalar_select %p172, %s171, 15
      %s174 = smul.addr %s173, 4
      %s175 = scalar_lea.vmem %s3, %s174
      %s176 = smul.u32 8, %s14
      %v178 = vld [vmem:[%s169] sm:$0xff]
      %v179 = vld [vmem:[%s169 + $0x8] sm:$0xff]
      %v180 = vld [vmem:[%s169 + $0x10] sm:$0xff]
      %v181 = vld [vmem:[%s169 + $0x18] sm:$0xff]
      %v182 = vld [vmem:[%s169 + $0x20] sm:$0xff]
      %v183 = vld [vmem:[%s169 + $0x28] sm:$0xff]
      %v184 = vld [vmem:[%s169 + $0x30] sm:$0xff]
      %v185 = vld [vmem:[%s169 + $0x38] sm:$0xff]
      %v186 = vld [vmem:[%s1] sm:$0xf]
      %v187 = vld [vmem:[%s1 + $0x4] sm:$0xf]
      %v188 = vld [vmem:[%s1 + $0x8] sm:$0xf]
      %v189 = vld [vmem:[%s1 + $0xc] sm:$0xf]
      %v190 = vld [vmem:[%s1 + $0x10] sm:$0xf]
      %v191 = vld [vmem:[%s1 + $0x14] sm:$0xf]
      %v192 = vld [vmem:[%s1 + $0x18] sm:$0xf]
      %v193 = vld [vmem:[%s1 + $0x1c] sm:$0xf]
      %v194 = vld [vmem:[%s1 + $0x20] sm:$0xf]
      %v195 = vld [vmem:[%s1 + $0x24] sm:$0xf]
      %v196 = vld [vmem:[%s1 + $0x28] sm:$0xf]
      %v197 = vld [vmem:[%s1 + $0x2c] sm:$0xf]
      %v198 = vld [vmem:[%s1 + $0x30] sm:$0xf]
      %v199 = vld [vmem:[%s1 + $0x34] sm:$0xf]
      %v200 = vld [vmem:[%s1 + $0x38] sm:$0xf]
      %v201 = vld [vmem:[%s1 + $0x3c] sm:$0xf]
      %v202 = vld [vmem:[%s1 + $0x40] sm:$0xf]
      %v203 = vld [vmem:[%s1 + $0x44] sm:$0xf]
      %v204 = vld [vmem:[%s2] sm:$0x1]
      %v206 = vlaneseq
      %v207 = vshrl.u32 %v206, 7
      %v208 = vsub.s32 0, %v207
      %v209 = vrot.slane %v204, %v208
      %v219 = vunpack.c.l.b16 %v178
      %v220 = vunpack.c.h.b16 %v178
      %v221 = vunpack.c.l.b16 %v179
      %v222 = vunpack.c.h.b16 %v179
      %v223 = vunpack.c.l.b16 %v180
      %v224 = vunpack.c.h.b16 %v180
      %v225 = vunpack.c.l.b16 %v181
      %v226 = vunpack.c.h.b16 %v181
      %v227 = vunpack.c.l.b16 %v182
      %v228 = vunpack.c.h.b16 %v182
      %v229 = vunpack.c.l.b16 %v183
      %v230 = vunpack.c.h.b16 %v183
      %v231 = vunpack.c.l.b16 %v184
      %v232 = vunpack.c.h.b16 %v184
      %v233 = vunpack.c.l.b16 %v185
      %v234 = vunpack.c.h.b16 %v185
      %v235 = vpack.c.b16 %v221, %v219
      %v236 = vpack.c.b16 %v222, %v220
      %v237 = vpack.c.b16 %v225, %v223
      %v238 = vpack.c.b16 %v226, %v224
      %v239 = vpack.c.b16 %v229, %v227
      %v240 = vpack.c.b16 %v230, %v228
      %v241 = vpack.c.b16 %v233, %v231
      %v242 = vpack.c.b16 %v234, %v232
      %v265 = vunpack.c.l.b16 %v186
      %v266 = vunpack.c.l.b16 %v187
      %v267 = vunpack.c.l.b16 %v188
      %v268 = vunpack.c.l.b16 %v189
      %v269 = vunpack.c.l.b16 %v190
      %v270 = vunpack.c.l.b16 %v191
      %v271 = vunpack.c.l.b16 %v192
      %v272 = vunpack.c.l.b16 %v193
      %v273 = vunpack.c.l.b16 %v194
      %v274 = vunpack.c.l.b16 %v195
      %v275 = vunpack.c.l.b16 %v196
      %v276 = vunpack.c.l.b16 %v197
      %v277 = vunpack.c.l.b16 %v198
      %v278 = vunpack.c.l.b16 %v199
      %v279 = vunpack.c.l.b16 %v200
      %v280 = vunpack.c.l.b16 %v201
      %v281 = vunpack.c.l.b16 %v202
      %v282 = vunpack.c.l.b16 %v203
      %v283 = vpack.c.b16 %v266, %v265
      %v284 = vpack.c.b16 %v268, %v267
      %v285 = vpack.c.b16 %v270, %v269
      %v286 = vpack.c.b16 %v272, %v271
      %v287 = vpack.c.b16 %v274, %v273
      %v288 = vpack.c.b16 %v276, %v275
      %v289 = vpack.c.b16 %v278, %v277
      %v290 = vpack.c.b16 %v280, %v279
      %v291 = vpack.c.b16 %v282, %v281
      %vm301 = vcmask 130048
      %v303 = vsel %vm301, %v236, 0
      %v306 = vsel %vm301, %v238, 0
      %v309 = vsel %vm301, %v240, 0
      %v312 = vsel %vm301, %v242, 0
      %314 = vmatprep.subr.bf16.mxu0 0
      %315 = vmatpush1.bf16.msra.mxu0 %v290
      %316 = vmatprep.subr.bf16.mxu0 0
      %317 = vmatpush1.bf16.msra.mxu0 %v289
      %318 = vmatprep.subr.bf16.mxu0 0
      %319 = vmatpush1.bf16.msra.mxu0 %v288
      %320 = vmatprep.subr.bf16.mxu0 0
      %321 = vmatpush1.bf16.msra.mxu0 %v287
      %322 = vmatprep.subr.bf16.mxu0 0
      %323 = vmatpush1.bf16.msra.mxu0 %v286
      %324 = vmatprep.subr.bf16.mxu0 0
      %325 = vmatpush1.bf16.msra.mxu0 %v285
      %326 = vmatprep.subr.bf16.mxu0 0
      %327 = vmatpush1.bf16.msra.mxu0 %v284
      %328 = vmatprep.subr.bf16.mxu0 0
      %329 = vmatpush1.bf16.msra.mxu0 %v283
      %330 = vmatprep.subr.bf16.mxu0 0
      %331 = vmatpush2.bf16.msra.mxu0 0
      %332 = vmatprep.subr.bf16.mxu0 0
      %333 = vmatpush2.bf16.msra.mxu0 0
      %334 = vmatprep.subr.bf16.mxu0 0
      %335 = vmatpush2.bf16.msra.mxu0 0
      %336 = vmatprep.subr.bf16.mxu0 0
      %337 = vmatpush2.bf16.msra.mxu0 0
      %338 = vmatprep.subr.bf16.mxu0 0
      %339 = vmatpush2.bf16.msra.mxu0 0
      %340 = vmatprep.subr.bf16.mxu0 0
      %341 = vmatpush2.bf16.msra.mxu0 0
      %342 = vmatprep.subr.bf16.mxu0 0
      %343 = vmatpush2.bf16.msra.mxu0 0
      %344 = vmatprep.subr.bf16.mxu0 0
      %345 = vmatpush2.bf16.msra.mxu0 %v291
      %346 = vmatprep.mubr.bf16.mxu0 %v303
      %347 = vmatmul.mubr.bf16.gmra.mxu0 %v235
      %v348 = vpop.f32.mrf.mxu0
      %v349 = vadd.f32 %v209, %v348
      %v350 = vpop.f32.mrf.mxu0
      %v351 = vpop.f32.mrf.mxu0
      %v352 = vadd.f32 %v209, %v351
      %v353 = vpop.f32.mrf.mxu0
      %354 = vmatprep.mubr.bf16.mxu0 %v306
      %355 = vmatmul.mubr.bf16.gmra.mxu0 %v237
      %v356 = vpop.f32.mrf.mxu0
      %v357 = vadd.f32 %v209, %v356
      %v358 = vpop.f32.mrf.mxu0
      %v359 = vpop.f32.mrf.mxu0
      %v360 = vadd.f32 %v209, %v359
      %v361 = vpop.f32.mrf.mxu0
      %362 = vmatprep.mubr.bf16.mxu0 %v309
      %363 = vmatmul.mubr.bf16.gmra.mxu0 %v239
      %v364 = vpop.f32.mrf.mxu0
      %v365 = vadd.f32 %v209, %v364
      %v366 = vpop.f32.mrf.mxu0
      %v367 = vpop.f32.mrf.mxu0
      %v368 = vadd.f32 %v209, %v367
      %v369 = vpop.f32.mrf.mxu0
      %370 = vmatprep.mubr.bf16.mxu0 %v312
      %371 = vmatmul.mubr.bf16.gmra.mxu0 %v241
      %v372 = vpop.f32.mrf.mxu0
      %v373 = vadd.f32 %v209, %v372
      %v374 = vpop.f32.mrf.mxu0
      %v375 = vpop.f32.mrf.mxu0
      %v376 = vadd.f32 %v209, %v375
      %v377 = vpop.f32.mrf.mxu0
      %378 = vdwg.mxu0
      %vm379 = vcmp.ge.f32.partialorder %v349, 0.0
      %vm380 = vcmp.ge.f32.partialorder %v352, 0.0
      %vm381 = vcmp.ge.f32.partialorder %v357, 0.0
      %vm382 = vcmp.ge.f32.partialorder %v360, 0.0
      %vm383 = vcmp.ge.f32.partialorder %v365, 0.0
      %vm384 = vcmp.ge.f32.partialorder %v368, 0.0
      %vm385 = vcmp.ge.f32.partialorder %v373, 0.0
      %vm386 = vcmp.ge.f32.partialorder %v376, 0.0
      %v387 = vmul.f32 %v349, 0.01
      %v388 = vmul.f32 %v352, 0.01
      %v389 = vmul.f32 %v357, 0.01
      %v390 = vmul.f32 %v360, 0.01
      %v391 = vmul.f32 %v365, 0.01
      %v392 = vmul.f32 %v368, 0.01
      %v393 = vmul.f32 %v373, 0.01
      %v394 = vmul.f32 %v376, 0.01
      %v395 = vsel %vm379, %v349, %v387
      %v396 = vsel %vm380, %v352, %v388
      %v397 = vsel %vm381, %v357, %v389
      %v398 = vsel %vm382, %v360, %v390
      %v399 = vsel %vm383, %v365, %v391
      %v400 = vsel %vm384, %v368, %v392
      %v401 = vsel %vm385, %v373, %v393
      %v402 = vsel %vm386, %v376, %v394
      %v403 = vpack.c.bf16 %v396, %v395
      %v404 = vpack.c.bf16 %v398, %v397
      %v405 = vpack.c.bf16 %v400, %v399
      %v406 = vpack.c.bf16 %v402, %v401
      %v411 = vunpack.c.l.b16 %v403
      %v412 = vunpack.c.h.b16 %v403
      %v413 = vunpack.c.l.b16 %v404
      %v414 = vunpack.c.h.b16 %v404
      %v415 = vunpack.c.l.b16 %v405
      %v416 = vunpack.c.h.b16 %v405
      %v417 = vunpack.c.l.b16 %v406
      %v418 = vunpack.c.h.b16 %v406
      %v419 = vpack.c.b16 %v411, %v411
      %v420 = vpack.c.b16 %v412, %v412
      %v421 = vpack.c.b16 %v413, %v413
      %v422 = vpack.c.b16 %v414, %v414
      %v423 = vpack.c.b16 %v415, %v415
      %v424 = vpack.c.b16 %v416, %v416
      %v425 = vpack.c.b16 %v417, %v417
      %v426 = vpack.c.b16 %v418, %v418
      %vm435 = vcmask 257024
      %436 = vst.msk [vmem:[%s175] sm:$0xf] %vm435, %v419
      %437 = vst.msk [vmem:[%s175 + $0x4] sm:$0xf] %vm435, %v420
      %438 = vst.msk [vmem:[%s175 + $0x8] sm:$0xf] %vm435, %v421
      %439 = vst.msk [vmem:[%s175 + $0xc] sm:$0xf] %vm435, %v422
      %440 = vst.msk [vmem:[%s175 + $0x10] sm:$0xf] %vm435, %v423
      %441 = vst.msk [vmem:[%s175 + $0x14] sm:$0xf] %vm435, %v424
      %442 = vst.msk [vmem:[%s175 + $0x18] sm:$0xf] %vm435, %v425
      %443 = vst.msk [vmem:[%s175 + $0x1c] sm:$0xf] %vm435, %v426
      %s444 = smul.u32 8, %s14
      %p445 = scmp.lt.s32.totalorder %s444, 15
      %s446 = scalar_select %p445, %s444, 15
      %s447 = smul.addr %s446, 4
      %s448 = scalar_lea.vmem %s3, %s447
      // Predicated region
      $region33: #{image_reconstruction_forward.9} parent=31 // pred_check
        %p449 = pneg %p100
      $region34: #{image_reconstruction_forward.9} parent=31 // pred_check_branch
        %451 = sbr.rel (%p449) target = $region36
      $region35: #{image_reconstruction_forward.9} parent=31 // pred_region
        %s452 = smul.u32 8, %s14
      $region36: #{image_reconstruction_forward.9} parent=31 // pred_fallthru
        _
    $region32: #{image_reconstruction_forward.9} parent=5 // pred_fallthru
      _
    %p453 = scmp.le.s32.totalorder 2, %s9
    // Predicated region
    $region37: #{image_reconstruction_forward.9} parent=5 // pred_check
      %p454 = pneg %p453
    $region38: #{image_reconstruction_forward.9} parent=5 // pred_check_branch
      %456 = sbr.rel (%p454) target = $region40
    $region39: #{image_reconstruction_forward.9} parent=5 // pred_region
      %s457 = ssub.s32 %s9, 2
      // Predicated region
      $region41: #{image_reconstruction_forward.9} parent=39 // pred_check
        %p458 = pneg %p106
      $region42: #{image_reconstruction_forward.9} parent=39 // pred_check_branch
        %460 = sbr.rel (%p458) target = $region44
      $region43: #{image_reconstruction_forward.9} parent=39 // pred_region
        %s461 = smul.u32 8, %s15
        %p462 = scmp.lt.s32.totalorder %s461, 15
        %s463 = scalar_select %p462, %s461, 15
        %s464 = smul.addr %s463, 4
        %s465 = scalar_lea.vmem %s3, %s464
      $region44: #{image_reconstruction_forward.9} parent=39 // pred_fallthru
        _
    $region40: #{image_reconstruction_forward.9} parent=5 // pred_fallthru
      _
  $region6: #{image_reconstruction_forward.9} parent=0 // loop_footer
    %s13 = sadd.s32 1, %s9
  $region7: #{image_reconstruction_forward.9} parent=0 // loop_footer_branch
    %8 = sbr.rel target = $region3
  $region8: #{image_reconstruction_forward.9} parent=0 // loop_exit
    _

// kernel: image_reconstruction_forward.10
$region0: #{image_reconstruction_forward.10}
  #allocation0 [shape = 'u32[]', space=smem, size = 0x4, offset = 0x4, fixed_abs, tag = 'smem constant byte address 0x4 - core index']
  #allocation1 [shape = 'u32[144,128]{1,0:T(1,128)}', space=vmem, size = 0x12000, scoped, tag = 'internal scratch']
  %s0 = inlined_call_operand.vmem [shape: bf16[32,288], index: 0, kind: input, shape index: {}]
  %s1 = inlined_call_operand.vmem [shape: bf16[288,64], index: 1, kind: input, shape index: {}]
  %s2 = inlined_call_operand.vmem [shape: f32[1,64], index: 2, kind: input, shape index: {}]
  %s3 = inlined_call_operand.vmem [shape: bf16[32,64], index: 3, kind: output, shape index: {}]
  %s4 = sld [smem:[#allocation0]]
  $region45: #{image_reconstruction_forward.10} parent=0
    _
  %s6 = ssub.s32 1, %s4
  %s7 = scalar_select 0, %s6, %s4
  loop: start=0, step=1, limit=4
  $region2: #{image_reconstruction_forward.10} parent=0 // loop_pre_header
    _
  $region3: #{image_reconstruction_forward.10} parent=0 // loop_header
    %s9 = sphi 0, %s13
    %p10 = scmp.ge.s32.totalorder %s9, 4
    %s19 = sphi 0, %s21
    %s22 = sphi 0, %s19
    %s23 = sphi 0, %s22
    %s39 = sphi 0, %s23
    %s43 = sphi 0, %s43
    %s45 = sphi 0, %s43
    %s46 = sphi 0, %s45
    %s60 = sphi 0, %s46
    %s64 = sphi 0, %s64
    %s66 = sphi 0, %s64
    %s67 = sphi 0, %s66
    %s81 = sphi 0, %s67
    %s87 = sphi 0, %s89
    %s90 = sphi 0, %s87
    %s91 = sphi 0, %s90
    %s107 = sphi 0, %s91
  $region4: #{image_reconstruction_forward.10} parent=0 // loop_header_branch
    %12 = sbr.rel (%p10) target = $region8
  $region5: #{image_reconstruction_forward.10} parent=0 // loop_body
    %s14 = ssub.s32 %s9, 1
    %s15 = ssub.s32 %s9, 2
    %s16 = sadd.s32 %s9, 1
    %s17 = ssub.s32 %s9, %s16
    %p18 = scmp.eq.s32.totalorder %s17, 0
    %s20 = sadd.s32 %s19, 1
    %s21 = scalar_select %p18, %s19, %s20
    %p24 = pneg %p18
    %p25 = scmp.eq.s32.totalorder %s9, 1
    %p26 = por %p24, %p25
    %p27 = scmp.ne.s32.totalorder %s19, %s22
    %p28 = scmp.eq.s32.totalorder %s9, 0
    %p29 = por %p27, %p28
    %p30 = scmp.ne.s32.totalorder %s19, %s22
    %p31 = scmp.eq.s32.totalorder %s14, 1
    %p32 = por %p30, %p31
    %p33 = scmp.ne.s32.totalorder %s22, %s23
    %p34 = scmp.eq.s32.totalorder %s14, 0
    %p35 = por %p33, %p34
    %p36 = scmp.ne.s32.totalorder %s22, %s23
    %p37 = scmp.eq.s32.totalorder %s15, 1
    %p38 = por %p36, %p37
    %p40 = scmp.ne.s32.totalorder %s23, %s39
    %p41 = scmp.eq.s32.totalorder %s15, 0
    %p42 = por %p40, %p41
    %s44 = sadd.s32 %s43, 1
    %p47 = scmp.eq.s32.totalorder %s9, 1
    %p48 = scmp.ne.s32.totalorder %s43, %s45
    %p49 = scmp.eq.s32.totalorder %s9, 0
    %p50 = por %p48, %p49
    %p51 = scmp.ne.s32.totalorder %s43, %s45
    %p52 = scmp.eq.s32.totalorder %s14, 1
    %p53 = por %p51, %p52
    %p54 = scmp.ne.s32.totalorder %s45, %s46
    %p55 = scmp.eq.s32.totalorder %s14, 0
    %p56 = por %p54, %p55
    %p57 = scmp.ne.s32.totalorder %s45, %s46
    %p58 = scmp.eq.s32.totalorder %s15, 1
    %p59 = por %p57, %p58
    %p61 = scmp.ne.s32.totalorder %s46, %s60
    %p62 = scmp.eq.s32.totalorder %s15, 0
    %p63 = por %p61, %p62
    %s65 = sadd.s32 %s64, 1
    %p68 = scmp.eq.s32.totalorder %s9, 1
    %p69 = scmp.ne.s32.totalorder %s64, %s66
    %p70 = scmp.eq.s32.totalorder %s9, 0
    %p71 = por %p69, %p70
    %p72 = scmp.ne.s32.totalorder %s64, %s66
    %p73 = scmp.eq.s32.totalorder %s14, 1
    %p74 = por %p72, %p73
    %p75 = scmp.ne.s32.totalorder %s66, %s67
    %p76 = scmp.eq.s32.totalorder %s14, 0
    %p77 = por %p75, %p76
    %p78 = scmp.ne.s32.totalorder %s66, %s67
    %p79 = scmp.eq.s32.totalorder %s15, 1
    %p80 = por %p78, %p79
    %p82 = scmp.ne.s32.totalorder %s67, %s81
    %p83 = scmp.eq.s32.totalorder %s15, 0
    %p84 = por %p82, %p83
    %s85 = ssub.s32 %s9, %s16
    %p86 = scmp.eq.s32.totalorder %s85, 0
    %s88 = sadd.s32 %s87, 1
    %s89 = scalar_select %p86, %s87, %s88
    %p92 = pneg %p86
    %p93 = scmp.eq.s32.totalorder %s9, 1
    %p94 = por %p92, %p93
    %p95 = scmp.ne.s32.totalorder %s87, %s90
    %p96 = scmp.eq.s32.totalorder %s9, 0
    %p97 = por %p95, %p96
    %p98 = scmp.ne.s32.totalorder %s87, %s90
    %p99 = scmp.eq.s32.totalorder %s14, 1
    %p100 = por %p98, %p99
    %p101 = scmp.ne.s32.totalorder %s90, %s91
    %p102 = scmp.eq.s32.totalorder %s14, 0
    %p103 = por %p101, %p102
    %p104 = scmp.ne.s32.totalorder %s90, %s91
    %p105 = scmp.eq.s32.totalorder %s15, 1
    %p106 = por %p104, %p105
    %p108 = scmp.ne.s32.totalorder %s91, %s107
    %p109 = scmp.eq.s32.totalorder %s15, 0
    %p110 = por %p108, %p109
    %p111 = scmp.le.s32.totalorder 1, %s9
    %p112 = scmp.lt.s32.totalorder %s9, 3
    %p113 = pnand %p111, %p112
    %p114 = pneg %p113
    // Predicated region
    $region9: #{image_reconstruction_forward.10} parent=5 // pred_check
      _
    $region10: #{image_reconstruction_forward.10} parent=5 // pred_check_branch
      %116 = sbr.rel (%p113) target = $region12
    $region11: #{image_reconstruction_forward.10} parent=5 // pred_region
      %s117 = ssub.s32 %s9, 1
      // Predicated region
      $region13: #{image_reconstruction_forward.10} parent=11 // pred_check
        %p118 = pneg %p56
      $region14: #{image_reconstruction_forward.10} parent=11 // pred_check_branch
        %120 = sbr.rel (%p118) target = $region16
      $region15: #{image_reconstruction_forward.10} parent=11 // pred_region
        _
      $region16: #{image_reconstruction_forward.10} parent=11 // pred_fallthru
        _
      // Predicated region
      $region17: #{image_reconstruction_forward.10} parent=11 // pred_check
        %p121 = pneg %p77
      $region18: #{image_reconstruction_forward.10} parent=11 // pred_check_branch
        %123 = sbr.rel (%p121) target = $region20
      $region19: #{image_reconstruction_forward.10} parent=11 // pred_region
        _
      $region20: #{image_reconstruction_forward.10} parent=11 // pred_fallthru
        _
    $region12: #{image_reconstruction_forward.10} parent=5 // pred_fallthru
      _
    %p124 = scmp.lt.s32.totalorder %s9, 2
    // Predicated region
    $region21: #{image_reconstruction_forward.10} parent=5 // pred_check
      %p125 = pneg %p124
    $region22: #{image_reconstruction_forward.10} parent=5 // pred_check_branch
      %127 = sbr.rel (%p125) target = $region24
    $region23: #{image_reconstruction_forward.10} parent=5 // pred_region
      // Predicated region
      $region25: #{image_reconstruction_forward.10} parent=23 // pred_check
        %p128 = pneg %p29
      $region26: #{image_reconstruction_forward.10} parent=23 // pred_check_branch
        %130 = sbr.rel (%p128) target = $region28
      $region27: #{image_reconstruction_forward.10} parent=23 // pred_region
        %s131 = smul.u32 2, %s9
        %p132 = scmp.lt.s32.totalorder %s131, 3
        %s133 = scalar_select %p132, %s131, 3
        %s134 = smul.addr %s133, 3
        %s135 = smul.addr %s134, 4
        %s136 = scalar_lea.vmem %s0, %s135
        %s137 = smul.u32 2, %s9
      $region28: #{image_reconstruction_forward.10} parent=23 // pred_fallthru
        _
    $region24: #{image_reconstruction_forward.10} parent=5 // pred_fallthru
      _
    %p138 = scmp.le.s32.totalorder 1, %s9
    %p139 = scmp.lt.s32.totalorder %s9, 3
    %p140 = pnand %p138, %p139
    %p141 = pneg %p140
    // Predicated region
    $region29: #{image_reconstruction_forward.10} parent=5 // pred_check
      _
    $region30: #{image_reconstruction_forward.10} parent=5 // pred_check_branch
      %143 = sbr.rel (%p140) target = $region32
    $region31: #{image_reconstruction_forward.10} parent=5 // pred_region
      %s144 = ssub.s32 %s9, 1
      %s145 = smul.u32 2, %s14
      %p146 = scmp.lt.s32.totalorder %s145, 3
      %s147 = scalar_select %p146, %s145, 3
      %s148 = smul.addr %s147, 3
      %s149 = smul.addr %s148, 4
      %s150 = scalar_lea.vmem %s0, %s149
      %p151 = pneg %p35
      %p152 = pneg %p32
      %p153 = pneg %p56
      %p154 = pneg %p53
      %p155 = pneg %p77
      %p156 = pneg %p74
      %p157 = pneg %p103
      %p158 = pneg %p100
      %s159 = smul.u32 2, %s14
      %p160 = scmp.lt.s32.totalorder %s159, 3
      %s161 = scalar_select %p160, %s159, 3
      %s162 = smul.addr %s161, 4
      %s163 = scalar_lea.vmem %s3, %s162
      %s164 = smul.u32 2, %s14
      %p165 = scmp.lt.s32.totalorder %s164, 3
      %s166 = scalar_select %p165, %s164, 3
      %s167 = smul.addr %s166, 3
      %s168 = smul.addr %s167, 4
      %s169 = scalar_lea.vmem %s0, %s168
      %s170 = smul.u32 2, %s14
      %s171 = smul.u32 2, %s14
      %p172 = scmp.lt.s32.totalorder %s171, 3
      %s173 = scalar_select %p172, %s171, 3
      %s174 = smul.addr %s173, 4
      %s175 = scalar_lea.vmem %s3, %s174
      %s176 = smul.u32 2, %s14
      %v178 = vld [vmem:[%s169] sm:$0xff]
      %v179 = vld [vmem:[%s169 + $0x8] sm:$0xf]
      %v180 = vld [vmem:[%s169 + $0xc] sm:$0xff]
      %v181 = vld [vmem:[%s169 + $0x14] sm:$0xf]
      %v182 = vld [vmem:[%s1] sm:$0xf]
      %v183 = vld [vmem:[%s1 + $0x4] sm:$0xf]
      %v184 = vld [vmem:[%s1 + $0x8] sm:$0xf]
      %v185 = vld [vmem:[%s1 + $0xc] sm:$0xf]
      %v186 = vld [vmem:[%s1 + $0x10] sm:$0xf]
      %v187 = vld [vmem:[%s1 + $0x14] sm:$0xf]
      %v188 = vld [vmem:[%s1 + $0x18] sm:$0xf]
      %v189 = vld [vmem:[%s1 + $0x1c] sm:$0xf]
      %v190 = vld [vmem:[%s1 + $0x20] sm:$0xf]
      %v191 = vld [vmem:[%s1 + $0x24] sm:$0xf]
      %v192 = vld [vmem:[%s1 + $0x28] sm:$0xf]
      %v193 = vld [vmem:[%s1 + $0x2c] sm:$0xf]
      %v194 = vld [vmem:[%s1 + $0x30] sm:$0xf]
      %v195 = vld [vmem:[%s1 + $0x34] sm:$0xf]
      %v196 = vld [vmem:[%s1 + $0x38] sm:$0xf]
      %v197 = vld [vmem:[%s1 + $0x3c] sm:$0xf]
      %v198 = vld [vmem:[%s1 + $0x40] sm:$0xf]
      %v199 = vld [vmem:[%s1 + $0x44] sm:$0xf]
      %v200 = vld [vmem:[%s1 + $0x48] sm:$0xf]
      %v201 = vld [vmem:[%s1 + $0x4c] sm:$0xf]
      %v202 = vld [vmem:[%s1 + $0x50] sm:$0xf]
      %v203 = vld [vmem:[%s1 + $0x54] sm:$0xf]
      %v204 = vld [vmem:[%s1 + $0x58] sm:$0xf]
      %v205 = vld [vmem:[%s1 + $0x5c] sm:$0xf]
      %v206 = vld [vmem:[%s1 + $0x60] sm:$0xf]
      %v207 = vld [vmem:[%s1 + $0x64] sm:$0xf]
      %v208 = vld [vmem:[%s1 + $0x68] sm:$0xf]
      %v209 = vld [vmem:[%s1 + $0x6c] sm:$0xf]
      %v210 = vld [vmem:[%s1 + $0x70] sm:$0xf]
      %v211 = vld [vmem:[%s1 + $0x74] sm:$0xf]
      %v212 = vld [vmem:[%s1 + $0x78] sm:$0xf]
      %v213 = vld [vmem:[%s1 + $0x7c] sm:$0xf]
      %v214 = vld [vmem:[%s1 + $0x80] sm:$0xf]
      %v215 = vld [vmem:[%s1 + $0x84] sm:$0xf]
      %v216 = vld [vmem:[%s1 + $0x88] sm:$0xf]
      %v217 = vld [vmem:[%s1 + $0x8c] sm:$0xf]
      %v218 = vld [vmem:[%s2] sm:$0x1]
      %v220 = vlaneseq
      %v221 = vshrl.u32 %v220, 7
      %v222 = vsub.s32 0, %v221
      %v223 = vrot.slane %v218, %v222
      %v229 = vunpack.c.l.b16 %v178
      %v230 = vunpack.c.h.b16 %v178
      %v231 = vunpack.c.l.b16 %v179
      %v232 = vunpack.c.l.b16 %v180
      %v233 = vunpack.c.h.b16 %v180
      %v234 = vunpack.c.l.b16 %v181
      %v235 = vpack.c.b16 %v232, %v229
      %v236 = vpack.c.b16 %v233, %v230
      %v237 = vpack.c.b16 %v234, %v231
      %v276 = vunpack.c.l.b16 %v182
      %v277 = vunpack.c.l.b16 %v183
      %v278 = vunpack.c.l.b16 %v184
      %v279 = vunpack.c.l.b16 %v185
      %v280 = vunpack.c.l.b16 %v186
      %v281 = vunpack.c.l.b16 %v187
      %v282 = vunpack.c.l.b16 %v188
      %v283 = vunpack.c.l.b16 %v189
      %v284 = vunpack.c.l.b16 %v190
      %v285 = vunpack.c.l.b16 %v191
      %v286 = vunpack.c.l.b16 %v192
      %v287 = vunpack.c.l.b16 %v193
      %v288 = vunpack.c.l.b16 %v194
      %v289 = vunpack.c.l.b16 %v195
      %v290 = vunpack.c.l.b16 %v196
      %v291 = vunpack.c.l.b16 %v197
      %v292 = vunpack.c.l.b16 %v198
      %v293 = vunpack.c.l.b16 %v199
      %v294 = vunpack.c.l.b16 %v200
      %v295 = vunpack.c.l.b16 %v201
      %v296 = vunpack.c.l.b16 %v202
      %v297 = vunpack.c.l.b16 %v203
      %v298 = vunpack.c.l.b16 %v204
      %v299 = vunpack.c.l.b16 %v205
      %v300 = vunpack.c.l.b16 %v206
      %v301 = vunpack.c.l.b16 %v207
      %v302 = vunpack.c.l.b16 %v208
      %v303 = vunpack.c.l.b16 %v209
      %v304 = vunpack.c.l.b16 %v210
      %v305 = vunpack.c.l.b16 %v211
      %v306 = vunpack.c.l.b16 %v212
      %v307 = vunpack.c.l.b16 %v213
      %v308 = vunpack.c.l.b16 %v214
      %v309 = vunpack.c.l.b16 %v215
      %v310 = vunpack.c.l.b16 %v216
      %v311 = vunpack.c.l.b16 %v217
      %v312 = vpack.c.b16 %v277, %v276
      %v313 = vpack.c.b16 %v279, %v278
      %v314 = vpack.c.b16 %v281, %v280
      %v315 = vpack.c.b16 %v283, %v282
      %v316 = vpack.c.b16 %v285, %v284
      %v317 = vpack.c.b16 %v287, %v286
      %v318 = vpack.c.b16 %v289, %v288
      %v319 = vpack.c.b16 %v291, %v290
      %v320 = vpack.c.b16 %v293, %v292
      %v321 = vpack.c.b16 %v295, %v294
      %v322 = vpack.c.b16 %v297, %v296
      %v323 = vpack.c.b16 %v299, %v298
      %v324 = vpack.c.b16 %v301, %v300
      %v325 = vpack.c.b16 %v303, %v302
      %v326 = vpack.c.b16 %v305, %v304
      %v327 = vpack.c.b16 %v307, %v306
      %v328 = vpack.c.b16 %v309, %v308
      %v329 = vpack.c.b16 %v311, %v310
      %vm348 = vcmask 261120
      %v350 = vsel %vm348, %v237, 0
      %352 = vmatprep.subr.bf16.mxu0 0
      %353 = vmatpush1.bf16.msra.mxu0 %v319
      %354 = vmatprep.subr.bf16.mxu0 0
      %355 = vmatpush1.bf16.msra.mxu0 %v318
      %356 = vmatprep.subr.bf16.mxu0 0
      %357 = vmatpush1.bf16.msra.mxu0 %v317
      %358 = vmatprep.subr.bf16.mxu0 0
      %359 = vmatpush1.bf16.msra.mxu0 %v316
      %360 = vmatprep.subr.bf16.mxu0 0
      %361 = vmatpush1.bf16.msra.mxu0 %v315
      %362 = vmatprep.subr.bf16.mxu0 0
      %363 = vmatpush1.bf16.msra.mxu0 %v314
      %364 = vmatprep.subr.bf16.mxu0 0
      %365 = vmatpush1.bf16.msra.mxu0 %v313
      %366 = vmatprep.subr.bf16.mxu0 0
      %367 = vmatpush1.bf16.msra.mxu0 %v312
      %368 = vmatprep.subr.bf16.mxu0 0
      %369 = vmatpush2.bf16.msra.mxu0 %v327
      %370 = vmatprep.subr.bf16.mxu0 0
      %371 = vmatpush2.bf16.msra.mxu0 %v326
      %372 = vmatprep.subr.bf16.mxu0 0
      %373 = vmatpush2.bf16.msra.mxu0 %v325
      %374 = vmatprep.subr.bf16.mxu0 0
      %375 = vmatpush2.bf16.msra.mxu0 %v324
      %376 = vmatprep.subr.bf16.mxu0 0
      %377 = vmatpush2.bf16.msra.mxu0 %v323
      %378 = vmatprep.subr.bf16.mxu0 0
      %379 = vmatpush2.bf16.msra.mxu0 %v322
      %380 = vmatprep.subr.bf16.mxu0 0
      %381 = vmatpush2.bf16.msra.mxu0 %v321
      %382 = vmatprep.subr.bf16.mxu0 0
      %383 = vmatpush2.bf16.msra.mxu0 %v320
      %384 = vmatprep.mubr.bf16.mxu0 %v236
      %385 = vmatmul.mubr.bf16.gmra.mxu0 %v235
      %v386 = vpop.f32.mrf.mxu0
      %v387 = vadd.f32 %v223, %v386
      %v388 = vpop.f32.mrf.mxu0
      %v389 = vpop.f32.mrf.mxu0
      %v390 = vadd.f32 %v223, %v389
      %v391 = vpop.f32.mrf.mxu0
      %392 = vdwg.mxu0
      %393 = vmatprep.subr.bf16.mxu0 0
      %394 = vmatpush1.bf16.msra.mxu0 0
      %395 = vmatprep.subr.bf16.mxu0 0
      %396 = vmatpush1.bf16.msra.mxu0 0
      %397 = vmatprep.subr.bf16.mxu0 0
      %398 = vmatpush1.bf16.msra.mxu0 0
      %399 = vmatprep.subr.bf16.mxu0 0
      %400 = vmatpush1.bf16.msra.mxu0 0
      %401 = vmatprep.subr.bf16.mxu0 0
      %402 = vmatpush1.bf16.msra.mxu0 0
      %403 = vmatprep.subr.bf16.mxu0 0
      %404 = vmatpush1.bf16.msra.mxu0 0
      %405 = vmatprep.subr.bf16.mxu0 0
      %406 = vmatpush1.bf16.msra.mxu0 %v329
      %407 = vmatprep.subr.bf16.mxu0 0
      %408 = vmatpush1.bf16.msra.mxu0 %v328
      %409 = vmatprep.subr.bf16.mxu0 0
      %410 = vmatpush2.bf16.msra.mxu0 0
      %411 = vmatprep.subr.bf16.mxu0 0
      %412 = vmatpush2.bf16.msra.mxu0 0
      %413 = vmatprep.subr.bf16.mxu0 0
      %414 = vmatpush2.bf16.msra.mxu0 0
      %415 = vmatprep.subr.bf16.mxu0 0
      %416 = vmatpush2.bf16.msra.mxu0 0
      %417 = vmatprep.subr.bf16.mxu0 0
      %418 = vmatpush2.bf16.msra.mxu0 0
      %419 = vmatprep.subr.bf16.mxu0 0
      %420 = vmatpush2.bf16.msra.mxu0 0
      %421 = vmatprep.subr.bf16.mxu0 0
      %422 = vmatpush2.bf16.msra.mxu0 0
      %423 = vmatprep.subr.bf16.mxu0 0
      %424 = vmatpush2.bf16.msra.mxu0 0
      %425 = vmatprep.mubr.bf16.mxu0 0
      %426 = vmatmul.mubr.bf16.gmra.mxu0 %v350
      %v427 = vpop.f32.mrf.mxu0
      %v428 = vadd.f32 %v387, %v427
      %v429 = vpop.f32.mrf.mxu0
      %v430 = vpop.f32.mrf.mxu0
      %v431 = vadd.f32 %v390, %v430
      %v432 = vpop.f32.mrf.mxu0
      %433 = vdwg.mxu0
      %vm434 = vcmp.ge.f32.partialorder %v428, 0.0
      %vm435 = vcmp.ge.f32.partialorder %v431, 0.0
      %v436 = vmul.f32 %v428, 0.01
      %v437 = vmul.f32 %v431, 0.01
      %v438 = vsel %vm434, %v428, %v436
      %v439 = vsel %vm435, %v431, %v437
      %v440 = vpack.c.bf16 %v439, %v438
      %v442 = vunpack.c.l.b16 %v440
      %v443 = vunpack.c.h.b16 %v440
      %v444 = vpack.c.b16 %v442, %v442
      %v445 = vpack.c.b16 %v443, %v443
      %vm448 = vcmask 519168
      %449 = vst.msk [vmem:[%s175] sm:$0xf] %vm448, %v444
      %450 = vst.msk [vmem:[%s175 + $0x4] sm:$0xf] %vm448, %v445
      %s451 = smul.u32 2, %s14
      %p452 = scmp.lt.s32.totalorder %s451, 3
      %s453 = scalar_select %p452, %s451, 3
      %s454 = smul.addr %s453, 4
      %s455 = scalar_lea.vmem %s3, %s454
      // Predicated region
      $region33: #{image_reconstruction_forward.10} parent=31 // pred_check
        %p456 = pneg %p100
      $region34: #{image_reconstruction_forward.10} parent=31 // pred_check_branch
        %458 = sbr.rel (%p456) target = $region36
      $region35: #{image_reconstruction_forward.10} parent=31 // pred_region
        %s459 = smul.u32 2, %s14
      $region36: #{image_reconstruction_forward.10} parent=31 // pred_fallthru
        _
    $region32: #{image_reconstruction_forward.10} parent=5 // pred_fallthru
      _
    %p460 = scmp.le.s32.totalorder 2, %s9
    // Predicated region
    $region37: #{image_reconstruction_forward.10} parent=5 // pred_check
      %p461 = pneg %p460
    $region38: #{image_reconstruction_forward.10} parent=5 // pred_check_branch
      %463 = sbr.rel (%p461) target = $region40
    $region39: #{image_reconstruction_forward.10} parent=5 // pred_region
      %s464 = ssub.s32 %s9, 2
      // Predicated region
      $region41: #{image_reconstruction_forward.10} parent=39 // pred_check
        %p465 = pneg %p106
      $region42: #{image_reconstruction_forward.10} parent=39 // pred_check_branch
        %467 = sbr.rel (%p465) target = $region44
      $region43: #{image_reconstruction_forward.10} parent=39 // pred_region
        %s468 = smul.u32 2, %s15
        %p469 = scmp.lt.s32.totalorder %s468, 3
        %s470 = scalar_select %p469, %s468, 3
        %s471 = smul.addr %s470, 4
        %s472 = scalar_lea.vmem %s3, %s471
      $region44: #{image_reconstruction_forward.10} parent=39 // pred_fallthru
        _
    $region40: #{image_reconstruction_forward.10} parent=5 // pred_fallthru
      _
  $region6: #{image_reconstruction_forward.10} parent=0 // loop_footer
    %s13 = sadd.s32 1, %s9
  $region7: #{image_reconstruction_forward.10} parent=0 // loop_footer_branch
    %8 = sbr.rel target = $region3
  $region8: #{image_reconstruction_forward.10} parent=0 // loop_exit
    _

// kernel: image_reconstruction_forward.11
$region0: #{image_reconstruction_forward.11}
  #allocation0 [shape = 'u32[]', space=smem, size = 0x4, offset = 0x4, fixed_abs, tag = 'smem constant byte address 0x4 - core index']
  #allocation1 [shape = 'u32[144,128]{1,0:T(1,128)}', space=vmem, size = 0x12000, scoped, tag = 'internal scratch']
  %s0 = inlined_call_operand.vmem [shape: bf16[8,576], index: 0, kind: input, shape index: {}]
  %s1 = inlined_call_operand.vmem [shape: bf16[576,128], index: 1, kind: input, shape index: {}]
  %s2 = inlined_call_operand.vmem [shape: f32[1,128], index: 2, kind: input, shape index: {}]
  %s3 = inlined_call_operand.vmem [shape: bf16[8,128], index: 3, kind: output, shape index: {}]
  %s4 = sld [smem:[#allocation0]]
  $region22: #{image_reconstruction_forward.11} parent=0
    _
  %s6 = ssub.s32 1, %s4
  %s7 = scalar_select 0, %s6, %s4
  // Predicated region
  $region2: #{image_reconstruction_forward.11} parent=0 // pred_check
    _
  $region3: #{image_reconstruction_forward.11} parent=0 // pred_check_branch
    %9 = sbr.rel (0) target = $region5
  $region4: #{image_reconstruction_forward.11} parent=0 // pred_region
    _
  $region5: #{image_reconstruction_forward.11} parent=0 // pred_fallthru
    _
  // Predicated region
  $region6: #{image_reconstruction_forward.11} parent=0 // pred_check
    _
  $region7: #{image_reconstruction_forward.11} parent=0 // pred_check_branch
    %11 = sbr.rel (0) target = $region9
  $region8: #{image_reconstruction_forward.11} parent=0 // pred_region
    _
  $region9: #{image_reconstruction_forward.11} parent=0 // pred_fallthru
    _
  // Predicated region
  $region10: #{image_reconstruction_forward.11} parent=0 // pred_check
    _
  $region11: #{image_reconstruction_forward.11} parent=0 // pred_check_branch
    %13 = sbr.rel (0) target = $region13
  $region12: #{image_reconstruction_forward.11} parent=0 // pred_region
    _
  $region13: #{image_reconstruction_forward.11} parent=0 // pred_fallthru
    _
  %v15 = vld [vmem:[%s0] sm:$0xff]
  %v16 = vld [vmem:[%s0 + $0x8] sm:$0xff]
  %v17 = vld [vmem:[%s0 + $0x10] sm:$0xf]
  %v18 = vld [vmem:[%s1] sm:$0xf]
  %v19 = vld [vmem:[%s1 + $0x4] sm:$0xf]
  %v20 = vld [vmem:[%s1 + $0x8] sm:$0xf]
  %v21 = vld [vmem:[%s1 + $0xc] sm:$0xf]
  %v22 = vld [vmem:[%s1 + $0x10] sm:$0xf]
  %v23 = vld [vmem:[%s1 + $0x14] sm:$0xf]
  %v24 = vld [vmem:[%s1 + $0x18] sm:$0xf]
  %v25 = vld [vmem:[%s1 + $0x1c] sm:$0xf]
  %v26 = vld [vmem:[%s1 + $0x20] sm:$0xf]
  %v27 = vld [vmem:[%s1 + $0x24] sm:$0xf]
  %v28 = vld [vmem:[%s1 + $0x28] sm:$0xf]
  %v29 = vld [vmem:[%s1 + $0x2c] sm:$0xf]
  %v30 = vld [vmem:[%s1 + $0x30] sm:$0xf]
  %v31 = vld [vmem:[%s1 + $0x34] sm:$0xf]
  %v32 = vld [vmem:[%s1 + $0x38] sm:$0xf]
  %v33 = vld [vmem:[%s1 + $0x3c] sm:$0xf]
  %v34 = vld [vmem:[%s1 + $0x40] sm:$0xf]
  %v35 = vld [vmem:[%s1 + $0x44] sm:$0xf]
  %v36 = vld [vmem:[%s1 + $0x48] sm:$0xf]
  %v37 = vld [vmem:[%s1 + $0x4c] sm:$0xf]
  %v38 = vld [vmem:[%s1 + $0x50] sm:$0xf]
  %v39 = vld [vmem:[%s1 + $0x54] sm:$0xf]
  %v40 = vld [vmem:[%s1 + $0x58] sm:$0xf]
  %v41 = vld [vmem:[%s1 + $0x5c] sm:$0xf]
  %v42 = vld [vmem:[%s1 + $0x60] sm:$0xf]
  %v43 = vld [vmem:[%s1 + $0x64] sm:$0xf]
  %v44 = vld [vmem:[%s1 + $0x68] sm:$0xf]
  %v45 = vld [vmem:[%s1 + $0x6c] sm:$0xf]
  %v46 = vld [vmem:[%s1 + $0x70] sm:$0xf]
  %v47 = vld [vmem:[%s1 + $0x74] sm:$0xf]
  %v48 = vld [vmem:[%s1 + $0x78] sm:$0xf]
  %v49 = vld [vmem:[%s1 + $0x7c] sm:$0xf]
  %v50 = vld [vmem:[%s1 + $0x80] sm:$0xf]
  %v51 = vld [vmem:[%s1 + $0x84] sm:$0xf]
  %v52 = vld [vmem:[%s1 + $0x88] sm:$0xf]
  %v53 = vld [vmem:[%s1 + $0x8c] sm:$0xf]
  %v54 = vld [vmem:[%s1 + $0x90] sm:$0xf]
  %v55 = vld [vmem:[%s1 + $0x94] sm:$0xf]
  %v56 = vld [vmem:[%s1 + $0x98] sm:$0xf]
  %v57 = vld [vmem:[%s1 + $0x9c] sm:$0xf]
  %v58 = vld [vmem:[%s1 + $0xa0] sm:$0xf]
  %v59 = vld [vmem:[%s1 + $0xa4] sm:$0xf]
  %v60 = vld [vmem:[%s1 + $0xa8] sm:$0xf]
  %v61 = vld [vmem:[%s1 + $0xac] sm:$0xf]
  %v62 = vld [vmem:[%s1 + $0xb0] sm:$0xf]
  %v63 = vld [vmem:[%s1 + $0xb4] sm:$0xf]
  %v64 = vld [vmem:[%s1 + $0xb8] sm:$0xf]
  %v65 = vld [vmem:[%s1 + $0xbc] sm:$0xf]
  %v66 = vld [vmem:[%s1 + $0xc0] sm:$0xf]
  %v67 = vld [vmem:[%s1 + $0xc4] sm:$0xf]
  %v68 = vld [vmem:[%s1 + $0xc8] sm:$0xf]
  %v69 = vld [vmem:[%s1 + $0xcc] sm:$0xf]
  %v70 = vld [vmem:[%s1 + $0xd0] sm:$0xf]
  %v71 = vld [vmem:[%s1 + $0xd4] sm:$0xf]
  %v72 = vld [vmem:[%s1 + $0xd8] sm:$0xf]
  %v73 = vld [vmem:[%s1 + $0xdc] sm:$0xf]
  %v74 = vld [vmem:[%s1 + $0xe0] sm:$0xf]
  %v75 = vld [vmem:[%s1 + $0xe4] sm:$0xf]
  %v76 = vld [vmem:[%s1 + $0xe8] sm:$0xf]
  %v77 = vld [vmem:[%s1 + $0xec] sm:$0xf]
  %v78 = vld [vmem:[%s1 + $0xf0] sm:$0xf]
  %v79 = vld [vmem:[%s1 + $0xf4] sm:$0xf]
  %v80 = vld [vmem:[%s1 + $0xf8] sm:$0xf]
  %v81 = vld [vmem:[%s1 + $0xfc] sm:$0xf]
  %v82 = vld [vmem:[%s1 + $0x100] sm:$0xf]
  %v83 = vld [vmem:[%s1 + $0x104] sm:$0xf]
  %v84 = vld [vmem:[%s1 + $0x108] sm:$0xf]
  %v85 = vld [vmem:[%s1 + $0x10c] sm:$0xf]
  %v86 = vld [vmem:[%s1 + $0x110] sm:$0xf]
  %v87 = vld [vmem:[%s1 + $0x114] sm:$0xf]
  %v88 = vld [vmem:[%s1 + $0x118] sm:$0xf]
  %v89 = vld [vmem:[%s1 + $0x11c] sm:$0xf]
  %v90 = vld [vmem:[%s2] sm:$0x1]
  %v92 = vlaneseq
  %v93 = vshrl.u32 %v92, 7
  %v94 = vsub.s32 0, %v93
  %v95 = vrot.slane %v90, %v94
  %v100 = vunpack.c.l.b16 %v15
  %v101 = vunpack.c.h.b16 %v15
  %v102 = vunpack.c.l.b16 %v16
  %v103 = vunpack.c.h.b16 %v16
  %v104 = vunpack.c.l.b16 %v17
  %v105 = vpack.c.b16 %v100, %v100
  %v106 = vpack.c.b16 %v101, %v101
  %v107 = vpack.c.b16 %v102, %v102
  %v108 = vpack.c.b16 %v103, %v103
  %v109 = vpack.c.b16 %v104, %v104
  %v186 = vunpack.c.l.b16 %v18
  %v187 = vunpack.c.l.b16 %v19
  %v188 = vunpack.c.l.b16 %v20
  %v189 = vunpack.c.l.b16 %v21
  %v190 = vunpack.c.l.b16 %v22
  %v191 = vunpack.c.l.b16 %v23
  %v192 = vunpack.c.l.b16 %v24
  %v193 = vunpack.c.l.b16 %v25
  %v194 = vunpack.c.l.b16 %v26
  %v195 = vunpack.c.l.b16 %v27
  %v196 = vunpack.c.l.b16 %v28
  %v197 = vunpack.c.l.b16 %v29
  %v198 = vunpack.c.l.b16 %v30
  %v199 = vunpack.c.l.b16 %v31
  %v200 = vunpack.c.l.b16 %v32
  %v201 = vunpack.c.l.b16 %v33
  %v202 = vunpack.c.l.b16 %v34
  %v203 = vunpack.c.l.b16 %v35
  %v204 = vunpack.c.l.b16 %v36
  %v205 = vunpack.c.l.b16 %v37
  %v206 = vunpack.c.l.b16 %v38
  %v207 = vunpack.c.l.b16 %v39
  %v208 = vunpack.c.l.b16 %v40
  %v209 = vunpack.c.l.b16 %v41
  %v210 = vunpack.c.l.b16 %v42
  %v211 = vunpack.c.l.b16 %v43
  %v212 = vunpack.c.l.b16 %v44
  %v213 = vunpack.c.l.b16 %v45
  %v214 = vunpack.c.l.b16 %v46
  %v215 = vunpack.c.l.b16 %v47
  %v216 = vunpack.c.l.b16 %v48
  %v217 = vunpack.c.l.b16 %v49
  %v218 = vunpack.c.l.b16 %v50
  %v219 = vunpack.c.l.b16 %v51
  %v220 = vunpack.c.l.b16 %v52
  %v221 = vunpack.c.l.b16 %v53
  %v222 = vunpack.c.l.b16 %v54
  %v223 = vunpack.c.l.b16 %v55
  %v224 = vunpack.c.l.b16 %v56
  %v225 = vunpack.c.l.b16 %v57
  %v226 = vunpack.c.l.b16 %v58
  %v227 = vunpack.c.l.b16 %v59
  %v228 = vunpack.c.l.b16 %v60
  %v229 = vunpack.c.l.b16 %v61
  %v230 = vunpack.c.l.b16 %v62
  %v231 = vunpack.c.l.b16 %v63
  %v232 = vunpack.c.l.b16 %v64
  %v233 = vunpack.c.l.b16 %v65
  %v234 = vunpack.c.l.b16 %v66
  %v235 = vunpack.c.l.b16 %v67
  %v236 = vunpack.c.l.b16 %v68
  %v237 = vunpack.c.l.b16 %v69
  %v238 = vunpack.c.l.b16 %v70
  %v239 = vunpack.c.l.b16 %v71
  %v240 = vunpack.c.l.b16 %v72
  %v241 = vunpack.c.l.b16 %v73
  %v242 = vunpack.c.l.b16 %v74
  %v243 = vunpack.c.l.b16 %v75
  %v244 = vunpack.c.l.b16 %v76
  %v245 = vunpack.c.l.b16 %v77
  %v246 = vunpack.c.l.b16 %v78
  %v247 = vunpack.c.l.b16 %v79
  %v248 = vunpack.c.l.b16 %v80
  %v249 = vunpack.c.l.b16 %v81
  %v250 = vunpack.c.l.b16 %v82
  %v251 = vunpack.c.l.b16 %v83
  %v252 = vunpack.c.l.b16 %v84
  %v253 = vunpack.c.l.b16 %v85
  %v254 = vunpack.c.l.b16 %v86
  %v255 = vunpack.c.l.b16 %v87
  %v256 = vunpack.c.l.b16 %v88
  %v257 = vunpack.c.l.b16 %v89
  %v258 = vpack.c.b16 %v187, %v186
  %v259 = vpack.c.b16 %v189, %v188
  %v260 = vpack.c.b16 %v191, %v190
  %v261 = vpack.c.b16 %v193, %v192
  %v262 = vpack.c.b16 %v195, %v194
  %v263 = vpack.c.b16 %v197, %v196
  %v264 = vpack.c.b16 %v199, %v198
  %v265 = vpack.c.b16 %v201, %v200
  %v266 = vpack.c.b16 %v203, %v202
  %v267 = vpack.c.b16 %v205, %v204
  %v268 = vpack.c.b16 %v207, %v206
  %v269 = vpack.c.b16 %v209, %v208
  %v270 = vpack.c.b16 %v211, %v210
  %v271 = vpack.c.b16 %v213, %v212
  %v272 = vpack.c.b16 %v215, %v214
  %v273 = vpack.c.b16 %v217, %v216
  %v274 = vpack.c.b16 %v219, %v218
  %v275 = vpack.c.b16 %v221, %v220
  %v276 = vpack.c.b16 %v223, %v222
  %v277 = vpack.c.b16 %v225, %v224
  %v278 = vpack.c.b16 %v227, %v226
  %v279 = vpack.c.b16 %v229, %v228
  %v280 = vpack.c.b16 %v231, %v230
  %v281 = vpack.c.b16 %v233, %v232
  %v282 = vpack.c.b16 %v235, %v234
  %v283 = vpack.c.b16 %v237, %v236
  %v284 = vpack.c.b16 %v239, %v238
  %v285 = vpack.c.b16 %v241, %v240
  %v286 = vpack.c.b16 %v243, %v242
  %v287 = vpack.c.b16 %v245, %v244
  %v288 = vpack.c.b16 %v247, %v246
  %v289 = vpack.c.b16 %v249, %v248
  %v290 = vpack.c.b16 %v251, %v250
  %v291 = vpack.c.b16 %v253, %v252
  %v292 = vpack.c.b16 %v255, %v254
  %v293 = vpack.c.b16 %v257, %v256
  %vm330 = vcmask 523264
  %v332 = vsel %vm330, %v109, 0
  %334 = vmatprep.subr.bf16.mxu0 0
  %335 = vmatpush1.bf16.msra.mxu0 %v265
  %336 = vmatprep.subr.bf16.mxu0 0
  %337 = vmatpush1.bf16.msra.mxu0 %v264
  %338 = vmatprep.subr.bf16.mxu0 0
  %339 = vmatpush1.bf16.msra.mxu0 %v263
  %340 = vmatprep.subr.bf16.mxu0 0
  %341 = vmatpush1.bf16.msra.mxu0 %v262
  %342 = vmatprep.subr.bf16.mxu0 0
  %343 = vmatpush1.bf16.msra.mxu0 %v261
  %344 = vmatprep.subr.bf16.mxu0 0
  %345 = vmatpush1.bf16.msra.mxu0 %v260
  %346 = vmatprep.subr.bf16.mxu0 0
  %347 = vmatpush1.bf16.msra.mxu0 %v259
  %348 = vmatprep.subr.bf16.mxu0 0
  %349 = vmatpush1.bf16.msra.mxu0 %v258
  %350 = vmatprep.subr.bf16.mxu0 0
  %351 = vmatpush2.bf16.msra.mxu0 %v273
  %352 = vmatprep.subr.bf16.mxu0 0
  %353 = vmatpush2.bf16.msra.mxu0 %v272
  %354 = vmatprep.subr.bf16.mxu0 0
  %355 = vmatpush2.bf16.msra.mxu0 %v271
  %356 = vmatprep.subr.bf16.mxu0 0
  %357 = vmatpush2.bf16.msra.mxu0 %v270
  %358 = vmatprep.subr.bf16.mxu0 0
  %359 = vmatpush2.bf16.msra.mxu0 %v269
  %360 = vmatprep.subr.bf16.mxu0 0
  %361 = vmatpush2.bf16.msra.mxu0 %v268
  %362 = vmatprep.subr.bf16.mxu0 0
  %363 = vmatpush2.bf16.msra.mxu0 %v267
  %364 = vmatprep.subr.bf16.mxu0 0
  %365 = vmatpush2.bf16.msra.mxu0 %v266
  %366 = vmatprep.mubr.bf16.mxu0 %v106
  %367 = vmatmul.mubr.bf16.gmra.mxu0 %v105
  %v368 = vpop.f32.mrf.mxu0
  %v369 = vadd.f32 %v95, %v368
  %v370 = vpop.f32.mrf.mxu0
  %v371 = vpop.f32.mrf.mxu0
  %v372 = vpop.f32.mrf.mxu0
  %373 = vdwg.mxu0
  %374 = vmatprep.subr.bf16.mxu0 0
  %375 = vmatpush1.bf16.msra.mxu0 %v281
  %376 = vmatprep.subr.bf16.mxu0 0
  %377 = vmatpush1.bf16.msra.mxu0 %v280
  %378 = vmatprep.subr.bf16.mxu0 0
  %379 = vmatpush1.bf16.msra.mxu0 %v279
  %380 = vmatprep.subr.bf16.mxu0 0
  %381 = vmatpush1.bf16.msra.mxu0 %v278
  %382 = vmatprep.subr.bf16.mxu0 0
  %383 = vmatpush1.bf16.msra.mxu0 %v277
  %384 = vmatprep.subr.bf16.mxu0 0
  %385 = vmatpush1.bf16.msra.mxu0 %v276
  %386 = vmatprep.subr.bf16.mxu0 0
  %387 = vmatpush1.bf16.msra.mxu0 %v275
  %388 = vmatprep.subr.bf16.mxu0 0
  %389 = vmatpush1.bf16.msra.mxu0 %v274
  %390 = vmatprep.subr.bf16.mxu0 0
  %391 = vmatpush2.bf16.msra.mxu0 %v289
  %392 = vmatprep.subr.bf16.mxu0 0
  %393 = vmatpush2.bf16.msra.mxu0 %v288
  %394 = vmatprep.subr.bf16.mxu0 0
  %395 = vmatpush2.bf16.msra.mxu0 %v287
  %396 = vmatprep.subr.bf16.mxu0 0
  %397 = vmatpush2.bf16.msra.mxu0 %v286
  %398 = vmatprep.subr.bf16.mxu0 0
  %399 = vmatpush2.bf16.msra.mxu0 %v285
  %400 = vmatprep.subr.bf16.mxu0 0
  %401 = vmatpush2.bf16.msra.mxu0 %v284
  %402 = vmatprep.subr.bf16.mxu0 0
  %403 = vmatpush2.bf16.msra.mxu0 %v283
  %404 = vmatprep.subr.bf16.mxu0 0
  %405 = vmatpush2.bf16.msra.mxu0 %v282
  %406 = vmatprep.mubr.bf16.mxu0 %v108
  %407 = vmatmul.mubr.bf16.gmra.mxu0 %v107
  %v408 = vpop.f32.mrf.mxu0
  %v409 = vadd.f32 %v369, %v408
  %v410 = vpop.f32.mrf.mxu0
  %v411 = vpop.f32.mrf.mxu0
  %v412 = vpop.f32.mrf.mxu0
  %413 = vdwg.mxu0
  %414 = vmatprep.subr.bf16.mxu0 0
  %415 = vmatpush1.bf16.msra.mxu0 0
  %416 = vmatprep.subr.bf16.mxu0 0
  %417 = vmatpush1.bf16.msra.mxu0 0
  %418 = vmatprep.subr.bf16.mxu0 0
  %419 = vmatpush1.bf16.msra.mxu0 0
  %420 = vmatprep.subr.bf16.mxu0 0
  %421 = vmatpush1.bf16.msra.mxu0 0
  %422 = vmatprep.subr.bf16.mxu0 0
  %423 = vmatpush1.bf16.msra.mxu0 %v293
  %424 = vmatprep.subr.bf16.mxu0 0
  %425 = vmatpush1.bf16.msra.mxu0 %v292
  %426 = vmatprep.subr.bf16.mxu0 0
  %427 = vmatpush1.bf16.msra.mxu0 %v291
  %428 = vmatprep.subr.bf16.mxu0 0
  %429 = vmatpush1.bf16.msra.mxu0 %v290
  %430 = vmatprep.subr.bf16.mxu0 0
  %431 = vmatpush2.bf16.msra.mxu0 0
  %432 = vmatprep.subr.bf16.mxu0 0
  %433 = vmatpush2.bf16.msra.mxu0 0
  %434 = vmatprep.subr.bf16.mxu0 0
  %435 = vmatpush2.bf16.msra.mxu0 0
  %436 = vmatprep.subr.bf16.mxu0 0
  %437 = vmatpush2.bf16.msra.mxu0 0
  %438 = vmatprep.subr.bf16.mxu0 0
  %439 = vmatpush2.bf16.msra.mxu0 0
  %440 = vmatprep.subr.bf16.mxu0 0
  %441 = vmatpush2.bf16.msra.mxu0 0
  %442 = vmatprep.subr.bf16.mxu0 0
  %443 = vmatpush2.bf16.msra.mxu0 0
  %444 = vmatprep.subr.bf16.mxu0 0
  %445 = vmatpush2.bf16.msra.mxu0 0
  %446 = vmatprep.mubr.bf16.mxu0 0
  %447 = vmatmul.mubr.bf16.gmra.mxu0 %v332
  %v448 = vpop.f32.mrf.mxu0
  %v449 = vadd.f32 %v409, %v448
  %v450 = vpop.f32.mrf.mxu0
  %v451 = vpop.f32.mrf.mxu0
  %v452 = vpop.f32.mrf.mxu0
  %453 = vdwg.mxu0
  %vm454 = vcmp.ge.f32.partialorder %v449, 0.0
  %v455 = vmul.f32 %v449, 0.01
  %v456 = vsel %vm454, %v449, %v455
  %v457 = vpack.c.bf16 %v456, %v456
  %458 = vst [vmem:[%s3] sm:$0xf] %v457
  // Predicated region
  $region14: #{image_reconstruction_forward.11} parent=0 // pred_check
    _
  $region15: #{image_reconstruction_forward.11} parent=0 // pred_check_branch
    %460 = sbr.rel (0) target = $region17
  $region16: #{image_reconstruction_forward.11} parent=0 // pred_region
    _
  $region17: #{image_reconstruction_forward.11} parent=0 // pred_fallthru
    _
  // Predicated region
  $region18: #{image_reconstruction_forward.11} parent=0 // pred_check
    _
  $region19: #{image_reconstruction_forward.11} parent=0 // pred_check_branch
    %462 = sbr.rel (0) target = $region21
  $region20: #{image_reconstruction_forward.11} parent=0 // pred_region
    _
  $region21: #{image_reconstruction_forward.11} parent=0 // pred_fallthru
    _

// kernel: image_reconstruction_forward.12
$region0: #{image_reconstruction_forward.12}
  #allocation0 [shape = 'u32[]', space=smem, size = 0x4, offset = 0x4, fixed_abs, tag = 'smem constant byte address 0x4 - core index']
  #allocation1 [shape = 'u32[144,128]{1,0:T(1,128)}', space=vmem, size = 0x12000, scoped, tag = 'internal scratch']
  %s0 = inlined_call_operand.vmem [shape: bf16[32,1152], index: 0, kind: input, shape index: {}]
  %s1 = inlined_call_operand.vmem [shape: bf16[32,576], index: 1, kind: input, shape index: {}]
  %s2 = inlined_call_operand.vmem [shape: bf16[1152,64], index: 2, kind: input, shape index: {}]
  %s3 = inlined_call_operand.vmem [shape: bf16[576,64], index: 3, kind: input, shape index: {}]
  %s4 = inlined_call_operand.vmem [shape: f32[1,64], index: 4, kind: input, shape index: {}]
  %s5 = inlined_call_operand.vmem [shape: bf16[32,64], index: 5, kind: output, shape index: {}]
  %s6 = sld [smem:[#allocation0]]
  $region53: #{image_reconstruction_forward.12} parent=0
    _
  %s8 = ssub.s32 1, %s6
  %s9 = scalar_select 0, %s8, %s6
  loop: start=0, step=1, limit=4
  $region2: #{image_reconstruction_forward.12} parent=0 // loop_pre_header
    _
  $region3: #{image_reconstruction_forward.12} parent=0 // loop_header
    %s11 = sphi 0, %s15
    %p12 = scmp.ge.s32.totalorder %s11, 4
    %s21 = sphi 0, %s23
    %s24 = sphi 0, %s21
    %s25 = sphi 0, %s24
    %s41 = sphi 0, %s25
    %s47 = sphi 0, %s49
    %s50 = sphi 0, %s47
    %s51 = sphi 0, %s50
    %s67 = sphi 0, %s51
    %s71 = sphi 0, %s71
    %s73 = sphi 0, %s71
    %s74 = sphi 0, %s73
    %s88 = sphi 0, %s74
    %s92 = sphi 0, %s92
    %s94 = sphi 0, %s92
    %s95 = sphi 0, %s94
    %s109 = sphi 0, %s95
    %s113 = sphi 0, %s113
    %s115 = sphi 0, %s113
    %s116 = sphi 0, %s115
    %s130 = sphi 0, %s116
    %s136 = sphi 0, %s138
    %s139 = sphi 0, %s136
    %s140 = sphi 0, %s139
    %s156 = sphi 0, %s140
  $region4: #{image_reconstruction_forward.12} parent=0 // loop_header_branch
    %14 = sbr.rel (%p12) target = $region8
  $region5: #{image_reconstruction_forward.12} parent=0 // loop_body
    %s16 = ssub.s32 %s11, 1
    %s17 = ssub.s32 %s11, 2
    %s18 = sadd.s32 %s11, 1
    %s19 = ssub.s32 %s11, %s18
    %p20 = scmp.eq.s32.totalorder %s19, 0
    %s22 = sadd.s32 %s21, 1
    %s23 = scalar_select %p20, %s21, %s22
    %p26 = pneg %p20
    %p27 = scmp.eq.s32.totalorder %s11, 1
    %p28 = por %p26, %p27
    %p29 = scmp.ne.s32.totalorder %s21, %s24
    %p30 = scmp.eq.s32.totalorder %s11, 0
    %p31 = por %p29, %p30
    %p32 = scmp.ne.s32.totalorder %s21, %s24
    %p33 = scmp.eq.s32.totalorder %s16, 1
    %p34 = por %p32, %p33
    %p35 = scmp.ne.s32.totalorder %s24, %s25
    %p36 = scmp.eq.s32.totalorder %s16, 0
    %p37 = por %p35, %p36
    %p38 = scmp.ne.s32.totalorder %s24, %s25
    %p39 = scmp.eq.s32.totalorder %s17, 1
    %p40 = por %p38, %p39
    %p42 = scmp.ne.s32.totalorder %s25, %s41
    %p43 = scmp.eq.s32.totalorder %s17, 0
    %p44 = por %p42, %p43
    %s45 = ssub.s32 %s11, %s18
    %p46 = scmp.eq.s32.totalorder %s45, 0
    %s48 = sadd.s32 %s47, 1
    %s49 = scalar_select %p46, %s47, %s48
    %p52 = pneg %p46
    %p53 = scmp.eq.s32.totalorder %s11, 1
    %p54 = por %p52, %p53
    %p55 = scmp.ne.s32.totalorder %s47, %s50
    %p56 = scmp.eq.s32.totalorder %s11, 0
    %p57 = por %p55, %p56
    %p58 = scmp.ne.s32.totalorder %s47, %s50
    %p59 = scmp.eq.s32.totalorder %s16, 1
    %p60 = por %p58, %p59
    %p61 = scmp.ne.s32.totalorder %s50, %s51
    %p62 = scmp.eq.s32.totalorder %s16, 0
    %p63 = por %p61, %p62
    %p64 = scmp.ne.s32.totalorder %s50, %s51
    %p65 = scmp.eq.s32.totalorder %s17, 1
    %p66 = por %p64, %p65
    %p68 = scmp.ne.s32.totalorder %s51, %s67
    %p69 = scmp.eq.s32.totalorder %s17, 0
    %p70 = por %p68, %p69
    %s72 = sadd.s32 %s71, 1
    %p75 = scmp.eq.s32.totalorder %s11, 1
    %p76 = scmp.ne.s32.totalorder %s71, %s73
    %p77 = scmp.eq.s32.totalorder %s11, 0
    %p78 = por %p76, %p77
    %p79 = scmp.ne.s32.totalorder %s71, %s73
    %p80 = scmp.eq.s32.totalorder %s16, 1
    %p81 = por %p79, %p80
    %p82 = scmp.ne.s32.totalorder %s73, %s74
    %p83 = scmp.eq.s32.totalorder %s16, 0
    %p84 = por %p82, %p83
    %p85 = scmp.ne.s32.totalorder %s73, %s74
    %p86 = scmp.eq.s32.totalorder %s17, 1
    %p87 = por %p85, %p86
    %p89 = scmp.ne.s32.totalorder %s74, %s88
    %p90 = scmp.eq.s32.totalorder %s17, 0
    %p91 = por %p89, %p90
    %s93 = sadd.s32 %s92, 1
    %p96 = scmp.eq.s32.totalorder %s11, 1
    %p97 = scmp.ne.s32.totalorder %s92, %s94
    %p98 = scmp.eq.s32.totalorder %s11, 0
    %p99 = por %p97, %p98
    %p100 = scmp.ne.s32.totalorder %s92, %s94
    %p101 = scmp.eq.s32.totalorder %s16, 1
    %p102 = por %p100, %p101
    %p103 = scmp.ne.s32.totalorder %s94, %s95
    %p104 = scmp.eq.s32.totalorder %s16, 0
    %p105 = por %p103, %p104
    %p106 = scmp.ne.s32.totalorder %s94, %s95
    %p107 = scmp.eq.s32.totalorder %s17, 1
    %p108 = por %p106, %p107
    %p110 = scmp.ne.s32.totalorder %s95, %s109
    %p111 = scmp.eq.s32.totalorder %s17, 0
    %p112 = por %p110, %p111
    %s114 = sadd.s32 %s113, 1
    %p117 = scmp.eq.s32.totalorder %s11, 1
    %p118 = scmp.ne.s32.totalorder %s113, %s115
    %p119 = scmp.eq.s32.totalorder %s11, 0
    %p120 = por %p118, %p119
    %p121 = scmp.ne.s32.totalorder %s113, %s115
    %p122 = scmp.eq.s32.totalorder %s16, 1
    %p123 = por %p121, %p122
    %p124 = scmp.ne.s32.totalorder %s115, %s116
    %p125 = scmp.eq.s32.totalorder %s16, 0
    %p126 = por %p124, %p125
    %p127 = scmp.ne.s32.totalorder %s115, %s116
    %p128 = scmp.eq.s32.totalorder %s17, 1
    %p129 = por %p127, %p128
    %p131 = scmp.ne.s32.totalorder %s116, %s130
    %p132 = scmp.eq.s32.totalorder %s17, 0
    %p133 = por %p131, %p132
    %s134 = ssub.s32 %s11, %s18
    %p135 = scmp.eq.s32.totalorder %s134, 0
    %s137 = sadd.s32 %s136, 1
    %s138 = scalar_select %p135, %s136, %s137
    %p141 = pneg %p135
    %p142 = scmp.eq.s32.totalorder %s11, 1
    %p143 = por %p141, %p142
    %p144 = scmp.ne.s32.totalorder %s136, %s139
    %p145 = scmp.eq.s32.totalorder %s11, 0
    %p146 = por %p144, %p145
    %p147 = scmp.ne.s32.totalorder %s136, %s139
    %p148 = scmp.eq.s32.totalorder %s16, 1
    %p149 = por %p147, %p148
    %p150 = scmp.ne.s32.totalorder %s139, %s140
    %p151 = scmp.eq.s32.totalorder %s16, 0
    %p152 = por %p150, %p151
    %p153 = scmp.ne.s32.totalorder %s139, %s140
    %p154 = scmp.eq.s32.totalorder %s17, 1
    %p155 = por %p153, %p154
    %p157 = scmp.ne.s32.totalorder %s140, %s156
    %p158 = scmp.eq.s32.totalorder %s17, 0
    %p159 = por %p157, %p158
    %p160 = scmp.le.s32.totalorder 1, %s11
    %p161 = scmp.lt.s32.totalorder %s11, 3
    %p162 = pnand %p160, %p161
    %p163 = pneg %p162
    // Predicated region
    $region9: #{image_reconstruction_forward.12} parent=5 // pred_check
      _
    $region10: #{image_reconstruction_forward.12} parent=5 // pred_check_branch
      %165 = sbr.rel (%p162) target = $region12
    $region11: #{image_reconstruction_forward.12} parent=5 // pred_region
      %s166 = ssub.s32 %s11, 1
      // Predicated region
      $region13: #{image_reconstruction_forward.12} parent=11 // pred_check
        %p167 = pneg %p84
      $region14: #{image_reconstruction_forward.12} parent=11 // pred_check_branch
        %169 = sbr.rel (%p167) target = $region16
      $region15: #{image_reconstruction_forward.12} parent=11 // pred_region
        _
      $region16: #{image_reconstruction_forward.12} parent=11 // pred_fallthru
        _
      // Predicated region
      $region17: #{image_reconstruction_forward.12} parent=11 // pred_check
        %p170 = pneg %p105
      $region18: #{image_reconstruction_forward.12} parent=11 // pred_check_branch
        %172 = sbr.rel (%p170) target = $region20
      $region19: #{image_reconstruction_forward.12} parent=11 // pred_region
        _
      $region20: #{image_reconstruction_forward.12} parent=11 // pred_fallthru
        _
      // Predicated region
      $region21: #{image_reconstruction_forward.12} parent=11 // pred_check
        %p173 = pneg %p126
      $region22: #{image_reconstruction_forward.12} parent=11 // pred_check_branch
        %175 = sbr.rel (%p173) target = $region24
      $region23: #{image_reconstruction_forward.12} parent=11 // pred_region
        _
      $region24: #{image_reconstruction_forward.12} parent=11 // pred_fallthru
        _
    $region12: #{image_reconstruction_forward.12} parent=5 // pred_fallthru
      _
    %p176 = scmp.lt.s32.totalorder %s11, 2
    // Predicated region
    $region25: #{image_reconstruction_forward.12} parent=5 // pred_check
      %p177 = pneg %p176
    $region26: #{image_reconstruction_forward.12} parent=5 // pred_check_branch
      %179 = sbr.rel (%p177) target = $region28
    $region27: #{image_reconstruction_forward.12} parent=5 // pred_region
      // Predicated region
      $region29: #{image_reconstruction_forward.12} parent=27 // pred_check
        %p180 = pneg %p31
      $region30: #{image_reconstruction_forward.12} parent=27 // pred_check_branch
        %182 = sbr.rel (%p180) target = $region32
      $region31: #{image_reconstruction_forward.12} parent=27 // pred_region
        %s183 = smul.u32 2, %s11
        %p184 = scmp.lt.s32.totalorder %s183, 3
        %s185 = scalar_select %p184, %s183, 3
        %s186 = smul.addr %s185, 9
        %s187 = smul.addr %s186, 4
        %s188 = scalar_lea.vmem %s0, %s187
        %s189 = smul.u32 2, %s11
      $region32: #{image_reconstruction_forward.12} parent=27 // pred_fallthru
        _
      // Predicated region
      $region33: #{image_reconstruction_forward.12} parent=27 // pred_check
        %p190 = pneg %p57
      $region34: #{image_reconstruction_forward.12} parent=27 // pred_check_branch
        %192 = sbr.rel (%p190) target = $region36
      $region35: #{image_reconstruction_forward.12} parent=27 // pred_region
        %s193 = smul.u32 2, %s11
        %p194 = scmp.lt.s32.totalorder %s193, 3
        %s195 = scalar_select %p194, %s193, 3
        %s196 = smul.addr %s195, 5
        %s197 = smul.addr %s196, 4
        %s198 = scalar_lea.vmem %s1, %s197
        %s199 = smul.u32 2, %s11
      $region36: #{image_reconstruction_forward.12} parent=27 // pred_fallthru
        _
    $region28: #{image_reconstruction_forward.12} parent=5 // pred_fallthru
      _
    %p200 = scmp.le.s32.totalorder 1, %s11
    %p201 = scmp.lt.s32.totalorder %s11, 3
    %p202 = pnand %p200, %p201
    %p203 = pneg %p202
    // Predicated region
    $region37: #{image_reconstruction_forward.12} parent=5 // pred_check
      _
    $region38: #{image_reconstruction_forward.12} parent=5 // pred_check_branch
      %205 = sbr.rel (%p202) target = $region40
    $region39: #{image_reconstruction_forward.12} parent=5 // pred_region
      %s206 = ssub.s32 %s11, 1
      %s207 = smul.u32 2, %s16
      %p208 = scmp.lt.s32.totalorder %s207, 3
      %s209 = scalar_select %p208, %s207, 3
      %s210 = smul.addr %s209, 9
      %s211 = smul.addr %s210, 4
      %s212 = scalar_lea.vmem %s0, %s211
      %p213 = pneg %p37
      %p214 = pneg %p34
      %s215 = smul.u32 2, %s16
      %p216 = scmp.lt.s32.totalorder %s215, 3
      %s217 = scalar_select %p216, %s215, 3
      %s218 = smul.addr %s217, 5
      %s219 = smul.addr %s218, 4
      %s220 = scalar_lea.vmem %s1, %s219
      %p221 = pneg %p63
      %p222 = pneg %p60
      %p223 = pneg %p84
      %p224 = pneg %p81
      %p225 = pneg %p105
      %p226 = pneg %p102
      %p227 = pneg %p126
      %p228 = pneg %p123
      %p229 = pneg %p152
      %p230 = pneg %p149
      %s231 = smul.u32 2, %s16
      %p232 = scmp.lt.s32.totalorder %s231, 3
      %s233 = scalar_select %p232, %s231, 3
      %s234 = smul.addr %s233, 4
      %s235 = scalar_lea.vmem %s5, %s234
      %s236 = smul.u32 2, %s16
      %p237 = scmp.lt.s32.totalorder %s236, 3
      %s238 = scalar_select %p237, %s236, 3
      %s239 = smul.addr %s238, 9
      %s240 = smul.addr %s239, 4
      %s241 = scalar_lea.vmem %s0, %s240
      %s242 = smul.u32 2, %s16
      %s243 = smul.u32 2, %s16
      %p244 = scmp.lt.s32.totalorder %s243, 3
      %s245 = scalar_select %p244, %s243, 3
      %s246 = smul.addr %s245, 5
      %s247 = smul.addr %s246, 4
      %s248 = scalar_lea.vmem %s1, %s247
      %s249 = smul.u32 2, %s16
      %s250 = smul.u32 2, %s16
      %p251 = scmp.lt.s32.totalorder %s250, 3
      %s252 = scalar_select %p251, %s250, 3
      %s253 = smul.addr %s252, 4
      %s254 = scalar_lea.vmem %s5, %s253
      %s255 = smul.u32 2, %s16
      %v257 = vld [vmem:[%s241] sm:$0xff]
      %v258 = vld [vmem:[%s241 + $0x8] sm:$0xff]
      %v259 = vld [vmem:[%s241 + $0x10] sm:$0xff]
      %v260 = vld [vmem:[%s241 + $0x18] sm:$0xff]
      %v261 = vld [vmem:[%s241 + $0x20] sm:$0xf]
      %v262 = vld [vmem:[%s241 + $0x24] sm:$0xff]
      %v263 = vld [vmem:[%s241 + $0x2c] sm:$0xff]
      %v264 = vld [vmem:[%s241 + $0x34] sm:$0xff]
      %v265 = vld [vmem:[%s241 + $0x3c] sm:$0xff]
      %v266 = vld [vmem:[%s241 + $0x44] sm:$0xf]
      %v267 = vld [vmem:[%s2] sm:$0xf]
      %v268 = vld [vmem:[%s2 + $0x4] sm:$0xf]
      %v269 = vld [vmem:[%s2 + $0x8] sm:$0xf]
      %v270 = vld [vmem:[%s2 + $0xc] sm:$0xf]
      %v271 = vld [vmem:[%s2 + $0x10] sm:$0xf]
      %v272 = vld [vmem:[%s2 + $0x14] sm:$0xf]
      %v273 = vld [vmem:[%s2 + $0x18] sm:$0xf]
      %v274 = vld [vmem:[%s2 + $0x1c] sm:$0xf]
      %v275 = vld [vmem:[%s2 + $0x20] sm:$0xf]
      %v276 = vld [vmem:[%s2 + $0x24] sm:$0xf]
      %v277 = vld [vmem:[%s2 + $0x28] sm:$0xf]
      %v278 = vld [vmem:[%s2 + $0x2c] sm:$0xf]
      %v279 = vld [vmem:[%s2 + $0x30] sm:$0xf]
      %v280 = vld [vmem:[%s2 + $0x34] sm:$0xf]
      %v281 = vld [vmem:[%s2 + $0x38] sm:$0xf]
      %v282 = vld [vmem:[%s2 + $0x3c] sm:$0xf]
      %v283 = vld [vmem:[%s2 + $0x40] sm:$0xf]
      %v284 = vld [vmem:[%s2 + $0x44] sm:$0xf]
      %v285 = vld [vmem:[%s2 + $0x48] sm:$0xf]
      %v286 = vld [vmem:[%s2 + $0x4c] sm:$0xf]
      %v287 = vld [vmem:[%s2 + $0x50] sm:$0xf]
      %v288 = vld [vmem:[%s2 + $0x54] sm:$0xf]
      %v289 = vld [vmem:[%s2 + $0x58] sm:$0xf]
      %v290 = vld [vmem:[%s2 + $0x5c] sm:$0xf]
      %v291 = vld [vmem:[%s2 + $0x60] sm:$0xf]
      %v292 = vld [vmem:[%s2 + $0x64] sm:$0xf]
      %v293 = vld [vmem:[%s2 + $0x68] sm:$0xf]
      %v294 = vld [vmem:[%s2 + $0x6c] sm:$0xf]
      %v295 = vld [vmem:[%s2 + $0x70] sm:$0xf]
      %v296 = vld [vmem:[%s2 + $0x74] sm:$0xf]
      %v297 = vld [vmem:[%s2 + $0x78] sm:$0xf]
      %v298 = vld [vmem:[%s2 + $0x7c] sm:$0xf]
      %v299 = vld [vmem:[%s2 + $0x80] sm:$0xf]
      %v300 = vld [vmem:[%s2 + $0x84] sm:$0xf]
      %v301 = vld [vmem:[%s2 + $0x88] sm:$0xf]
      %v302 = vld [vmem:[%s2 + $0x8c] sm:$0xf]
      %v303 = vld [vmem:[%s2 + $0x90] sm:$0xf]
      %v304 = vld [vmem:[%s2 + $0x94] sm:$0xf]
      %v305 = vld [vmem:[%s2 + $0x98] sm:$0xf]
      %v306 = vld [vmem:[%s2 + $0x9c] sm:$0xf]
      %v307 = vld [vmem:[%s2 + $0xa0] sm:$0xf]
      %v308 = vld [vmem:[%s2 + $0xa4] sm:$0xf]
      %v309 = vld [vmem:[%s2 + $0xa8] sm:$0xf]
      %v310 = vld [vmem:[%s2 + $0xac] sm:$0xf]
      %v311 = vld [vmem:[%s2 + $0xb0] sm:$0xf]
      %v312 = vld [vmem:[%s2 + $0xb4] sm:$0xf]
      %v313 = vld [vmem:[%s2 + $0xb8] sm:$0xf]
      %v314 = vld [vmem:[%s2 + $0xbc] sm:$0xf]
      %v315 = vld [vmem:[%s2 + $0xc0] sm:$0xf]
      %v316 = vld [vmem:[%s2 + $0xc4] sm:$0xf]
      %v317 = vld [vmem:[%s2 + $0xc8] sm:$0xf]
      %v318 = vld [vmem:[%s2 + $0xcc] sm:$0xf]
      %v319 = vld [vmem:[%s2 + $0xd0] sm:$0xf]
      %v320 = vld [vmem:[%s2 + $0xd4] sm:$0xf]
      %v321 = vld [vmem:[%s2 + $0xd8] sm:$0xf]
      %v322 = vld [vmem:[%s2 + $0xdc] sm:$0xf]
      %v323 = vld [vmem:[%s2 + $0xe0] sm:$0xf]
      %v324 = vld [vmem:[%s2 + $0xe4] sm:$0xf]
      %v325 = vld [vmem:[%s2 + $0xe8] sm:$0xf]
      %v326 = vld [vmem:[%s2 + $0xec] sm:$0xf]
      %v327 = vld [vmem:[%s2 + $0xf0] sm:$0xf]
      %v328 = vld [vmem:[%s2 + $0xf4] sm:$0xf]
      %v329 = vld [vmem:[%s2 + $0xf8] sm:$0xf]
      %v330 = vld [vmem:[%s2 + $0xfc] sm:$0xf]
      %v331 = vld [vmem:[%s2 + $0x100] sm:$0xf]
      %v332 = vld [vmem:[%s2 + $0x104] sm:$0xf]
      %v333 = vld [vmem:[%s2 + $0x108] sm:$0xf]
      %v334 = vld [vmem:[%s2 + $0x10c] sm:$0xf]
      %v335 = vld [vmem:[%s2 + $0x110] sm:$0xf]
      %v336 = vld [vmem:[%s2 + $0x114] sm:$0xf]
      %v337 = vld [vmem:[%s2 + $0x118] sm:$0xf]
      %v338 = vld [vmem:[%s2 + $0x11c] sm:$0xf]
      %v339 = vld [vmem:[%s2 + $0x120] sm:$0xf]
      %v340 = vld [vmem:[%s2 + $0x124] sm:$0xf]
      %v341 = vld [vmem:[%s2 + $0x128] sm:$0xf]
      %v342 = vld [vmem:[%s2 + $0x12c] sm:$0xf]
      %v343 = vld [vmem:[%s2 + $0x130] sm:$0xf]
      %v344 = vld [vmem:[%s2 + $0x134] sm:$0xf]
      %v345 = vld [vmem:[%s2 + $0x138] sm:$0xf]
      %v346 = vld [vmem:[%s2 + $0x13c] sm:$0xf]
      %v347 = vld [vmem:[%s2 + $0x140] sm:$0xf]
      %v348 = vld [vmem:[%s2 + $0x144] sm:$0xf]
      %v349 = vld [vmem:[%s2 + $0x148] sm:$0xf]
      %v350 = vld [vmem:[%s2 + $0x14c] sm:$0xf]
      %v351 = vld [vmem:[%s2 + $0x150] sm:$0xf]
      %v352 = vld [vmem:[%s2 + $0x154] sm:$0xf]
      %v353 = vld [vmem:[%s2 + $0x158] sm:$0xf]
      %v354 = vld [vmem:[%s2 + $0x15c] sm:$0xf]
      %v355 = vld [vmem:[%s2 + $0x160] sm:$0xf]
      %v356 = vld [vmem:[%s2 + $0x164] sm:$0xf]
      %v357 = vld [vmem:[%s2 + $0x168] sm:$0xf]
      %v358 = vld [vmem:[%s2 + $0x16c] sm:$0xf]
      %v359 = vld [vmem:[%s2 + $0x170] sm:$0xf]
      %v360 = vld [vmem:[%s2 + $0x174] sm:$0xf]
      %v361 = vld [vmem:[%s2 + $0x178] sm:$0xf]
      %v362 = vld [vmem:[%s2 + $0x17c] sm:$0xf]
      %v363 = vld [vmem:[%s2 + $0x180] sm:$0xf]
      %v364 = vld [vmem:[%s2 + $0x184] sm:$0xf]
      %v365 = vld [vmem:[%s2 + $0x188] sm:$0xf]
      %v366 = vld [vmem:[%s2 + $0x18c] sm:$0xf]
      %v367 = vld [vmem:[%s2 + $0x190] sm:$0xf]
      %v368 = vld [vmem:[%s2 + $0x194] sm:$0xf]
      %v369 = vld [vmem:[%s2 + $0x198] sm:$0xf]
      %v370 = vld [vmem:[%s2 + $0x19c] sm:$0xf]
      %v371 = vld [vmem:[%s2 + $0x1a0] sm:$0xf]
      %v372 = vld [vmem:[%s2 + $0x1a4] sm:$0xf]
      %v373 = vld [vmem:[%s2 + $0x1a8] sm:$0xf]
      %v374 = vld [vmem:[%s2 + $0x1ac] sm:$0xf]
      %v375 = vld [vmem:[%s2 + $0x1b0] sm:$0xf]
      %v376 = vld [vmem:[%s2 + $0x1b4] sm:$0xf]
      %v377 = vld [vmem:[%s2 + $0x1b8] sm:$0xf]
      %v378 = vld [vmem:[%s2 + $0x1bc] sm:$0xf]
      %v379 = vld [vmem:[%s2 + $0x1c0] sm:$0xf]
      %v380 = vld [vmem:[%s2 + $0x1c4] sm:$0xf]
      %v381 = vld [vmem:[%s2 + $0x1c8] sm:$0xf]
      %v382 = vld [vmem:[%s2 + $0x1cc] sm:$0xf]
      %v383 = vld [vmem:[%s2 + $0x1d0] sm:$0xf]
      %v384 = vld [vmem:[%s2 + $0x1d4] sm:$0xf]
      %v385 = vld [vmem:[%s2 + $0x1d8] sm:$0xf]
      %v386 = vld [vmem:[%s2 + $0x1dc] sm:$0xf]
      %v387 = vld [vmem:[%s2 + $0x1e0] sm:$0xf]
      %v388 = vld [vmem:[%s2 + $0x1e4] sm:$0xf]
      %v389 = vld [vmem:[%s2 + $0x1e8] sm:$0xf]
      %v390 = vld [vmem:[%s2 + $0x1ec] sm:$0xf]
      %v391 = vld [vmem:[%s2 + $0x1f0] sm:$0xf]
      %v392 = vld [vmem:[%s2 + $0x1f4] sm:$0xf]
      %v393 = vld [vmem:[%s2 + $0x1f8] sm:$0xf]
      %v394 = vld [vmem:[%s2 + $0x1fc] sm:$0xf]
      %v395 = vld [vmem:[%s2 + $0x200] sm:$0xf]
      %v396 = vld [vmem:[%s2 + $0x204] sm:$0xf]
      %v397 = vld [vmem:[%s2 + $0x208] sm:$0xf]
      %v398 = vld [vmem:[%s2 + $0x20c] sm:$0xf]
      %v399 = vld [vmem:[%s2 + $0x210] sm:$0xf]
      %v400 = vld [vmem:[%s2 + $0x214] sm:$0xf]
      %v401 = vld [vmem:[%s2 + $0x218] sm:$0xf]
      %v402 = vld [vmem:[%s2 + $0x21c] sm:$0xf]
      %v403 = vld [vmem:[%s2 + $0x220] sm:$0xf]
      %v404 = vld [vmem:[%s2 + $0x224] sm:$0xf]
      %v405 = vld [vmem:[%s2 + $0x228] sm:$0xf]
      %v406 = vld [vmem:[%s2 + $0x22c] sm:$0xf]
      %v407 = vld [vmem:[%s2 + $0x230] sm:$0xf]
      %v408 = vld [vmem:[%s2 + $0x234] sm:$0xf]
      %v409 = vld [vmem:[%s2 + $0x238] sm:$0xf]
      %v410 = vld [vmem:[%s2 + $0x23c] sm:$0xf]
      %v411 = vld [vmem:[%s248] sm:$0xff]
      %v412 = vld [vmem:[%s248 + $0x8] sm:$0xff]
      %v413 = vld [vmem:[%s248 + $0x10] sm:$0xf]
      %v414 = vld [vmem:[%s248 + $0x14] sm:$0xff]
      %v415 = vld [vmem:[%s248 + $0x1c] sm:$0xff]
      %v416 = vld [vmem:[%s248 + $0x24] sm:$0xf]
      %v417 = vld [vmem:[%s3] sm:$0xf]
      %v418 = vld [vmem:[%s3 + $0x4] sm:$0xf]
      %v419 = vld [vmem:[%s3 + $0x8] sm:$0xf]
      %v420 = vld [vmem:[%s3 + $0xc] sm:$0xf]
      %v421 = vld [vmem:[%s3 + $0x10] sm:$0xf]
      %v422 = vld [vmem:[%s3 + $0x14] sm:$0xf]
      %v423 = vld [vmem:[%s3 + $0x18] sm:$0xf]
      %v424 = vld [vmem:[%s3 + $0x1c] sm:$0xf]
      %v425 = vld [vmem:[%s3 + $0x20] sm:$0xf]
      %v426 = vld [vmem:[%s3 + $0x24] sm:$0xf]
      %v427 = vld [vmem:[%s3 + $0x28] sm:$0xf]
      %v428 = vld [vmem:[%s3 + $0x2c] sm:$0xf]
      %v429 = vld [vmem:[%s3 + $0x30] sm:$0xf]
      %v430 = vld [vmem:[%s3 + $0x34] sm:$0xf]
      %v431 = vld [vmem:[%s3 + $0x38] sm:$0xf]
      %v432 = vld [vmem:[%s3 + $0x3c] sm:$0xf]
      %v433 = vld [vmem:[%s3 + $0x40] sm:$0xf]
      %v434 = vld [vmem:[%s3 + $0x44] sm:$0xf]
      %v435 = vld [vmem:[%s3 + $0x48] sm:$0xf]
      %v436 = vld [vmem:[%s3 + $0x4c] sm:$0xf]
      %v437 = vld [vmem:[%s3 + $0x50] sm:$0xf]
      %v438 = vld [vmem:[%s3 + $0x54] sm:$0xf]
      %v439 = vld [vmem:[%s3 + $0x58] sm:$0xf]
      %v440 = vld [vmem:[%s3 + $0x5c] sm:$0xf]
      %v441 = vld [vmem:[%s3 + $0x60] sm:$0xf]
      %v442 = vld [vmem:[%s3 + $0x64] sm:$0xf]
      %v443 = vld [vmem:[%s3 + $0x68] sm:$0xf]
      %v444 = vld [vmem:[%s3 + $0x6c] sm:$0xf]
      %v445 = vld [vmem:[%s3 + $0x70] sm:$0xf]
      %v446 = vld [vmem:[%s3 + $0x74] sm:$0xf]
      %v447 = vld [vmem:[%s3 + $0x78] sm:$0xf]
      %v448 = vld [vmem:[%s3 + $0x7c] sm:$0xf]
      %v449 = vld [vmem:[%s3 + $0x80] sm:$0xf]
      %v450 = vld [vmem:[%s3 + $0x84] sm:$0xf]
      %v451 = vld [vmem:[%s3 + $0x88] sm:$0xf]
      %v452 = vld [vmem:[%s3 + $0x8c] sm:$0xf]
      %v453 = vld [vmem:[%s3 + $0x90] sm:$0xf]
      %v454 = vld [vmem:[%s3 + $0x94] sm:$0xf]
      %v455 = vld [vmem:[%s3 + $0x98] sm:$0xf]
      %v456 = vld [vmem:[%s3 + $0x9c] sm:$0xf]
      %v457 = vld [vmem:[%s3 + $0xa0] sm:$0xf]
      %v458 = vld [vmem:[%s3 + $0xa4] sm:$0xf]
      %v459 = vld [vmem:[%s3 + $0xa8] sm:$0xf]
      %v460 = vld [vmem:[%s3 + $0xac] sm:$0xf]
      %v461 = vld [vmem:[%s3 + $0xb0] sm:$0xf]
      %v462 = vld [vmem:[%s3 + $0xb4] sm:$0xf]
      %v463 = vld [vmem:[%s3 + $0xb8] sm:$0xf]
      %v464 = vld [vmem:[%s3 + $0xbc] sm:$0xf]
      %v465 = vld [vmem:[%s3 + $0xc0] sm:$0xf]
      %v466 = vld [vmem:[%s3 + $0xc4] sm:$0xf]
      %v467 = vld [vmem:[%s3 + $0xc8] sm:$0xf]
      %v468 = vld [vmem:[%s3 + $0xcc] sm:$0xf]
      %v469 = vld [vmem:[%s3 + $0xd0] sm:$0xf]
      %v470 = vld [vmem:[%s3 + $0xd4] sm:$0xf]
      %v471 = vld [vmem:[%s3 + $0xd8] sm:$0xf]
      %v472 = vld [vmem:[%s3 + $0xdc] sm:$0xf]
      %v473 = vld [vmem:[%s3 + $0xe0] sm:$0xf]
      %v474 = vld [vmem:[%s3 + $0xe4] sm:$0xf]
      %v475 = vld [vmem:[%s3 + $0xe8] sm:$0xf]
      %v476 = vld [vmem:[%s3 + $0xec] sm:$0xf]
      %v477 = vld [vmem:[%s3 + $0xf0] sm:$0xf]
      %v478 = vld [vmem:[%s3 + $0xf4] sm:$0xf]
      %v479 = vld [vmem:[%s3 + $0xf8] sm:$0xf]
      %v480 = vld [vmem:[%s3 + $0xfc] sm:$0xf]
      %v481 = vld [vmem:[%s3 + $0x100] sm:$0xf]
      %v482 = vld [vmem:[%s3 + $0x104] sm:$0xf]
      %v483 = vld [vmem:[%s3 + $0x108] sm:$0xf]
      %v484 = vld [vmem:[%s3 + $0x10c] sm:$0xf]
      %v485 = vld [vmem:[%s3 + $0x110] sm:$0xf]
      %v486 = vld [vmem:[%s3 + $0x114] sm:$0xf]
      %v487 = vld [vmem:[%s3 + $0x118] sm:$0xf]
      %v488 = vld [vmem:[%s3 + $0x11c] sm:$0xf]
      %v495 = vunpack.c.l.b16 %v411
      %v496 = vunpack.c.h.b16 %v411
      %v497 = vunpack.c.l.b16 %v412
      %v498 = vunpack.c.h.b16 %v412
      %v499 = vunpack.c.l.b16 %v413
      %v500 = vunpack.c.l.b16 %v414
      %v501 = vunpack.c.h.b16 %v414
      %v502 = vunpack.c.l.b16 %v415
      %v503 = vunpack.c.h.b16 %v415
      %v504 = vunpack.c.l.b16 %v416
      %v505 = vpack.c.b16 %v500, %v495
      %v506 = vpack.c.b16 %v501, %v496
      %v507 = vpack.c.b16 %v502, %v497
      %v508 = vpack.c.b16 %v503, %v498
      %v509 = vpack.c.b16 %v504, %v499
      %v586 = vunpack.c.l.b16 %v417
      %v587 = vunpack.c.l.b16 %v418
      %v588 = vunpack.c.l.b16 %v419
      %v589 = vunpack.c.l.b16 %v420
      %v590 = vunpack.c.l.b16 %v421
      %v591 = vunpack.c.l.b16 %v422
      %v592 = vunpack.c.l.b16 %v423
      %v593 = vunpack.c.l.b16 %v424
      %v594 = vunpack.c.l.b16 %v425
      %v595 = vunpack.c.l.b16 %v426
      %v596 = vunpack.c.l.b16 %v427
      %v597 = vunpack.c.l.b16 %v428
      %v598 = vunpack.c.l.b16 %v429
      %v599 = vunpack.c.l.b16 %v430
      %v600 = vunpack.c.l.b16 %v431
      %v601 = vunpack.c.l.b16 %v432
      %v602 = vunpack.c.l.b16 %v433
      %v603 = vunpack.c.l.b16 %v434
      %v604 = vunpack.c.l.b16 %v435
      %v605 = vunpack.c.l.b16 %v436
      %v606 = vunpack.c.l.b16 %v437
      %v607 = vunpack.c.l.b16 %v438
      %v608 = vunpack.c.l.b16 %v439
      %v609 = vunpack.c.l.b16 %v440
      %v610 = vunpack.c.l.b16 %v441
      %v611 = vunpack.c.l.b16 %v442
      %v612 = vunpack.c.l.b16 %v443
      %v613 = vunpack.c.l.b16 %v444
      %v614 = vunpack.c.l.b16 %v445
      %v615 = vunpack.c.l.b16 %v446
      %v616 = vunpack.c.l.b16 %v447
      %v617 = vunpack.c.l.b16 %v448
      %v618 = vunpack.c.l.b16 %v449
      %v619 = vunpack.c.l.b16 %v450
      %v620 = vunpack.c.l.b16 %v451
      %v621 = vunpack.c.l.b16 %v452
      %v622 = vunpack.c.l.b16 %v453
      %v623 = vunpack.c.l.b16 %v454
      %v624 = vunpack.c.l.b16 %v455
      %v625 = vunpack.c.l.b16 %v456
      %v626 = vunpack.c.l.b16 %v457
      %v627 = vunpack.c.l.b16 %v458
      %v628 = vunpack.c.l.b16 %v459
      %v629 = vunpack.c.l.b16 %v460
      %v630 = vunpack.c.l.b16 %v461
      %v631 = vunpack.c.l.b16 %v462
      %v632 = vunpack.c.l.b16 %v463
      %v633 = vunpack.c.l.b16 %v464
      %v634 = vunpack.c.l.b16 %v465
      %v635 = vunpack.c.l.b16 %v466
      %v636 = vunpack.c.l.b16 %v467
      %v637 = vunpack.c.l.b16 %v468
      %v638 = vunpack.c.l.b16 %v469
      %v639 = vunpack.c.l.b16 %v470
      %v640 = vunpack.c.l.b16 %v471
      %v641 = vunpack.c.l.b16 %v472
      %v642 = vunpack.c.l.b16 %v473
      %v643 = vunpack.c.l.b16 %v474
      %v644 = vunpack.c.l.b16 %v475
      %v645 = vunpack.c.l.b16 %v476
      %v646 = vunpack.c.l.b16 %v477
      %v647 = vunpack.c.l.b16 %v478
      %v648 = vunpack.c.l.b16 %v479
      %v649 = vunpack.c.l.b16 %v480
      %v650 = vunpack.c.l.b16 %v481
      %v651 = vunpack.c.l.b16 %v482
      %v652 = vunpack.c.l.b16 %v483
      %v653 = vunpack.c.l.b16 %v484
      %v654 = vunpack.c.l.b16 %v485
      %v655 = vunpack.c.l.b16 %v486
      %v656 = vunpack.c.l.b16 %v487
      %v657 = vunpack.c.l.b16 %v488
      %v658 = vpack.c.b16 %v587, %v586
      %v659 = vpack.c.b16 %v589, %v588
      %v660 = vpack.c.b16 %v591, %v590
      %v661 = vpack.c.b16 %v593, %v592
      %v662 = vpack.c.b16 %v595, %v594
      %v663 = vpack.c.b16 %v597, %v596
      %v664 = vpack.c.b16 %v599, %v598
      %v665 = vpack.c.b16 %v601, %v600
      %v666 = vpack.c.b16 %v603, %v602
      %v667 = vpack.c.b16 %v605, %v604
      %v668 = vpack.c.b16 %v607, %v606
      %v669 = vpack.c.b16 %v609, %v608
      %v670 = vpack.c.b16 %v611, %v610
      %v671 = vpack.c.b16 %v613, %v612
      %v672 = vpack.c.b16 %v615, %v614
      %v673 = vpack.c.b16 %v617, %v616
      %v674 = vpack.c.b16 %v619, %v618
      %v675 = vpack.c.b16 %v621, %v620
      %v676 = vpack.c.b16 %v623, %v622
      %v677 = vpack.c.b16 %v625, %v624
      %v678 = vpack.c.b16 %v627, %v626
      %v679 = vpack.c.b16 %v629, %v628
      %v680 = vpack.c.b16 %v631, %v630
      %v681 = vpack.c.b16 %v633, %v632
      %v682 = vpack.c.b16 %v635, %v634
      %v683 = vpack.c.b16 %v637, %v636
      %v684 = vpack.c.b16 %v639, %v638
      %v685 = vpack.c.b16 %v641, %v640
      %v686 = vpack.c.b16 %v643, %v642
      %v687 = vpack.c.b16 %v645, %v644
      %v688 = vpack.c.b16 %v647, %v646
      %v689 = vpack.c.b16 %v649, %v648
      %v690 = vpack.c.b16 %v651, %v650
      %v691 = vpack.c.b16 %v653, %v652
      %v692 = vpack.c.b16 %v655, %v654
      %v693 = vpack.c.b16 %v657, %v656
      %vm730 = vcmask 523264
      %v732 = vsel %vm730, %v509, 0
      %734 = vmatprep.subr.bf16.mxu0 0
      %735 = vmatpush1.bf16.msra.mxu0 %v665
      %736 = vmatprep.subr.bf16.mxu0 0
      %737 = vmatpush1.bf16.msra.mxu0 %v664
      %738 = vmatprep.subr.bf16.mxu0 0
      %739 = vmatpush1.bf16.msra.mxu0 %v663
      %740 = vmatprep.subr.bf16.mxu0 0
      %741 = vmatpush1.bf16.msra.mxu0 %v662
      %742 = vmatprep.subr.bf16.mxu0 0
      %743 = vmatpush1.bf16.msra.mxu0 %v661
      %744 = vmatprep.subr.bf16.mxu0 0
      %745 = vmatpush1.bf16.msra.mxu0 %v660
      %746 = vmatprep.subr.bf16.mxu0 0
      %747 = vmatpush1.bf16.msra.mxu0 %v659
      %748 = vmatprep.subr.bf16.mxu0 0
      %749 = vmatpush1.bf16.msra.mxu0 %v658
      %750 = vmatprep.subr.bf16.mxu0 0
      %751 = vmatpush2.bf16.msra.mxu0 %v673
      %752 = vmatprep.subr.bf16.mxu0 0
      %753 = vmatpush2.bf16.msra.mxu0 %v672
      %754 = vmatprep.subr.bf16.mxu0 0
      %755 = vmatpush2.bf16.msra.mxu0 %v671
      %756 = vmatprep.subr.bf16.mxu0 0
      %757 = vmatpush2.bf16.msra.mxu0 %v670
      %758 = vmatprep.subr.bf16.mxu0 0
      %759 = vmatpush2.bf16.msra.mxu0 %v669
      %760 = vmatprep.subr.bf16.mxu0 0
      %761 = vmatpush2.bf16.msra.mxu0 %v668
      %762 = vmatprep.subr.bf16.mxu0 0
      %763 = vmatpush2.bf16.msra.mxu0 %v667
      %764 = vmatprep.subr.bf16.mxu0 0
      %765 = vmatpush2.bf16.msra.mxu0 %v666
      %766 = vmatprep.mubr.bf16.mxu0 %v506
      %767 = vmatmul.mubr.bf16.gmra.mxu0 %v505
      %v768 = vpop.f32.mrf.mxu0
      %v769 = vadd.f32 0.0, %v768
      %v770 = vpop.f32.mrf.mxu0
      %v771 = vpop.f32.mrf.mxu0
      %v772 = vadd.f32 0.0, %v771
      %v773 = vpop.f32.mrf.mxu0
      %774 = vdwg.mxu0
      %775 = vmatprep.subr.bf16.mxu0 0
      %776 = vmatpush1.bf16.msra.mxu0 %v681
      %777 = vmatprep.subr.bf16.mxu0 0
      %778 = vmatpush1.bf16.msra.mxu0 %v680
      %779 = vmatprep.subr.bf16.mxu0 0
      %780 = vmatpush1.bf16.msra.mxu0 %v679
      %781 = vmatprep.subr.bf16.mxu0 0
      %782 = vmatpush1.bf16.msra.mxu0 %v678
      %783 = vmatprep.subr.bf16.mxu0 0
      %784 = vmatpush1.bf16.msra.mxu0 %v677
      %785 = vmatprep.subr.bf16.mxu0 0
      %786 = vmatpush1.bf16.msra.mxu0 %v676
      %787 = vmatprep.subr.bf16.mxu0 0
      %788 = vmatpush1.bf16.msra.mxu0 %v675
      %789 = vmatprep.subr.bf16.mxu0 0
      %790 = vmatpush1.bf16.msra.mxu0 %v674
      %791 = vmatprep.subr.bf16.mxu0 0
      %792 = vmatpush2.bf16.msra.mxu0 %v689
      %793 = vmatprep.subr.bf16.mxu0 0
      %794 = vmatpush2.bf16.msra.mxu0 %v688
      %795 = vmatprep.subr.bf16.mxu0 0
      %796 = vmatpush2.bf16.msra.mxu0 %v687
      %797 = vmatprep.subr.bf16.mxu0 0
      %798 = vmatpush2.bf16.msra.mxu0 %v686
      %799 = vmatprep.subr.bf16.mxu0 0
      %800 = vmatpush2.bf16.msra.mxu0 %v685
      %801 = vmatprep.subr.bf16.mxu0 0
      %802 = vmatpush2.bf16.msra.mxu0 %v684
      %803 = vmatprep.subr.bf16.mxu0 0
      %804 = vmatpush2.bf16.msra.mxu0 %v683
      %805 = vmatprep.subr.bf16.mxu0 0
      %806 = vmatpush2.bf16.msra.mxu0 %v682
      %807 = vmatprep.mubr.bf16.mxu0 %v508
      %808 = vmatmul.mubr.bf16.gmra.mxu0 %v507
      %v809 = vpop.f32.mrf.mxu0
      %v810 = vadd.f32 %v769, %v809
      %v811 = vpop.f32.mrf.mxu0
      %v812 = vpop.f32.mrf.mxu0
      %v813 = vadd.f32 %v772, %v812
      %v814 = vpop.f32.mrf.mxu0
      %815 = vdwg.mxu0
      %816 = vmatprep.subr.bf16.mxu0 0
      %817 = vmatpush1.bf16.msra.mxu0 0
      %818 = vmatprep.subr.bf16.mxu0 0
      %819 = vmatpush1.bf16.msra.mxu0 0
      %820 = vmatprep.subr.bf16.mxu0 0
      %821 = vmatpush1.bf16.msra.mxu0 0
      %822 = vmatprep.subr.bf16.mxu0 0
      %823 = vmatpush1.bf16.msra.mxu0 0
      %824 = vmatprep.subr.bf16.mxu0 0
      %825 = vmatpush1.bf16.msra.mxu0 %v693
      %826 = vmatprep.subr.bf16.mxu0 0
      %827 = vmatpush1.bf16.msra.mxu0 %v692
      %828 = vmatprep.subr.bf16.mxu0 0
      %829 = vmatpush1.bf16.msra.mxu0 %v691
      %830 = vmatprep.subr.bf16.mxu0 0
      %831 = vmatpush1.bf16.msra.mxu0 %v690
      %832 = vmatprep.subr.bf16.mxu0 0
      %833 = vmatpush2.bf16.msra.mxu0 0
      %834 = vmatprep.subr.bf16.mxu0 0
      %835 = vmatpush2.bf16.msra.mxu0 0
      %836 = vmatprep.subr.bf16.mxu0 0
      %837 = vmatpush2.bf16.msra.mxu0 0
      %838 = vmatprep.subr.bf16.mxu0 0
      %839 = vmatpush2.bf16.msra.mxu0 0
      %840 = vmatprep.subr.bf16.mxu0 0
      %841 = vmatpush2.bf16.msra.mxu0 0
      %842 = vmatprep.subr.bf16.mxu0 0
      %843 = vmatpush2.bf16.msra.mxu0 0
      %844 = vmatprep.subr.bf16.mxu0 0
      %845 = vmatpush2.bf16.msra.mxu0 0
      %846 = vmatprep.subr.bf16.mxu0 0
      %847 = vmatpush2.bf16.msra.mxu0 0
      %848 = vmatprep.mubr.bf16.mxu0 0
      %849 = vmatmul.mubr.bf16.gmra.mxu0 %v732
      %v850 = vpop.f32.mrf.mxu0
      %v851 = vadd.f32 %v810, %v850
      %v852 = vpop.f32.mrf.mxu0
      %v853 = vpop.f32.mrf.mxu0
      %v854 = vadd.f32 %v813, %v853
      %v855 = vpop.f32.mrf.mxu0
      %856 = vdwg.mxu0
      %v867 = vunpack.c.l.b16 %v257
      %v868 = vunpack.c.h.b16 %v257
      %v869 = vunpack.c.l.b16 %v258
      %v870 = vunpack.c.h.b16 %v258
      %v871 = vunpack.c.l.b16 %v259
      %v872 = vunpack.c.h.b16 %v259
      %v873 = vunpack.c.l.b16 %v260
      %v874 = vunpack.c.h.b16 %v260
      %v875 = vunpack.c.l.b16 %v261
      %v876 = vunpack.c.l.b16 %v262
      %v877 = vunpack.c.h.b16 %v262
      %v878 = vunpack.c.l.b16 %v263
      %v879 = vunpack.c.h.b16 %v263
      %v880 = vunpack.c.l.b16 %v264
      %v881 = vunpack.c.h.b16 %v264
      %v882 = vunpack.c.l.b16 %v265
      %v883 = vunpack.c.h.b16 %v265
      %v884 = vunpack.c.l.b16 %v266
      %v885 = vpack.c.b16 %v876, %v867
      %v886 = vpack.c.b16 %v877, %v868
      %v887 = vpack.c.b16 %v878, %v869
      %v888 = vpack.c.b16 %v879, %v870
      %v889 = vpack.c.b16 %v880, %v871
      %v890 = vpack.c.b16 %v881, %v872
      %v891 = vpack.c.b16 %v882, %v873
      %v892 = vpack.c.b16 %v883, %v874
      %v893 = vpack.c.b16 %v884, %v875
      %v1047 = vunpack.c.l.b16 %v267
      %v1048 = vunpack.c.l.b16 %v268
      %v1049 = vunpack.c.l.b16 %v269
      %v1050 = vunpack.c.l.b16 %v270
      %v1051 = vunpack.c.l.b16 %v271
      %v1052 = vunpack.c.l.b16 %v272
      %v1053 = vunpack.c.l.b16 %v273
      %v1054 = vunpack.c.l.b16 %v274
      %v1055 = vunpack.c.l.b16 %v275
      %v1056 = vunpack.c.l.b16 %v276
      %v1057 = vunpack.c.l.b16 %v277
      %v1058 = vunpack.c.l.b16 %v278
      %v1059 = vunpack.c.l.b16 %v279
      %v1060 = vunpack.c.l.b16 %v280
      %v1061 = vunpack.c.l.b16 %v281
      %v1062 = vunpack.c.l.b16 %v282
      %v1063 = vunpack.c.l.b16 %v283
      %v1064 = vunpack.c.l.b16 %v284
      %v1065 = vunpack.c.l.b16 %v285
      %v1066 = vunpack.c.l.b16 %v286
      %v1067 = vunpack.c.l.b16 %v287
      %v1068 = vunpack.c.l.b16 %v288
      %v1069 = vunpack.c.l.b16 %v289
      %v1070 = vunpack.c.l.b16 %v290
      %v1071 = vunpack.c.l.b16 %v291
      %v1072 = vunpack.c.l.b16 %v292
      %v1073 = vunpack.c.l.b16 %v293
      %v1074 = vunpack.c.l.b16 %v294
      %v1075 = vunpack.c.l.b16 %v295
      %v1076 = vunpack.c.l.b16 %v296
      %v1077 = vunpack.c.l.b16 %v297
      %v1078 = vunpack.c.l.b16 %v298
      %v1079 = vunpack.c.l.b16 %v299
      %v1080 = vunpack.c.l.b16 %v300
      %v1081 = vunpack.c.l.b16 %v301
      %v1082 = vunpack.c.l.b16 %v302
      %v1083 = vunpack.c.l.b16 %v303
      %v1084 = vunpack.c.l.b16 %v304
      %v1085 = vunpack.c.l.b16 %v305
      %v1086 = vunpack.c.l.b16 %v306
      %v1087 = vunpack.c.l.b16 %v307
      %v1088 = vunpack.c.l.b16 %v308
      %v1089 = vunpack.c.l.b16 %v309
      %v1090 = vunpack.c.l.b16 %v310
      %v1091 = vunpack.c.l.b16 %v311
      %v1092 = vunpack.c.l.b16 %v312
      %v1093 = vunpack.c.l.b16 %v313
      %v1094 = vunpack.c.l.b16 %v314
      %v1095 = vunpack.c.l.b16 %v315
      %v1096 = vunpack.c.l.b16 %v316
      %v1097 = vunpack.c.l.b16 %v317
      %v1098 = vunpack.c.l.b16 %v318
      %v1099 = vunpack.c.l.b16 %v319
      %v1100 = vunpack.c.l.b16 %v320
      %v1101 = vunpack.c.l.b16 %v321
      %v1102 = vunpack.c.l.b16 %v322
      %v1103 = vunpack.c.l.b16 %v323
      %v1104 = vunpack.c.l.b16 %v324
      %v1105 = vunpack.c.l.b16 %v325
      %v1106 = vunpack.c.l.b16 %v326
      %v1107 = vunpack.c.l.b16 %v327
      %v1108 = vunpack.c.l.b16 %v328
      %v1109 = vunpack.c.l.b16 %v329
      %v1110 = vunpack.c.l.b16 %v330
      %v1111 = vunpack.c.l.b16 %v331
      %v1112 = vunpack.c.l.b16 %v332
      %v1113 = vunpack.c.l.b16 %v333
      %v1114 = vunpack.c.l.b16 %v334
      %v1115 = vunpack.c.l.b16 %v335
      %v1116 = vunpack.c.l.b16 %v336
      %v1117 = vunpack.c.l.b16 %v337
      %v1118 = vunpack.c.l.b16 %v338
      %v1119 = vunpack.c.l.b16 %v339
      %v1120 = vunpack.c.l.b16 %v340
      %v1121 = vunpack.c.l.b16 %v341
      %v1122 = vunpack.c.l.b16 %v342
      %v1123 = vunpack.c.l.b16 %v343
      %v1124 = vunpack.c.l.b16 %v344
      %v1125 = vunpack.c.l.b16 %v345
      %v1126 = vunpack.c.l.b16 %v346
      %v1127 = vunpack.c.l.b16 %v347
      %v1128 = vunpack.c.l.b16 %v348
      %v1129 = vunpack.c.l.b16 %v349
      %v1130 = vunpack.c.l.b16 %v350
      %v1131 = vunpack.c.l.b16 %v351
      %v1132 = vunpack.c.l.b16 %v352
      %v1133 = vunpack.c.l.b16 %v353
      %v1134 = vunpack.c.l.b16 %v354
      %v1135 = vunpack.c.l.b16 %v355
      %v1136 = vunpack.c.l.b16 %v356
      %v1137 = vunpack.c.l.b16 %v357
      %v1138 = vunpack.c.l.b16 %v358
      %v1139 = vunpack.c.l.b16 %v359
      %v1140 = vunpack.c.l.b16 %v360
      %v1141 = vunpack.c.l.b16 %v361
      %v1142 = vunpack.c.l.b16 %v362
      %v1143 = vunpack.c.l.b16 %v363
      %v1144 = vunpack.c.l.b16 %v364
      %v1145 = vunpack.c.l.b16 %v365
      %v1146 = vunpack.c.l.b16 %v366
      %v1147 = vunpack.c.l.b16 %v367
      %v1148 = vunpack.c.l.b16 %v368
      %v1149 = vunpack.c.l.b16 %v369
      %v1150 = vunpack.c.l.b16 %v370
      %v1151 = vunpack.c.l.b16 %v371
      %v1152 = vunpack.c.l.b16 %v372
      %v1153 = vunpack.c.l.b16 %v373
      %v1154 = vunpack.c.l.b16 %v374
      %v1155 = vunpack.c.l.b16 %v375
      %v1156 = vunpack.c.l.b16 %v376
      %v1157 = vunpack.c.l.b16 %v377
      %v1158 = vunpack.c.l.b16 %v378
      %v1159 = vunpack.c.l.b16 %v379
      %v1160 = vunpack.c.l.b16 %v380
      %v1161 = vunpack.c.l.b16 %v381
      %v1162 = vunpack.c.l.b16 %v382
      %v1163 = vunpack.c.l.b16 %v383
      %v1164 = vunpack.c.l.b16 %v384
      %v1165 = vunpack.c.l.b16 %v385
      %v1166 = vunpack.c.l.b16 %v386
      %v1167 = vunpack.c.l.b16 %v387
      %v1168 = vunpack.c.l.b16 %v388
      %v1169 = vunpack.c.l.b16 %v389
      %v1170 = vunpack.c.l.b16 %v390
      %v1171 = vunpack.c.l.b16 %v391
      %v1172 = vunpack.c.l.b16 %v392
      %v1173 = vunpack.c.l.b16 %v393
      %v1174 = vunpack.c.l.b16 %v394
      %v1175 = vunpack.c.l.b16 %v395
      %v1176 = vunpack.c.l.b16 %v396
      %v1177 = vunpack.c.l.b16 %v397
      %v1178 = vunpack.c.l.b16 %v398
      %v1179 = vunpack.c.l.b16 %v399
      %v1180 = vunpack.c.l.b16 %v400
      %v1181 = vunpack.c.l.b16 %v401
      %v1182 = vunpack.c.l.b16 %v402
      %v1183 = vunpack.c.l.b16 %v403
      %v1184 = vunpack.c.l.b16 %v404
      %v1185 = vunpack.c.l.b16 %v405
      %v1186 = vunpack.c.l.b16 %v406
      %v1187 = vunpack.c.l.b16 %v407
      %v1188 = vunpack.c.l.b16 %v408
      %v1189 = vunpack.c.l.b16 %v409
      %v1190 = vunpack.c.l.b16 %v410
      %v1191 = vpack.c.b16 %v1048, %v1047
      %v1192 = vpack.c.b16 %v1050, %v1049
      %v1193 = vpack.c.b16 %v1052, %v1051
      %v1194 = vpack.c.b16 %v1054, %v1053
      %v1195 = vpack.c.b16 %v1056, %v1055
      %v1196 = vpack.c.b16 %v1058, %v1057
      %v1197 = vpack.c.b16 %v1060, %v1059
      %v1198 = vpack.c.b16 %v1062, %v1061
      %v1199 = vpack.c.b16 %v1064, %v1063
      %v1200 = vpack.c.b16 %v1066, %v1065
      %v1201 = vpack.c.b16 %v1068, %v1067
      %v1202 = vpack.c.b16 %v1070, %v1069
      %v1203 = vpack.c.b16 %v1072, %v1071
      %v1204 = vpack.c.b16 %v1074, %v1073
      %v1205 = vpack.c.b16 %v1076, %v1075
      %v1206 = vpack.c.b16 %v1078, %v1077
      %v1207 = vpack.c.b16 %v1080, %v1079
      %v1208 = vpack.c.b16 %v1082, %v1081
      %v1209 = vpack.c.b16 %v1084, %v1083
      %v1210 = vpack.c.b16 %v1086, %v1085
      %v1211 = vpack.c.b16 %v1088, %v1087
      %v1212 = vpack.c.b16 %v1090, %v1089
      %v1213 = vpack.c.b16 %v1092, %v1091
      %v1214 = vpack.c.b16 %v1094, %v1093
      %v1215 = vpack.c.b16 %v1096, %v1095
      %v1216 = vpack.c.b16 %v1098, %v1097
      %v1217 = vpack.c.b16 %v1100, %v1099
      %v1218 = vpack.c.b16 %v1102, %v1101
      %v1219 = vpack.c.b16 %v1104, %v1103
      %v1220 = vpack.c.b16 %v1106, %v1105
      %v1221 = vpack.c.b16 %v1108, %v1107
      %v1222 = vpack.c.b16 %v1110, %v1109
      %v1223 = vpack.c.b16 %v1112, %v1111
      %v1224 = vpack.c.b16 %v1114, %v1113
      %v1225 = vpack.c.b16 %v1116, %v1115
      %v1226 = vpack.c.b16 %v1118, %v1117
      %v1227 = vpack.c.b16 %v1120, %v1119
      %v1228 = vpack.c.b16 %v1122, %v1121
      %v1229 = vpack.c.b16 %v1124, %v1123
      %v1230 = vpack.c.b16 %v1126, %v1125
      %v1231 = vpack.c.b16 %v1128, %v1127
      %v1232 = vpack.c.b16 %v1130, %v1129
      %v1233 = vpack.c.b16 %v1132, %v1131
      %v1234 = vpack.c.b16 %v1134, %v1133
      %v1235 = vpack.c.b16 %v1136, %v1135
      %v1236 = vpack.c.b16 %v1138, %v1137
      %v1237 = vpack.c.b16 %v1140, %v1139
      %v1238 = vpack.c.b16 %v1142, %v1141
      %v1239 = vpack.c.b16 %v1144, %v1143
      %v1240 = vpack.c.b16 %v1146, %v1145
      %v1241 = vpack.c.b16 %v1148, %v1147
      %v1242 = vpack.c.b16 %v1150, %v1149
      %v1243 = vpack.c.b16 %v1152, %v1151
      %v1244 = vpack.c.b16 %v1154, %v1153
      %v1245 = vpack.c.b16 %v1156, %v1155
      %v1246 = vpack.c.b16 %v1158, %v1157
      %v1247 = vpack.c.b16 %v1160, %v1159
      %v1248 = vpack.c.b16 %v1162, %v1161
      %v1249 = vpack.c.b16 %v1164, %v1163
      %v1250 = vpack.c.b16 %v1166, %v1165
      %v1251 = vpack.c.b16 %v1168, %v1167
      %v1252 = vpack.c.b16 %v1170, %v1169
      %v1253 = vpack.c.b16 %v1172, %v1171
      %v1254 = vpack.c.b16 %v1174, %v1173
      %v1255 = vpack.c.b16 %v1176, %v1175
      %v1256 = vpack.c.b16 %v1178, %v1177
      %v1257 = vpack.c.b16 %v1180, %v1179
      %v1258 = vpack.c.b16 %v1182, %v1181
      %v1259 = vpack.c.b16 %v1184, %v1183
      %v1260 = vpack.c.b16 %v1186, %v1185
      %v1261 = vpack.c.b16 %v1188, %v1187
      %v1262 = vpack.c.b16 %v1190, %v1189
      %1335 = vmatprep.subr.bf16.mxu0 0
      %1336 = vmatpush1.bf16.msra.mxu0 %v1198
      %1337 = vmatprep.subr.bf16.mxu0 0
      %1338 = vmatpush1.bf16.msra.mxu0 %v1197
      %1339 = vmatprep.subr.bf16.mxu0 0
      %1340 = vmatpush1.bf16.msra.mxu0 %v1196
      %1341 = vmatprep.subr.bf16.mxu0 0
      %1342 = vmatpush1.bf16.msra.mxu0 %v1195
      %1343 = vmatprep.subr.bf16.mxu0 0
      %1344 = vmatpush1.bf16.msra.mxu0 %v1194
      %1345 = vmatprep.subr.bf16.mxu0 0
      %1346 = vmatpush1.bf16.msra.mxu0 %v1193
      %1347 = vmatprep.subr.bf16.mxu0 0
      %1348 = vmatpush1.bf16.msra.mxu0 %v1192
      %1349 = vmatprep.subr.bf16.mxu0 0
      %1350 = vmatpush1.bf16.msra.mxu0 %v1191
      %1351 = vmatprep.subr.bf16.mxu0 0
      %1352 = vmatpush2.bf16.msra.mxu0 %v1206
      %1353 = vmatprep.subr.bf16.mxu0 0
      %1354 = vmatpush2.bf16.msra.mxu0 %v1205
      %1355 = vmatprep.subr.bf16.mxu0 0
      %1356 = vmatpush2.bf16.msra.mxu0 %v1204
      %1357 = vmatprep.subr.bf16.mxu0 0
      %1358 = vmatpush2.bf16.msra.mxu0 %v1203
      %1359 = vmatprep.subr.bf16.mxu0 0
      %1360 = vmatpush2.bf16.msra.mxu0 %v1202
      %1361 = vmatprep.subr.bf16.mxu0 0
      %1362 = vmatpush2.bf16.msra.mxu0 %v1201
      %1363 = vmatprep.subr.bf16.mxu0 0
      %1364 = vmatpush2.bf16.msra.mxu0 %v1200
      %1365 = vmatprep.subr.bf16.mxu0 0
      %1366 = vmatpush2.bf16.msra.mxu0 %v1199
      %1367 = vmatprep.mubr.bf16.mxu0 %v886
      %1368 = vmatmul.mubr.bf16.gmra.mxu0 %v885
      %v1369 = vpop.f32.mrf.mxu0
      %v1370 = vadd.f32 %v851, %v1369
      %v1371 = vpop.f32.mrf.mxu0
      %v1372 = vpop.f32.mrf.mxu0
      %v1373 = vadd.f32 %v854, %v1372
      %v1374 = vpop.f32.mrf.mxu0
      %1375 = vdwg.mxu0
      %1376 = vmatprep.subr.bf16.mxu0 0
      %1377 = vmatpush1.bf16.msra.mxu0 %v1214
      %1378 = vmatprep.subr.bf16.mxu0 0
      %1379 = vmatpush1.bf16.msra.mxu0 %v1213
      %1380 = vmatprep.subr.bf16.mxu0 0
      %1381 = vmatpush1.bf16.msra.mxu0 %v1212
      %1382 = vmatprep.subr.bf16.mxu0 0
      %1383 = vmatpush1.bf16.msra.mxu0 %v1211
      %1384 = vmatprep.subr.bf16.mxu0 0
      %1385 = vmatpush1.bf16.msra.mxu0 %v1210
      %1386 = vmatprep.subr.bf16.mxu0 0
      %1387 = vmatpush1.bf16.msra.mxu0 %v1209
      %1388 = vmatprep.subr.bf16.mxu0 0
      %1389 = vmatpush1.bf16.msra.mxu0 %v1208
      %1390 = vmatprep.subr.bf16.mxu0 0
      %1391 = vmatpush1.bf16.msra.mxu0 %v1207
      %1392 = vmatprep.subr.bf16.mxu0 0
      %1393 = vmatpush2.bf16.msra.mxu0 %v1222
      %1394 = vmatprep.subr.bf16.mxu0 0
      %1395 = vmatpush2.bf16.msra.mxu0 %v1221
      %1396 = vmatprep.subr.bf16.mxu0 0
      %1397 = vmatpush2.bf16.msra.mxu0 %v1220
      %1398 = vmatprep.subr.bf16.mxu0 0
      %1399 = vmatpush2.bf16.msra.mxu0 %v1219
      %1400 = vmatprep.subr.bf16.mxu0 0
      %1401 = vmatpush2.bf16.msra.mxu0 %v1218
      %1402 = vmatprep.subr.bf16.mxu0 0
      %1403 = vmatpush2.bf16.msra.mxu0 %v1217
      %1404 = vmatprep.subr.bf16.mxu0 0
      %1405 = vmatpush2.bf16.msra.mxu0 %v1216
      %1406 = vmatprep.subr.bf16.mxu0 0
      %1407 = vmatpush2.bf16.msra.mxu0 %v1215
      %1408 = vmatprep.mubr.bf16.mxu0 %v888
      %1409 = vmatmul.mubr.bf16.gmra.mxu0 %v887
      %v1410 = vpop.f32.mrf.mxu0
      %v1411 = vadd.f32 %v1370, %v1410
      %v1412 = vpop.f32.mrf.mxu0
      %v1413 = vpop.f32.mrf.mxu0
      %v1414 = vadd.f32 %v1373, %v1413
      %v1415 = vpop.f32.mrf.mxu0
      %1416 = vdwg.mxu0
      %1417 = vmatprep.subr.bf16.mxu0 0
      %1418 = vmatpush1.bf16.msra.mxu0 %v1230
      %1419 = vmatprep.subr.bf16.mxu0 0
      %1420 = vmatpush1.bf16.msra.mxu0 %v1229
      %1421 = vmatprep.subr.bf16.mxu0 0
      %1422 = vmatpush1.bf16.msra.mxu0 %v1228
      %1423 = vmatprep.subr.bf16.mxu0 0
      %1424 = vmatpush1.bf16.msra.mxu0 %v1227
      %1425 = vmatprep.subr.bf16.mxu0 0
      %1426 = vmatpush1.bf16.msra.mxu0 %v1226
      %1427 = vmatprep.subr.bf16.mxu0 0
      %1428 = vmatpush1.bf16.msra.mxu0 %v1225
      %1429 = vmatprep.subr.bf16.mxu0 0
      %1430 = vmatpush1.bf16.msra.mxu0 %v1224
      %1431 = vmatprep.subr.bf16.mxu0 0
      %1432 = vmatpush1.bf16.msra.mxu0 %v1223
      %1433 = vmatprep.subr.bf16.mxu0 0
      %1434 = vmatpush2.bf16.msra.mxu0 %v1238
      %1435 = vmatprep.subr.bf16.mxu0 0
      %1436 = vmatpush2.bf16.msra.mxu0 %v1237
      %1437 = vmatprep.subr.bf16.mxu0 0
      %1438 = vmatpush2.bf16.msra.mxu0 %v1236
      %1439 = vmatprep.subr.bf16.mxu0 0
      %1440 = vmatpush2.bf16.msra.mxu0 %v1235
      %1441 = vmatprep.subr.bf16.mxu0 0
      %1442 = vmatpush2.bf16.msra.mxu0 %v1234
      %1443 = vmatprep.subr.bf16.mxu0 0
      %1444 = vmatpush2.bf16.msra.mxu0 %v1233
      %1445 = vmatprep.subr.bf16.mxu0 0
      %1446 = vmatpush2.bf16.msra.mxu0 %v1232
      %1447 = vmatprep.subr.bf16.mxu0 0
      %1448 = vmatpush2.bf16.msra.mxu0 %v1231
      %1449 = vmatprep.mubr.bf16.mxu0 %v890
      %1450 = vmatmul.mubr.bf16.gmra.mxu0 %v889
      %v1451 = vpop.f32.mrf.mxu0
      %v1452 = vadd.f32 %v1411, %v1451
      %v1453 = vpop.f32.mrf.mxu0
      %v1454 = vpop.f32.mrf.mxu0
      %v1455 = vadd.f32 %v1414, %v1454
      %v1456 = vpop.f32.mrf.mxu0
      %1457 = vdwg.mxu0
      %1458 = vmatprep.subr.bf16.mxu0 0
      %1459 = vmatpush1.bf16.msra.mxu0 %v1246
      %1460 = vmatprep.subr.bf16.mxu0 0
      %1461 = vmatpush1.bf16.msra.mxu0 %v1245
      %1462 = vmatprep.subr.bf16.mxu0 0
      %1463 = vmatpush1.bf16.msra.mxu0 %v1244
      %1464 = vmatprep.subr.bf16.mxu0 0
      %1465 = vmatpush1.bf16.msra.mxu0 %v1243
      %1466 = vmatprep.subr.bf16.mxu0 0
      %1467 = vmatpush1.bf16.msra.mxu0 %v1242
      %1468 = vmatprep.subr.bf16.mxu0 0
      %1469 = vmatpush1.bf16.msra.mxu0 %v1241
      %1470 = vmatprep.subr.bf16.mxu0 0
      %1471 = vmatpush1.bf16.msra.mxu0 %v1240
      %1472 = vmatprep.subr.bf16.mxu0 0
      %1473 = vmatpush1.bf16.msra.mxu0 %v1239
      %1474 = vmatprep.subr.bf16.mxu0 0
      %1475 = vmatpush2.bf16.msra.mxu0 %v1254
      %1476 = vmatprep.subr.bf16.mxu0 0
      %1477 = vmatpush2.bf16.msra.mxu0 %v1253
      %1478 = vmatprep.subr.bf16.mxu0 0
      %1479 = vmatpush2.bf16.msra.mxu0 %v1252
      %1480 = vmatprep.subr.bf16.mxu0 0
      %1481 = vmatpush2.bf16.msra.mxu0 %v1251
      %1482 = vmatprep.subr.bf16.mxu0 0
      %1483 = vmatpush2.bf16.msra.mxu0 %v1250
      %1484 = vmatprep.subr.bf16.mxu0 0
      %1485 = vmatpush2.bf16.msra.mxu0 %v1249
      %1486 = vmatprep.subr.bf16.mxu0 0
      %1487 = vmatpush2.bf16.msra.mxu0 %v1248
      %1488 = vmatprep.subr.bf16.mxu0 0
      %1489 = vmatpush2.bf16.msra.mxu0 %v1247
      %1490 = vmatprep.mubr.bf16.mxu0 %v892
      %1491 = vmatmul.mubr.bf16.gmra.mxu0 %v891
      %v1492 = vpop.f32.mrf.mxu0
      %v1493 = vadd.f32 %v1452, %v1492
      %v1494 = vpop.f32.mrf.mxu0
      %v1495 = vpop.f32.mrf.mxu0
      %v1496 = vadd.f32 %v1455, %v1495
      %v1497 = vpop.f32.mrf.mxu0
      %1498 = vdwg.mxu0
      %1499 = vmatprep.subr.bf16.mxu0 0
      %1500 = vmatpush1.bf16.msra.mxu0 %v1262
      %1501 = vmatprep.subr.bf16.mxu0 0
      %1502 = vmatpush1.bf16.msra.mxu0 %v1261
      %1503 = vmatprep.subr.bf16.mxu0 0
      %1504 = vmatpush1.bf16.msra.mxu0 %v1260
      %1505 = vmatprep.subr.bf16.mxu0 0
      %1506 = vmatpush1.bf16.msra.mxu0 %v1259
      %1507 = vmatprep.subr.bf16.mxu0 0
      %1508 = vmatpush1.bf16.msra.mxu0 %v1258
      %1509 = vmatprep.subr.bf16.mxu0 0
      %1510 = vmatpush1.bf16.msra.mxu0 %v1257
      %1511 = vmatprep.subr.bf16.mxu0 0
      %1512 = vmatpush1.bf16.msra.mxu0 %v1256
      %1513 = vmatprep.subr.bf16.mxu0 0
      %1514 = vmatpush1.bf16.msra.mxu0 %v1255
      %1515 = vmatprep.subr.bf16.mxu0 0
      %1516 = vmatpush2.bf16.msra.mxu0 0
      %1517 = vmatprep.subr.bf16.mxu0 0
      %1518 = vmatpush2.bf16.msra.mxu0 0
      %1519 = vmatprep.subr.bf16.mxu0 0
      %1520 = vmatpush2.bf16.msra.mxu0 0
      %1521 = vmatprep.subr.bf16.mxu0 0
      %1522 = vmatpush2.bf16.msra.mxu0 0
      %1523 = vmatprep.subr.bf16.mxu0 0
      %1524 = vmatpush2.bf16.msra.mxu0 0
      %1525 = vmatprep.subr.bf16.mxu0 0
      %1526 = vmatpush2.bf16.msra.mxu0 0
      %1527 = vmatprep.subr.bf16.mxu0 0
      %1528 = vmatpush2.bf16.msra.mxu0 0
      %1529 = vmatprep.subr.bf16.mxu0 0
      %1530 = vmatpush2.bf16.msra.mxu0 0
      %1531 = vmatprep.mubr.bf16.mxu0 0
      %1532 = vmatmul.mubr.bf16.gmra.mxu0 %v893
      %v1533 = vpop.f32.mrf.mxu0
      %v1534 = vadd.f32 %v1493, %v1533
      %v1535 = vpop.f32.mrf.mxu0
      %v1536 = vpop.f32.mrf.mxu0
      %v1537 = vadd.f32 %v1496, %v1536
      %v1538 = vpop.f32.mrf.mxu0
      %1539 = vdwg.mxu0
      %v1540 = vld [vmem:[%s4] sm:$0x1]
      %v1542 = vlaneseq
      %v1543 = vshrl.u32 %v1542, 7
      %v1544 = vsub.s32 0, %v1543
      %v1545 = vrot.slane %v1540, %v1544
      %v1547 = vadd.f32 %v1534, %v1545
      %v1548 = vadd.f32 %v1537, %v1545
      %vm1549 = vcmp.ge.f32.partialorder %v1547, 0.0
      %vm1550 = vcmp.ge.f32.partialorder %v1548, 0.0
      %v1551 = vmul.f32 %v1547, 0.01
      %v1552 = vmul.f32 %v1548, 0.01
      %v1553 = vsel %vm1549, %v1547, %v1551
      %v1554 = vsel %vm1550, %v1548, %v1552
      %v1555 = vpack.c.bf16 %v1554, %v1553
      %v1557 = vunpack.c.l.b16 %v1555
      %v1558 = vunpack.c.h.b16 %v1555
      %v1559 = vpack.c.b16 %v1557, %v1557
      %v1560 = vpack.c.b16 %v1558, %v1558
      %vm1563 = vcmask 519168
      %1564 = vst.msk [vmem:[%s254] sm:$0xf] %vm1563, %v1559
      %1565 = vst.msk [vmem:[%s254 + $0x4] sm:$0xf] %vm1563, %v1560
      %s1566 = smul.u32 2, %s16
      %p1567 = scmp.lt.s32.totalorder %s1566, 3
      %s1568 = scalar_select %p1567, %s1566, 3
      %s1569 = smul.addr %s1568, 4
      %s1570 = scalar_lea.vmem %s5, %s1569
      // Predicated region
      $region41: #{image_reconstruction_forward.12} parent=39 // pred_check
        %p1571 = pneg %p149
      $region42: #{image_reconstruction_forward.12} parent=39 // pred_check_branch
        %1573 = sbr.rel (%p1571) target = $region44
      $region43: #{image_reconstruction_forward.12} parent=39 // pred_region
        %s1574 = smul.u32 2, %s16
      $region44: #{image_reconstruction_forward.12} parent=39 // pred_fallthru
        _
    $region40: #{image_reconstruction_forward.12} parent=5 // pred_fallthru
      _
    %p1575 = scmp.le.s32.totalorder 2, %s11
    // Predicated region
    $region45: #{image_reconstruction_forward.12} parent=5 // pred_check
      %p1576 = pneg %p1575
    $region46: #{image_reconstruction_forward.12} parent=5 // pred_check_branch
      %1578 = sbr.rel (%p1576) target = $region48
    $region47: #{image_reconstruction_forward.12} parent=5 // pred_region
      %s1579 = ssub.s32 %s11, 2
      // Predicated region
      $region49: #{image_reconstruction_forward.12} parent=47 // pred_check
        %p1580 = pneg %p155
      $region50: #{image_reconstruction_forward.12} parent=47 // pred_check_branch
        %1582 = sbr.rel (%p1580) target = $region52
      $region51: #{image_reconstruction_forward.12} parent=47 // pred_region
        %s1583 = smul.u32 2, %s17
        %p1584 = scmp.lt.s32.totalorder %s1583, 3
        %s1585 = scalar_select %p1584, %s1583, 3
        %s1586 = smul.addr %s1585, 4
        %s1587 = scalar_lea.vmem %s5, %s1586
      $region52: #{image_reconstruction_forward.12} parent=47 // pred_fallthru
        _
    $region48: #{image_reconstruction_forward.12} parent=5 // pred_fallthru
      _
  $region6: #{image_reconstruction_forward.12} parent=0 // loop_footer
    %s15 = sadd.s32 1, %s11
  $region7: #{image_reconstruction_forward.12} parent=0 // loop_footer_branch
    %10 = sbr.rel target = $region3
  $region8: #{image_reconstruction_forward.12} parent=0 // loop_exit
    _

// kernel: image_reconstruction_forward.13
$region0: #{image_reconstruction_forward.13}
  #allocation0 [shape = 'u32[]', space=smem, size = 0x4, offset = 0x4, fixed_abs, tag = 'smem constant byte address 0x4 - core index']
  #allocation1 [shape = 'u32[144,128]{1,0:T(1,128)}', space=vmem, size = 0x12000, scoped, tag = 'internal scratch']
  %s0 = inlined_call_operand.vmem [shape: bf16[128,576], index: 0, kind: input, shape index: {}]
  %s1 = inlined_call_operand.vmem [shape: bf16[128,288], index: 1, kind: input, shape index: {}]
  %s2 = inlined_call_operand.vmem [shape: bf16[576,32], index: 2, kind: input, shape index: {}]
  %s3 = inlined_call_operand.vmem [shape: bf16[288,32], index: 3, kind: input, shape index: {}]
  %s4 = inlined_call_operand.vmem [shape: f32[1,32], index: 4, kind: input, shape index: {}]
  %s5 = inlined_call_operand.vmem [shape: bf16[128,32], index: 5, kind: output, shape index: {}]
  %s6 = sld [smem:[#allocation0]]
  $region53: #{image_reconstruction_forward.13} parent=0
    _
  %s8 = ssub.s32 1, %s6
  %s9 = scalar_select 0, %s8, %s6
  loop: start=0, step=1, limit=4
  $region2: #{image_reconstruction_forward.13} parent=0 // loop_pre_header
    _
  $region3: #{image_reconstruction_forward.13} parent=0 // loop_header
    %s11 = sphi 0, %s15
    %p12 = scmp.ge.s32.totalorder %s11, 4
    %s21 = sphi 0, %s23
    %s24 = sphi 0, %s21
    %s25 = sphi 0, %s24
    %s41 = sphi 0, %s25
    %s47 = sphi 0, %s49
    %s50 = sphi 0, %s47
    %s51 = sphi 0, %s50
    %s67 = sphi 0, %s51
    %s71 = sphi 0, %s71
    %s73 = sphi 0, %s71
    %s74 = sphi 0, %s73
    %s88 = sphi 0, %s74
    %s92 = sphi 0, %s92
    %s94 = sphi 0, %s92
    %s95 = sphi 0, %s94
    %s109 = sphi 0, %s95
    %s113 = sphi 0, %s113
    %s115 = sphi 0, %s113
    %s116 = sphi 0, %s115
    %s130 = sphi 0, %s116
    %s136 = sphi 0, %s138
    %s139 = sphi 0, %s136
    %s140 = sphi 0, %s139
    %s156 = sphi 0, %s140
  $region4: #{image_reconstruction_forward.13} parent=0 // loop_header_branch
    %14 = sbr.rel (%p12) target = $region8
  $region5: #{image_reconstruction_forward.13} parent=0 // loop_body
    %s16 = ssub.s32 %s11, 1
    %s17 = ssub.s32 %s11, 2
    %s18 = sadd.s32 %s11, 1
    %s19 = ssub.s32 %s11, %s18
    %p20 = scmp.eq.s32.totalorder %s19, 0
    %s22 = sadd.s32 %s21, 1
    %s23 = scalar_select %p20, %s21, %s22
    %p26 = pneg %p20
    %p27 = scmp.eq.s32.totalorder %s11, 1
    %p28 = por %p26, %p27
    %p29 = scmp.ne.s32.totalorder %s21, %s24
    %p30 = scmp.eq.s32.totalorder %s11, 0
    %p31 = por %p29, %p30
    %p32 = scmp.ne.s32.totalorder %s21, %s24
    %p33 = scmp.eq.s32.totalorder %s16, 1
    %p34 = por %p32, %p33
    %p35 = scmp.ne.s32.totalorder %s24, %s25
    %p36 = scmp.eq.s32.totalorder %s16, 0
    %p37 = por %p35, %p36
    %p38 = scmp.ne.s32.totalorder %s24, %s25
    %p39 = scmp.eq.s32.totalorder %s17, 1
    %p40 = por %p38, %p39
    %p42 = scmp.ne.s32.totalorder %s25, %s41
    %p43 = scmp.eq.s32.totalorder %s17, 0
    %p44 = por %p42, %p43
    %s45 = ssub.s32 %s11, %s18
    %p46 = scmp.eq.s32.totalorder %s45, 0
    %s48 = sadd.s32 %s47, 1
    %s49 = scalar_select %p46, %s47, %s48
    %p52 = pneg %p46
    %p53 = scmp.eq.s32.totalorder %s11, 1
    %p54 = por %p52, %p53
    %p55 = scmp.ne.s32.totalorder %s47, %s50
    %p56 = scmp.eq.s32.totalorder %s11, 0
    %p57 = por %p55, %p56
    %p58 = scmp.ne.s32.totalorder %s47, %s50
    %p59 = scmp.eq.s32.totalorder %s16, 1
    %p60 = por %p58, %p59
    %p61 = scmp.ne.s32.totalorder %s50, %s51
    %p62 = scmp.eq.s32.totalorder %s16, 0
    %p63 = por %p61, %p62
    %p64 = scmp.ne.s32.totalorder %s50, %s51
    %p65 = scmp.eq.s32.totalorder %s17, 1
    %p66 = por %p64, %p65
    %p68 = scmp.ne.s32.totalorder %s51, %s67
    %p69 = scmp.eq.s32.totalorder %s17, 0
    %p70 = por %p68, %p69
    %s72 = sadd.s32 %s71, 1
    %p75 = scmp.eq.s32.totalorder %s11, 1
    %p76 = scmp.ne.s32.totalorder %s71, %s73
    %p77 = scmp.eq.s32.totalorder %s11, 0
    %p78 = por %p76, %p77
    %p79 = scmp.ne.s32.totalorder %s71, %s73
    %p80 = scmp.eq.s32.totalorder %s16, 1
    %p81 = por %p79, %p80
    %p82 = scmp.ne.s32.totalorder %s73, %s74
    %p83 = scmp.eq.s32.totalorder %s16, 0
    %p84 = por %p82, %p83
    %p85 = scmp.ne.s32.totalorder %s73, %s74
    %p86 = scmp.eq.s32.totalorder %s17, 1
    %p87 = por %p85, %p86
    %p89 = scmp.ne.s32.totalorder %s74, %s88
    %p90 = scmp.eq.s32.totalorder %s17, 0
    %p91 = por %p89, %p90
    %s93 = sadd.s32 %s92, 1
    %p96 = scmp.eq.s32.totalorder %s11, 1
    %p97 = scmp.ne.s32.totalorder %s92, %s94
    %p98 = scmp.eq.s32.totalorder %s11, 0
    %p99 = por %p97, %p98
    %p100 = scmp.ne.s32.totalorder %s92, %s94
    %p101 = scmp.eq.s32.totalorder %s16, 1
    %p102 = por %p100, %p101
    %p103 = scmp.ne.s32.totalorder %s94, %s95
    %p104 = scmp.eq.s32.totalorder %s16, 0
    %p105 = por %p103, %p104
    %p106 = scmp.ne.s32.totalorder %s94, %s95
    %p107 = scmp.eq.s32.totalorder %s17, 1
    %p108 = por %p106, %p107
    %p110 = scmp.ne.s32.totalorder %s95, %s109
    %p111 = scmp.eq.s32.totalorder %s17, 0
    %p112 = por %p110, %p111
    %s114 = sadd.s32 %s113, 1
    %p117 = scmp.eq.s32.totalorder %s11, 1
    %p118 = scmp.ne.s32.totalorder %s113, %s115
    %p119 = scmp.eq.s32.totalorder %s11, 0
    %p120 = por %p118, %p119
    %p121 = scmp.ne.s32.totalorder %s113, %s115
    %p122 = scmp.eq.s32.totalorder %s16, 1
    %p123 = por %p121, %p122
    %p124 = scmp.ne.s32.totalorder %s115, %s116
    %p125 = scmp.eq.s32.totalorder %s16, 0
    %p126 = por %p124, %p125
    %p127 = scmp.ne.s32.totalorder %s115, %s116
    %p128 = scmp.eq.s32.totalorder %s17, 1
    %p129 = por %p127, %p128
    %p131 = scmp.ne.s32.totalorder %s116, %s130
    %p132 = scmp.eq.s32.totalorder %s17, 0
    %p133 = por %p131, %p132
    %s134 = ssub.s32 %s11, %s18
    %p135 = scmp.eq.s32.totalorder %s134, 0
    %s137 = sadd.s32 %s136, 1
    %s138 = scalar_select %p135, %s136, %s137
    %p141 = pneg %p135
    %p142 = scmp.eq.s32.totalorder %s11, 1
    %p143 = por %p141, %p142
    %p144 = scmp.ne.s32.totalorder %s136, %s139
    %p145 = scmp.eq.s32.totalorder %s11, 0
    %p146 = por %p144, %p145
    %p147 = scmp.ne.s32.totalorder %s136, %s139
    %p148 = scmp.eq.s32.totalorder %s16, 1
    %p149 = por %p147, %p148
    %p150 = scmp.ne.s32.totalorder %s139, %s140
    %p151 = scmp.eq.s32.totalorder %s16, 0
    %p152 = por %p150, %p151
    %p153 = scmp.ne.s32.totalorder %s139, %s140
    %p154 = scmp.eq.s32.totalorder %s17, 1
    %p155 = por %p153, %p154
    %p157 = scmp.ne.s32.totalorder %s140, %s156
    %p158 = scmp.eq.s32.totalorder %s17, 0
    %p159 = por %p157, %p158
    %p160 = scmp.le.s32.totalorder 1, %s11
    %p161 = scmp.lt.s32.totalorder %s11, 3
    %p162 = pnand %p160, %p161
    %p163 = pneg %p162
    // Predicated region
    $region9: #{image_reconstruction_forward.13} parent=5 // pred_check
      _
    $region10: #{image_reconstruction_forward.13} parent=5 // pred_check_branch
      %165 = sbr.rel (%p162) target = $region12
    $region11: #{image_reconstruction_forward.13} parent=5 // pred_region
      %s166 = ssub.s32 %s11, 1
      // Predicated region
      $region13: #{image_reconstruction_forward.13} parent=11 // pred_check
        %p167 = pneg %p84
      $region14: #{image_reconstruction_forward.13} parent=11 // pred_check_branch
        %169 = sbr.rel (%p167) target = $region16
      $region15: #{image_reconstruction_forward.13} parent=11 // pred_region
        _
      $region16: #{image_reconstruction_forward.13} parent=11 // pred_fallthru
        _
      // Predicated region
      $region17: #{image_reconstruction_forward.13} parent=11 // pred_check
        %p170 = pneg %p105
      $region18: #{image_reconstruction_forward.13} parent=11 // pred_check_branch
        %172 = sbr.rel (%p170) target = $region20
      $region19: #{image_reconstruction_forward.13} parent=11 // pred_region
        _
      $region20: #{image_reconstruction_forward.13} parent=11 // pred_fallthru
        _
      // Predicated region
      $region21: #{image_reconstruction_forward.13} parent=11 // pred_check
        %p173 = pneg %p126
      $region22: #{image_reconstruction_forward.13} parent=11 // pred_check_branch
        %175 = sbr.rel (%p173) target = $region24
      $region23: #{image_reconstruction_forward.13} parent=11 // pred_region
        _
      $region24: #{image_reconstruction_forward.13} parent=11 // pred_fallthru
        _
    $region12: #{image_reconstruction_forward.13} parent=5 // pred_fallthru
      _
    %p176 = scmp.lt.s32.totalorder %s11, 2
    // Predicated region
    $region25: #{image_reconstruction_forward.13} parent=5 // pred_check
      %p177 = pneg %p176
    $region26: #{image_reconstruction_forward.13} parent=5 // pred_check_branch
      %179 = sbr.rel (%p177) target = $region28
    $region27: #{image_reconstruction_forward.13} parent=5 // pred_region
      // Predicated region
      $region29: #{image_reconstruction_forward.13} parent=27 // pred_check
        %p180 = pneg %p31
      $region30: #{image_reconstruction_forward.13} parent=27 // pred_check_branch
        %182 = sbr.rel (%p180) target = $region32
      $region31: #{image_reconstruction_forward.13} parent=27 // pred_region
        %s183 = smul.u32 8, %s11
        %p184 = scmp.lt.s32.totalorder %s183, 15
        %s185 = scalar_select %p184, %s183, 15
        %s186 = smul.addr %s185, 5
        %s187 = smul.addr %s186, 4
        %s188 = scalar_lea.vmem %s0, %s187
        %s189 = smul.u32 8, %s11
      $region32: #{image_reconstruction_forward.13} parent=27 // pred_fallthru
        _
      // Predicated region
      $region33: #{image_reconstruction_forward.13} parent=27 // pred_check
        %p190 = pneg %p57
      $region34: #{image_reconstruction_forward.13} parent=27 // pred_check_branch
        %192 = sbr.rel (%p190) target = $region36
      $region35: #{image_reconstruction_forward.13} parent=27 // pred_region
        %s193 = smul.u32 8, %s11
        %p194 = scmp.lt.s32.totalorder %s193, 15
        %s195 = scalar_select %p194, %s193, 15
        %s196 = smul.addr %s195, 3
        %s197 = smul.addr %s196, 4
        %s198 = scalar_lea.vmem %s1, %s197
        %s199 = smul.u32 8, %s11
      $region36: #{image_reconstruction_forward.13} parent=27 // pred_fallthru
        _
    $region28: #{image_reconstruction_forward.13} parent=5 // pred_fallthru
      _
    %p200 = scmp.le.s32.totalorder 1, %s11
    %p201 = scmp.lt.s32.totalorder %s11, 3
    %p202 = pnand %p200, %p201
    %p203 = pneg %p202
    // Predicated region
    $region37: #{image_reconstruction_forward.13} parent=5 // pred_check
      _
    $region38: #{image_reconstruction_forward.13} parent=5 // pred_check_branch
      %205 = sbr.rel (%p202) target = $region40
    $region39: #{image_reconstruction_forward.13} parent=5 // pred_region
      %s206 = ssub.s32 %s11, 1
      %s207 = smul.u32 8, %s16
      %p208 = scmp.lt.s32.totalorder %s207, 15
      %s209 = scalar_select %p208, %s207, 15
      %s210 = smul.addr %s209, 5
      %s211 = smul.addr %s210, 4
      %s212 = scalar_lea.vmem %s0, %s211
      %p213 = pneg %p37
      %p214 = pneg %p34
      %s215 = smul.u32 8, %s16
      %p216 = scmp.lt.s32.totalorder %s215, 15
      %s217 = scalar_select %p216, %s215, 15
      %s218 = smul.addr %s217, 3
      %s219 = smul.addr %s218, 4
      %s220 = scalar_lea.vmem %s1, %s219
      %p221 = pneg %p63
      %p222 = pneg %p60
      %p223 = pneg %p84
      %p224 = pneg %p81
      %p225 = pneg %p105
      %p226 = pneg %p102
      %p227 = pneg %p126
      %p228 = pneg %p123
      %p229 = pneg %p152
      %p230 = pneg %p149
      %s231 = smul.u32 8, %s16
      %p232 = scmp.lt.s32.totalorder %s231, 15
      %s233 = scalar_select %p232, %s231, 15
      %s234 = smul.addr %s233, 4
      %s235 = scalar_lea.vmem %s5, %s234
      %s236 = smul.u32 8, %s16
      %p237 = scmp.lt.s32.totalorder %s236, 15
      %s238 = scalar_select %p237, %s236, 15
      %s239 = smul.addr %s238, 5
      %s240 = smul.addr %s239, 4
      %s241 = scalar_lea.vmem %s0, %s240
      %s242 = smul.u32 8, %s16
      %s243 = smul.u32 8, %s16
      %p244 = scmp.lt.s32.totalorder %s243, 15
      %s245 = scalar_select %p244, %s243, 15
      %s246 = smul.addr %s245, 3
      %s247 = smul.addr %s246, 4
      %s248 = scalar_lea.vmem %s1, %s247
      %s249 = smul.u32 8, %s16
      %s250 = smul.u32 8, %s16
      %p251 = scmp.lt.s32.totalorder %s250, 15
      %s252 = scalar_select %p251, %s250, 15
      %s253 = smul.addr %s252, 4
      %s254 = scalar_lea.vmem %s5, %s253
      %s255 = smul.u32 8, %s16
      %v257 = vld [vmem:[%s241] sm:$0xff]
      %v258 = vld [vmem:[%s241 + $0x8] sm:$0xff]
      %v259 = vld [vmem:[%s241 + $0x10] sm:$0xf]
      %v260 = vld [vmem:[%s241 + $0x14] sm:$0xff]
      %v261 = vld [vmem:[%s241 + $0x1c] sm:$0xff]
      %v262 = vld [vmem:[%s241 + $0x24] sm:$0xf]
      %v263 = vld [vmem:[%s241 + $0x28] sm:$0xff]
      %v264 = vld [vmem:[%s241 + $0x30] sm:$0xff]
      %v265 = vld [vmem:[%s241 + $0x38] sm:$0xf]
      %v266 = vld [vmem:[%s241 + $0x3c] sm:$0xff]
      %v267 = vld [vmem:[%s241 + $0x44] sm:$0xff]
      %v268 = vld [vmem:[%s241 + $0x4c] sm:$0xf]
      %v269 = vld [vmem:[%s241 + $0x50] sm:$0xff]
      %v270 = vld [vmem:[%s241 + $0x58] sm:$0xff]
      %v271 = vld [vmem:[%s241 + $0x60] sm:$0xf]
      %v272 = vld [vmem:[%s241 + $0x64] sm:$0xff]
      %v273 = vld [vmem:[%s241 + $0x6c] sm:$0xff]
      %v274 = vld [vmem:[%s241 + $0x74] sm:$0xf]
      %v275 = vld [vmem:[%s241 + $0x78] sm:$0xff]
      %v276 = vld [vmem:[%s241 + $0x80] sm:$0xff]
      %v277 = vld [vmem:[%s241 + $0x88] sm:$0xf]
      %v278 = vld [vmem:[%s241 + $0x8c] sm:$0xff]
      %v279 = vld [vmem:[%s241 + $0x94] sm:$0xff]
      %v280 = vld [vmem:[%s241 + $0x9c] sm:$0xf]
      %v281 = vld [vmem:[%s2] sm:$0xf]
      %v282 = vld [vmem:[%s2 + $0x4] sm:$0xf]
      %v283 = vld [vmem:[%s2 + $0x8] sm:$0xf]
      %v284 = vld [vmem:[%s2 + $0xc] sm:$0xf]
      %v285 = vld [vmem:[%s2 + $0x10] sm:$0xf]
      %v286 = vld [vmem:[%s2 + $0x14] sm:$0xf]
      %v287 = vld [vmem:[%s2 + $0x18] sm:$0xf]
      %v288 = vld [vmem:[%s2 + $0x1c] sm:$0xf]
      %v289 = vld [vmem:[%s2 + $0x20] sm:$0xf]
      %v290 = vld [vmem:[%s2 + $0x24] sm:$0xf]
      %v291 = vld [vmem:[%s2 + $0x28] sm:$0xf]
      %v292 = vld [vmem:[%s2 + $0x2c] sm:$0xf]
      %v293 = vld [vmem:[%s2 + $0x30] sm:$0xf]
      %v294 = vld [vmem:[%s2 + $0x34] sm:$0xf]
      %v295 = vld [vmem:[%s2 + $0x38] sm:$0xf]
      %v296 = vld [vmem:[%s2 + $0x3c] sm:$0xf]
      %v297 = vld [vmem:[%s2 + $0x40] sm:$0xf]
      %v298 = vld [vmem:[%s2 + $0x44] sm:$0xf]
      %v299 = vld [vmem:[%s2 + $0x48] sm:$0xf]
      %v300 = vld [vmem:[%s2 + $0x4c] sm:$0xf]
      %v301 = vld [vmem:[%s2 + $0x50] sm:$0xf]
      %v302 = vld [vmem:[%s2 + $0x54] sm:$0xf]
      %v303 = vld [vmem:[%s2 + $0x58] sm:$0xf]
      %v304 = vld [vmem:[%s2 + $0x5c] sm:$0xf]
      %v305 = vld [vmem:[%s2 + $0x60] sm:$0xf]
      %v306 = vld [vmem:[%s2 + $0x64] sm:$0xf]
      %v307 = vld [vmem:[%s2 + $0x68] sm:$0xf]
      %v308 = vld [vmem:[%s2 + $0x6c] sm:$0xf]
      %v309 = vld [vmem:[%s2 + $0x70] sm:$0xf]
      %v310 = vld [vmem:[%s2 + $0x74] sm:$0xf]
      %v311 = vld [vmem:[%s2 + $0x78] sm:$0xf]
      %v312 = vld [vmem:[%s2 + $0x7c] sm:$0xf]
      %v313 = vld [vmem:[%s2 + $0x80] sm:$0xf]
      %v314 = vld [vmem:[%s2 + $0x84] sm:$0xf]
      %v315 = vld [vmem:[%s2 + $0x88] sm:$0xf]
      %v316 = vld [vmem:[%s2 + $0x8c] sm:$0xf]
      %v317 = vld [vmem:[%s2 + $0x90] sm:$0xf]
      %v318 = vld [vmem:[%s2 + $0x94] sm:$0xf]
      %v319 = vld [vmem:[%s2 + $0x98] sm:$0xf]
      %v320 = vld [vmem:[%s2 + $0x9c] sm:$0xf]
      %v321 = vld [vmem:[%s2 + $0xa0] sm:$0xf]
      %v322 = vld [vmem:[%s2 + $0xa4] sm:$0xf]
      %v323 = vld [vmem:[%s2 + $0xa8] sm:$0xf]
      %v324 = vld [vmem:[%s2 + $0xac] sm:$0xf]
      %v325 = vld [vmem:[%s2 + $0xb0] sm:$0xf]
      %v326 = vld [vmem:[%s2 + $0xb4] sm:$0xf]
      %v327 = vld [vmem:[%s2 + $0xb8] sm:$0xf]
      %v328 = vld [vmem:[%s2 + $0xbc] sm:$0xf]
      %v329 = vld [vmem:[%s2 + $0xc0] sm:$0xf]
      %v330 = vld [vmem:[%s2 + $0xc4] sm:$0xf]
      %v331 = vld [vmem:[%s2 + $0xc8] sm:$0xf]
      %v332 = vld [vmem:[%s2 + $0xcc] sm:$0xf]
      %v333 = vld [vmem:[%s2 + $0xd0] sm:$0xf]
      %v334 = vld [vmem:[%s2 + $0xd4] sm:$0xf]
      %v335 = vld [vmem:[%s2 + $0xd8] sm:$0xf]
      %v336 = vld [vmem:[%s2 + $0xdc] sm:$0xf]
      %v337 = vld [vmem:[%s2 + $0xe0] sm:$0xf]
      %v338 = vld [vmem:[%s2 + $0xe4] sm:$0xf]
      %v339 = vld [vmem:[%s2 + $0xe8] sm:$0xf]
      %v340 = vld [vmem:[%s2 + $0xec] sm:$0xf]
      %v341 = vld [vmem:[%s2 + $0xf0] sm:$0xf]
      %v342 = vld [vmem:[%s2 + $0xf4] sm:$0xf]
      %v343 = vld [vmem:[%s2 + $0xf8] sm:$0xf]
      %v344 = vld [vmem:[%s2 + $0xfc] sm:$0xf]
      %v345 = vld [vmem:[%s2 + $0x100] sm:$0xf]
      %v346 = vld [vmem:[%s2 + $0x104] sm:$0xf]
      %v347 = vld [vmem:[%s2 + $0x108] sm:$0xf]
      %v348 = vld [vmem:[%s2 + $0x10c] sm:$0xf]
      %v349 = vld [vmem:[%s2 + $0x110] sm:$0xf]
      %v350 = vld [vmem:[%s2 + $0x114] sm:$0xf]
      %v351 = vld [vmem:[%s2 + $0x118] sm:$0xf]
      %v352 = vld [vmem:[%s2 + $0x11c] sm:$0xf]
      %v353 = vld [vmem:[%s248] sm:$0xff]
      %v354 = vld [vmem:[%s248 + $0x8] sm:$0xf]
      %v355 = vld [vmem:[%s248 + $0xc] sm:$0xff]
      %v356 = vld [vmem:[%s248 + $0x14] sm:$0xf]
      %v357 = vld [vmem:[%s248 + $0x18] sm:$0xff]
      %v358 = vld [vmem:[%s248 + $0x20] sm:$0xf]
      %v359 = vld [vmem:[%s248 + $0x24] sm:$0xff]
      %v360 = vld [vmem:[%s248 + $0x2c] sm:$0xf]
      %v361 = vld [vmem:[%s248 + $0x30] sm:$0xff]
      %v362 = vld [vmem:[%s248 + $0x38] sm:$0xf]
      %v363 = vld [vmem:[%s248 + $0x3c] sm:$0xff]
      %v364 = vld [vmem:[%s248 + $0x44] sm:$0xf]
      %v365 = vld [vmem:[%s248 + $0x48] sm:$0xff]
      %v366 = vld [vmem:[%s248 + $0x50] sm:$0xf]
      %v367 = vld [vmem:[%s248 + $0x54] sm:$0xff]
      %v368 = vld [vmem:[%s248 + $0x5c] sm:$0xf]
      %v369 = vld [vmem:[%s3] sm:$0xf]
      %v370 = vld [vmem:[%s3 + $0x4] sm:$0xf]
      %v371 = vld [vmem:[%s3 + $0x8] sm:$0xf]
      %v372 = vld [vmem:[%s3 + $0xc] sm:$0xf]
      %v373 = vld [vmem:[%s3 + $0x10] sm:$0xf]
      %v374 = vld [vmem:[%s3 + $0x14] sm:$0xf]
      %v375 = vld [vmem:[%s3 + $0x18] sm:$0xf]
      %v376 = vld [vmem:[%s3 + $0x1c] sm:$0xf]
      %v377 = vld [vmem:[%s3 + $0x20] sm:$0xf]
      %v378 = vld [vmem:[%s3 + $0x24] sm:$0xf]
      %v379 = vld [vmem:[%s3 + $0x28] sm:$0xf]
      %v380 = vld [vmem:[%s3 + $0x2c] sm:$0xf]
      %v381 = vld [vmem:[%s3 + $0x30] sm:$0xf]
      %v382 = vld [vmem:[%s3 + $0x34] sm:$0xf]
      %v383 = vld [vmem:[%s3 + $0x38] sm:$0xf]
      %v384 = vld [vmem:[%s3 + $0x3c] sm:$0xf]
      %v385 = vld [vmem:[%s3 + $0x40] sm:$0xf]
      %v386 = vld [vmem:[%s3 + $0x44] sm:$0xf]
      %v387 = vld [vmem:[%s3 + $0x48] sm:$0xf]
      %v388 = vld [vmem:[%s3 + $0x4c] sm:$0xf]
      %v389 = vld [vmem:[%s3 + $0x50] sm:$0xf]
      %v390 = vld [vmem:[%s3 + $0x54] sm:$0xf]
      %v391 = vld [vmem:[%s3 + $0x58] sm:$0xf]
      %v392 = vld [vmem:[%s3 + $0x5c] sm:$0xf]
      %v393 = vld [vmem:[%s3 + $0x60] sm:$0xf]
      %v394 = vld [vmem:[%s3 + $0x64] sm:$0xf]
      %v395 = vld [vmem:[%s3 + $0x68] sm:$0xf]
      %v396 = vld [vmem:[%s3 + $0x6c] sm:$0xf]
      %v397 = vld [vmem:[%s3 + $0x70] sm:$0xf]
      %v398 = vld [vmem:[%s3 + $0x74] sm:$0xf]
      %v399 = vld [vmem:[%s3 + $0x78] sm:$0xf]
      %v400 = vld [vmem:[%s3 + $0x7c] sm:$0xf]
      %v401 = vld [vmem:[%s3 + $0x80] sm:$0xf]
      %v402 = vld [vmem:[%s3 + $0x84] sm:$0xf]
      %v403 = vld [vmem:[%s3 + $0x88] sm:$0xf]
      %v404 = vld [vmem:[%s3 + $0x8c] sm:$0xf]
      %v421 = vunpack.c.l.b16 %v353
      %v422 = vunpack.c.h.b16 %v353
      %v423 = vunpack.c.l.b16 %v354
      %v424 = vunpack.c.l.b16 %v355
      %v425 = vunpack.c.h.b16 %v355
      %v426 = vunpack.c.l.b16 %v356
      %v427 = vunpack.c.l.b16 %v357
      %v428 = vunpack.c.h.b16 %v357
      %v429 = vunpack.c.l.b16 %v358
      %v430 = vunpack.c.l.b16 %v359
      %v431 = vunpack.c.h.b16 %v359
      %v432 = vunpack.c.l.b16 %v360
      %v433 = vunpack.c.l.b16 %v361
      %v434 = vunpack.c.h.b16 %v361
      %v435 = vunpack.c.l.b16 %v362
      %v436 = vunpack.c.l.b16 %v363
      %v437 = vunpack.c.h.b16 %v363
      %v438 = vunpack.c.l.b16 %v364
      %v439 = vunpack.c.l.b16 %v365
      %v440 = vunpack.c.h.b16 %v365
      %v441 = vunpack.c.l.b16 %v366
      %v442 = vunpack.c.l.b16 %v367
      %v443 = vunpack.c.h.b16 %v367
      %v444 = vunpack.c.l.b16 %v368
      %v445 = vpack.c.b16 %v424, %v421
      %v446 = vpack.c.b16 %v425, %v422
      %v447 = vpack.c.b16 %v426, %v423
      %v448 = vpack.c.b16 %v430, %v427
      %v449 = vpack.c.b16 %v431, %v428
      %v450 = vpack.c.b16 %v432, %v429
      %v451 = vpack.c.b16 %v436, %v433
      %v452 = vpack.c.b16 %v437, %v434
      %v453 = vpack.c.b16 %v438, %v435
      %v454 = vpack.c.b16 %v442, %v439
      %v455 = vpack.c.b16 %v443, %v440
      %v456 = vpack.c.b16 %v444, %v441
      %v501 = vunpack.c.l.b16 %v369
      %v502 = vunpack.c.l.b16 %v370
      %v503 = vunpack.c.l.b16 %v371
      %v504 = vunpack.c.l.b16 %v372
      %v505 = vunpack.c.l.b16 %v373
      %v506 = vunpack.c.l.b16 %v374
      %v507 = vunpack.c.l.b16 %v375
      %v508 = vunpack.c.l.b16 %v376
      %v509 = vunpack.c.l.b16 %v377
      %v510 = vunpack.c.l.b16 %v378
      %v511 = vunpack.c.l.b16 %v379
      %v512 = vunpack.c.l.b16 %v380
      %v513 = vunpack.c.l.b16 %v381
      %v514 = vunpack.c.l.b16 %v382
      %v515 = vunpack.c.l.b16 %v383
      %v516 = vunpack.c.l.b16 %v384
      %v517 = vunpack.c.l.b16 %v385
      %v518 = vunpack.c.l.b16 %v386
      %v519 = vunpack.c.l.b16 %v387
      %v520 = vunpack.c.l.b16 %v388
      %v521 = vunpack.c.l.b16 %v389
      %v522 = vunpack.c.l.b16 %v390
      %v523 = vunpack.c.l.b16 %v391
      %v524 = vunpack.c.l.b16 %v392
      %v525 = vunpack.c.l.b16 %v393
      %v526 = vunpack.c.l.b16 %v394
      %v527 = vunpack.c.l.b16 %v395
      %v528 = vunpack.c.l.b16 %v396
      %v529 = vunpack.c.l.b16 %v397
      %v530 = vunpack.c.l.b16 %v398
      %v531 = vunpack.c.l.b16 %v399
      %v532 = vunpack.c.l.b16 %v400
      %v533 = vunpack.c.l.b16 %v401
      %v534 = vunpack.c.l.b16 %v402
      %v535 = vunpack.c.l.b16 %v403
      %v536 = vunpack.c.l.b16 %v404
      %v537 = vpack.c.b16 %v502, %v501
      %v538 = vpack.c.b16 %v504, %v503
      %v539 = vpack.c.b16 %v506, %v505
      %v540 = vpack.c.b16 %v508, %v507
      %v541 = vpack.c.b16 %v510, %v509
      %v542 = vpack.c.b16 %v512, %v511
      %v543 = vpack.c.b16 %v514, %v513
      %v544 = vpack.c.b16 %v516, %v515
      %v545 = vpack.c.b16 %v518, %v517
      %v546 = vpack.c.b16 %v520, %v519
      %v547 = vpack.c.b16 %v522, %v521
      %v548 = vpack.c.b16 %v524, %v523
      %v549 = vpack.c.b16 %v526, %v525
      %v550 = vpack.c.b16 %v528, %v527
      %v551 = vpack.c.b16 %v530, %v529
      %v552 = vpack.c.b16 %v532, %v531
      %v553 = vpack.c.b16 %v534, %v533
      %v554 = vpack.c.b16 %v536, %v535
      %vm573 = vcmask 261120
      %v575 = vsel %vm573, %v447, 0
      %v578 = vsel %vm573, %v450, 0
      %v581 = vsel %vm573, %v453, 0
      %v584 = vsel %vm573, %v456, 0
      %586 = vmatprep.subr.bf16.mxu0 0
      %587 = vmatpush1.bf16.msra.mxu0 %v544
      %588 = vmatprep.subr.bf16.mxu0 0
      %589 = vmatpush1.bf16.msra.mxu0 %v543
      %590 = vmatprep.subr.bf16.mxu0 0
      %591 = vmatpush1.bf16.msra.mxu0 %v542
      %592 = vmatprep.subr.bf16.mxu0 0
      %593 = vmatpush1.bf16.msra.mxu0 %v541
      %594 = vmatprep.subr.bf16.mxu0 0
      %595 = vmatpush1.bf16.msra.mxu0 %v540
      %596 = vmatprep.subr.bf16.mxu0 0
      %597 = vmatpush1.bf16.msra.mxu0 %v539
      %598 = vmatprep.subr.bf16.mxu0 0
      %599 = vmatpush1.bf16.msra.mxu0 %v538
      %600 = vmatprep.subr.bf16.mxu0 0
      %601 = vmatpush1.bf16.msra.mxu0 %v537
      %602 = vmatprep.subr.bf16.mxu0 0
      %603 = vmatpush2.bf16.msra.mxu0 %v552
      %604 = vmatprep.subr.bf16.mxu0 0
      %605 = vmatpush2.bf16.msra.mxu0 %v551
      %606 = vmatprep.subr.bf16.mxu0 0
      %607 = vmatpush2.bf16.msra.mxu0 %v550
      %608 = vmatprep.subr.bf16.mxu0 0
      %609 = vmatpush2.bf16.msra.mxu0 %v549
      %610 = vmatprep.subr.bf16.mxu0 0
      %611 = vmatpush2.bf16.msra.mxu0 %v548
      %612 = vmatprep.subr.bf16.mxu0 0
      %613 = vmatpush2.bf16.msra.mxu0 %v547
      %614 = vmatprep.subr.bf16.mxu0 0
      %615 = vmatpush2.bf16.msra.mxu0 %v546
      %616 = vmatprep.subr.bf16.mxu0 0
      %617 = vmatpush2.bf16.msra.mxu0 %v545
      %618 = vmatprep.mubr.bf16.mxu0 %v446
      %619 = vmatmul.mubr.bf16.gmra.mxu0 %v445
      %v620 = vpop.f32.mrf.mxu0
      %v621 = vadd.f32 0.0, %v620
      %v622 = vpop.f32.mrf.mxu0
      %v623 = vpop.f32.mrf.mxu0
      %v624 = vadd.f32 0.0, %v623
      %v625 = vpop.f32.mrf.mxu0
      %626 = vmatprep.mubr.bf16.mxu0 %v449
      %627 = vmatmul.mubr.bf16.gmra.mxu0 %v448
      %v628 = vpop.f32.mrf.mxu0
      %v629 = vadd.f32 0.0, %v628
      %v630 = vpop.f32.mrf.mxu0
      %v631 = vpop.f32.mrf.mxu0
      %v632 = vadd.f32 0.0, %v631
      %v633 = vpop.f32.mrf.mxu0
      %634 = vmatprep.mubr.bf16.mxu0 %v452
      %635 = vmatmul.mubr.bf16.gmra.mxu0 %v451
      %v636 = vpop.f32.mrf.mxu0
      %v637 = vadd.f32 0.0, %v636
      %v638 = vpop.f32.mrf.mxu0
      %v639 = vpop.f32.mrf.mxu0
      %v640 = vadd.f32 0.0, %v639
      %v641 = vpop.f32.mrf.mxu0
      %642 = vmatprep.mubr.bf16.mxu0 %v455
      %643 = vmatmul.mubr.bf16.gmra.mxu0 %v454
      %v644 = vpop.f32.mrf.mxu0
      %v645 = vadd.f32 0.0, %v644
      %v646 = vpop.f32.mrf.mxu0
      %v647 = vpop.f32.mrf.mxu0
      %v648 = vadd.f32 0.0, %v647
      %v649 = vpop.f32.mrf.mxu0
      %650 = vdwg.mxu0
      %651 = vmatprep.subr.bf16.mxu0 0
      %652 = vmatpush1.bf16.msra.mxu0 0
      %653 = vmatprep.subr.bf16.mxu0 0
      %654 = vmatpush1.bf16.msra.mxu0 0
      %655 = vmatprep.subr.bf16.mxu0 0
      %656 = vmatpush1.bf16.msra.mxu0 0
      %657 = vmatprep.subr.bf16.mxu0 0
      %658 = vmatpush1.bf16.msra.mxu0 0
      %659 = vmatprep.subr.bf16.mxu0 0
      %660 = vmatpush1.bf16.msra.mxu0 0
      %661 = vmatprep.subr.bf16.mxu0 0
      %662 = vmatpush1.bf16.msra.mxu0 0
      %663 = vmatprep.subr.bf16.mxu0 0
      %664 = vmatpush1.bf16.msra.mxu0 %v554
      %665 = vmatprep.subr.bf16.mxu0 0
      %666 = vmatpush1.bf16.msra.mxu0 %v553
      %667 = vmatprep.subr.bf16.mxu0 0
      %668 = vmatpush2.bf16.msra.mxu0 0
      %669 = vmatprep.subr.bf16.mxu0 0
      %670 = vmatpush2.bf16.msra.mxu0 0
      %671 = vmatprep.subr.bf16.mxu0 0
      %672 = vmatpush2.bf16.msra.mxu0 0
      %673 = vmatprep.subr.bf16.mxu0 0
      %674 = vmatpush2.bf16.msra.mxu0 0
      %675 = vmatprep.subr.bf16.mxu0 0
      %676 = vmatpush2.bf16.msra.mxu0 0
      %677 = vmatprep.subr.bf16.mxu0 0
      %678 = vmatpush2.bf16.msra.mxu0 0
      %679 = vmatprep.subr.bf16.mxu0 0
      %680 = vmatpush2.bf16.msra.mxu0 0
      %681 = vmatprep.subr.bf16.mxu0 0
      %682 = vmatpush2.bf16.msra.mxu0 0
      %683 = vmatprep.mubr.bf16.mxu0 0
      %684 = vmatmul.mubr.bf16.gmra.mxu0 %v575
      %v685 = vpop.f32.mrf.mxu0
      %v686 = vadd.f32 %v621, %v685
      %v687 = vpop.f32.mrf.mxu0
      %v688 = vpop.f32.mrf.mxu0
      %v689 = vadd.f32 %v624, %v688
      %v690 = vpop.f32.mrf.mxu0
      %691 = vmatprep.mubr.bf16.mxu0 0
      %692 = vmatmul.mubr.bf16.gmra.mxu0 %v578
      %v693 = vpop.f32.mrf.mxu0
      %v694 = vadd.f32 %v629, %v693
      %v695 = vpop.f32.mrf.mxu0
      %v696 = vpop.f32.mrf.mxu0
      %v697 = vadd.f32 %v632, %v696
      %v698 = vpop.f32.mrf.mxu0
      %699 = vmatprep.mubr.bf16.mxu0 0
      %700 = vmatmul.mubr.bf16.gmra.mxu0 %v581
      %v701 = vpop.f32.mrf.mxu0
      %v702 = vadd.f32 %v637, %v701
      %v703 = vpop.f32.mrf.mxu0
      %v704 = vpop.f32.mrf.mxu0
      %v705 = vadd.f32 %v640, %v704
      %v706 = vpop.f32.mrf.mxu0
      %707 = vmatprep.mubr.bf16.mxu0 0
      %708 = vmatmul.mubr.bf16.gmra.mxu0 %v584
      %v709 = vpop.f32.mrf.mxu0
      %v710 = vadd.f32 %v645, %v709
      %v711 = vpop.f32.mrf.mxu0
      %v712 = vpop.f32.mrf.mxu0
      %v713 = vadd.f32 %v648, %v712
      %v714 = vpop.f32.mrf.mxu0
      %715 = vdwg.mxu0
      %v740 = vunpack.c.l.b16 %v257
      %v741 = vunpack.c.h.b16 %v257
      %v742 = vunpack.c.l.b16 %v258
      %v743 = vunpack.c.h.b16 %v258
      %v744 = vunpack.c.l.b16 %v259
      %v745 = vunpack.c.l.b16 %v260
      %v746 = vunpack.c.h.b16 %v260
      %v747 = vunpack.c.l.b16 %v261
      %v748 = vunpack.c.h.b16 %v261
      %v749 = vunpack.c.l.b16 %v262
      %v750 = vunpack.c.l.b16 %v263
      %v751 = vunpack.c.h.b16 %v263
      %v752 = vunpack.c.l.b16 %v264
      %v753 = vunpack.c.h.b16 %v264
      %v754 = vunpack.c.l.b16 %v265
      %v755 = vunpack.c.l.b16 %v266
      %v756 = vunpack.c.h.b16 %v266
      %v757 = vunpack.c.l.b16 %v267
      %v758 = vunpack.c.h.b16 %v267
      %v759 = vunpack.c.l.b16 %v268
      %v760 = vunpack.c.l.b16 %v269
      %v761 = vunpack.c.h.b16 %v269
      %v762 = vunpack.c.l.b16 %v270
      %v763 = vunpack.c.h.b16 %v270
      %v764 = vunpack.c.l.b16 %v271
      %v765 = vunpack.c.l.b16 %v272
      %v766 = vunpack.c.h.b16 %v272
      %v767 = vunpack.c.l.b16 %v273
      %v768 = vunpack.c.h.b16 %v273
      %v769 = vunpack.c.l.b16 %v274
      %v770 = vunpack.c.l.b16 %v275
      %v771 = vunpack.c.h.b16 %v275
      %v772 = vunpack.c.l.b16 %v276
      %v773 = vunpack.c.h.b16 %v276
      %v774 = vunpack.c.l.b16 %v277
      %v775 = vunpack.c.l.b16 %v278
      %v776 = vunpack.c.h.b16 %v278
      %v777 = vunpack.c.l.b16 %v279
      %v778 = vunpack.c.h.b16 %v279
      %v779 = vunpack.c.l.b16 %v280
      %v780 = vpack.c.b16 %v745, %v740
      %v781 = vpack.c.b16 %v746, %v741
      %v782 = vpack.c.b16 %v747, %v742
      %v783 = vpack.c.b16 %v748, %v743
      %v784 = vpack.c.b16 %v749, %v744
      %v785 = vpack.c.b16 %v755, %v750
      %v786 = vpack.c.b16 %v756, %v751
      %v787 = vpack.c.b16 %v757, %v752
      %v788 = vpack.c.b16 %v758, %v753
      %v789 = vpack.c.b16 %v759, %v754
      %v790 = vpack.c.b16 %v765, %v760
      %v791 = vpack.c.b16 %v766, %v761
      %v792 = vpack.c.b16 %v767, %v762
      %v793 = vpack.c.b16 %v768, %v763
      %v794 = vpack.c.b16 %v769, %v764
      %v795 = vpack.c.b16 %v775, %v770
      %v796 = vpack.c.b16 %v776, %v771
      %v797 = vpack.c.b16 %v777, %v772
      %v798 = vpack.c.b16 %v778, %v773
      %v799 = vpack.c.b16 %v779, %v774
      %v888 = vunpack.c.l.b16 %v281
      %v889 = vunpack.c.l.b16 %v282
      %v890 = vunpack.c.l.b16 %v283
      %v891 = vunpack.c.l.b16 %v284
      %v892 = vunpack.c.l.b16 %v285
      %v893 = vunpack.c.l.b16 %v286
      %v894 = vunpack.c.l.b16 %v287
      %v895 = vunpack.c.l.b16 %v288
      %v896 = vunpack.c.l.b16 %v289
      %v897 = vunpack.c.l.b16 %v290
      %v898 = vunpack.c.l.b16 %v291
      %v899 = vunpack.c.l.b16 %v292
      %v900 = vunpack.c.l.b16 %v293
      %v901 = vunpack.c.l.b16 %v294
      %v902 = vunpack.c.l.b16 %v295
      %v903 = vunpack.c.l.b16 %v296
      %v904 = vunpack.c.l.b16 %v297
      %v905 = vunpack.c.l.b16 %v298
      %v906 = vunpack.c.l.b16 %v299
      %v907 = vunpack.c.l.b16 %v300
      %v908 = vunpack.c.l.b16 %v301
      %v909 = vunpack.c.l.b16 %v302
      %v910 = vunpack.c.l.b16 %v303
      %v911 = vunpack.c.l.b16 %v304
      %v912 = vunpack.c.l.b16 %v305
      %v913 = vunpack.c.l.b16 %v306
      %v914 = vunpack.c.l.b16 %v307
      %v915 = vunpack.c.l.b16 %v308
      %v916 = vunpack.c.l.b16 %v309
      %v917 = vunpack.c.l.b16 %v310
      %v918 = vunpack.c.l.b16 %v311
      %v919 = vunpack.c.l.b16 %v312
      %v920 = vunpack.c.l.b16 %v313
      %v921 = vunpack.c.l.b16 %v314
      %v922 = vunpack.c.l.b16 %v315
      %v923 = vunpack.c.l.b16 %v316
      %v924 = vunpack.c.l.b16 %v317
      %v925 = vunpack.c.l.b16 %v318
      %v926 = vunpack.c.l.b16 %v319
      %v927 = vunpack.c.l.b16 %v320
      %v928 = vunpack.c.l.b16 %v321
      %v929 = vunpack.c.l.b16 %v322
      %v930 = vunpack.c.l.b16 %v323
      %v931 = vunpack.c.l.b16 %v324
      %v932 = vunpack.c.l.b16 %v325
      %v933 = vunpack.c.l.b16 %v326
      %v934 = vunpack.c.l.b16 %v327
      %v935 = vunpack.c.l.b16 %v328
      %v936 = vunpack.c.l.b16 %v329
      %v937 = vunpack.c.l.b16 %v330
      %v938 = vunpack.c.l.b16 %v331
      %v939 = vunpack.c.l.b16 %v332
      %v940 = vunpack.c.l.b16 %v333
      %v941 = vunpack.c.l.b16 %v334
      %v942 = vunpack.c.l.b16 %v335
      %v943 = vunpack.c.l.b16 %v336
      %v944 = vunpack.c.l.b16 %v337
      %v945 = vunpack.c.l.b16 %v338
      %v946 = vunpack.c.l.b16 %v339
      %v947 = vunpack.c.l.b16 %v340
      %v948 = vunpack.c.l.b16 %v341
      %v949 = vunpack.c.l.b16 %v342
      %v950 = vunpack.c.l.b16 %v343
      %v951 = vunpack.c.l.b16 %v344
      %v952 = vunpack.c.l.b16 %v345
      %v953 = vunpack.c.l.b16 %v346
      %v954 = vunpack.c.l.b16 %v347
      %v955 = vunpack.c.l.b16 %v348
      %v956 = vunpack.c.l.b16 %v349
      %v957 = vunpack.c.l.b16 %v350
      %v958 = vunpack.c.l.b16 %v351
      %v959 = vunpack.c.l.b16 %v352
      %v960 = vpack.c.b16 %v889, %v888
      %v961 = vpack.c.b16 %v891, %v890
      %v962 = vpack.c.b16 %v893, %v892
      %v963 = vpack.c.b16 %v895, %v894
      %v964 = vpack.c.b16 %v897, %v896
      %v965 = vpack.c.b16 %v899, %v898
      %v966 = vpack.c.b16 %v901, %v900
      %v967 = vpack.c.b16 %v903, %v902
      %v968 = vpack.c.b16 %v905, %v904
      %v969 = vpack.c.b16 %v907, %v906
      %v970 = vpack.c.b16 %v909, %v908
      %v971 = vpack.c.b16 %v911, %v910
      %v972 = vpack.c.b16 %v913, %v912
      %v973 = vpack.c.b16 %v915, %v914
      %v974 = vpack.c.b16 %v917, %v916
      %v975 = vpack.c.b16 %v919, %v918
      %v976 = vpack.c.b16 %v921, %v920
      %v977 = vpack.c.b16 %v923, %v922
      %v978 = vpack.c.b16 %v925, %v924
      %v979 = vpack.c.b16 %v927, %v926
      %v980 = vpack.c.b16 %v929, %v928
      %v981 = vpack.c.b16 %v931, %v930
      %v982 = vpack.c.b16 %v933, %v932
      %v983 = vpack.c.b16 %v935, %v934
      %v984 = vpack.c.b16 %v937, %v936
      %v985 = vpack.c.b16 %v939, %v938
      %v986 = vpack.c.b16 %v941, %v940
      %v987 = vpack.c.b16 %v943, %v942
      %v988 = vpack.c.b16 %v945, %v944
      %v989 = vpack.c.b16 %v947, %v946
      %v990 = vpack.c.b16 %v949, %v948
      %v991 = vpack.c.b16 %v951, %v950
      %v992 = vpack.c.b16 %v953, %v952
      %v993 = vpack.c.b16 %v955, %v954
      %v994 = vpack.c.b16 %v957, %v956
      %v995 = vpack.c.b16 %v959, %v958
      %vm1032 = vcmask 523264
      %v1034 = vsel %vm1032, %v784, 0
      %v1037 = vsel %vm1032, %v789, 0
      %v1040 = vsel %vm1032, %v794, 0
      %v1043 = vsel %vm1032, %v799, 0
      %1045 = vmatprep.subr.bf16.mxu0 0
      %1046 = vmatpush1.bf16.msra.mxu0 %v967
      %1047 = vmatprep.subr.bf16.mxu0 0
      %1048 = vmatpush1.bf16.msra.mxu0 %v966
      %1049 = vmatprep.subr.bf16.mxu0 0
      %1050 = vmatpush1.bf16.msra.mxu0 %v965
      %1051 = vmatprep.subr.bf16.mxu0 0
      %1052 = vmatpush1.bf16.msra.mxu0 %v964
      %1053 = vmatprep.subr.bf16.mxu0 0
      %1054 = vmatpush1.bf16.msra.mxu0 %v963
      %1055 = vmatprep.subr.bf16.mxu0 0
      %1056 = vmatpush1.bf16.msra.mxu0 %v962
      %1057 = vmatprep.subr.bf16.mxu0 0
      %1058 = vmatpush1.bf16.msra.mxu0 %v961
      %1059 = vmatprep.subr.bf16.mxu0 0
      %1060 = vmatpush1.bf16.msra.mxu0 %v960
      %1061 = vmatprep.subr.bf16.mxu0 0
      %1062 = vmatpush2.bf16.msra.mxu0 %v975
      %1063 = vmatprep.subr.bf16.mxu0 0
      %1064 = vmatpush2.bf16.msra.mxu0 %v974
      %1065 = vmatprep.subr.bf16.mxu0 0
      %1066 = vmatpush2.bf16.msra.mxu0 %v973
      %1067 = vmatprep.subr.bf16.mxu0 0
      %1068 = vmatpush2.bf16.msra.mxu0 %v972
      %1069 = vmatprep.subr.bf16.mxu0 0
      %1070 = vmatpush2.bf16.msra.mxu0 %v971
      %1071 = vmatprep.subr.bf16.mxu0 0
      %1072 = vmatpush2.bf16.msra.mxu0 %v970
      %1073 = vmatprep.subr.bf16.mxu0 0
      %1074 = vmatpush2.bf16.msra.mxu0 %v969
      %1075 = vmatprep.subr.bf16.mxu0 0
      %1076 = vmatpush2.bf16.msra.mxu0 %v968
      %1077 = vmatprep.mubr.bf16.mxu0 %v781
      %1078 = vmatmul.mubr.bf16.gmra.mxu0 %v780
      %v1079 = vpop.f32.mrf.mxu0
      %v1080 = vadd.f32 %v686, %v1079
      %v1081 = vpop.f32.mrf.mxu0
      %v1082 = vpop.f32.mrf.mxu0
      %v1083 = vadd.f32 %v689, %v1082
      %v1084 = vpop.f32.mrf.mxu0
      %1085 = vmatprep.mubr.bf16.mxu0 %v786
      %1086 = vmatmul.mubr.bf16.gmra.mxu0 %v785
      %v1087 = vpop.f32.mrf.mxu0
      %v1088 = vadd.f32 %v694, %v1087
      %v1089 = vpop.f32.mrf.mxu0
      %v1090 = vpop.f32.mrf.mxu0
      %v1091 = vadd.f32 %v697, %v1090
      %v1092 = vpop.f32.mrf.mxu0
      %1093 = vmatprep.mubr.bf16.mxu0 %v791
      %1094 = vmatmul.mubr.bf16.gmra.mxu0 %v790
      %v1095 = vpop.f32.mrf.mxu0
      %v1096 = vadd.f32 %v702, %v1095
      %v1097 = vpop.f32.mrf.mxu0
      %v1098 = vpop.f32.mrf.mxu0
      %v1099 = vadd.f32 %v705, %v1098
      %v1100 = vpop.f32.mrf.mxu0
      %1101 = vmatprep.mubr.bf16.mxu0 %v796
      %1102 = vmatmul.mubr.bf16.gmra.mxu0 %v795
      %v1103 = vpop.f32.mrf.mxu0
      %v1104 = vadd.f32 %v710, %v1103
      %v1105 = vpop.f32.mrf.mxu0
      %v1106 = vpop.f32.mrf.mxu0
      %v1107 = vadd.f32 %v713, %v1106
      %v1108 = vpop.f32.mrf.mxu0
      %1109 = vdwg.mxu0
      %1110 = vmatprep.subr.bf16.mxu0 0
      %1111 = vmatpush1.bf16.msra.mxu0 %v983
      %1112 = vmatprep.subr.bf16.mxu0 0
      %1113 = vmatpush1.bf16.msra.mxu0 %v982
      %1114 = vmatprep.subr.bf16.mxu0 0
      %1115 = vmatpush1.bf16.msra.mxu0 %v981
      %1116 = vmatprep.subr.bf16.mxu0 0
      %1117 = vmatpush1.bf16.msra.mxu0 %v980
      %1118 = vmatprep.subr.bf16.mxu0 0
      %1119 = vmatpush1.bf16.msra.mxu0 %v979
      %1120 = vmatprep.subr.bf16.mxu0 0
      %1121 = vmatpush1.bf16.msra.mxu0 %v978
      %1122 = vmatprep.subr.bf16.mxu0 0
      %1123 = vmatpush1.bf16.msra.mxu0 %v977
      %1124 = vmatprep.subr.bf16.mxu0 0
      %1125 = vmatpush1.bf16.msra.mxu0 %v976
      %1126 = vmatprep.subr.bf16.mxu0 0
      %1127 = vmatpush2.bf16.msra.mxu0 %v991
      %1128 = vmatprep.subr.bf16.mxu0 0
      %1129 = vmatpush2.bf16.msra.mxu0 %v990
      %1130 = vmatprep.subr.bf16.mxu0 0
      %1131 = vmatpush2.bf16.msra.mxu0 %v989
      %1132 = vmatprep.subr.bf16.mxu0 0
      %1133 = vmatpush2.bf16.msra.mxu0 %v988
      %1134 = vmatprep.subr.bf16.mxu0 0
      %1135 = vmatpush2.bf16.msra.mxu0 %v987
      %1136 = vmatprep.subr.bf16.mxu0 0
      %1137 = vmatpush2.bf16.msra.mxu0 %v986
      %1138 = vmatprep.subr.bf16.mxu0 0
      %1139 = vmatpush2.bf16.msra.mxu0 %v985
      %1140 = vmatprep.subr.bf16.mxu0 0
      %1141 = vmatpush2.bf16.msra.mxu0 %v984
      %1142 = vmatprep.mubr.bf16.mxu0 %v783
      %1143 = vmatmul.mubr.bf16.gmra.mxu0 %v782
      %v1144 = vpop.f32.mrf.mxu0
      %v1145 = vadd.f32 %v1080, %v1144
      %v1146 = vpop.f32.mrf.mxu0
      %v1147 = vpop.f32.mrf.mxu0
      %v1148 = vadd.f32 %v1083, %v1147
      %v1149 = vpop.f32.mrf.mxu0
      %1150 = vmatprep.mubr.bf16.mxu0 %v788
      %1151 = vmatmul.mubr.bf16.gmra.mxu0 %v787
      %v1152 = vpop.f32.mrf.mxu0
      %v1153 = vadd.f32 %v1088, %v1152
      %v1154 = vpop.f32.mrf.mxu0
      %v1155 = vpop.f32.mrf.mxu0
      %v1156 = vadd.f32 %v1091, %v1155
      %v1157 = vpop.f32.mrf.mxu0
      %1158 = vmatprep.mubr.bf16.mxu0 %v793
      %1159 = vmatmul.mubr.bf16.gmra.mxu0 %v792
      %v1160 = vpop.f32.mrf.mxu0
      %v1161 = vadd.f32 %v1096, %v1160
      %v1162 = vpop.f32.mrf.mxu0
      %v1163 = vpop.f32.mrf.mxu0
      %v1164 = vadd.f32 %v1099, %v1163
      %v1165 = vpop.f32.mrf.mxu0
      %1166 = vmatprep.mubr.bf16.mxu0 %v798
      %1167 = vmatmul.mubr.bf16.gmra.mxu0 %v797
      %v1168 = vpop.f32.mrf.mxu0
      %v1169 = vadd.f32 %v1104, %v1168
      %v1170 = vpop.f32.mrf.mxu0
      %v1171 = vpop.f32.mrf.mxu0
      %v1172 = vadd.f32 %v1107, %v1171
      %v1173 = vpop.f32.mrf.mxu0
      %1174 = vdwg.mxu0
      %1175 = vmatprep.subr.bf16.mxu0 0
      %1176 = vmatpush1.bf16.msra.mxu0 0
      %1177 = vmatprep.subr.bf16.mxu0 0
      %1178 = vmatpush1.bf16.msra.mxu0 0
      %1179 = vmatprep.subr.bf16.mxu0 0
      %1180 = vmatpush1.bf16.msra.mxu0 0
      %1181 = vmatprep.subr.bf16.mxu0 0
      %1182 = vmatpush1.bf16.msra.mxu0 0
      %1183 = vmatprep.subr.bf16.mxu0 0
      %1184 = vmatpush1.bf16.msra.mxu0 %v995
      %1185 = vmatprep.subr.bf16.mxu0 0
      %1186 = vmatpush1.bf16.msra.mxu0 %v994
      %1187 = vmatprep.subr.bf16.mxu0 0
      %1188 = vmatpush1.bf16.msra.mxu0 %v993
      %1189 = vmatprep.subr.bf16.mxu0 0
      %1190 = vmatpush1.bf16.msra.mxu0 %v992
      %1191 = vmatprep.subr.bf16.mxu0 0
      %1192 = vmatpush2.bf16.msra.mxu0 0
      %1193 = vmatprep.subr.bf16.mxu0 0
      %1194 = vmatpush2.bf16.msra.mxu0 0
      %1195 = vmatprep.subr.bf16.mxu0 0
      %1196 = vmatpush2.bf16.msra.mxu0 0
      %1197 = vmatprep.subr.bf16.mxu0 0
      %1198 = vmatpush2.bf16.msra.mxu0 0
      %1199 = vmatprep.subr.bf16.mxu0 0
      %1200 = vmatpush2.bf16.msra.mxu0 0
      %1201 = vmatprep.subr.bf16.mxu0 0
      %1202 = vmatpush2.bf16.msra.mxu0 0
      %1203 = vmatprep.subr.bf16.mxu0 0
      %1204 = vmatpush2.bf16.msra.mxu0 0
      %1205 = vmatprep.subr.bf16.mxu0 0
      %1206 = vmatpush2.bf16.msra.mxu0 0
      %1207 = vmatprep.mubr.bf16.mxu0 0
      %1208 = vmatmul.mubr.bf16.gmra.mxu0 %v1034
      %v1209 = vpop.f32.mrf.mxu0
      %v1210 = vadd.f32 %v1145, %v1209
      %v1211 = vpop.f32.mrf.mxu0
      %v1212 = vpop.f32.mrf.mxu0
      %v1213 = vadd.f32 %v1148, %v1212
      %v1214 = vpop.f32.mrf.mxu0
      %1215 = vmatprep.mubr.bf16.mxu0 0
      %1216 = vmatmul.mubr.bf16.gmra.mxu0 %v1037
      %v1217 = vpop.f32.mrf.mxu0
      %v1218 = vadd.f32 %v1153, %v1217
      %v1219 = vpop.f32.mrf.mxu0
      %v1220 = vpop.f32.mrf.mxu0
      %v1221 = vadd.f32 %v1156, %v1220
      %v1222 = vpop.f32.mrf.mxu0
      %1223 = vmatprep.mubr.bf16.mxu0 0
      %1224 = vmatmul.mubr.bf16.gmra.mxu0 %v1040
      %v1225 = vpop.f32.mrf.mxu0
      %v1226 = vadd.f32 %v1161, %v1225
      %v1227 = vpop.f32.mrf.mxu0
      %v1228 = vpop.f32.mrf.mxu0
      %v1229 = vadd.f32 %v1164, %v1228
      %v1230 = vpop.f32.mrf.mxu0
      %1231 = vmatprep.mubr.bf16.mxu0 0
      %1232 = vmatmul.mubr.bf16.gmra.mxu0 %v1043
      %v1233 = vpop.f32.mrf.mxu0
      %v1234 = vadd.f32 %v1169, %v1233
      %v1235 = vpop.f32.mrf.mxu0
      %v1236 = vpop.f32.mrf.mxu0
      %v1237 = vadd.f32 %v1172, %v1236
      %v1238 = vpop.f32.mrf.mxu0
      %1239 = vdwg.mxu0
      %v1240 = vld [vmem:[%s4] sm:$0x1]
      %v1242 = vlaneseq
      %v1243 = vshrl.u32 %v1242, 7
      %v1244 = vsub.s32 0, %v1243
      %v1245 = vrot.slane %v1240, %v1244
      %v1247 = vadd.f32 %v1210, %v1245
      %v1248 = vadd.f32 %v1213, %v1245
      %v1249 = vadd.f32 %v1218, %v1245
      %v1250 = vadd.f32 %v1221, %v1245
      %v1251 = vadd.f32 %v1226, %v1245
      %v1252 = vadd.f32 %v1229, %v1245
      %v1253 = vadd.f32 %v1234, %v1245
      %v1254 = vadd.f32 %v1237, %v1245
      %vm1255 = vcmp.ge.f32.partialorder %v1247, 0.0
      %vm1256 = vcmp.ge.f32.partialorder %v1248, 0.0
      %vm1257 = vcmp.ge.f32.partialorder %v1249, 0.0
      %vm1258 = vcmp.ge.f32.partialorder %v1250, 0.0
      %vm1259 = vcmp.ge.f32.partialorder %v1251, 0.0
      %vm1260 = vcmp.ge.f32.partialorder %v1252, 0.0
      %vm1261 = vcmp.ge.f32.partialorder %v1253, 0.0
      %vm1262 = vcmp.ge.f32.partialorder %v1254, 0.0
      %v1263 = vmul.f32 %v1247, 0.01
      %v1264 = vmul.f32 %v1248, 0.01
      %v1265 = vmul.f32 %v1249, 0.01
      %v1266 = vmul.f32 %v1250, 0.01
      %v1267 = vmul.f32 %v1251, 0.01
      %v1268 = vmul.f32 %v1252, 0.01
      %v1269 = vmul.f32 %v1253, 0.01
      %v1270 = vmul.f32 %v1254, 0.01
      %v1271 = vsel %vm1255, %v1247, %v1263
      %v1272 = vsel %vm1256, %v1248, %v1264
      %v1273 = vsel %vm1257, %v1249, %v1265
      %v1274 = vsel %vm1258, %v1250, %v1266
      %v1275 = vsel %vm1259, %v1251, %v1267
      %v1276 = vsel %vm1260, %v1252, %v1268
      %v1277 = vsel %vm1261, %v1253, %v1269
      %v1278 = vsel %vm1262, %v1254, %v1270
      %v1279 = vpack.c.bf16 %v1272, %v1271
      %v1280 = vpack.c.bf16 %v1274, %v1273
      %v1281 = vpack.c.bf16 %v1276, %v1275
      %v1282 = vpack.c.bf16 %v1278, %v1277
      %v1287 = vunpack.c.l.b16 %v1279
      %v1288 = vunpack.c.h.b16 %v1279
      %v1289 = vunpack.c.l.b16 %v1280
      %v1290 = vunpack.c.h.b16 %v1280
      %v1291 = vunpack.c.l.b16 %v1281
      %v1292 = vunpack.c.h.b16 %v1281
      %v1293 = vunpack.c.l.b16 %v1282
      %v1294 = vunpack.c.h.b16 %v1282
      %v1295 = vpack.c.b16 %v1287, %v1287
      %v1296 = vpack.c.b16 %v1288, %v1288
      %v1297 = vpack.c.b16 %v1289, %v1289
      %v1298 = vpack.c.b16 %v1290, %v1290
      %v1299 = vpack.c.b16 %v1291, %v1291
      %v1300 = vpack.c.b16 %v1292, %v1292
      %v1301 = vpack.c.b16 %v1293, %v1293
      %v1302 = vpack.c.b16 %v1294, %v1294
      %vm1311 = vcmask 257024
      %1312 = vst.msk [vmem:[%s254] sm:$0xf] %vm1311, %v1295
      %1313 = vst.msk [vmem:[%s254 + $0x4] sm:$0xf] %vm1311, %v1296
      %1314 = vst.msk [vmem:[%s254 + $0x8] sm:$0xf] %vm1311, %v1297
      %1315 = vst.msk [vmem:[%s254 + $0xc] sm:$0xf] %vm1311, %v1298
      %1316 = vst.msk [vmem:[%s254 + $0x10] sm:$0xf] %vm1311, %v1299
      %1317 = vst.msk [vmem:[%s254 + $0x14] sm:$0xf] %vm1311, %v1300
      %1318 = vst.msk [vmem:[%s254 + $0x18] sm:$0xf] %vm1311, %v1301
      %1319 = vst.msk [vmem:[%s254 + $0x1c] sm:$0xf] %vm1311, %v1302
      %s1320 = smul.u32 8, %s16
      %p1321 = scmp.lt.s32.totalorder %s1320, 15
      %s1322 = scalar_select %p1321, %s1320, 15
      %s1323 = smul.addr %s1322, 4
      %s1324 = scalar_lea.vmem %s5, %s1323
      // Predicated region
      $region41: #{image_reconstruction_forward.13} parent=39 // pred_check
        %p1325 = pneg %p149
      $region42: #{image_reconstruction_forward.13} parent=39 // pred_check_branch
        %1327 = sbr.rel (%p1325) target = $region44
      $region43: #{image_reconstruction_forward.13} parent=39 // pred_region
        %s1328 = smul.u32 8, %s16
      $region44: #{image_reconstruction_forward.13} parent=39 // pred_fallthru
        _
    $region40: #{image_reconstruction_forward.13} parent=5 // pred_fallthru
      _
    %p1329 = scmp.le.s32.totalorder 2, %s11
    // Predicated region
    $region45: #{image_reconstruction_forward.13} parent=5 // pred_check
      %p1330 = pneg %p1329
    $region46: #{image_reconstruction_forward.13} parent=5 // pred_check_branch
      %1332 = sbr.rel (%p1330) target = $region48
    $region47: #{image_reconstruction_forward.13} parent=5 // pred_region
      %s1333 = ssub.s32 %s11, 2
      // Predicated region
      $region49: #{image_reconstruction_forward.13} parent=47 // pred_check
        %p1334 = pneg %p155
      $region50: #{image_reconstruction_forward.13} parent=47 // pred_check_branch
        %1336 = sbr.rel (%p1334) target = $region52
      $region51: #{image_reconstruction_forward.13} parent=47 // pred_region
        %s1337 = smul.u32 8, %s17
        %p1338 = scmp.lt.s32.totalorder %s1337, 15
        %s1339 = scalar_select %p1338, %s1337, 15
        %s1340 = smul.addr %s1339, 4
        %s1341 = scalar_lea.vmem %s5, %s1340
      $region52: #{image_reconstruction_forward.13} parent=47 // pred_fallthru
        _
    $region48: #{image_reconstruction_forward.13} parent=5 // pred_fallthru
      _
  $region6: #{image_reconstruction_forward.13} parent=0 // loop_footer
    %s15 = sadd.s32 1, %s11
  $region7: #{image_reconstruction_forward.13} parent=0 // loop_footer_branch
    %10 = sbr.rel target = $region3
  $region8: #{image_reconstruction_forward.13} parent=0 // loop_exit
    _

// kernel: image_reconstruction_forward.14
$region0: #{image_reconstruction_forward.14}
  #allocation0 [shape = 'u32[]', space=smem, size = 0x4, offset = 0x4, fixed_abs, tag = 'smem constant byte address 0x4 - core index']
  #allocation1 [shape = 'u32[144,128]{1,0:T(1,128)}', space=vmem, size = 0x12000, scoped, tag = 'internal scratch']
  %s0 = inlined_call_operand.vmem [shape: bf16[512,288], index: 0, kind: input, shape index: {}]
  %s1 = inlined_call_operand.vmem [shape: bf16[288,16], index: 1, kind: input, shape index: {}]
  %s2 = inlined_call_operand.vmem [shape: f32[1,16], index: 2, kind: input, shape index: {}]
  %s3 = inlined_call_operand.vmem [shape: bf16[512,16], index: 3, kind: output, shape index: {}]
  %s4 = sld [smem:[#allocation0]]
  $region45: #{image_reconstruction_forward.14} parent=0
    _
  %s6 = ssub.s32 1, %s4
  %s7 = scalar_select 0, %s6, %s4
  loop: start=0, step=1, limit=4
  $region2: #{image_reconstruction_forward.14} parent=0 // loop_pre_header
    _
  $region3: #{image_reconstruction_forward.14} parent=0 // loop_header
    %s9 = sphi 0, %s13
    %p10 = scmp.ge.s32.totalorder %s9, 4
    %s19 = sphi 0, %s21
    %s22 = sphi 0, %s19
    %s23 = sphi 0, %s22
    %s39 = sphi 0, %s23
    %s43 = sphi 0, %s43
    %s45 = sphi 0, %s43
    %s46 = sphi 0, %s45
    %s60 = sphi 0, %s46
    %s64 = sphi 0, %s64
    %s66 = sphi 0, %s64
    %s67 = sphi 0, %s66
    %s81 = sphi 0, %s67
    %s87 = sphi 0, %s89
    %s90 = sphi 0, %s87
    %s91 = sphi 0, %s90
    %s107 = sphi 0, %s91
  $region4: #{image_reconstruction_forward.14} parent=0 // loop_header_branch
    %12 = sbr.rel (%p10) target = $region8
  $region5: #{image_reconstruction_forward.14} parent=0 // loop_body
    %s14 = ssub.s32 %s9, 1
    %s15 = ssub.s32 %s9, 2
    %s16 = sadd.s32 %s9, 1
    %s17 = ssub.s32 %s9, %s16
    %p18 = scmp.eq.s32.totalorder %s17, 0
    %s20 = sadd.s32 %s19, 1
    %s21 = scalar_select %p18, %s19, %s20
    %p24 = pneg %p18
    %p25 = scmp.eq.s32.totalorder %s9, 1
    %p26 = por %p24, %p25
    %p27 = scmp.ne.s32.totalorder %s19, %s22
    %p28 = scmp.eq.s32.totalorder %s9, 0
    %p29 = por %p27, %p28
    %p30 = scmp.ne.s32.totalorder %s19, %s22
    %p31 = scmp.eq.s32.totalorder %s14, 1
    %p32 = por %p30, %p31
    %p33 = scmp.ne.s32.totalorder %s22, %s23
    %p34 = scmp.eq.s32.totalorder %s14, 0
    %p35 = por %p33, %p34
    %p36 = scmp.ne.s32.totalorder %s22, %s23
    %p37 = scmp.eq.s32.totalorder %s15, 1
    %p38 = por %p36, %p37
    %p40 = scmp.ne.s32.totalorder %s23, %s39
    %p41 = scmp.eq.s32.totalorder %s15, 0
    %p42 = por %p40, %p41
    %s44 = sadd.s32 %s43, 1
    %p47 = scmp.eq.s32.totalorder %s9, 1
    %p48 = scmp.ne.s32.totalorder %s43, %s45
    %p49 = scmp.eq.s32.totalorder %s9, 0
    %p50 = por %p48, %p49
    %p51 = scmp.ne.s32.totalorder %s43, %s45
    %p52 = scmp.eq.s32.totalorder %s14, 1
    %p53 = por %p51, %p52
    %p54 = scmp.ne.s32.totalorder %s45, %s46
    %p55 = scmp.eq.s32.totalorder %s14, 0
    %p56 = por %p54, %p55
    %p57 = scmp.ne.s32.totalorder %s45, %s46
    %p58 = scmp.eq.s32.totalorder %s15, 1
    %p59 = por %p57, %p58
    %p61 = scmp.ne.s32.totalorder %s46, %s60
    %p62 = scmp.eq.s32.totalorder %s15, 0
    %p63 = por %p61, %p62
    %s65 = sadd.s32 %s64, 1
    %p68 = scmp.eq.s32.totalorder %s9, 1
    %p69 = scmp.ne.s32.totalorder %s64, %s66
    %p70 = scmp.eq.s32.totalorder %s9, 0
    %p71 = por %p69, %p70
    %p72 = scmp.ne.s32.totalorder %s64, %s66
    %p73 = scmp.eq.s32.totalorder %s14, 1
    %p74 = por %p72, %p73
    %p75 = scmp.ne.s32.totalorder %s66, %s67
    %p76 = scmp.eq.s32.totalorder %s14, 0
    %p77 = por %p75, %p76
    %p78 = scmp.ne.s32.totalorder %s66, %s67
    %p79 = scmp.eq.s32.totalorder %s15, 1
    %p80 = por %p78, %p79
    %p82 = scmp.ne.s32.totalorder %s67, %s81
    %p83 = scmp.eq.s32.totalorder %s15, 0
    %p84 = por %p82, %p83
    %s85 = ssub.s32 %s9, %s16
    %p86 = scmp.eq.s32.totalorder %s85, 0
    %s88 = sadd.s32 %s87, 1
    %s89 = scalar_select %p86, %s87, %s88
    %p92 = pneg %p86
    %p93 = scmp.eq.s32.totalorder %s9, 1
    %p94 = por %p92, %p93
    %p95 = scmp.ne.s32.totalorder %s87, %s90
    %p96 = scmp.eq.s32.totalorder %s9, 0
    %p97 = por %p95, %p96
    %p98 = scmp.ne.s32.totalorder %s87, %s90
    %p99 = scmp.eq.s32.totalorder %s14, 1
    %p100 = por %p98, %p99
    %p101 = scmp.ne.s32.totalorder %s90, %s91
    %p102 = scmp.eq.s32.totalorder %s14, 0
    %p103 = por %p101, %p102
    %p104 = scmp.ne.s32.totalorder %s90, %s91
    %p105 = scmp.eq.s32.totalorder %s15, 1
    %p106 = por %p104, %p105
    %p108 = scmp.ne.s32.totalorder %s91, %s107
    %p109 = scmp.eq.s32.totalorder %s15, 0
    %p110 = por %p108, %p109
    %p111 = scmp.le.s32.totalorder 1, %s9
    %p112 = scmp.lt.s32.totalorder %s9, 3
    %p113 = pnand %p111, %p112
    %p114 = pneg %p113
    // Predicated region
    $region9: #{image_reconstruction_forward.14} parent=5 // pred_check
      _
    $region10: #{image_reconstruction_forward.14} parent=5 // pred_check_branch
      %116 = sbr.rel (%p113) target = $region12
    $region11: #{image_reconstruction_forward.14} parent=5 // pred_region
      %s117 = ssub.s32 %s9, 1
      // Predicated region
      $region13: #{image_reconstruction_forward.14} parent=11 // pred_check
        %p118 = pneg %p56
      $region14: #{image_reconstruction_forward.14} parent=11 // pred_check_branch
        %120 = sbr.rel (%p118) target = $region16
      $region15: #{image_reconstruction_forward.14} parent=11 // pred_region
        _
      $region16: #{image_reconstruction_forward.14} parent=11 // pred_fallthru
        _
      // Predicated region
      $region17: #{image_reconstruction_forward.14} parent=11 // pred_check
        %p121 = pneg %p77
      $region18: #{image_reconstruction_forward.14} parent=11 // pred_check_branch
        %123 = sbr.rel (%p121) target = $region20
      $region19: #{image_reconstruction_forward.14} parent=11 // pred_region
        _
      $region20: #{image_reconstruction_forward.14} parent=11 // pred_fallthru
        _
    $region12: #{image_reconstruction_forward.14} parent=5 // pred_fallthru
      _
    %p124 = scmp.lt.s32.totalorder %s9, 2
    // Predicated region
    $region21: #{image_reconstruction_forward.14} parent=5 // pred_check
      %p125 = pneg %p124
    $region22: #{image_reconstruction_forward.14} parent=5 // pred_check_branch
      %127 = sbr.rel (%p125) target = $region24
    $region23: #{image_reconstruction_forward.14} parent=5 // pred_region
      // Predicated region
      $region25: #{image_reconstruction_forward.14} parent=23 // pred_check
        %p128 = pneg %p29
      $region26: #{image_reconstruction_forward.14} parent=23 // pred_check_branch
        %130 = sbr.rel (%p128) target = $region28
      $region27: #{image_reconstruction_forward.14} parent=23 // pred_region
        %s131 = smul.u32 32, %s9
        %p132 = scmp.lt.s32.totalorder %s131, 63
        %s133 = scalar_select %p132, %s131, 63
        %s134 = smul.addr %s133, 3
        %s135 = smul.addr %s134, 4
        %s136 = scalar_lea.vmem %s0, %s135
        %s137 = smul.u32 32, %s9
      $region28: #{image_reconstruction_forward.14} parent=23 // pred_fallthru
        _
    $region24: #{image_reconstruction_forward.14} parent=5 // pred_fallthru
      _
    %p138 = scmp.le.s32.totalorder 1, %s9
    %p139 = scmp.lt.s32.totalorder %s9, 3
    %p140 = pnand %p138, %p139
    %p141 = pneg %p140
    // Predicated region
    $region29: #{image_reconstruction_forward.14} parent=5 // pred_check
      _
    $region30: #{image_reconstruction_forward.14} parent=5 // pred_check_branch
      %143 = sbr.rel (%p140) target = $region32
    $region31: #{image_reconstruction_forward.14} parent=5 // pred_region
      %s144 = ssub.s32 %s9, 1
      %s145 = smul.u32 32, %s14
      %p146 = scmp.lt.s32.totalorder %s145, 63
      %s147 = scalar_select %p146, %s145, 63
      %s148 = smul.addr %s147, 3
      %s149 = smul.addr %s148, 4
      %s150 = scalar_lea.vmem %s0, %s149
      %p151 = pneg %p35
      %p152 = pneg %p32
      %p153 = pneg %p56
      %p154 = pneg %p53
      %p155 = pneg %p77
      %p156 = pneg %p74
      %p157 = pneg %p103
      %p158 = pneg %p100
      %s159 = smul.u32 32, %s14
      %p160 = scmp.lt.s32.totalorder %s159, 63
      %s161 = scalar_select %p160, %s159, 63
      %s162 = smul.addr %s161, 4
      %s163 = scalar_lea.vmem %s3, %s162
      %s164 = smul.u32 32, %s14
      %p165 = scmp.lt.s32.totalorder %s164, 63
      %s166 = scalar_select %p165, %s164, 63
      %s167 = smul.addr %s166, 3
      %s168 = smul.addr %s167, 4
      %s169 = scalar_lea.vmem %s0, %s168
      %s170 = smul.u32 32, %s14
      %s171 = smul.u32 32, %s14
      %p172 = scmp.lt.s32.totalorder %s171, 63
      %s173 = scalar_select %p172, %s171, 63
      %s174 = smul.addr %s173, 4
      %s175 = scalar_lea.vmem %s3, %s174
      %s176 = smul.u32 32, %s14
      %v178 = vld [vmem:[%s169] sm:$0xff]
      %v179 = vld [vmem:[%s169 + $0x8] sm:$0xf]
      %v180 = vld [vmem:[%s169 + $0xc] sm:$0xff]
      %v181 = vld [vmem:[%s169 + $0x14] sm:$0xf]
      %v182 = vld [vmem:[%s169 + $0x18] sm:$0xff]
      %v183 = vld [vmem:[%s169 + $0x20] sm:$0xf]
      %v184 = vld [vmem:[%s169 + $0x24] sm:$0xff]
      %v185 = vld [vmem:[%s169 + $0x2c] sm:$0xf]
      %v186 = vld [vmem:[%s169 + $0x30] sm:$0xff]
      %v187 = vld [vmem:[%s169 + $0x38] sm:$0xf]
      %v188 = vld [vmem:[%s169 + $0x3c] sm:$0xff]
      %v189 = vld [vmem:[%s169 + $0x44] sm:$0xf]
      %v190 = vld [vmem:[%s169 + $0x48] sm:$0xff]
      %v191 = vld [vmem:[%s169 + $0x50] sm:$0xf]
      %v192 = vld [vmem:[%s169 + $0x54] sm:$0xff]
      %v193 = vld [vmem:[%s169 + $0x5c] sm:$0xf]
      %v194 = vld [vmem:[%s169 + $0x60] sm:$0xff]
      %v195 = vld [vmem:[%s169 + $0x68] sm:$0xf]
      %v196 = vld [vmem:[%s169 + $0x6c] sm:$0xff]
      %v197 = vld [vmem:[%s169 + $0x74] sm:$0xf]
      %v198 = vld [vmem:[%s169 + $0x78] sm:$0xff]
      %v199 = vld [vmem:[%s169 + $0x80] sm:$0xf]
      %v200 = vld [vmem:[%s169 + $0x84] sm:$0xff]
      %v201 = vld [vmem:[%s169 + $0x8c] sm:$0xf]
      %v202 = vld [vmem:[%s169 + $0x90] sm:$0xff]
      %v203 = vld [vmem:[%s169 + $0x98] sm:$0xf]
      %v204 = vld [vmem:[%s169 + $0x9c] sm:$0xff]
      %v205 = vld [vmem:[%s169 + $0xa4] sm:$0xf]
      %v206 = vld [vmem:[%s169 + $0xa8] sm:$0xff]
      %v207 = vld [vmem:[%s169 + $0xb0] sm:$0xf]
      %v208 = vld [vmem:[%s169 + $0xb4] sm:$0xff]
      %v209 = vld [vmem:[%s169 + $0xbc] sm:$0xf]
      %v210 = vld [vmem:[%s169 + $0xc0] sm:$0xff]
      %v211 = vld [vmem:[%s169 + $0xc8] sm:$0xf]
      %v212 = vld [vmem:[%s169 + $0xcc] sm:$0xff]
      %v213 = vld [vmem:[%s169 + $0xd4] sm:$0xf]
      %v214 = vld [vmem:[%s169 + $0xd8] sm:$0xff]
      %v215 = vld [vmem:[%s169 + $0xe0] sm:$0xf]
      %v216 = vld [vmem:[%s169 + $0xe4] sm:$0xff]
      %v217 = vld [vmem:[%s169 + $0xec] sm:$0xf]
      %v218 = vld [vmem:[%s169 + $0xf0] sm:$0xff]
      %v219 = vld [vmem:[%s169 + $0xf8] sm:$0xf]
      %v220 = vld [vmem:[%s169 + $0xfc] sm:$0xff]
      %v221 = vld [vmem:[%s169 + $0x104] sm:$0xf]
      %v222 = vld [vmem:[%s169 + $0x108] sm:$0xff]
      %v223 = vld [vmem:[%s169 + $0x110] sm:$0xf]
      %v224 = vld [vmem:[%s169 + $0x114] sm:$0xff]
      %v225 = vld [vmem:[%s169 + $0x11c] sm:$0xf]
      %v226 = vld [vmem:[%s169 + $0x120] sm:$0xff]
      %v227 = vld [vmem:[%s169 + $0x128] sm:$0xf]
      %v228 = vld [vmem:[%s169 + $0x12c] sm:$0xff]
      %v229 = vld [vmem:[%s169 + $0x134] sm:$0xf]
      %v230 = vld [vmem:[%s169 + $0x138] sm:$0xff]
      %v231 = vld [vmem:[%s169 + $0x140] sm:$0xf]
      %v232 = vld [vmem:[%s169 + $0x144] sm:$0xff]
      %v233 = vld [vmem:[%s169 + $0x14c] sm:$0xf]
      %v234 = vld [vmem:[%s169 + $0x150] sm:$0xff]
      %v235 = vld [vmem:[%s169 + $0x158] sm:$0xf]
      %v236 = vld [vmem:[%s169 + $0x15c] sm:$0xff]
      %v237 = vld [vmem:[%s169 + $0x164] sm:$0xf]
      %v238 = vld [vmem:[%s169 + $0x168] sm:$0xff]
      %v239 = vld [vmem:[%s169 + $0x170] sm:$0xf]
      %v240 = vld [vmem:[%s169 + $0x174] sm:$0xff]
      %v241 = vld [vmem:[%s169 + $0x17c] sm:$0xf]
      %v242 = vld [vmem:[%s1] sm:$0xf]
      %v243 = vld [vmem:[%s1 + $0x4] sm:$0xf]
      %v244 = vld [vmem:[%s1 + $0x8] sm:$0xf]
      %v245 = vld [vmem:[%s1 + $0xc] sm:$0xf]
      %v246 = vld [vmem:[%s1 + $0x10] sm:$0xf]
      %v247 = vld [vmem:[%s1 + $0x14] sm:$0xf]
      %v248 = vld [vmem:[%s1 + $0x18] sm:$0xf]
      %v249 = vld [vmem:[%s1 + $0x1c] sm:$0xf]
      %v250 = vld [vmem:[%s1 + $0x20] sm:$0xf]
      %v251 = vld [vmem:[%s1 + $0x24] sm:$0xf]
      %v252 = vld [vmem:[%s1 + $0x28] sm:$0xf]
      %v253 = vld [vmem:[%s1 + $0x2c] sm:$0xf]
      %v254 = vld [vmem:[%s1 + $0x30] sm:$0xf]
      %v255 = vld [vmem:[%s1 + $0x34] sm:$0xf]
      %v256 = vld [vmem:[%s1 + $0x38] sm:$0xf]
      %v257 = vld [vmem:[%s1 + $0x3c] sm:$0xf]
      %v258 = vld [vmem:[%s1 + $0x40] sm:$0xf]
      %v259 = vld [vmem:[%s1 + $0x44] sm:$0xf]
      %v260 = vld [vmem:[%s1 + $0x48] sm:$0xf]
      %v261 = vld [vmem:[%s1 + $0x4c] sm:$0xf]
      %v262 = vld [vmem:[%s1 + $0x50] sm:$0xf]
      %v263 = vld [vmem:[%s1 + $0x54] sm:$0xf]
      %v264 = vld [vmem:[%s1 + $0x58] sm:$0xf]
      %v265 = vld [vmem:[%s1 + $0x5c] sm:$0xf]
      %v266 = vld [vmem:[%s1 + $0x60] sm:$0xf]
      %v267 = vld [vmem:[%s1 + $0x64] sm:$0xf]
      %v268 = vld [vmem:[%s1 + $0x68] sm:$0xf]
      %v269 = vld [vmem:[%s1 + $0x6c] sm:$0xf]
      %v270 = vld [vmem:[%s1 + $0x70] sm:$0xf]
      %v271 = vld [vmem:[%s1 + $0x74] sm:$0xf]
      %v272 = vld [vmem:[%s1 + $0x78] sm:$0xf]
      %v273 = vld [vmem:[%s1 + $0x7c] sm:$0xf]
      %v274 = vld [vmem:[%s1 + $0x80] sm:$0xf]
      %v275 = vld [vmem:[%s1 + $0x84] sm:$0xf]
      %v276 = vld [vmem:[%s1 + $0x88] sm:$0xf]
      %v277 = vld [vmem:[%s1 + $0x8c] sm:$0xf]
      %v278 = vld [vmem:[%s2] sm:$0x1]
      %v280 = vlaneseq
      %v281 = vshrl.u32 %v280, 7
      %v282 = vsub.s32 0, %v281
      %v283 = vrot.slane %v278, %v282
      %v349 = vunpack.c.l.b16 %v178
      %v350 = vunpack.c.h.b16 %v178
      %v351 = vunpack.c.l.b16 %v179
      %v352 = vunpack.c.l.b16 %v180
      %v353 = vunpack.c.h.b16 %v180
      %v354 = vunpack.c.l.b16 %v181
      %v355 = vunpack.c.l.b16 %v182
      %v356 = vunpack.c.h.b16 %v182
      %v357 = vunpack.c.l.b16 %v183
      %v358 = vunpack.c.l.b16 %v184
      %v359 = vunpack.c.h.b16 %v184
      %v360 = vunpack.c.l.b16 %v185
      %v361 = vunpack.c.l.b16 %v186
      %v362 = vunpack.c.h.b16 %v186
      %v363 = vunpack.c.l.b16 %v187
      %v364 = vunpack.c.l.b16 %v188
      %v365 = vunpack.c.h.b16 %v188
      %v366 = vunpack.c.l.b16 %v189
      %v367 = vunpack.c.l.b16 %v190
      %v368 = vunpack.c.h.b16 %v190
      %v369 = vunpack.c.l.b16 %v191
      %v370 = vunpack.c.l.b16 %v192
      %v371 = vunpack.c.h.b16 %v192
      %v372 = vunpack.c.l.b16 %v193
      %v373 = vunpack.c.l.b16 %v194
      %v374 = vunpack.c.h.b16 %v194
      %v375 = vunpack.c.l.b16 %v195
      %v376 = vunpack.c.l.b16 %v196
      %v377 = vunpack.c.h.b16 %v196
      %v378 = vunpack.c.l.b16 %v197
      %v379 = vunpack.c.l.b16 %v198
      %v380 = vunpack.c.h.b16 %v198
      %v381 = vunpack.c.l.b16 %v199
      %v382 = vunpack.c.l.b16 %v200
      %v383 = vunpack.c.h.b16 %v200
      %v384 = vunpack.c.l.b16 %v201
      %v385 = vunpack.c.l.b16 %v202
      %v386 = vunpack.c.h.b16 %v202
      %v387 = vunpack.c.l.b16 %v203
      %v388 = vunpack.c.l.b16 %v204
      %v389 = vunpack.c.h.b16 %v204
      %v390 = vunpack.c.l.b16 %v205
      %v391 = vunpack.c.l.b16 %v206
      %v392 = vunpack.c.h.b16 %v206
      %v393 = vunpack.c.l.b16 %v207
      %v394 = vunpack.c.l.b16 %v208
      %v395 = vunpack.c.h.b16 %v208
      %v396 = vunpack.c.l.b16 %v209
      %v397 = vunpack.c.l.b16 %v210
      %v398 = vunpack.c.h.b16 %v210
      %v399 = vunpack.c.l.b16 %v211
      %v400 = vunpack.c.l.b16 %v212
      %v401 = vunpack.c.h.b16 %v212
      %v402 = vunpack.c.l.b16 %v213
      %v403 = vunpack.c.l.b16 %v214
      %v404 = vunpack.c.h.b16 %v214
      %v405 = vunpack.c.l.b16 %v215
      %v406 = vunpack.c.l.b16 %v216
      %v407 = vunpack.c.h.b16 %v216
      %v408 = vunpack.c.l.b16 %v217
      %v409 = vunpack.c.l.b16 %v218
      %v410 = vunpack.c.h.b16 %v218
      %v411 = vunpack.c.l.b16 %v219
      %v412 = vunpack.c.l.b16 %v220
      %v413 = vunpack.c.h.b16 %v220
      %v414 = vunpack.c.l.b16 %v221
      %v415 = vunpack.c.l.b16 %v222
      %v416 = vunpack.c.h.b16 %v222
      %v417 = vunpack.c.l.b16 %v223
      %v418 = vunpack.c.l.b16 %v224
      %v419 = vunpack.c.h.b16 %v224
      %v420 = vunpack.c.l.b16 %v225
      %v421 = vunpack.c.l.b16 %v226
      %v422 = vunpack.c.h.b16 %v226
      %v423 = vunpack.c.l.b16 %v227
      %v424 = vunpack.c.l.b16 %v228
      %v425 = vunpack.c.h.b16 %v228
      %v426 = vunpack.c.l.b16 %v229
      %v427 = vunpack.c.l.b16 %v230
      %v428 = vunpack.c.h.b16 %v230
      %v429 = vunpack.c.l.b16 %v231
      %v430 = vunpack.c.l.b16 %v232
      %v431 = vunpack.c.h.b16 %v232
      %v432 = vunpack.c.l.b16 %v233
      %v433 = vunpack.c.l.b16 %v234
      %v434 = vunpack.c.h.b16 %v234
      %v435 = vunpack.c.l.b16 %v235
      %v436 = vunpack.c.l.b16 %v236
      %v437 = vunpack.c.h.b16 %v236
      %v438 = vunpack.c.l.b16 %v237
      %v439 = vunpack.c.l.b16 %v238
      %v440 = vunpack.c.h.b16 %v238
      %v441 = vunpack.c.l.b16 %v239
      %v442 = vunpack.c.l.b16 %v240
      %v443 = vunpack.c.h.b16 %v240
      %v444 = vunpack.c.l.b16 %v241
      %v445 = vpack.c.b16 %v352, %v349
      %v446 = vpack.c.b16 %v353, %v350
      %v447 = vpack.c.b16 %v354, %v351
      %v448 = vpack.c.b16 %v358, %v355
      %v449 = vpack.c.b16 %v359, %v356
      %v450 = vpack.c.b16 %v360, %v357
      %v451 = vpack.c.b16 %v364, %v361
      %v452 = vpack.c.b16 %v365, %v362
      %v453 = vpack.c.b16 %v366, %v363
      %v454 = vpack.c.b16 %v370, %v367
      %v455 = vpack.c.b16 %v371, %v368
      %v456 = vpack.c.b16 %v372, %v369
      %v457 = vpack.c.b16 %v376, %v373
      %v458 = vpack.c.b16 %v377, %v374
      %v459 = vpack.c.b16 %v378, %v375
      %v460 = vpack.c.b16 %v382, %v379
      %v461 = vpack.c.b16 %v383, %v380
      %v462 = vpack.c.b16 %v384, %v381
      %v463 = vpack.c.b16 %v388, %v385
      %v464 = vpack.c.b16 %v389, %v386
      %v465 = vpack.c.b16 %v390, %v387
      %v466 = vpack.c.b16 %v394, %v391
      %v467 = vpack.c.b16 %v395, %v392
      %v468 = vpack.c.b16 %v396, %v393
      %v469 = vpack.c.b16 %v400, %v397
      %v470 = vpack.c.b16 %v401, %v398
      %v471 = vpack.c.b16 %v402, %v399
      %v472 = vpack.c.b16 %v406, %v403
      %v473 = vpack.c.b16 %v407, %v404
      %v474 = vpack.c.b16 %v408, %v405
      %v475 = vpack.c.b16 %v412, %v409
      %v476 = vpack.c.b16 %v413, %v410
      %v477 = vpack.c.b16 %v414, %v411
      %v478 = vpack.c.b16 %v418, %v415
      %v479 = vpack.c.b16 %v419, %v416
      %v480 = vpack.c.b16 %v420, %v417
      %v481 = vpack.c.b16 %v424, %v421
      %v482 = vpack.c.b16 %v425, %v422
      %v483 = vpack.c.b16 %v426, %v423
      %v484 = vpack.c.b16 %v430, %v427
      %v485 = vpack.c.b16 %v431, %v428
      %v486 = vpack.c.b16 %v432, %v429
      %v487 = vpack.c.b16 %v436, %v433
      %v488 = vpack.c.b16 %v437, %v434
      %v489 = vpack.c.b16 %v438, %v435
      %v490 = vpack.c.b16 %v442, %v439
      %v491 = vpack.c.b16 %v443, %v440
      %v492 = vpack.c.b16 %v444, %v441
      %v561 = vunpack.c.l.b16 %v242
      %v562 = vunpack.c.l.b16 %v243
      %v563 = vunpack.c.l.b16 %v244
      %v564 = vunpack.c.l.b16 %v245
      %v565 = vunpack.c.l.b16 %v246
      %v566 = vunpack.c.l.b16 %v247
      %v567 = vunpack.c.l.b16 %v248
      %v568 = vunpack.c.l.b16 %v249
      %v569 = vunpack.c.l.b16 %v250
      %v570 = vunpack.c.l.b16 %v251
      %v571 = vunpack.c.l.b16 %v252
      %v572 = vunpack.c.l.b16 %v253
      %v573 = vunpack.c.l.b16 %v254
      %v574 = vunpack.c.l.b16 %v255
      %v575 = vunpack.c.l.b16 %v256
      %v576 = vunpack.c.l.b16 %v257
      %v577 = vunpack.c.l.b16 %v258
      %v578 = vunpack.c.l.b16 %v259
      %v579 = vunpack.c.l.b16 %v260
      %v580 = vunpack.c.l.b16 %v261
      %v581 = vunpack.c.l.b16 %v262
      %v582 = vunpack.c.l.b16 %v263
      %v583 = vunpack.c.l.b16 %v264
      %v584 = vunpack.c.l.b16 %v265
      %v585 = vunpack.c.l.b16 %v266
      %v586 = vunpack.c.l.b16 %v267
      %v587 = vunpack.c.l.b16 %v268
      %v588 = vunpack.c.l.b16 %v269
      %v589 = vunpack.c.l.b16 %v270
      %v590 = vunpack.c.l.b16 %v271
      %v591 = vunpack.c.l.b16 %v272
      %v592 = vunpack.c.l.b16 %v273
      %v593 = vunpack.c.l.b16 %v274
      %v594 = vunpack.c.l.b16 %v275
      %v595 = vunpack.c.l.b16 %v276
      %v596 = vunpack.c.l.b16 %v277
      %v597 = vpack.c.b16 %v562, %v561
      %v598 = vpack.c.b16 %v564, %v563
      %v599 = vpack.c.b16 %v566, %v565
      %v600 = vpack.c.b16 %v568, %v567
      %v601 = vpack.c.b16 %v570, %v569
      %v602 = vpack.c.b16 %v572, %v571
      %v603 = vpack.c.b16 %v574, %v573
      %v604 = vpack.c.b16 %v576, %v575
      %v605 = vpack.c.b16 %v578, %v577
      %v606 = vpack.c.b16 %v580, %v579
      %v607 = vpack.c.b16 %v582, %v581
      %v608 = vpack.c.b16 %v584, %v583
      %v609 = vpack.c.b16 %v586, %v585
      %v610 = vpack.c.b16 %v588, %v587
      %v611 = vpack.c.b16 %v590, %v589
      %v612 = vpack.c.b16 %v592, %v591
      %v613 = vpack.c.b16 %v594, %v593
      %v614 = vpack.c.b16 %v596, %v595
      %vm633 = vcmask 261120
      %v635 = vsel %vm633, %v447, 0
      %v638 = vsel %vm633, %v450, 0
      %v641 = vsel %vm633, %v453, 0
      %v644 = vsel %vm633, %v456, 0
      %v647 = vsel %vm633, %v459, 0
      %v650 = vsel %vm633, %v462, 0
      %v653 = vsel %vm633, %v465, 0
      %v656 = vsel %vm633, %v468, 0
      %v659 = vsel %vm633, %v471, 0
      %v662 = vsel %vm633, %v474, 0
      %v665 = vsel %vm633, %v477, 0
      %v668 = vsel %vm633, %v480, 0
      %v671 = vsel %vm633, %v483, 0
      %v674 = vsel %vm633, %v486, 0
      %v677 = vsel %vm633, %v489, 0
      %v680 = vsel %vm633, %v492, 0
      %682 = vmatprep.subr.bf16.mxu0 0
      %683 = vmatpush1.bf16.msra.mxu0 %v604
      %684 = vmatprep.subr.bf16.mxu0 0
      %685 = vmatpush1.bf16.msra.mxu0 %v603
      %686 = vmatprep.subr.bf16.mxu0 0
      %687 = vmatpush1.bf16.msra.mxu0 %v602
      %688 = vmatprep.subr.bf16.mxu0 0
      %689 = vmatpush1.bf16.msra.mxu0 %v601
      %690 = vmatprep.subr.bf16.mxu0 0
      %691 = vmatpush1.bf16.msra.mxu0 %v600
      %692 = vmatprep.subr.bf16.mxu0 0
      %693 = vmatpush1.bf16.msra.mxu0 %v599
      %694 = vmatprep.subr.bf16.mxu0 0
      %695 = vmatpush1.bf16.msra.mxu0 %v598
      %696 = vmatprep.subr.bf16.mxu0 0
      %697 = vmatpush1.bf16.msra.mxu0 %v597
      %698 = vmatprep.subr.bf16.mxu0 0
      %699 = vmatpush2.bf16.msra.mxu0 %v612
      %700 = vmatprep.subr.bf16.mxu0 0
      %701 = vmatpush2.bf16.msra.mxu0 %v611
      %702 = vmatprep.subr.bf16.mxu0 0
      %703 = vmatpush2.bf16.msra.mxu0 %v610
      %704 = vmatprep.subr.bf16.mxu0 0
      %705 = vmatpush2.bf16.msra.mxu0 %v609
      %706 = vmatprep.subr.bf16.mxu0 0
      %707 = vmatpush2.bf16.msra.mxu0 %v608
      %708 = vmatprep.subr.bf16.mxu0 0
      %709 = vmatpush2.bf16.msra.mxu0 %v607
      %710 = vmatprep.subr.bf16.mxu0 0
      %711 = vmatpush2.bf16.msra.mxu0 %v606
      %712 = vmatprep.subr.bf16.mxu0 0
      %713 = vmatpush2.bf16.msra.mxu0 %v605
      %714 = vmatprep.mubr.bf16.mxu0 %v446
      %715 = vmatmul.mubr.bf16.gmra.mxu0 %v445
      %v716 = vpop.f32.mrf.mxu0
      %v717 = vadd.f32 %v283, %v716
      %v718 = vpop.f32.mrf.mxu0
      %v719 = vpop.f32.mrf.mxu0
      %v720 = vadd.f32 %v283, %v719
      %v721 = vpop.f32.mrf.mxu0
      %722 = vmatprep.mubr.bf16.mxu0 %v449
      %723 = vmatmul.mubr.bf16.gmra.mxu0 %v448
      %v724 = vpop.f32.mrf.mxu0
      %v725 = vadd.f32 %v283, %v724
      %v726 = vpop.f32.mrf.mxu0
      %v727 = vpop.f32.mrf.mxu0
      %v728 = vadd.f32 %v283, %v727
      %v729 = vpop.f32.mrf.mxu0
      %730 = vmatprep.mubr.bf16.mxu0 %v452
      %731 = vmatmul.mubr.bf16.gmra.mxu0 %v451
      %v732 = vpop.f32.mrf.mxu0
      %v733 = vadd.f32 %v283, %v732
      %v734 = vpop.f32.mrf.mxu0
      %v735 = vpop.f32.mrf.mxu0
      %v736 = vadd.f32 %v283, %v735
      %v737 = vpop.f32.mrf.mxu0
      %738 = vmatprep.mubr.bf16.mxu0 %v455
      %739 = vmatmul.mubr.bf16.gmra.mxu0 %v454
      %v740 = vpop.f32.mrf.mxu0
      %v741 = vadd.f32 %v283, %v740
      %v742 = vpop.f32.mrf.mxu0
      %v743 = vpop.f32.mrf.mxu0
      %v744 = vadd.f32 %v283, %v743
      %v745 = vpop.f32.mrf.mxu0
      %746 = vmatprep.mubr.bf16.mxu0 %v458
      %747 = vmatmul.mubr.bf16.gmra.mxu0 %v457
      %v748 = vpop.f32.mrf.mxu0
      %v749 = vadd.f32 %v283, %v748
      %v750 = vpop.f32.mrf.mxu0
      %v751 = vpop.f32.mrf.mxu0
      %v752 = vadd.f32 %v283, %v751
      %v753 = vpop.f32.mrf.mxu0
      %754 = vmatprep.mubr.bf16.mxu0 %v461
      %755 = vmatmul.mubr.bf16.gmra.mxu0 %v460
      %v756 = vpop.f32.mrf.mxu0
      %v757 = vadd.f32 %v283, %v756
      %v758 = vpop.f32.mrf.mxu0
      %v759 = vpop.f32.mrf.mxu0
      %v760 = vadd.f32 %v283, %v759
      %v761 = vpop.f32.mrf.mxu0
      %762 = vmatprep.mubr.bf16.mxu0 %v464
      %763 = vmatmul.mubr.bf16.gmra.mxu0 %v463
      %v764 = vpop.f32.mrf.mxu0
      %v765 = vadd.f32 %v283, %v764
      %v766 = vpop.f32.mrf.mxu0
      %v767 = vpop.f32.mrf.mxu0
      %v768 = vadd.f32 %v283, %v767
      %v769 = vpop.f32.mrf.mxu0
      %770 = vmatprep.mubr.bf16.mxu0 %v467
      %771 = vmatmul.mubr.bf16.gmra.mxu0 %v466
      %v772 = vpop.f32.mrf.mxu0
      %v773 = vadd.f32 %v283, %v772
      %v774 = vpop.f32.mrf.mxu0
      %v775 = vpop.f32.mrf.mxu0
      %v776 = vadd.f32 %v283, %v775
      %v777 = vpop.f32.mrf.mxu0
      %778 = vmatprep.mubr.bf16.mxu0 %v470
      %779 = vmatmul.mubr.bf16.gmra.mxu0 %v469
      %v780 = vpop.f32.mrf.mxu0
      %v781 = vadd.f32 %v283, %v780
      %v782 = vpop.f32.mrf.mxu0
      %v783 = vpop.f32.mrf.mxu0
      %v784 = vadd.f32 %v283, %v783
      %v785 = vpop.f32.mrf.mxu0
      %786 = vmatprep.mubr.bf16.mxu0 %v473
      %787 = vmatmul.mubr.bf16.gmra.mxu0 %v472
      %v788 = vpop.f32.mrf.mxu0
      %v789 = vadd.f32 %v283, %v788
      %v790 = vpop.f32.mrf.mxu0
      %v791 = vpop.f32.mrf.mxu0
      %v792 = vadd.f32 %v283, %v791
      %v793 = vpop.f32.mrf.mxu0
      %794 = vmatprep.mubr.bf16.mxu0 %v476
      %795 = vmatmul.mubr.bf16.gmra.mxu0 %v475
      %v796 = vpop.f32.mrf.mxu0
      %v797 = vadd.f32 %v283, %v796
      %v798 = vpop.f32.mrf.mxu0
      %v799 = vpop.f32.mrf.mxu0
      %v800 = vadd.f32 %v283, %v799
      %v801 = vpop.f32.mrf.mxu0
      %802 = vmatprep.mubr.bf16.mxu0 %v479
      %803 = vmatmul.mubr.bf16.gmra.mxu0 %v478
      %v804 = vpop.f32.mrf.mxu0
      %v805 = vadd.f32 %v283, %v804
      %v806 = vpop.f32.mrf.mxu0
      %v807 = vpop.f32.mrf.mxu0
      %v808 = vadd.f32 %v283, %v807
      %v809 = vpop.f32.mrf.mxu0
      %810 = vmatprep.mubr.bf16.mxu0 %v482
      %811 = vmatmul.mubr.bf16.gmra.mxu0 %v481
      %v812 = vpop.f32.mrf.mxu0
      %v813 = vadd.f32 %v283, %v812
      %v814 = vpop.f32.mrf.mxu0
      %v815 = vpop.f32.mrf.mxu0
      %v816 = vadd.f32 %v283, %v815
      %v817 = vpop.f32.mrf.mxu0
      %818 = vmatprep.mubr.bf16.mxu0 %v485
      %819 = vmatmul.mubr.bf16.gmra.mxu0 %v484
      %v820 = vpop.f32.mrf.mxu0
      %v821 = vadd.f32 %v283, %v820
      %v822 = vpop.f32.mrf.mxu0
      %v823 = vpop.f32.mrf.mxu0
      %v824 = vadd.f32 %v283, %v823
      %v825 = vpop.f32.mrf.mxu0
      %826 = vmatprep.mubr.bf16.mxu0 %v488
      %827 = vmatmul.mubr.bf16.gmra.mxu0 %v487
      %v828 = vpop.f32.mrf.mxu0
      %v829 = vadd.f32 %v283, %v828
      %v830 = vpop.f32.mrf.mxu0
      %v831 = vpop.f32.mrf.mxu0
      %v832 = vadd.f32 %v283, %v831
      %v833 = vpop.f32.mrf.mxu0
      %834 = vmatprep.mubr.bf16.mxu0 %v491
      %835 = vmatmul.mubr.bf16.gmra.mxu0 %v490
      %v836 = vpop.f32.mrf.mxu0
      %v837 = vadd.f32 %v283, %v836
      %v838 = vpop.f32.mrf.mxu0
      %v839 = vpop.f32.mrf.mxu0
      %v840 = vadd.f32 %v283, %v839
      %v841 = vpop.f32.mrf.mxu0
      %842 = vdwg.mxu0
      %843 = vmatprep.subr.bf16.mxu0 0
      %844 = vmatpush1.bf16.msra.mxu0 0
      %845 = vmatprep.subr.bf16.mxu0 0
      %846 = vmatpush1.bf16.msra.mxu0 0
      %847 = vmatprep.subr.bf16.mxu0 0
      %848 = vmatpush1.bf16.msra.mxu0 0
      %849 = vmatprep.subr.bf16.mxu0 0
      %850 = vmatpush1.bf16.msra.mxu0 0
      %851 = vmatprep.subr.bf16.mxu0 0
      %852 = vmatpush1.bf16.msra.mxu0 0
      %853 = vmatprep.subr.bf16.mxu0 0
      %854 = vmatpush1.bf16.msra.mxu0 0
      %855 = vmatprep.subr.bf16.mxu0 0
      %856 = vmatpush1.bf16.msra.mxu0 %v614
      %857 = vmatprep.subr.bf16.mxu0 0
      %858 = vmatpush1.bf16.msra.mxu0 %v613
      %859 = vmatprep.subr.bf16.mxu0 0
      %860 = vmatpush2.bf16.msra.mxu0 0
      %861 = vmatprep.subr.bf16.mxu0 0
      %862 = vmatpush2.bf16.msra.mxu0 0
      %863 = vmatprep.subr.bf16.mxu0 0
      %864 = vmatpush2.bf16.msra.mxu0 0
      %865 = vmatprep.subr.bf16.mxu0 0
      %866 = vmatpush2.bf16.msra.mxu0 0
      %867 = vmatprep.subr.bf16.mxu0 0
      %868 = vmatpush2.bf16.msra.mxu0 0
      %869 = vmatprep.subr.bf16.mxu0 0
      %870 = vmatpush2.bf16.msra.mxu0 0
      %871 = vmatprep.subr.bf16.mxu0 0
      %872 = vmatpush2.bf16.msra.mxu0 0
      %873 = vmatprep.subr.bf16.mxu0 0
      %874 = vmatpush2.bf16.msra.mxu0 0
      %875 = vmatprep.mubr.bf16.mxu0 0
      %876 = vmatmul.mubr.bf16.gmra.mxu0 %v635
      %v877 = vpop.f32.mrf.mxu0
      %v878 = vadd.f32 %v717, %v877
      %v879 = vpop.f32.mrf.mxu0
      %v880 = vpop.f32.mrf.mxu0
      %v881 = vadd.f32 %v720, %v880
      %v882 = vpop.f32.mrf.mxu0
      %883 = vmatprep.mubr.bf16.mxu0 0
      %884 = vmatmul.mubr.bf16.gmra.mxu0 %v638
      %v885 = vpop.f32.mrf.mxu0
      %v886 = vadd.f32 %v725, %v885
      %v887 = vpop.f32.mrf.mxu0
      %v888 = vpop.f32.mrf.mxu0
      %v889 = vadd.f32 %v728, %v888
      %v890 = vpop.f32.mrf.mxu0
      %891 = vmatprep.mubr.bf16.mxu0 0
      %892 = vmatmul.mubr.bf16.gmra.mxu0 %v641
      %v893 = vpop.f32.mrf.mxu0
      %v894 = vadd.f32 %v733, %v893
      %v895 = vpop.f32.mrf.mxu0
      %v896 = vpop.f32.mrf.mxu0
      %v897 = vadd.f32 %v736, %v896
      %v898 = vpop.f32.mrf.mxu0
      %899 = vmatprep.mubr.bf16.mxu0 0
      %900 = vmatmul.mubr.bf16.gmra.mxu0 %v644
      %v901 = vpop.f32.mrf.mxu0
      %v902 = vadd.f32 %v741, %v901
      %v903 = vpop.f32.mrf.mxu0
      %v904 = vpop.f32.mrf.mxu0
      %v905 = vadd.f32 %v744, %v904
      %v906 = vpop.f32.mrf.mxu0
      %907 = vmatprep.mubr.bf16.mxu0 0
      %908 = vmatmul.mubr.bf16.gmra.mxu0 %v647
      %v909 = vpop.f32.mrf.mxu0
      %v910 = vadd.f32 %v749, %v909
      %v911 = vpop.f32.mrf.mxu0
      %v912 = vpop.f32.mrf.mxu0
      %v913 = vadd.f32 %v752, %v912
      %v914 = vpop.f32.mrf.mxu0
      %915 = vmatprep.mubr.bf16.mxu0 0
      %916 = vmatmul.mubr.bf16.gmra.mxu0 %v650
      %v917 = vpop.f32.mrf.mxu0
      %v918 = vadd.f32 %v757, %v917
      %v919 = vpop.f32.mrf.mxu0
      %v920 = vpop.f32.mrf.mxu0
      %v921 = vadd.f32 %v760, %v920
      %v922 = vpop.f32.mrf.mxu0
      %923 = vmatprep.mubr.bf16.mxu0 0
      %924 = vmatmul.mubr.bf16.gmra.mxu0 %v653
      %v925 = vpop.f32.mrf.mxu0
      %v926 = vadd.f32 %v765, %v925
      %v927 = vpop.f32.mrf.mxu0
      %v928 = vpop.f32.mrf.mxu0
      %v929 = vadd.f32 %v768, %v928
      %v930 = vpop.f32.mrf.mxu0
      %931 = vmatprep.mubr.bf16.mxu0 0
      %932 = vmatmul.mubr.bf16.gmra.mxu0 %v656
      %v933 = vpop.f32.mrf.mxu0
      %v934 = vadd.f32 %v773, %v933
      %v935 = vpop.f32.mrf.mxu0
      %v936 = vpop.f32.mrf.mxu0
      %v937 = vadd.f32 %v776, %v936
      %v938 = vpop.f32.mrf.mxu0
      %939 = vmatprep.mubr.bf16.mxu0 0
      %940 = vmatmul.mubr.bf16.gmra.mxu0 %v659
      %v941 = vpop.f32.mrf.mxu0
      %v942 = vadd.f32 %v781, %v941
      %v943 = vpop.f32.mrf.mxu0
      %v944 = vpop.f32.mrf.mxu0
      %v945 = vadd.f32 %v784, %v944
      %v946 = vpop.f32.mrf.mxu0
      %947 = vmatprep.mubr.bf16.mxu0 0
      %948 = vmatmul.mubr.bf16.gmra.mxu0 %v662
      %v949 = vpop.f32.mrf.mxu0
      %v950 = vadd.f32 %v789, %v949
      %v951 = vpop.f32.mrf.mxu0
      %v952 = vpop.f32.mrf.mxu0
      %v953 = vadd.f32 %v792, %v952
      %v954 = vpop.f32.mrf.mxu0
      %955 = vmatprep.mubr.bf16.mxu0 0
      %956 = vmatmul.mubr.bf16.gmra.mxu0 %v665
      %v957 = vpop.f32.mrf.mxu0
      %v958 = vadd.f32 %v797, %v957
      %v959 = vpop.f32.mrf.mxu0
      %v960 = vpop.f32.mrf.mxu0
      %v961 = vadd.f32 %v800, %v960
      %v962 = vpop.f32.mrf.mxu0
      %963 = vmatprep.mubr.bf16.mxu0 0
      %964 = vmatmul.mubr.bf16.gmra.mxu0 %v668
      %v965 = vpop.f32.mrf.mxu0
      %v966 = vadd.f32 %v805, %v965
      %v967 = vpop.f32.mrf.mxu0
      %v968 = vpop.f32.mrf.mxu0
      %v969 = vadd.f32 %v808, %v968
      %v970 = vpop.f32.mrf.mxu0
      %971 = vmatprep.mubr.bf16.mxu0 0
      %972 = vmatmul.mubr.bf16.gmra.mxu0 %v671
      %v973 = vpop.f32.mrf.mxu0
      %v974 = vadd.f32 %v813, %v973
      %v975 = vpop.f32.mrf.mxu0
      %v976 = vpop.f32.mrf.mxu0
      %v977 = vadd.f32 %v816, %v976
      %v978 = vpop.f32.mrf.mxu0
      %979 = vmatprep.mubr.bf16.mxu0 0
      %980 = vmatmul.mubr.bf16.gmra.mxu0 %v674
      %v981 = vpop.f32.mrf.mxu0
      %v982 = vadd.f32 %v821, %v981
      %v983 = vpop.f32.mrf.mxu0
      %v984 = vpop.f32.mrf.mxu0
      %v985 = vadd.f32 %v824, %v984
      %v986 = vpop.f32.mrf.mxu0
      %987 = vmatprep.mubr.bf16.mxu0 0
      %988 = vmatmul.mubr.bf16.gmra.mxu0 %v677
      %v989 = vpop.f32.mrf.mxu0
      %v990 = vadd.f32 %v829, %v989
      %v991 = vpop.f32.mrf.mxu0
      %v992 = vpop.f32.mrf.mxu0
      %v993 = vadd.f32 %v832, %v992
      %v994 = vpop.f32.mrf.mxu0
      %995 = vmatprep.mubr.bf16.mxu0 0
      %996 = vmatmul.mubr.bf16.gmra.mxu0 %v680
      %v997 = vpop.f32.mrf.mxu0
      %v998 = vadd.f32 %v837, %v997
      %v999 = vpop.f32.mrf.mxu0
      %v1000 = vpop.f32.mrf.mxu0
      %v1001 = vadd.f32 %v840, %v1000
      %v1002 = vpop.f32.mrf.mxu0
      %1003 = vdwg.mxu0
      %vm1004 = vcmp.ge.f32.partialorder %v878, 0.0
      %vm1005 = vcmp.ge.f32.partialorder %v881, 0.0
      %vm1006 = vcmp.ge.f32.partialorder %v886, 0.0
      %vm1007 = vcmp.ge.f32.partialorder %v889, 0.0
      %vm1008 = vcmp.ge.f32.partialorder %v894, 0.0
      %vm1009 = vcmp.ge.f32.partialorder %v897, 0.0
      %vm1010 = vcmp.ge.f32.partialorder %v902, 0.0
      %vm1011 = vcmp.ge.f32.partialorder %v905, 0.0
      %vm1012 = vcmp.ge.f32.partialorder %v910, 0.0
      %vm1013 = vcmp.ge.f32.partialorder %v913, 0.0
      %vm1014 = vcmp.ge.f32.partialorder %v918, 0.0
      %vm1015 = vcmp.ge.f32.partialorder %v921, 0.0
      %vm1016 = vcmp.ge.f32.partialorder %v926, 0.0
      %vm1017 = vcmp.ge.f32.partialorder %v929, 0.0
      %vm1018 = vcmp.ge.f32.partialorder %v934, 0.0
      %vm1019 = vcmp.ge.f32.partialorder %v937, 0.0
      %vm1020 = vcmp.ge.f32.partialorder %v942, 0.0
      %vm1021 = vcmp.ge.f32.partialorder %v945, 0.0
      %vm1022 = vcmp.ge.f32.partialorder %v950, 0.0
      %vm1023 = vcmp.ge.f32.partialorder %v953, 0.0
      %vm1024 = vcmp.ge.f32.partialorder %v958, 0.0
      %vm1025 = vcmp.ge.f32.partialorder %v961, 0.0
      %vm1026 = vcmp.ge.f32.partialorder %v966, 0.0
      %vm1027 = vcmp.ge.f32.partialorder %v969, 0.0
      %vm1028 = vcmp.ge.f32.partialorder %v974, 0.0
      %vm1029 = vcmp.ge.f32.partialorder %v977, 0.0
      %vm1030 = vcmp.ge.f32.partialorder %v982, 0.0
      %vm1031 = vcmp.ge.f32.partialorder %v985, 0.0
      %vm1032 = vcmp.ge.f32.partialorder %v990, 0.0
      %vm1033 = vcmp.ge.f32.partialorder %v993, 0.0
      %vm1034 = vcmp.ge.f32.partialorder %v998, 0.0
      %vm1035 = vcmp.ge.f32.partialorder %v1001, 0.0
      %v1036 = vmul.f32 %v878, 0.01
      %v1037 = vmul.f32 %v881, 0.01
      %v1038 = vmul.f32 %v886, 0.01
      %v1039 = vmul.f32 %v889, 0.01
      %v1040 = vmul.f32 %v894, 0.01
      %v1041 = vmul.f32 %v897, 0.01
      %v1042 = vmul.f32 %v902, 0.01
      %v1043 = vmul.f32 %v905, 0.01
      %v1044 = vmul.f32 %v910, 0.01
      %v1045 = vmul.f32 %v913, 0.01
      %v1046 = vmul.f32 %v918, 0.01
      %v1047 = vmul.f32 %v921, 0.01
      %v1048 = vmul.f32 %v926, 0.01
      %v1049 = vmul.f32 %v929, 0.01
      %v1050 = vmul.f32 %v934, 0.01
      %v1051 = vmul.f32 %v937, 0.01
      %v1052 = vmul.f32 %v942, 0.01
      %v1053 = vmul.f32 %v945, 0.01
      %v1054 = vmul.f32 %v950, 0.01
      %v1055 = vmul.f32 %v953, 0.01
      %v1056 = vmul.f32 %v958, 0.01
      %v1057 = vmul.f32 %v961, 0.01
      %v1058 = vmul.f32 %v966, 0.01
      %v1059 = vmul.f32 %v969, 0.01
      %v1060 = vmul.f32 %v974, 0.01
      %v1061 = vmul.f32 %v977, 0.01
      %v1062 = vmul.f32 %v982, 0.01
      %v1063 = vmul.f32 %v985, 0.01
      %v1064 = vmul.f32 %v990, 0.01
      %v1065 = vmul.f32 %v993, 0.01
      %v1066 = vmul.f32 %v998, 0.01
      %v1067 = vmul.f32 %v1001, 0.01
      %v1068 = vsel %vm1004, %v878, %v1036
      %v1069 = vsel %vm1005, %v881, %v1037
      %v1070 = vsel %vm1006, %v886, %v1038
      %v1071 = vsel %vm1007, %v889, %v1039
      %v1072 = vsel %vm1008, %v894, %v1040
      %v1073 = vsel %vm1009, %v897, %v1041
      %v1074 = vsel %vm1010, %v902, %v1042
      %v1075 = vsel %vm1011, %v905, %v1043
      %v1076 = vsel %vm1012, %v910, %v1044
      %v1077 = vsel %vm1013, %v913, %v1045
      %v1078 = vsel %vm1014, %v918, %v1046
      %v1079 = vsel %vm1015, %v921, %v1047
      %v1080 = vsel %vm1016, %v926, %v1048
      %v1081 = vsel %vm1017, %v929, %v1049
      %v1082 = vsel %vm1018, %v934, %v1050
      %v1083 = vsel %vm1019, %v937, %v1051
      %v1084 = vsel %vm1020, %v942, %v1052
      %v1085 = vsel %vm1021, %v945, %v1053
      %v1086 = vsel %vm1022, %v950, %v1054
      %v1087 = vsel %vm1023, %v953, %v1055
      %v1088 = vsel %vm1024, %v958, %v1056
      %v1089 = vsel %vm1025, %v961, %v1057
      %v1090 = vsel %vm1026, %v966, %v1058
      %v1091 = vsel %vm1027, %v969, %v1059
      %v1092 = vsel %vm1028, %v974, %v1060
      %v1093 = vsel %vm1029, %v977, %v1061
      %v1094 = vsel %vm1030, %v982, %v1062
      %v1095 = vsel %vm1031, %v985, %v1063
      %v1096 = vsel %vm1032, %v990, %v1064
      %v1097 = vsel %vm1033, %v993, %v1065
      %v1098 = vsel %vm1034, %v998, %v1066
      %v1099 = vsel %vm1035, %v1001, %v1067
      %v1100 = vpack.c.bf16 %v1069, %v1068
      %v1101 = vpack.c.bf16 %v1071, %v1070
      %v1102 = vpack.c.bf16 %v1073, %v1072
      %v1103 = vpack.c.bf16 %v1075, %v1074
      %v1104 = vpack.c.bf16 %v1077, %v1076
      %v1105 = vpack.c.bf16 %v1079, %v1078
      %v1106 = vpack.c.bf16 %v1081, %v1080
      %v1107 = vpack.c.bf16 %v1083, %v1082
      %v1108 = vpack.c.bf16 %v1085, %v1084
      %v1109 = vpack.c.bf16 %v1087, %v1086
      %v1110 = vpack.c.bf16 %v1089, %v1088
      %v1111 = vpack.c.bf16 %v1091, %v1090
      %v1112 = vpack.c.bf16 %v1093, %v1092
      %v1113 = vpack.c.bf16 %v1095, %v1094
      %v1114 = vpack.c.bf16 %v1097, %v1096
      %v1115 = vpack.c.bf16 %v1099, %v1098
      %v1132 = vunpack.c.l.b16 %v1100
      %v1133 = vunpack.c.h.b16 %v1100
      %v1134 = vunpack.c.l.b16 %v1101
      %v1135 = vunpack.c.h.b16 %v1101
      %v1136 = vunpack.c.l.b16 %v1102
      %v1137 = vunpack.c.h.b16 %v1102
      %v1138 = vunpack.c.l.b16 %v1103
      %v1139 = vunpack.c.h.b16 %v1103
      %v1140 = vunpack.c.l.b16 %v1104
      %v1141 = vunpack.c.h.b16 %v1104
      %v1142 = vunpack.c.l.b16 %v1105
      %v1143 = vunpack.c.h.b16 %v1105
      %v1144 = vunpack.c.l.b16 %v1106
      %v1145 = vunpack.c.h.b16 %v1106
      %v1146 = vunpack.c.l.b16 %v1107
      %v1147 = vunpack.c.h.b16 %v1107
      %v1148 = vunpack.c.l.b16 %v1108
      %v1149 = vunpack.c.h.b16 %v1108
      %v1150 = vunpack.c.l.b16 %v1109
      %v1151 = vunpack.c.h.b16 %v1109
      %v1152 = vunpack.c.l.b16 %v1110
      %v1153 = vunpack.c.h.b16 %v1110
      %v1154 = vunpack.c.l.b16 %v1111
      %v1155 = vunpack.c.h.b16 %v1111
      %v1156 = vunpack.c.l.b16 %v1112
      %v1157 = vunpack.c.h.b16 %v1112
      %v1158 = vunpack.c.l.b16 %v1113
      %v1159 = vunpack.c.h.b16 %v1113
      %v1160 = vunpack.c.l.b16 %v1114
      %v1161 = vunpack.c.h.b16 %v1114
      %v1162 = vunpack.c.l.b16 %v1115
      %v1163 = vunpack.c.h.b16 %v1115
      %v1164 = vpack.c.b16 %v1132, %v1132
      %v1165 = vpack.c.b16 %v1133, %v1133
      %v1166 = vpack.c.b16 %v1134, %v1134
      %v1167 = vpack.c.b16 %v1135, %v1135
      %v1168 = vpack.c.b16 %v1136, %v1136
      %v1169 = vpack.c.b16 %v1137, %v1137
      %v1170 = vpack.c.b16 %v1138, %v1138
      %v1171 = vpack.c.b16 %v1139, %v1139
      %v1172 = vpack.c.b16 %v1140, %v1140
      %v1173 = vpack.c.b16 %v1141, %v1141
      %v1174 = vpack.c.b16 %v1142, %v1142
      %v1175 = vpack.c.b16 %v1143, %v1143
      %v1176 = vpack.c.b16 %v1144, %v1144
      %v1177 = vpack.c.b16 %v1145, %v1145
      %v1178 = vpack.c.b16 %v1146, %v1146
      %v1179 = vpack.c.b16 %v1147, %v1147
      %v1180 = vpack.c.b16 %v1148, %v1148
      %v1181 = vpack.c.b16 %v1149, %v1149
      %v1182 = vpack.c.b16 %v1150, %v1150
      %v1183 = vpack.c.b16 %v1151, %v1151
      %v1184 = vpack.c.b16 %v1152, %v1152
      %v1185 = vpack.c.b16 %v1153, %v1153
      %v1186 = vpack.c.b16 %v1154, %v1154
      %v1187 = vpack.c.b16 %v1155, %v1155
      %v1188 = vpack.c.b16 %v1156, %v1156
      %v1189 = vpack.c.b16 %v1157, %v1157
      %v1190 = vpack.c.b16 %v1158, %v1158
      %v1191 = vpack.c.b16 %v1159, %v1159
      %v1192 = vpack.c.b16 %v1160, %v1160
      %v1193 = vpack.c.b16 %v1161, %v1161
      %v1194 = vpack.c.b16 %v1162, %v1162
      %v1195 = vpack.c.b16 %v1163, %v1163
      %vm1228 = vcmask 125952
      %1229 = vst.msk [vmem:[%s175] sm:$0xf] %vm1228, %v1164
      %1230 = vst.msk [vmem:[%s175 + $0x4] sm:$0xf] %vm1228, %v1165
      %1231 = vst.msk [vmem:[%s175 + $0x8] sm:$0xf] %vm1228, %v1166
      %1232 = vst.msk [vmem:[%s175 + $0xc] sm:$0xf] %vm1228, %v1167
      %1233 = vst.msk [vmem:[%s175 + $0x10] sm:$0xf] %vm1228, %v1168
      %1234 = vst.msk [vmem:[%s175 + $0x14] sm:$0xf] %vm1228, %v1169
      %1235 = vst.msk [vmem:[%s175 + $0x18] sm:$0xf] %vm1228, %v1170
      %1236 = vst.msk [vmem:[%s175 + $0x1c] sm:$0xf] %vm1228, %v1171
      %1237 = vst.msk [vmem:[%s175 + $0x20] sm:$0xf] %vm1228, %v1172
      %1238 = vst.msk [vmem:[%s175 + $0x24] sm:$0xf] %vm1228, %v1173
      %1239 = vst.msk [vmem:[%s175 + $0x28] sm:$0xf] %vm1228, %v1174
      %1240 = vst.msk [vmem:[%s175 + $0x2c] sm:$0xf] %vm1228, %v1175
      %1241 = vst.msk [vmem:[%s175 + $0x30] sm:$0xf] %vm1228, %v1176
      %1242 = vst.msk [vmem:[%s175 + $0x34] sm:$0xf] %vm1228, %v1177
      %1243 = vst.msk [vmem:[%s175 + $0x38] sm:$0xf] %vm1228, %v1178
      %1244 = vst.msk [vmem:[%s175 + $0x3c] sm:$0xf] %vm1228, %v1179
      %1245 = vst.msk [vmem:[%s175 + $0x40] sm:$0xf] %vm1228, %v1180
      %1246 = vst.msk [vmem:[%s175 + $0x44] sm:$0xf] %vm1228, %v1181
      %1247 = vst.msk [vmem:[%s175 + $0x48] sm:$0xf] %vm1228, %v1182
      %1248 = vst.msk [vmem:[%s175 + $0x4c] sm:$0xf] %vm1228, %v1183
      %1249 = vst.msk [vmem:[%s175 + $0x50] sm:$0xf] %vm1228, %v1184
      %1250 = vst.msk [vmem:[%s175 + $0x54] sm:$0xf] %vm1228, %v1185
      %1251 = vst.msk [vmem:[%s175 + $0x58] sm:$0xf] %vm1228, %v1186
      %1252 = vst.msk [vmem:[%s175 + $0x5c] sm:$0xf] %vm1228, %v1187
      %1253 = vst.msk [vmem:[%s175 + $0x60] sm:$0xf] %vm1228, %v1188
      %1254 = vst.msk [vmem:[%s175 + $0x64] sm:$0xf] %vm1228, %v1189
      %1255 = vst.msk [vmem:[%s175 + $0x68] sm:$0xf] %vm1228, %v1190
      %1256 = vst.msk [vmem:[%s175 + $0x6c] sm:$0xf] %vm1228, %v1191
      %1257 = vst.msk [vmem:[%s175 + $0x70] sm:$0xf] %vm1228, %v1192
      %1258 = vst.msk [vmem:[%s175 + $0x74] sm:$0xf] %vm1228, %v1193
      %1259 = vst.msk [vmem:[%s175 + $0x78] sm:$0xf] %vm1228, %v1194
      %1260 = vst.msk [vmem:[%s175 + $0x7c] sm:$0xf] %vm1228, %v1195
      %s1261 = smul.u32 32, %s14
      %p1262 = scmp.lt.s32.totalorder %s1261, 63
      %s1263 = scalar_select %p1262, %s1261, 63
      %s1264 = smul.addr %s1263, 4
      %s1265 = scalar_lea.vmem %s3, %s1264
      // Predicated region
      $region33: #{image_reconstruction_forward.14} parent=31 // pred_check
        %p1266 = pneg %p100
      $region34: #{image_reconstruction_forward.14} parent=31 // pred_check_branch
        %1268 = sbr.rel (%p1266) target = $region36
      $region35: #{image_reconstruction_forward.14} parent=31 // pred_region
        %s1269 = smul.u32 32, %s14
      $region36: #{image_reconstruction_forward.14} parent=31 // pred_fallthru
        _
    $region32: #{image_reconstruction_forward.14} parent=5 // pred_fallthru
      _
    %p1270 = scmp.le.s32.totalorder 2, %s9
    // Predicated region
    $region37: #{image_reconstruction_forward.14} parent=5 // pred_check
      %p1271 = pneg %p1270
    $region38: #{image_reconstruction_forward.14} parent=5 // pred_check_branch
      %1273 = sbr.rel (%p1271) target = $region40
    $region39: #{image_reconstruction_forward.14} parent=5 // pred_region
      %s1274 = ssub.s32 %s9, 2
      // Predicated region
      $region41: #{image_reconstruction_forward.14} parent=39 // pred_check
        %p1275 = pneg %p106
      $region42: #{image_reconstruction_forward.14} parent=39 // pred_check_branch
        %1277 = sbr.rel (%p1275) target = $region44
      $region43: #{image_reconstruction_forward.14} parent=39 // pred_region
        %s1278 = smul.u32 32, %s15
        %p1279 = scmp.lt.s32.totalorder %s1278, 63
        %s1280 = scalar_select %p1279, %s1278, 63
        %s1281 = smul.addr %s1280, 4
        %s1282 = scalar_lea.vmem %s3, %s1281
      $region44: #{image_reconstruction_forward.14} parent=39 // pred_fallthru
        _
    $region40: #{image_reconstruction_forward.14} parent=5 // pred_fallthru
      _
  $region6: #{image_reconstruction_forward.14} parent=0 // loop_footer
    %s13 = sadd.s32 1, %s9
  $region7: #{image_reconstruction_forward.14} parent=0 // loop_footer_branch
    %8 = sbr.rel target = $region3
  $region8: #{image_reconstruction_forward.14} parent=0 // loop_exit
    _

// kernel: image_reconstruction_forward.15
$region0: #{image_reconstruction_forward.15}
  #allocation0 [shape = 'u32[]', space=smem, size = 0x4, offset = 0x4, fixed_abs, tag = 'smem constant byte address 0x4 - core index']
  #allocation1 [shape = 'u32[144,128]{1,0:T(1,128)}', space=vmem, size = 0x12000, scoped, tag = 'internal scratch']
  %s0 = inlined_call_operand.vmem [shape: bf16[2048,144], index: 0, kind: input, shape index: {}]
  %s1 = inlined_call_operand.vmem [shape: bf16[144,3], index: 1, kind: input, shape index: {}]
  %s2 = inlined_call_operand.vmem [shape: f32[1,3], index: 2, kind: input, shape index: {}]
  %s3 = inlined_call_operand.vmem [shape: f32[2048,3], index: 3, kind: output, shape index: {}]
  %s4 = sld [smem:[#allocation0]]
  $region45: #{image_reconstruction_forward.15} parent=0
    _
  %s6 = ssub.s32 1, %s4
  %s7 = scalar_select 0, %s6, %s4
  loop: start=0, step=1, limit=6
  $region2: #{image_reconstruction_forward.15} parent=0 // loop_pre_header
    _
  $region3: #{image_reconstruction_forward.15} parent=0 // loop_header
    %s9 = sphi 0, %s13
    %p10 = scmp.ge.s32.totalorder %s9, 6
    %s19 = sphi 0, %s21
    %s22 = sphi 0, %s19
    %s23 = sphi 0, %s22
    %s39 = sphi 0, %s23
    %s43 = sphi 0, %s43
    %s45 = sphi 0, %s43
    %s46 = sphi 0, %s45
    %s60 = sphi 0, %s46
    %s64 = sphi 0, %s64
    %s66 = sphi 0, %s64
    %s67 = sphi 0, %s66
    %s81 = sphi 0, %s67
    %s87 = sphi 0, %s89
    %s90 = sphi 0, %s87
    %s91 = sphi 0, %s90
    %s107 = sphi 0, %s91
  $region4: #{image_reconstruction_forward.15} parent=0 // loop_header_branch
    %12 = sbr.rel (%p10) target = $region8
  $region5: #{image_reconstruction_forward.15} parent=0 // loop_body
    %s14 = ssub.s32 %s9, 1
    %s15 = ssub.s32 %s9, 2
    %s16 = sadd.s32 %s9, 1
    %s17 = ssub.s32 %s9, %s16
    %p18 = scmp.eq.s32.totalorder %s17, 0
    %s20 = sadd.s32 %s19, 1
    %s21 = scalar_select %p18, %s19, %s20
    %p24 = pneg %p18
    %p25 = scmp.eq.s32.totalorder %s9, 3
    %p26 = por %p24, %p25
    %p27 = scmp.ne.s32.totalorder %s19, %s22
    %p28 = scmp.eq.s32.totalorder %s9, 0
    %p29 = por %p27, %p28
    %p30 = scmp.ne.s32.totalorder %s19, %s22
    %p31 = scmp.eq.s32.totalorder %s14, 3
    %p32 = por %p30, %p31
    %p33 = scmp.ne.s32.totalorder %s22, %s23
    %p34 = scmp.eq.s32.totalorder %s14, 0
    %p35 = por %p33, %p34
    %p36 = scmp.ne.s32.totalorder %s22, %s23
    %p37 = scmp.eq.s32.totalorder %s15, 3
    %p38 = por %p36, %p37
    %p40 = scmp.ne.s32.totalorder %s23, %s39
    %p41 = scmp.eq.s32.totalorder %s15, 0
    %p42 = por %p40, %p41
    %s44 = sadd.s32 %s43, 1
    %p47 = scmp.eq.s32.totalorder %s9, 3
    %p48 = scmp.ne.s32.totalorder %s43, %s45
    %p49 = scmp.eq.s32.totalorder %s9, 0
    %p50 = por %p48, %p49
    %p51 = scmp.ne.s32.totalorder %s43, %s45
    %p52 = scmp.eq.s32.totalorder %s14, 3
    %p53 = por %p51, %p52
    %p54 = scmp.ne.s32.totalorder %s45, %s46
    %p55 = scmp.eq.s32.totalorder %s14, 0
    %p56 = por %p54, %p55
    %p57 = scmp.ne.s32.totalorder %s45, %s46
    %p58 = scmp.eq.s32.totalorder %s15, 3
    %p59 = por %p57, %p58
    %p61 = scmp.ne.s32.totalorder %s46, %s60
    %p62 = scmp.eq.s32.totalorder %s15, 0
    %p63 = por %p61, %p62
    %s65 = sadd.s32 %s64, 1
    %p68 = scmp.eq.s32.totalorder %s9, 3
    %p69 = scmp.ne.s32.totalorder %s64, %s66
    %p70 = scmp.eq.s32.totalorder %s9, 0
    %p71 = por %p69, %p70
    %p72 = scmp.ne.s32.totalorder %s64, %s66
    %p73 = scmp.eq.s32.totalorder %s14, 3
    %p74 = por %p72, %p73
    %p75 = scmp.ne.s32.totalorder %s66, %s67
    %p76 = scmp.eq.s32.totalorder %s14, 0
    %p77 = por %p75, %p76
    %p78 = scmp.ne.s32.totalorder %s66, %s67
    %p79 = scmp.eq.s32.totalorder %s15, 3
    %p80 = por %p78, %p79
    %p82 = scmp.ne.s32.totalorder %s67, %s81
    %p83 = scmp.eq.s32.totalorder %s15, 0
    %p84 = por %p82, %p83
    %s85 = ssub.s32 %s9, %s16
    %p86 = scmp.eq.s32.totalorder %s85, 0
    %s88 = sadd.s32 %s87, 1
    %s89 = scalar_select %p86, %s87, %s88
    %p92 = pneg %p86
    %p93 = scmp.eq.s32.totalorder %s9, 3
    %p94 = por %p92, %p93
    %p95 = scmp.ne.s32.totalorder %s87, %s90
    %p96 = scmp.eq.s32.totalorder %s9, 0
    %p97 = por %p95, %p96
    %p98 = scmp.ne.s32.totalorder %s87, %s90
    %p99 = scmp.eq.s32.totalorder %s14, 3
    %p100 = por %p98, %p99
    %p101 = scmp.ne.s32.totalorder %s90, %s91
    %p102 = scmp.eq.s32.totalorder %s14, 0
    %p103 = por %p101, %p102
    %p104 = scmp.ne.s32.totalorder %s90, %s91
    %p105 = scmp.eq.s32.totalorder %s15, 3
    %p106 = por %p104, %p105
    %p108 = scmp.ne.s32.totalorder %s91, %s107
    %p109 = scmp.eq.s32.totalorder %s15, 0
    %p110 = por %p108, %p109
    %p111 = scmp.le.s32.totalorder 1, %s9
    %p112 = scmp.lt.s32.totalorder %s9, 5
    %p113 = pnand %p111, %p112
    %p114 = pneg %p113
    // Predicated region
    $region9: #{image_reconstruction_forward.15} parent=5 // pred_check
      _
    $region10: #{image_reconstruction_forward.15} parent=5 // pred_check_branch
      %116 = sbr.rel (%p113) target = $region12
    $region11: #{image_reconstruction_forward.15} parent=5 // pred_region
      %s117 = ssub.s32 %s9, 1
      // Predicated region
      $region13: #{image_reconstruction_forward.15} parent=11 // pred_check
        %p118 = pneg %p56
      $region14: #{image_reconstruction_forward.15} parent=11 // pred_check_branch
        %120 = sbr.rel (%p118) target = $region16
      $region15: #{image_reconstruction_forward.15} parent=11 // pred_region
        _
      $region16: #{image_reconstruction_forward.15} parent=11 // pred_fallthru
        _
      // Predicated region
      $region17: #{image_reconstruction_forward.15} parent=11 // pred_check
        %p121 = pneg %p77
      $region18: #{image_reconstruction_forward.15} parent=11 // pred_check_branch
        %123 = sbr.rel (%p121) target = $region20
      $region19: #{image_reconstruction_forward.15} parent=11 // pred_region
        _
      $region20: #{image_reconstruction_forward.15} parent=11 // pred_fallthru
        _
    $region12: #{image_reconstruction_forward.15} parent=5 // pred_fallthru
      _
    %p124 = scmp.lt.s32.totalorder %s9, 4
    // Predicated region
    $region21: #{image_reconstruction_forward.15} parent=5 // pred_check
      %p125 = pneg %p124
    $region22: #{image_reconstruction_forward.15} parent=5 // pred_check_branch
      %127 = sbr.rel (%p125) target = $region24
    $region23: #{image_reconstruction_forward.15} parent=5 // pred_region
      // Predicated region
      $region25: #{image_reconstruction_forward.15} parent=23 // pred_check
        %p128 = pneg %p29
      $region26: #{image_reconstruction_forward.15} parent=23 // pred_check_branch
        %130 = sbr.rel (%p128) target = $region28
      $region27: #{image_reconstruction_forward.15} parent=23 // pred_region
        %s131 = smul.u32 64, %s9
        %p132 = scmp.lt.s32.totalorder %s131, 255
        %s133 = scalar_select %p132, %s131, 255
        %s134 = smul.addr %s133, 2
        %s135 = smul.addr %s134, 4
        %s136 = scalar_lea.vmem %s0, %s135
        %s137 = smul.u32 64, %s9
      $region28: #{image_reconstruction_forward.15} parent=23 // pred_fallthru
        _
    $region24: #{image_reconstruction_forward.15} parent=5 // pred_fallthru
      _
    %p138 = scmp.le.s32.totalorder 1, %s9
    %p139 = scmp.lt.s32.totalorder %s9, 5
    %p140 = pnand %p138, %p139
    %p141 = pneg %p140
    // Predicated region
    $region29: #{image_reconstruction_forward.15} parent=5 // pred_check
      _
    $region30: #{image_reconstruction_forward.15} parent=5 // pred_check_branch
      %143 = sbr.rel (%p140) target = $region32
    $region31: #{image_reconstruction_forward.15} parent=5 // pred_region
      %s144 = ssub.s32 %s9, 1
      %s145 = smul.u32 64, %s14
      %p146 = scmp.lt.s32.totalorder %s145, 255
      %s147 = scalar_select %p146, %s145, 255
      %s148 = smul.addr %s147, 2
      %s149 = smul.addr %s148, 4
      %s150 = scalar_lea.vmem %s0, %s149
      %p151 = pneg %p35
      %p152 = pneg %p32
      %p153 = pneg %p56
      %p154 = pneg %p53
      %p155 = pneg %p77
      %p156 = pneg %p74
      %p157 = pneg %p103
      %p158 = pneg %p100
      %s159 = smul.u32 64, %s14
      %p160 = scmp.lt.s32.totalorder %s159, 255
      %s161 = scalar_select %p160, %s159, 255
      %s162 = smul.addr %s161, 8
      %s163 = scalar_lea.vmem %s3, %s162
      %s164 = smul.u32 64, %s14
      %p165 = scmp.lt.s32.totalorder %s164, 255
      %s166 = scalar_select %p165, %s164, 255
      %s167 = smul.addr %s166, 2
      %s168 = smul.addr %s167, 4
      %s169 = scalar_lea.vmem %s0, %s168
      %s170 = smul.u32 64, %s14
      %s171 = smul.u32 64, %s14
      %p172 = scmp.lt.s32.totalorder %s171, 255
      %s173 = scalar_select %p172, %s171, 255
      %s174 = smul.addr %s173, 8
      %s175 = scalar_lea.vmem %s3, %s174
      %s176 = smul.u32 64, %s14
      %v178 = vld [vmem:[%s169] sm:$0xff]
      %v179 = vld [vmem:[%s169 + $0x8] sm:$0xff]
      %v180 = vld [vmem:[%s169 + $0x10] sm:$0xff]
      %v181 = vld [vmem:[%s169 + $0x18] sm:$0xff]
      %v182 = vld [vmem:[%s169 + $0x20] sm:$0xff]
      %v183 = vld [vmem:[%s169 + $0x28] sm:$0xff]
      %v184 = vld [vmem:[%s169 + $0x30] sm:$0xff]
      %v185 = vld [vmem:[%s169 + $0x38] sm:$0xff]
      %v186 = vld [vmem:[%s169 + $0x40] sm:$0xff]
      %v187 = vld [vmem:[%s169 + $0x48] sm:$0xff]
      %v188 = vld [vmem:[%s169 + $0x50] sm:$0xff]
      %v189 = vld [vmem:[%s169 + $0x58] sm:$0xff]
      %v190 = vld [vmem:[%s169 + $0x60] sm:$0xff]
      %v191 = vld [vmem:[%s169 + $0x68] sm:$0xff]
      %v192 = vld [vmem:[%s169 + $0x70] sm:$0xff]
      %v193 = vld [vmem:[%s169 + $0x78] sm:$0xff]
      %v194 = vld [vmem:[%s169 + $0x80] sm:$0xff]
      %v195 = vld [vmem:[%s169 + $0x88] sm:$0xff]
      %v196 = vld [vmem:[%s169 + $0x90] sm:$0xff]
      %v197 = vld [vmem:[%s169 + $0x98] sm:$0xff]
      %v198 = vld [vmem:[%s169 + $0xa0] sm:$0xff]
      %v199 = vld [vmem:[%s169 + $0xa8] sm:$0xff]
      %v200 = vld [vmem:[%s169 + $0xb0] sm:$0xff]
      %v201 = vld [vmem:[%s169 + $0xb8] sm:$0xff]
      %v202 = vld [vmem:[%s169 + $0xc0] sm:$0xff]
      %v203 = vld [vmem:[%s169 + $0xc8] sm:$0xff]
      %v204 = vld [vmem:[%s169 + $0xd0] sm:$0xff]
      %v205 = vld [vmem:[%s169 + $0xd8] sm:$0xff]
      %v206 = vld [vmem:[%s169 + $0xe0] sm:$0xff]
      %v207 = vld [vmem:[%s169 + $0xe8] sm:$0xff]
      %v208 = vld [vmem:[%s169 + $0xf0] sm:$0xff]
      %v209 = vld [vmem:[%s169 + $0xf8] sm:$0xff]
      %v210 = vld [vmem:[%s169 + $0x100] sm:$0xff]
      %v211 = vld [vmem:[%s169 + $0x108] sm:$0xff]
      %v212 = vld [vmem:[%s169 + $0x110] sm:$0xff]
      %v213 = vld [vmem:[%s169 + $0x118] sm:$0xff]
      %v214 = vld [vmem:[%s169 + $0x120] sm:$0xff]
      %v215 = vld [vmem:[%s169 + $0x128] sm:$0xff]
      %v216 = vld [vmem:[%s169 + $0x130] sm:$0xff]
      %v217 = vld [vmem:[%s169 + $0x138] sm:$0xff]
      %v218 = vld [vmem:[%s169 + $0x140] sm:$0xff]
      %v219 = vld [vmem:[%s169 + $0x148] sm:$0xff]
      %v220 = vld [vmem:[%s169 + $0x150] sm:$0xff]
      %v221 = vld [vmem:[%s169 + $0x158] sm:$0xff]
      %v222 = vld [vmem:[%s169 + $0x160] sm:$0xff]
      %v223 = vld [vmem:[%s169 + $0x168] sm:$0xff]
      %v224 = vld [vmem:[%s169 + $0x170] sm:$0xff]
      %v225 = vld [vmem:[%s169 + $0x178] sm:$0xff]
      %v226 = vld [vmem:[%s169 + $0x180] sm:$0xff]
      %v227 = vld [vmem:[%s169 + $0x188] sm:$0xff]
      %v228 = vld [vmem:[%s169 + $0x190] sm:$0xff]
      %v229 = vld [vmem:[%s169 + $0x198] sm:$0xff]
      %v230 = vld [vmem:[%s169 + $0x1a0] sm:$0xff]
      %v231 = vld [vmem:[%s169 + $0x1a8] sm:$0xff]
      %v232 = vld [vmem:[%s169 + $0x1b0] sm:$0xff]
      %v233 = vld [vmem:[%s169 + $0x1b8] sm:$0xff]
      %v234 = vld [vmem:[%s169 + $0x1c0] sm:$0xff]
      %v235 = vld [vmem:[%s169 + $0x1c8] sm:$0xff]
      %v236 = vld [vmem:[%s169 + $0x1d0] sm:$0xff]
      %v237 = vld [vmem:[%s169 + $0x1d8] sm:$0xff]
      %v238 = vld [vmem:[%s169 + $0x1e0] sm:$0xff]
      %v239 = vld [vmem:[%s169 + $0x1e8] sm:$0xff]
      %v240 = vld [vmem:[%s169 + $0x1f0] sm:$0xff]
      %v241 = vld [vmem:[%s169 + $0x1f8] sm:$0xff]
      %v242 = vld [vmem:[%s1] sm:$0xf]
      %v243 = vld [vmem:[%s1 + $0x4] sm:$0xf]
      %v244 = vld [vmem:[%s1 + $0x8] sm:$0xf]
      %v245 = vld [vmem:[%s1 + $0xc] sm:$0xf]
      %v246 = vld [vmem:[%s1 + $0x10] sm:$0xf]
      %v247 = vld [vmem:[%s1 + $0x14] sm:$0xf]
      %v248 = vld [vmem:[%s1 + $0x18] sm:$0xf]
      %v249 = vld [vmem:[%s1 + $0x1c] sm:$0xf]
      %v250 = vld [vmem:[%s1 + $0x20] sm:$0xf]
      %v251 = vld [vmem:[%s1 + $0x24] sm:$0xf]
      %v252 = vld [vmem:[%s1 + $0x28] sm:$0xf]
      %v253 = vld [vmem:[%s1 + $0x2c] sm:$0xf]
      %v254 = vld [vmem:[%s1 + $0x30] sm:$0xf]
      %v255 = vld [vmem:[%s1 + $0x34] sm:$0xf]
      %v256 = vld [vmem:[%s1 + $0x38] sm:$0xf]
      %v257 = vld [vmem:[%s1 + $0x3c] sm:$0xf]
      %v258 = vld [vmem:[%s1 + $0x40] sm:$0xf]
      %v259 = vld [vmem:[%s1 + $0x44] sm:$0xf]
      %v260 = vld [vmem:[%s2] sm:$0x1]
      %v262 = vlaneseq
      %v263 = vshrl.u32 %v262, 7
      %v264 = vsub.s32 0, %v263
      %v265 = vrot.slane %v260, %v264
      %v331 = vunpack.c.l.b16 %v178
      %v332 = vunpack.c.h.b16 %v178
      %v333 = vunpack.c.l.b16 %v179
      %v334 = vunpack.c.h.b16 %v179
      %v335 = vunpack.c.l.b16 %v180
      %v336 = vunpack.c.h.b16 %v180
      %v337 = vunpack.c.l.b16 %v181
      %v338 = vunpack.c.h.b16 %v181
      %v339 = vunpack.c.l.b16 %v182
      %v340 = vunpack.c.h.b16 %v182
      %v341 = vunpack.c.l.b16 %v183
      %v342 = vunpack.c.h.b16 %v183
      %v343 = vunpack.c.l.b16 %v184
      %v344 = vunpack.c.h.b16 %v184
      %v345 = vunpack.c.l.b16 %v185
      %v346 = vunpack.c.h.b16 %v185
      %v347 = vunpack.c.l.b16 %v186
      %v348 = vunpack.c.h.b16 %v186
      %v349 = vunpack.c.l.b16 %v187
      %v350 = vunpack.c.h.b16 %v187
      %v351 = vunpack.c.l.b16 %v188
      %v352 = vunpack.c.h.b16 %v188
      %v353 = vunpack.c.l.b16 %v189
      %v354 = vunpack.c.h.b16 %v189
      %v355 = vunpack.c.l.b16 %v190
      %v356 = vunpack.c.h.b16 %v190
      %v357 = vunpack.c.l.b16 %v191
      %v358 = vunpack.c.h.b16 %v191
      %v359 = vunpack.c.l.b16 %v192
      %v360 = vunpack.c.h.b16 %v192
      %v361 = vunpack.c.l.b16 %v193
      %v362 = vunpack.c.h.b16 %v193
      %v363 = vunpack.c.l.b16 %v194
      %v364 = vunpack.c.h.b16 %v194
      %v365 = vunpack.c.l.b16 %v195
      %v366 = vunpack.c.h.b16 %v195
      %v367 = vunpack.c.l.b16 %v196
      %v368 = vunpack.c.h.b16 %v196
      %v369 = vunpack.c.l.b16 %v197
      %v370 = vunpack.c.h.b16 %v197
      %v371 = vunpack.c.l.b16 %v198
      %v372 = vunpack.c.h.b16 %v198
      %v373 = vunpack.c.l.b16 %v199
      %v374 = vunpack.c.h.b16 %v199
      %v375 = vunpack.c.l.b16 %v200
      %v376 = vunpack.c.h.b16 %v200
      %v377 = vunpack.c.l.b16 %v201
      %v378 = vunpack.c.h.b16 %v201
      %v379 = vunpack.c.l.b16 %v202
      %v380 = vunpack.c.h.b16 %v202
      %v381 = vunpack.c.l.b16 %v203
      %v382 = vunpack.c.h.b16 %v203
      %v383 = vunpack.c.l.b16 %v204
      %v384 = vunpack.c.h.b16 %v204
      %v385 = vunpack.c.l.b16 %v205
      %v386 = vunpack.c.h.b16 %v205
      %v387 = vunpack.c.l.b16 %v206
      %v388 = vunpack.c.h.b16 %v206
      %v389 = vunpack.c.l.b16 %v207
      %v390 = vunpack.c.h.b16 %v207
      %v391 = vunpack.c.l.b16 %v208
      %v392 = vunpack.c.h.b16 %v208
      %v393 = vunpack.c.l.b16 %v209
      %v394 = vunpack.c.h.b16 %v209
      %v395 = vunpack.c.l.b16 %v210
      %v396 = vunpack.c.h.b16 %v210
      %v397 = vunpack.c.l.b16 %v211
      %v398 = vunpack.c.h.b16 %v211
      %v399 = vunpack.c.l.b16 %v212
      %v400 = vunpack.c.h.b16 %v212
      %v401 = vunpack.c.l.b16 %v213
      %v402 = vunpack.c.h.b16 %v213
      %v403 = vunpack.c.l.b16 %v214
      %v404 = vunpack.c.h.b16 %v214
      %v405 = vunpack.c.l.b16 %v215
      %v406 = vunpack.c.h.b16 %v215
      %v407 = vunpack.c.l.b16 %v216
      %v408 = vunpack.c.h.b16 %v216
      %v409 = vunpack.c.l.b16 %v217
      %v410 = vunpack.c.h.b16 %v217
      %v411 = vunpack.c.l.b16 %v218
      %v412 = vunpack.c.h.b16 %v218
      %v413 = vunpack.c.l.b16 %v219
      %v414 = vunpack.c.h.b16 %v219
      %v415 = vunpack.c.l.b16 %v220
      %v416 = vunpack.c.h.b16 %v220
      %v417 = vunpack.c.l.b16 %v221
      %v418 = vunpack.c.h.b16 %v221
      %v419 = vunpack.c.l.b16 %v222
      %v420 = vunpack.c.h.b16 %v222
      %v421 = vunpack.c.l.b16 %v223
      %v422 = vunpack.c.h.b16 %v223
      %v423 = vunpack.c.l.b16 %v224
      %v424 = vunpack.c.h.b16 %v224
      %v425 = vunpack.c.l.b16 %v225
      %v426 = vunpack.c.h.b16 %v225
      %v427 = vunpack.c.l.b16 %v226
      %v428 = vunpack.c.h.b16 %v226
      %v429 = vunpack.c.l.b16 %v227
      %v430 = vunpack.c.h.b16 %v227
      %v431 = vunpack.c.l.b16 %v228
      %v432 = vunpack.c.h.b16 %v228
      %v433 = vunpack.c.l.b16 %v229
      %v434 = vunpack.c.h.b16 %v229
      %v435 = vunpack.c.l.b16 %v230
      %v436 = vunpack.c.h.b16 %v230
      %v437 = vunpack.c.l.b16 %v231
      %v438 = vunpack.c.h.b16 %v231
      %v439 = vunpack.c.l.b16 %v232
      %v440 = vunpack.c.h.b16 %v232
      %v441 = vunpack.c.l.b16 %v233
      %v442 = vunpack.c.h.b16 %v233
      %v443 = vunpack.c.l.b16 %v234
      %v444 = vunpack.c.h.b16 %v234
      %v445 = vunpack.c.l.b16 %v235
      %v446 = vunpack.c.h.b16 %v235
      %v447 = vunpack.c.l.b16 %v236
      %v448 = vunpack.c.h.b16 %v236
      %v449 = vunpack.c.l.b16 %v237
      %v450 = vunpack.c.h.b16 %v237
      %v451 = vunpack.c.l.b16 %v238
      %v452 = vunpack.c.h.b16 %v238
      %v453 = vunpack.c.l.b16 %v239
      %v454 = vunpack.c.h.b16 %v239
      %v455 = vunpack.c.l.b16 %v240
      %v456 = vunpack.c.h.b16 %v240
      %v457 = vunpack.c.l.b16 %v241
      %v458 = vunpack.c.h.b16 %v241
      %v459 = vpack.c.b16 %v333, %v331
      %v460 = vpack.c.b16 %v334, %v332
      %v461 = vpack.c.b16 %v337, %v335
      %v462 = vpack.c.b16 %v338, %v336
      %v463 = vpack.c.b16 %v341, %v339
      %v464 = vpack.c.b16 %v342, %v340
      %v465 = vpack.c.b16 %v345, %v343
      %v466 = vpack.c.b16 %v346, %v344
      %v467 = vpack.c.b16 %v349, %v347
      %v468 = vpack.c.b16 %v350, %v348
      %v469 = vpack.c.b16 %v353, %v351
      %v470 = vpack.c.b16 %v354, %v352
      %v471 = vpack.c.b16 %v357, %v355
      %v472 = vpack.c.b16 %v358, %v356
      %v473 = vpack.c.b16 %v361, %v359
      %v474 = vpack.c.b16 %v362, %v360
      %v475 = vpack.c.b16 %v365, %v363
      %v476 = vpack.c.b16 %v366, %v364
      %v477 = vpack.c.b16 %v369, %v367
      %v478 = vpack.c.b16 %v370, %v368
      %v479 = vpack.c.b16 %v373, %v371
      %v480 = vpack.c.b16 %v374, %v372
      %v481 = vpack.c.b16 %v377, %v375
      %v482 = vpack.c.b16 %v378, %v376
      %v483 = vpack.c.b16 %v381, %v379
      %v484 = vpack.c.b16 %v382, %v380
      %v485 = vpack.c.b16 %v385, %v383
      %v486 = vpack.c.b16 %v386, %v384
      %v487 = vpack.c.b16 %v389, %v387
      %v488 = vpack.c.b16 %v390, %v388
      %v489 = vpack.c.b16 %v393, %v391
      %v490 = vpack.c.b16 %v394, %v392
      %v491 = vpack.c.b16 %v397, %v395
      %v492 = vpack.c.b16 %v398, %v396
      %v493 = vpack.c.b16 %v401, %v399
      %v494 = vpack.c.b16 %v402, %v400
      %v495 = vpack.c.b16 %v405, %v403
      %v496 = vpack.c.b16 %v406, %v404
      %v497 = vpack.c.b16 %v409, %v407
      %v498 = vpack.c.b16 %v410, %v408
      %v499 = vpack.c.b16 %v413, %v411
      %v500 = vpack.c.b16 %v414, %v412
      %v501 = vpack.c.b16 %v417, %v415
      %v502 = vpack.c.b16 %v418, %v416
      %v503 = vpack.c.b16 %v421, %v419
      %v504 = vpack.c.b16 %v422, %v420
      %v505 = vpack.c.b16 %v425, %v423
      %v506 = vpack.c.b16 %v426, %v424
      %v507 = vpack.c.b16 %v429, %v427
      %v508 = vpack.c.b16 %v430, %v428
      %v509 = vpack.c.b16 %v433, %v431
      %v510 = vpack.c.b16 %v434, %v432
      %v511 = vpack.c.b16 %v437, %v435
      %v512 = vpack.c.b16 %v438, %v436
      %v513 = vpack.c.b16 %v441, %v439
      %v514 = vpack.c.b16 %v442, %v440
      %v515 = vpack.c.b16 %v445, %v443
      %v516 = vpack.c.b16 %v446, %v444
      %v517 = vpack.c.b16 %v449, %v447
      %v518 = vpack.c.b16 %v450, %v448
      %v519 = vpack.c.b16 %v453, %v451
      %v520 = vpack.c.b16 %v454, %v452
      %v521 = vpack.c.b16 %v457, %v455
      %v522 = vpack.c.b16 %v458, %v456
      %v573 = vunpack.c.l.b16 %v242
      %v574 = vunpack.c.l.b16 %v243
      %v575 = vunpack.c.l.b16 %v244
      %v576 = vunpack.c.l.b16 %v245
      %v577 = vunpack.c.l.b16 %v246
      %v578 = vunpack.c.l.b16 %v247
      %v579 = vunpack.c.l.b16 %v248
      %v580 = vunpack.c.l.b16 %v249
      %v581 = vunpack.c.l.b16 %v250
      %v582 = vunpack.c.l.b16 %v251
      %v583 = vunpack.c.l.b16 %v252
      %v584 = vunpack.c.l.b16 %v253
      %v585 = vunpack.c.l.b16 %v254
      %v586 = vunpack.c.l.b16 %v255
      %v587 = vunpack.c.l.b16 %v256
      %v588 = vunpack.c.l.b16 %v257
      %v589 = vunpack.c.l.b16 %v258
      %v590 = vunpack.c.l.b16 %v259
      %v591 = vpack.c.b16 %v574, %v573
      %v592 = vpack.c.b16 %v576, %v575
      %v593 = vpack.c.b16 %v578, %v577
      %v594 = vpack.c.b16 %v580, %v579
      %v595 = vpack.c.b16 %v582, %v581
      %v596 = vpack.c.b16 %v584, %v583
      %v597 = vpack.c.b16 %v586, %v585
      %v598 = vpack.c.b16 %v588, %v587
      %v599 = vpack.c.b16 %v590, %v589
      %vm609 = vcmask 130048
      %v611 = vsel %vm609, %v460, 0
      %v614 = vsel %vm609, %v462, 0
      %v617 = vsel %vm609, %v464, 0
      %v620 = vsel %vm609, %v466, 0
      %v623 = vsel %vm609, %v468, 0
      %v626 = vsel %vm609, %v470, 0
      %v629 = vsel %vm609, %v472, 0
      %v632 = vsel %vm609, %v474, 0
      %v635 = vsel %vm609, %v476, 0
      %v638 = vsel %vm609, %v478, 0
      %v641 = vsel %vm609, %v480, 0
      %v644 = vsel %vm609, %v482, 0
      %v647 = vsel %vm609, %v484, 0
      %v650 = vsel %vm609, %v486, 0
      %v653 = vsel %vm609, %v488, 0
      %v656 = vsel %vm609, %v490, 0
      %v659 = vsel %vm609, %v492, 0
      %v662 = vsel %vm609, %v494, 0
      %v665 = vsel %vm609, %v496, 0
      %v668 = vsel %vm609, %v498, 0
      %v671 = vsel %vm609, %v500, 0
      %v674 = vsel %vm609, %v502, 0
      %v677 = vsel %vm609, %v504, 0
      %v680 = vsel %vm609, %v506, 0
      %v683 = vsel %vm609, %v508, 0
      %v686 = vsel %vm609, %v510, 0
      %v689 = vsel %vm609, %v512, 0
      %v692 = vsel %vm609, %v514, 0
      %v695 = vsel %vm609, %v516, 0
      %v698 = vsel %vm609, %v518, 0
      %v701 = vsel %vm609, %v520, 0
      %v704 = vsel %vm609, %v522, 0
      %706 = vmatprep.subr.bf16.mxu0 0
      %707 = vmatpush1.bf16.msra.mxu0 %v598
      %708 = vmatprep.subr.bf16.mxu0 0
      %709 = vmatpush1.bf16.msra.mxu0 %v597
      %710 = vmatprep.subr.bf16.mxu0 0
      %711 = vmatpush1.bf16.msra.mxu0 %v596
      %712 = vmatprep.subr.bf16.mxu0 0
      %713 = vmatpush1.bf16.msra.mxu0 %v595
      %714 = vmatprep.subr.bf16.mxu0 0
      %715 = vmatpush1.bf16.msra.mxu0 %v594
      %716 = vmatprep.subr.bf16.mxu0 0
      %717 = vmatpush1.bf16.msra.mxu0 %v593
      %718 = vmatprep.subr.bf16.mxu0 0
      %719 = vmatpush1.bf16.msra.mxu0 %v592
      %720 = vmatprep.subr.bf16.mxu0 0
      %721 = vmatpush1.bf16.msra.mxu0 %v591
      %722 = vmatprep.subr.bf16.mxu0 0
      %723 = vmatpush2.bf16.msra.mxu0 0
      %724 = vmatprep.subr.bf16.mxu0 0
      %725 = vmatpush2.bf16.msra.mxu0 0
      %726 = vmatprep.subr.bf16.mxu0 0
      %727 = vmatpush2.bf16.msra.mxu0 0
      %728 = vmatprep.subr.bf16.mxu0 0
      %729 = vmatpush2.bf16.msra.mxu0 0
      %730 = vmatprep.subr.bf16.mxu0 0
      %731 = vmatpush2.bf16.msra.mxu0 0
      %732 = vmatprep.subr.bf16.mxu0 0
      %733 = vmatpush2.bf16.msra.mxu0 0
      %734 = vmatprep.subr.bf16.mxu0 0
      %735 = vmatpush2.bf16.msra.mxu0 0
      %736 = vmatprep.subr.bf16.mxu0 0
      %737 = vmatpush2.bf16.msra.mxu0 %v599
      %738 = vmatprep.mubr.bf16.mxu0 %v611
      %739 = vmatmul.mubr.bf16.gmra.mxu0 %v459
      %v740 = vpop.f32.mrf.mxu0
      %v741 = vadd.f32 %v265, %v740
      %v742 = vpop.f32.mrf.mxu0
      %v743 = vpop.f32.mrf.mxu0
      %v744 = vadd.f32 %v265, %v743
      %v745 = vpop.f32.mrf.mxu0
      %746 = vmatprep.mubr.bf16.mxu0 %v614
      %747 = vmatmul.mubr.bf16.gmra.mxu0 %v461
      %v748 = vpop.f32.mrf.mxu0
      %v749 = vadd.f32 %v265, %v748
      %v750 = vpop.f32.mrf.mxu0
      %v751 = vpop.f32.mrf.mxu0
      %v752 = vadd.f32 %v265, %v751
      %v753 = vpop.f32.mrf.mxu0
      %754 = vmatprep.mubr.bf16.mxu0 %v617
      %755 = vmatmul.mubr.bf16.gmra.mxu0 %v463
      %v756 = vpop.f32.mrf.mxu0
      %v757 = vadd.f32 %v265, %v756
      %v758 = vpop.f32.mrf.mxu0
      %v759 = vpop.f32.mrf.mxu0
      %v760 = vadd.f32 %v265, %v759
      %v761 = vpop.f32.mrf.mxu0
      %762 = vmatprep.mubr.bf16.mxu0 %v620
      %763 = vmatmul.mubr.bf16.gmra.mxu0 %v465
      %v764 = vpop.f32.mrf.mxu0
      %v765 = vadd.f32 %v265, %v764
      %v766 = vpop.f32.mrf.mxu0
      %v767 = vpop.f32.mrf.mxu0
      %v768 = vadd.f32 %v265, %v767
      %v769 = vpop.f32.mrf.mxu0
      %770 = vmatprep.mubr.bf16.mxu0 %v623
      %771 = vmatmul.mubr.bf16.gmra.mxu0 %v467
      %v772 = vpop.f32.mrf.mxu0
      %v773 = vadd.f32 %v265, %v772
      %v774 = vpop.f32.mrf.mxu0
      %v775 = vpop.f32.mrf.mxu0
      %v776 = vadd.f32 %v265, %v775
      %v777 = vpop.f32.mrf.mxu0
      %778 = vmatprep.mubr.bf16.mxu0 %v626
      %779 = vmatmul.mubr.bf16.gmra.mxu0 %v469
      %v780 = vpop.f32.mrf.mxu0
      %v781 = vadd.f32 %v265, %v780
      %v782 = vpop.f32.mrf.mxu0
      %v783 = vpop.f32.mrf.mxu0
      %v784 = vadd.f32 %v265, %v783
      %v785 = vpop.f32.mrf.mxu0
      %786 = vmatprep.mubr.bf16.mxu0 %v629
      %787 = vmatmul.mubr.bf16.gmra.mxu0 %v471
      %v788 = vpop.f32.mrf.mxu0
      %v789 = vadd.f32 %v265, %v788
      %v790 = vpop.f32.mrf.mxu0
      %v791 = vpop.f32.mrf.mxu0
      %v792 = vadd.f32 %v265, %v791
      %v793 = vpop.f32.mrf.mxu0
      %794 = vmatprep.mubr.bf16.mxu0 %v632
      %795 = vmatmul.mubr.bf16.gmra.mxu0 %v473
      %v796 = vpop.f32.mrf.mxu0
      %v797 = vadd.f32 %v265, %v796
      %v798 = vpop.f32.mrf.mxu0
      %v799 = vpop.f32.mrf.mxu0
      %v800 = vadd.f32 %v265, %v799
      %v801 = vpop.f32.mrf.mxu0
      %802 = vmatprep.mubr.bf16.mxu0 %v635
      %803 = vmatmul.mubr.bf16.gmra.mxu0 %v475
      %v804 = vpop.f32.mrf.mxu0
      %v805 = vadd.f32 %v265, %v804
      %v806 = vpop.f32.mrf.mxu0
      %v807 = vpop.f32.mrf.mxu0
      %v808 = vadd.f32 %v265, %v807
      %v809 = vpop.f32.mrf.mxu0
      %810 = vmatprep.mubr.bf16.mxu0 %v638
      %811 = vmatmul.mubr.bf16.gmra.mxu0 %v477
      %v812 = vpop.f32.mrf.mxu0
      %v813 = vadd.f32 %v265, %v812
      %v814 = vpop.f32.mrf.mxu0
      %v815 = vpop.f32.mrf.mxu0
      %v816 = vadd.f32 %v265, %v815
      %v817 = vpop.f32.mrf.mxu0
      %818 = vmatprep.mubr.bf16.mxu0 %v641
      %819 = vmatmul.mubr.bf16.gmra.mxu0 %v479
      %v820 = vpop.f32.mrf.mxu0
      %v821 = vadd.f32 %v265, %v820
      %v822 = vpop.f32.mrf.mxu0
      %v823 = vpop.f32.mrf.mxu0
      %v824 = vadd.f32 %v265, %v823
      %v825 = vpop.f32.mrf.mxu0
      %826 = vmatprep.mubr.bf16.mxu0 %v644
      %827 = vmatmul.mubr.bf16.gmra.mxu0 %v481
      %v828 = vpop.f32.mrf.mxu0
      %v829 = vadd.f32 %v265, %v828
      %v830 = vpop.f32.mrf.mxu0
      %v831 = vpop.f32.mrf.mxu0
      %v832 = vadd.f32 %v265, %v831
      %v833 = vpop.f32.mrf.mxu0
      %834 = vmatprep.mubr.bf16.mxu0 %v647
      %835 = vmatmul.mubr.bf16.gmra.mxu0 %v483
      %v836 = vpop.f32.mrf.mxu0
      %v837 = vadd.f32 %v265, %v836
      %v838 = vpop.f32.mrf.mxu0
      %v839 = vpop.f32.mrf.mxu0
      %v840 = vadd.f32 %v265, %v839
      %v841 = vpop.f32.mrf.mxu0
      %842 = vmatprep.mubr.bf16.mxu0 %v650
      %843 = vmatmul.mubr.bf16.gmra.mxu0 %v485
      %v844 = vpop.f32.mrf.mxu0
      %v845 = vadd.f32 %v265, %v844
      %v846 = vpop.f32.mrf.mxu0
      %v847 = vpop.f32.mrf.mxu0
      %v848 = vadd.f32 %v265, %v847
      %v849 = vpop.f32.mrf.mxu0
      %850 = vmatprep.mubr.bf16.mxu0 %v653
      %851 = vmatmul.mubr.bf16.gmra.mxu0 %v487
      %v852 = vpop.f32.mrf.mxu0
      %v853 = vadd.f32 %v265, %v852
      %v854 = vpop.f32.mrf.mxu0
      %v855 = vpop.f32.mrf.mxu0
      %v856 = vadd.f32 %v265, %v855
      %v857 = vpop.f32.mrf.mxu0
      %858 = vmatprep.mubr.bf16.mxu0 %v656
      %859 = vmatmul.mubr.bf16.gmra.mxu0 %v489
      %v860 = vpop.f32.mrf.mxu0
      %v861 = vadd.f32 %v265, %v860
      %v862 = vpop.f32.mrf.mxu0
      %v863 = vpop.f32.mrf.mxu0
      %v864 = vadd.f32 %v265, %v863
      %v865 = vpop.f32.mrf.mxu0
      %866 = vmatprep.mubr.bf16.mxu0 %v659
      %867 = vmatmul.mubr.bf16.gmra.mxu0 %v491
      %v868 = vpop.f32.mrf.mxu0
      %v869 = vadd.f32 %v265, %v868
      %v870 = vpop.f32.mrf.mxu0
      %v871 = vpop.f32.mrf.mxu0
      %v872 = vadd.f32 %v265, %v871
      %v873 = vpop.f32.mrf.mxu0
      %874 = vmatprep.mubr.bf16.mxu0 %v662
      %875 = vmatmul.mubr.bf16.gmra.mxu0 %v493
      %v876 = vpop.f32.mrf.mxu0
      %v877 = vadd.f32 %v265, %v876
      %v878 = vpop.f32.mrf.mxu0
      %v879 = vpop.f32.mrf.mxu0
      %v880 = vadd.f32 %v265, %v879
      %v881 = vpop.f32.mrf.mxu0
      %882 = vmatprep.mubr.bf16.mxu0 %v665
      %883 = vmatmul.mubr.bf16.gmra.mxu0 %v495
      %v884 = vpop.f32.mrf.mxu0
      %v885 = vadd.f32 %v265, %v884
      %v886 = vpop.f32.mrf.mxu0
      %v887 = vpop.f32.mrf.mxu0
      %v888 = vadd.f32 %v265, %v887
      %v889 = vpop.f32.mrf.mxu0
      %890 = vmatprep.mubr.bf16.mxu0 %v668
      %891 = vmatmul.mubr.bf16.gmra.mxu0 %v497
      %v892 = vpop.f32.mrf.mxu0
      %v893 = vadd.f32 %v265, %v892
      %v894 = vpop.f32.mrf.mxu0
      %v895 = vpop.f32.mrf.mxu0
      %v896 = vadd.f32 %v265, %v895
      %v897 = vpop.f32.mrf.mxu0
      %898 = vmatprep.mubr.bf16.mxu0 %v671
      %899 = vmatmul.mubr.bf16.gmra.mxu0 %v499
      %v900 = vpop.f32.mrf.mxu0
      %v901 = vadd.f32 %v265, %v900
      %v902 = vpop.f32.mrf.mxu0
      %v903 = vpop.f32.mrf.mxu0
      %v904 = vadd.f32 %v265, %v903
      %v905 = vpop.f32.mrf.mxu0
      %906 = vmatprep.mubr.bf16.mxu0 %v674
      %907 = vmatmul.mubr.bf16.gmra.mxu0 %v501
      %v908 = vpop.f32.mrf.mxu0
      %v909 = vadd.f32 %v265, %v908
      %v910 = vpop.f32.mrf.mxu0
      %v911 = vpop.f32.mrf.mxu0
      %v912 = vadd.f32 %v265, %v911
      %v913 = vpop.f32.mrf.mxu0
      %914 = vmatprep.mubr.bf16.mxu0 %v677
      %915 = vmatmul.mubr.bf16.gmra.mxu0 %v503
      %v916 = vpop.f32.mrf.mxu0
      %v917 = vadd.f32 %v265, %v916
      %v918 = vpop.f32.mrf.mxu0
      %v919 = vpop.f32.mrf.mxu0
      %v920 = vadd.f32 %v265, %v919
      %v921 = vpop.f32.mrf.mxu0
      %922 = vmatprep.mubr.bf16.mxu0 %v680
      %923 = vmatmul.mubr.bf16.gmra.mxu0 %v505
      %v924 = vpop.f32.mrf.mxu0
      %v925 = vadd.f32 %v265, %v924
      %v926 = vpop.f32.mrf.mxu0
      %v927 = vpop.f32.mrf.mxu0
      %v928 = vadd.f32 %v265, %v927
      %v929 = vpop.f32.mrf.mxu0
      %930 = vmatprep.mubr.bf16.mxu0 %v683
      %931 = vmatmul.mubr.bf16.gmra.mxu0 %v507
      %v932 = vpop.f32.mrf.mxu0
      %v933 = vadd.f32 %v265, %v932
      %v934 = vpop.f32.mrf.mxu0
      %v935 = vpop.f32.mrf.mxu0
      %v936 = vadd.f32 %v265, %v935
      %v937 = vpop.f32.mrf.mxu0
      %938 = vmatprep.mubr.bf16.mxu0 %v686
      %939 = vmatmul.mubr.bf16.gmra.mxu0 %v509
      %v940 = vpop.f32.mrf.mxu0
      %v941 = vadd.f32 %v265, %v940
      %v942 = vpop.f32.mrf.mxu0
      %v943 = vpop.f32.mrf.mxu0
      %v944 = vadd.f32 %v265, %v943
      %v945 = vpop.f32.mrf.mxu0
      %946 = vmatprep.mubr.bf16.mxu0 %v689
      %947 = vmatmul.mubr.bf16.gmra.mxu0 %v511
      %v948 = vpop.f32.mrf.mxu0
      %v949 = vadd.f32 %v265, %v948
      %v950 = vpop.f32.mrf.mxu0
      %v951 = vpop.f32.mrf.mxu0
      %v952 = vadd.f32 %v265, %v951
      %v953 = vpop.f32.mrf.mxu0
      %954 = vmatprep.mubr.bf16.mxu0 %v692
      %955 = vmatmul.mubr.bf16.gmra.mxu0 %v513
      %v956 = vpop.f32.mrf.mxu0
      %v957 = vadd.f32 %v265, %v956
      %v958 = vpop.f32.mrf.mxu0
      %v959 = vpop.f32.mrf.mxu0
      %v960 = vadd.f32 %v265, %v959
      %v961 = vpop.f32.mrf.mxu0
      %962 = vmatprep.mubr.bf16.mxu0 %v695
      %963 = vmatmul.mubr.bf16.gmra.mxu0 %v515
      %v964 = vpop.f32.mrf.mxu0
      %v965 = vadd.f32 %v265, %v964
      %v966 = vpop.f32.mrf.mxu0
      %v967 = vpop.f32.mrf.mxu0
      %v968 = vadd.f32 %v265, %v967
      %v969 = vpop.f32.mrf.mxu0
      %970 = vmatprep.mubr.bf16.mxu0 %v698
      %971 = vmatmul.mubr.bf16.gmra.mxu0 %v517
      %v972 = vpop.f32.mrf.mxu0
      %v973 = vadd.f32 %v265, %v972
      %v974 = vpop.f32.mrf.mxu0
      %v975 = vpop.f32.mrf.mxu0
      %v976 = vadd.f32 %v265, %v975
      %v977 = vpop.f32.mrf.mxu0
      %978 = vmatprep.mubr.bf16.mxu0 %v701
      %979 = vmatmul.mubr.bf16.gmra.mxu0 %v519
      %v980 = vpop.f32.mrf.mxu0
      %v981 = vadd.f32 %v265, %v980
      %v982 = vpop.f32.mrf.mxu0
      %v983 = vpop.f32.mrf.mxu0
      %v984 = vadd.f32 %v265, %v983
      %v985 = vpop.f32.mrf.mxu0
      %986 = vmatprep.mubr.bf16.mxu0 %v704
      %987 = vmatmul.mubr.bf16.gmra.mxu0 %v521
      %v988 = vpop.f32.mrf.mxu0
      %v989 = vadd.f32 %v265, %v988
      %v990 = vpop.f32.mrf.mxu0
      %v991 = vpop.f32.mrf.mxu0
      %v992 = vadd.f32 %v265, %v991
      %v993 = vpop.f32.mrf.mxu0
      %994 = vdwg.mxu0
      %v995 = vxor.u32 %v741, 2147483648
      %v996 = vxor.u32 %v744, 2147483648
      %v997 = vxor.u32 %v749, 2147483648
      %v998 = vxor.u32 %v752, 2147483648
      %v999 = vxor.u32 %v757, 2147483648
      %v1000 = vxor.u32 %v760, 2147483648
      %v1001 = vxor.u32 %v765, 2147483648
      %v1002 = vxor.u32 %v768, 2147483648
      %v1003 = vxor.u32 %v773, 2147483648
      %v1004 = vxor.u32 %v776, 2147483648
      %v1005 = vxor.u32 %v781, 2147483648
      %v1006 = vxor.u32 %v784, 2147483648
      %v1007 = vxor.u32 %v789, 2147483648
      %v1008 = vxor.u32 %v792, 2147483648
      %v1009 = vxor.u32 %v797, 2147483648
      %v1010 = vxor.u32 %v800, 2147483648
      %v1011 = vxor.u32 %v805, 2147483648
      %v1012 = vxor.u32 %v808, 2147483648
      %v1013 = vxor.u32 %v813, 2147483648
      %v1014 = vxor.u32 %v816, 2147483648
      %v1015 = vxor.u32 %v821, 2147483648
      %v1016 = vxor.u32 %v824, 2147483648
      %v1017 = vxor.u32 %v829, 2147483648
      %v1018 = vxor.u32 %v832, 2147483648
      %v1019 = vxor.u32 %v837, 2147483648
      %v1020 = vxor.u32 %v840, 2147483648
      %v1021 = vxor.u32 %v845, 2147483648
      %v1022 = vxor.u32 %v848, 2147483648
      %v1023 = vxor.u32 %v853, 2147483648
      %v1024 = vxor.u32 %v856, 2147483648
      %v1025 = vxor.u32 %v861, 2147483648
      %v1026 = vxor.u32 %v864, 2147483648
      %v1027 = vxor.u32 %v869, 2147483648
      %v1028 = vxor.u32 %v872, 2147483648
      %v1029 = vxor.u32 %v877, 2147483648
      %v1030 = vxor.u32 %v880, 2147483648
      %v1031 = vxor.u32 %v885, 2147483648
      %v1032 = vxor.u32 %v888, 2147483648
      %v1033 = vxor.u32 %v893, 2147483648
      %v1034 = vxor.u32 %v896, 2147483648
      %v1035 = vxor.u32 %v901, 2147483648
      %v1036 = vxor.u32 %v904, 2147483648
      %v1037 = vxor.u32 %v909, 2147483648
      %v1038 = vxor.u32 %v912, 2147483648
      %v1039 = vxor.u32 %v917, 2147483648
      %v1040 = vxor.u32 %v920, 2147483648
      %v1041 = vxor.u32 %v925, 2147483648
      %v1042 = vxor.u32 %v928, 2147483648
      %v1043 = vxor.u32 %v933, 2147483648
      %v1044 = vxor.u32 %v936, 2147483648
      %v1045 = vxor.u32 %v941, 2147483648
      %v1046 = vxor.u32 %v944, 2147483648
      %v1047 = vxor.u32 %v949, 2147483648
      %v1048 = vxor.u32 %v952, 2147483648
      %v1049 = vxor.u32 %v957, 2147483648
      %v1050 = vxor.u32 %v960, 2147483648
      %v1051 = vxor.u32 %v965, 2147483648
      %v1052 = vxor.u32 %v968, 2147483648
      %v1053 = vxor.u32 %v973, 2147483648
      %v1054 = vxor.u32 %v976, 2147483648
      %v1055 = vxor.u32 %v981, 2147483648
      %v1056 = vxor.u32 %v984, 2147483648
      %v1057 = vxor.u32 %v989, 2147483648
      %v1058 = vxor.u32 %v992, 2147483648
      %v1059 = vmul.f32 %v995, 1.442695
      %v1060 = vpow.pop %v1059
      %v1061 = vmul.f32 %v996, 1.442695
      %v1062 = vpow.pop %v1061
      %v1063 = vmul.f32 %v997, 1.442695
      %v1064 = vpow.pop %v1063
      %v1065 = vmul.f32 %v998, 1.442695
      %v1066 = vpow.pop %v1065
      %v1067 = vmul.f32 %v999, 1.442695
      %v1068 = vpow.pop %v1067
      %v1069 = vmul.f32 %v1000, 1.442695
      %v1070 = vpow.pop %v1069
      %v1071 = vmul.f32 %v1001, 1.442695
      %v1072 = vpow.pop %v1071
      %v1073 = vmul.f32 %v1002, 1.442695
      %v1074 = vpow.pop %v1073
      %v1075 = vmul.f32 %v1003, 1.442695
      %v1076 = vpow.pop %v1075
      %v1077 = vmul.f32 %v1004, 1.442695
      %v1078 = vpow.pop %v1077
      %v1079 = vmul.f32 %v1005, 1.442695
      %v1080 = vpow.pop %v1079
      %v1081 = vmul.f32 %v1006, 1.442695
      %v1082 = vpow.pop %v1081
      %v1083 = vmul.f32 %v1007, 1.442695
      %v1084 = vpow.pop %v1083
      %v1085 = vmul.f32 %v1008, 1.442695
      %v1086 = vpow.pop %v1085
      %v1087 = vmul.f32 %v1009, 1.442695
      %v1088 = vpow.pop %v1087
      %v1089 = vmul.f32 %v1010, 1.442695
      %v1090 = vpow.pop %v1089
      %v1091 = vmul.f32 %v1011, 1.442695
      %v1092 = vpow.pop %v1091
      %v1093 = vmul.f32 %v1012, 1.442695
      %v1094 = vpow.pop %v1093
      %v1095 = vmul.f32 %v1013, 1.442695
      %v1096 = vpow.pop %v1095
      %v1097 = vmul.f32 %v1014, 1.442695
      %v1098 = vpow.pop %v1097
      %v1099 = vmul.f32 %v1015, 1.442695
      %v1100 = vpow.pop %v1099
      %v1101 = vmul.f32 %v1016, 1.442695
      %v1102 = vpow.pop %v1101
      %v1103 = vmul.f32 %v1017, 1.442695
      %v1104 = vpow.pop %v1103
      %v1105 = vmul.f32 %v1018, 1.442695
      %v1106 = vpow.pop %v1105
      %v1107 = vmul.f32 %v1019, 1.442695
      %v1108 = vpow.pop %v1107
      %v1109 = vmul.f32 %v1020, 1.442695
      %v1110 = vpow.pop %v1109
      %v1111 = vmul.f32 %v1021, 1.442695
      %v1112 = vpow.pop %v1111
      %v1113 = vmul.f32 %v1022, 1.442695
      %v1114 = vpow.pop %v1113
      %v1115 = vmul.f32 %v1023, 1.442695
      %v1116 = vpow.pop %v1115
      %v1117 = vmul.f32 %v1024, 1.442695
      %v1118 = vpow.pop %v1117
      %v1119 = vmul.f32 %v1025, 1.442695
      %v1120 = vpow.pop %v1119
      %v1121 = vmul.f32 %v1026, 1.442695
      %v1122 = vpow.pop %v1121
      %v1123 = vmul.f32 %v1027, 1.442695
      %v1124 = vpow.pop %v1123
      %v1125 = vmul.f32 %v1028, 1.442695
      %v1126 = vpow.pop %v1125
      %v1127 = vmul.f32 %v1029, 1.442695
      %v1128 = vpow.pop %v1127
      %v1129 = vmul.f32 %v1030, 1.442695
      %v1130 = vpow.pop %v1129
      %v1131 = vmul.f32 %v1031, 1.442695
      %v1132 = vpow.pop %v1131
      %v1133 = vmul.f32 %v1032, 1.442695
      %v1134 = vpow.pop %v1133
      %v1135 = vmul.f32 %v1033, 1.442695
      %v1136 = vpow.pop %v1135
      %v1137 = vmul.f32 %v1034, 1.442695
      %v1138 = vpow.pop %v1137
      %v1139 = vmul.f32 %v1035, 1.442695
      %v1140 = vpow.pop %v1139
      %v1141 = vmul.f32 %v1036, 1.442695
      %v1142 = vpow.pop %v1141
      %v1143 = vmul.f32 %v1037, 1.442695
      %v1144 = vpow.pop %v1143
      %v1145 = vmul.f32 %v1038, 1.442695
      %v1146 = vpow.pop %v1145
      %v1147 = vmul.f32 %v1039, 1.442695
      %v1148 = vpow.pop %v1147
      %v1149 = vmul.f32 %v1040, 1.442695
      %v1150 = vpow.pop %v1149
      %v1151 = vmul.f32 %v1041, 1.442695
      %v1152 = vpow.pop %v1151
      %v1153 = vmul.f32 %v1042, 1.442695
      %v1154 = vpow.pop %v1153
      %v1155 = vmul.f32 %v1043, 1.442695
      %v1156 = vpow.pop %v1155
      %v1157 = vmul.f32 %v1044, 1.442695
      %v1158 = vpow.pop %v1157
      %v1159 = vmul.f32 %v1045, 1.442695
      %v1160 = vpow.pop %v1159
      %v1161 = vmul.f32 %v1046, 1.442695
      %v1162 = vpow.pop %v1161
      %v1163 = vmul.f32 %v1047, 1.442695
      %v1164 = vpow.pop %v1163
      %v1165 = vmul.f32 %v1048, 1.442695
      %v1166 = vpow.pop %v1165
      %v1167 = vmul.f32 %v1049, 1.442695
      %v1168 = vpow.pop %v1167
      %v1169 = vmul.f32 %v1050, 1.442695
      %v1170 = vpow.pop %v1169
      %v1171 = vmul.f32 %v1051, 1.442695
      %v1172 = vpow.pop %v1171
      %v1173 = vmul.f32 %v1052, 1.442695
      %v1174 = vpow.pop %v1173
      %v1175 = vmul.f32 %v1053, 1.442695
      %v1176 = vpow.pop %v1175
      %v1177 = vmul.f32 %v1054, 1.442695
      %v1178 = vpow.pop %v1177
      %v1179 = vmul.f32 %v1055, 1.442695
      %v1180 = vpow.pop %v1179
      %v1181 = vmul.f32 %v1056, 1.442695
      %v1182 = vpow.pop %v1181
      %v1183 = vmul.f32 %v1057, 1.442695
      %v1184 = vpow.pop %v1183
      %v1185 = vmul.f32 %v1058, 1.442695
      %v1186 = vpow.pop %v1185
      %v1187 = vadd.f32 %v1060, 1.0
      %v1188 = vadd.f32 %v1062, 1.0
      %v1189 = vadd.f32 %v1064, 1.0
      %v1190 = vadd.f32 %v1066, 1.0
      %v1191 = vadd.f32 %v1068, 1.0
      %v1192 = vadd.f32 %v1070, 1.0
      %v1193 = vadd.f32 %v1072, 1.0
      %v1194 = vadd.f32 %v1074, 1.0
      %v1195 = vadd.f32 %v1076, 1.0
      %v1196 = vadd.f32 %v1078, 1.0
      %v1197 = vadd.f32 %v1080, 1.0
      %v1198 = vadd.f32 %v1082, 1.0
      %v1199 = vadd.f32 %v1084, 1.0
      %v1200 = vadd.f32 %v1086, 1.0
      %v1201 = vadd.f32 %v1088, 1.0
      %v1202 = vadd.f32 %v1090, 1.0
      %v1203 = vadd.f32 %v1092, 1.0
      %v1204 = vadd.f32 %v1094, 1.0
      %v1205 = vadd.f32 %v1096, 1.0
      %v1206 = vadd.f32 %v1098, 1.0
      %v1207 = vadd.f32 %v1100, 1.0
      %v1208 = vadd.f32 %v1102, 1.0
      %v1209 = vadd.f32 %v1104, 1.0
      %v1210 = vadd.f32 %v1106, 1.0
      %v1211 = vadd.f32 %v1108, 1.0
      %v1212 = vadd.f32 %v1110, 1.0
      %v1213 = vadd.f32 %v1112, 1.0
      %v1214 = vadd.f32 %v1114, 1.0
      %v1215 = vadd.f32 %v1116, 1.0
      %v1216 = vadd.f32 %v1118, 1.0
      %v1217 = vadd.f32 %v1120, 1.0
      %v1218 = vadd.f32 %v1122, 1.0
      %v1219 = vadd.f32 %v1124, 1.0
      %v1220 = vadd.f32 %v1126, 1.0
      %v1221 = vadd.f32 %v1128, 1.0
      %v1222 = vadd.f32 %v1130, 1.0
      %v1223 = vadd.f32 %v1132, 1.0
      %v1224 = vadd.f32 %v1134, 1.0
      %v1225 = vadd.f32 %v1136, 1.0
      %v1226 = vadd.f32 %v1138, 1.0
      %v1227 = vadd.f32 %v1140, 1.0
      %v1228 = vadd.f32 %v1142, 1.0
      %v1229 = vadd.f32 %v1144, 1.0
      %v1230 = vadd.f32 %v1146, 1.0
      %v1231 = vadd.f32 %v1148, 1.0
      %v1232 = vadd.f32 %v1150, 1.0
      %v1233 = vadd.f32 %v1152, 1.0
      %v1234 = vadd.f32 %v1154, 1.0
      %v1235 = vadd.f32 %v1156, 1.0
      %v1236 = vadd.f32 %v1158, 1.0
      %v1237 = vadd.f32 %v1160, 1.0
      %v1238 = vadd.f32 %v1162, 1.0
      %v1239 = vadd.f32 %v1164, 1.0
      %v1240 = vadd.f32 %v1166, 1.0
      %v1241 = vadd.f32 %v1168, 1.0
      %v1242 = vadd.f32 %v1170, 1.0
      %v1243 = vadd.f32 %v1172, 1.0
      %v1244 = vadd.f32 %v1174, 1.0
      %v1245 = vadd.f32 %v1176, 1.0
      %v1246 = vadd.f32 %v1178, 1.0
      %v1247 = vadd.f32 %v1180, 1.0
      %v1248 = vadd.f32 %v1182, 1.0
      %v1249 = vadd.f32 %v1184, 1.0
      %v1250 = vadd.f32 %v1186, 1.0
      %v1251 = vrcp.pop %v1187
      %v1252 = vmul.f32 1.0, %v1251
      %v1253 = vrcp.pop %v1188
      %v1254 = vmul.f32 1.0, %v1253
      %v1255 = vrcp.pop %v1189
      %v1256 = vmul.f32 1.0, %v1255
      %v1257 = vrcp.pop %v1190
      %v1258 = vmul.f32 1.0, %v1257
      %v1259 = vrcp.pop %v1191
      %v1260 = vmul.f32 1.0, %v1259
      %v1261 = vrcp.pop %v1192
      %v1262 = vmul.f32 1.0, %v1261
      %v1263 = vrcp.pop %v1193
      %v1264 = vmul.f32 1.0, %v1263
      %v1265 = vrcp.pop %v1194
      %v1266 = vmul.f32 1.0, %v1265
      %v1267 = vrcp.pop %v1195
      %v1268 = vmul.f32 1.0, %v1267
      %v1269 = vrcp.pop %v1196
      %v1270 = vmul.f32 1.0, %v1269
      %v1271 = vrcp.pop %v1197
      %v1272 = vmul.f32 1.0, %v1271
      %v1273 = vrcp.pop %v1198
      %v1274 = vmul.f32 1.0, %v1273
      %v1275 = vrcp.pop %v1199
      %v1276 = vmul.f32 1.0, %v1275
      %v1277 = vrcp.pop %v1200
      %v1278 = vmul.f32 1.0, %v1277
      %v1279 = vrcp.pop %v1201
      %v1280 = vmul.f32 1.0, %v1279
      %v1281 = vrcp.pop %v1202
      %v1282 = vmul.f32 1.0, %v1281
      %v1283 = vrcp.pop %v1203
      %v1284 = vmul.f32 1.0, %v1283
      %v1285 = vrcp.pop %v1204
      %v1286 = vmul.f32 1.0, %v1285
      %v1287 = vrcp.pop %v1205
      %v1288 = vmul.f32 1.0, %v1287
      %v1289 = vrcp.pop %v1206
      %v1290 = vmul.f32 1.0, %v1289
      %v1291 = vrcp.pop %v1207
      %v1292 = vmul.f32 1.0, %v1291
      %v1293 = vrcp.pop %v1208
      %v1294 = vmul.f32 1.0, %v1293
      %v1295 = vrcp.pop %v1209
      %v1296 = vmul.f32 1.0, %v1295
      %v1297 = vrcp.pop %v1210
      %v1298 = vmul.f32 1.0, %v1297
      %v1299 = vrcp.pop %v1211
      %v1300 = vmul.f32 1.0, %v1299
      %v1301 = vrcp.pop %v1212
      %v1302 = vmul.f32 1.0, %v1301
      %v1303 = vrcp.pop %v1213
      %v1304 = vmul.f32 1.0, %v1303
      %v1305 = vrcp.pop %v1214
      %v1306 = vmul.f32 1.0, %v1305
      %v1307 = vrcp.pop %v1215
      %v1308 = vmul.f32 1.0, %v1307
      %v1309 = vrcp.pop %v1216
      %v1310 = vmul.f32 1.0, %v1309
      %v1311 = vrcp.pop %v1217
      %v1312 = vmul.f32 1.0, %v1311
      %v1313 = vrcp.pop %v1218
      %v1314 = vmul.f32 1.0, %v1313
      %v1315 = vrcp.pop %v1219
      %v1316 = vmul.f32 1.0, %v1315
      %v1317 = vrcp.pop %v1220
      %v1318 = vmul.f32 1.0, %v1317
      %v1319 = vrcp.pop %v1221
      %v1320 = vmul.f32 1.0, %v1319
      %v1321 = vrcp.pop %v1222
      %v1322 = vmul.f32 1.0, %v1321
      %v1323 = vrcp.pop %v1223
      %v1324 = vmul.f32 1.0, %v1323
      %v1325 = vrcp.pop %v1224
      %v1326 = vmul.f32 1.0, %v1325
      %v1327 = vrcp.pop %v1225
      %v1328 = vmul.f32 1.0, %v1327
      %v1329 = vrcp.pop %v1226
      %v1330 = vmul.f32 1.0, %v1329
      %v1331 = vrcp.pop %v1227
      %v1332 = vmul.f32 1.0, %v1331
      %v1333 = vrcp.pop %v1228
      %v1334 = vmul.f32 1.0, %v1333
      %v1335 = vrcp.pop %v1229
      %v1336 = vmul.f32 1.0, %v1335
      %v1337 = vrcp.pop %v1230
      %v1338 = vmul.f32 1.0, %v1337
      %v1339 = vrcp.pop %v1231
      %v1340 = vmul.f32 1.0, %v1339
      %v1341 = vrcp.pop %v1232
      %v1342 = vmul.f32 1.0, %v1341
      %v1343 = vrcp.pop %v1233
      %v1344 = vmul.f32 1.0, %v1343
      %v1345 = vrcp.pop %v1234
      %v1346 = vmul.f32 1.0, %v1345
      %v1347 = vrcp.pop %v1235
      %v1348 = vmul.f32 1.0, %v1347
      %v1349 = vrcp.pop %v1236
      %v1350 = vmul.f32 1.0, %v1349
      %v1351 = vrcp.pop %v1237
      %v1352 = vmul.f32 1.0, %v1351
      %v1353 = vrcp.pop %v1238
      %v1354 = vmul.f32 1.0, %v1353
      %v1355 = vrcp.pop %v1239
      %v1356 = vmul.f32 1.0, %v1355
      %v1357 = vrcp.pop %v1240
      %v1358 = vmul.f32 1.0, %v1357
      %v1359 = vrcp.pop %v1241
      %v1360 = vmul.f32 1.0, %v1359
      %v1361 = vrcp.pop %v1242
      %v1362 = vmul.f32 1.0, %v1361
      %v1363 = vrcp.pop %v1243
      %v1364 = vmul.f32 1.0, %v1363
      %v1365 = vrcp.pop %v1244
      %v1366 = vmul.f32 1.0, %v1365
      %v1367 = vrcp.pop %v1245
      %v1368 = vmul.f32 1.0, %v1367
      %v1369 = vrcp.pop %v1246
      %v1370 = vmul.f32 1.0, %v1369
      %v1371 = vrcp.pop %v1247
      %v1372 = vmul.f32 1.0, %v1371
      %v1373 = vrcp.pop %v1248
      %v1374 = vmul.f32 1.0, %v1373
      %v1375 = vrcp.pop %v1249
      %v1376 = vmul.f32 1.0, %v1375
      %v1377 = vrcp.pop %v1250
      %v1378 = vmul.f32 1.0, %v1377
      %vm1379 = vcmask 23552
      %1380 = vst.msk [vmem:[%s175] sm:$0xff] %vm1379, %v1252
      %1381 = vst.msk [vmem:[%s175 + $0x8] sm:$0xff] %vm1379, %v1254
      %1382 = vst.msk [vmem:[%s175 + $0x10] sm:$0xff] %vm1379, %v1256
      %1383 = vst.msk [vmem:[%s175 + $0x18] sm:$0xff] %vm1379, %v1258
      %1384 = vst.msk [vmem:[%s175 + $0x20] sm:$0xff] %vm1379, %v1260
      %1385 = vst.msk [vmem:[%s175 + $0x28] sm:$0xff] %vm1379, %v1262
      %1386 = vst.msk [vmem:[%s175 + $0x30] sm:$0xff] %vm1379, %v1264
      %1387 = vst.msk [vmem:[%s175 + $0x38] sm:$0xff] %vm1379, %v1266
      %1388 = vst.msk [vmem:[%s175 + $0x40] sm:$0xff] %vm1379, %v1268
      %1389 = vst.msk [vmem:[%s175 + $0x48] sm:$0xff] %vm1379, %v1270
      %1390 = vst.msk [vmem:[%s175 + $0x50] sm:$0xff] %vm1379, %v1272
      %1391 = vst.msk [vmem:[%s175 + $0x58] sm:$0xff] %vm1379, %v1274
      %1392 = vst.msk [vmem:[%s175 + $0x60] sm:$0xff] %vm1379, %v1276
      %1393 = vst.msk [vmem:[%s175 + $0x68] sm:$0xff] %vm1379, %v1278
      %1394 = vst.msk [vmem:[%s175 + $0x70] sm:$0xff] %vm1379, %v1280
      %1395 = vst.msk [vmem:[%s175 + $0x78] sm:$0xff] %vm1379, %v1282
      %1396 = vst.msk [vmem:[%s175 + $0x80] sm:$0xff] %vm1379, %v1284
      %1397 = vst.msk [vmem:[%s175 + $0x88] sm:$0xff] %vm1379, %v1286
      %1398 = vst.msk [vmem:[%s175 + $0x90] sm:$0xff] %vm1379, %v1288
      %1399 = vst.msk [vmem:[%s175 + $0x98] sm:$0xff] %vm1379, %v1290
      %1400 = vst.msk [vmem:[%s175 + $0xa0] sm:$0xff] %vm1379, %v1292
      %1401 = vst.msk [vmem:[%s175 + $0xa8] sm:$0xff] %vm1379, %v1294
      %1402 = vst.msk [vmem:[%s175 + $0xb0] sm:$0xff] %vm1379, %v1296
      %1403 = vst.msk [vmem:[%s175 + $0xb8] sm:$0xff] %vm1379, %v1298
      %1404 = vst.msk [vmem:[%s175 + $0xc0] sm:$0xff] %vm1379, %v1300
      %1405 = vst.msk [vmem:[%s175 + $0xc8] sm:$0xff] %vm1379, %v1302
      %1406 = vst.msk [vmem:[%s175 + $0xd0] sm:$0xff] %vm1379, %v1304
      %1407 = vst.msk [vmem:[%s175 + $0xd8] sm:$0xff] %vm1379, %v1306
      %1408 = vst.msk [vmem:[%s175 + $0xe0] sm:$0xff] %vm1379, %v1308
      %1409 = vst.msk [vmem:[%s175 + $0xe8] sm:$0xff] %vm1379, %v1310
      %1410 = vst.msk [vmem:[%s175 + $0xf0] sm:$0xff] %vm1379, %v1312
      %1411 = vst.msk [vmem:[%s175 + $0xf8] sm:$0xff] %vm1379, %v1314
      %1412 = vst.msk [vmem:[%s175 + $0x100] sm:$0xff] %vm1379, %v1316
      %1413 = vst.msk [vmem:[%s175 + $0x108] sm:$0xff] %vm1379, %v1318
      %1414 = vst.msk [vmem:[%s175 + $0x110] sm:$0xff] %vm1379, %v1320
      %1415 = vst.msk [vmem:[%s175 + $0x118] sm:$0xff] %vm1379, %v1322
      %1416 = vst.msk [vmem:[%s175 + $0x120] sm:$0xff] %vm1379, %v1324
      %1417 = vst.msk [vmem:[%s175 + $0x128] sm:$0xff] %vm1379, %v1326
      %1418 = vst.msk [vmem:[%s175 + $0x130] sm:$0xff] %vm1379, %v1328
      %1419 = vst.msk [vmem:[%s175 + $0x138] sm:$0xff] %vm1379, %v1330
      %1420 = vst.msk [vmem:[%s175 + $0x140] sm:$0xff] %vm1379, %v1332
      %1421 = vst.msk [vmem:[%s175 + $0x148] sm:$0xff] %vm1379, %v1334
      %1422 = vst.msk [vmem:[%s175 + $0x150] sm:$0xff] %vm1379, %v1336
      %1423 = vst.msk [vmem:[%s175 + $0x158] sm:$0xff] %vm1379, %v1338
      %1424 = vst.msk [vmem:[%s175 + $0x160] sm:$0xff] %vm1379, %v1340
      %1425 = vst.msk [vmem:[%s175 + $0x168] sm:$0xff] %vm1379, %v1342
      %1426 = vst.msk [vmem:[%s175 + $0x170] sm:$0xff] %vm1379, %v1344
      %1427 = vst.msk [vmem:[%s175 + $0x178] sm:$0xff] %vm1379, %v1346
      %1428 = vst.msk [vmem:[%s175 + $0x180] sm:$0xff] %vm1379, %v1348
      %1429 = vst.msk [vmem:[%s175 + $0x188] sm:$0xff] %vm1379, %v1350
      %1430 = vst.msk [vmem:[%s175 + $0x190] sm:$0xff] %vm1379, %v1352
      %1431 = vst.msk [vmem:[%s175 + $0x198] sm:$0xff] %vm1379, %v1354
      %1432 = vst.msk [vmem:[%s175 + $0x1a0] sm:$0xff] %vm1379, %v1356
      %1433 = vst.msk [vmem:[%s175 + $0x1a8] sm:$0xff] %vm1379, %v1358
      %1434 = vst.msk [vmem:[%s175 + $0x1b0] sm:$0xff] %vm1379, %v1360
      %1435 = vst.msk [vmem:[%s175 + $0x1b8] sm:$0xff] %vm1379, %v1362
      %1436 = vst.msk [vmem:[%s175 + $0x1c0] sm:$0xff] %vm1379, %v1364
      %1437 = vst.msk [vmem:[%s175 + $0x1c8] sm:$0xff] %vm1379, %v1366
      %1438 = vst.msk [vmem:[%s175 + $0x1d0] sm:$0xff] %vm1379, %v1368
      %1439 = vst.msk [vmem:[%s175 + $0x1d8] sm:$0xff] %vm1379, %v1370
      %1440 = vst.msk [vmem:[%s175 + $0x1e0] sm:$0xff] %vm1379, %v1372
      %1441 = vst.msk [vmem:[%s175 + $0x1e8] sm:$0xff] %vm1379, %v1374
      %1442 = vst.msk [vmem:[%s175 + $0x1f0] sm:$0xff] %vm1379, %v1376
      %1443 = vst.msk [vmem:[%s175 + $0x1f8] sm:$0xff] %vm1379, %v1378
      %s1444 = smul.u32 64, %s14
      %p1445 = scmp.lt.s32.totalorder %s1444, 255
      %s1446 = scalar_select %p1445, %s1444, 255
      %s1447 = smul.addr %s1446, 8
      %s1448 = scalar_lea.vmem %s3, %s1447
      // Predicated region
      $region33: #{image_reconstruction_forward.15} parent=31 // pred_check
        %p1449 = pneg %p100
      $region34: #{image_reconstruction_forward.15} parent=31 // pred_check_branch
        %1451 = sbr.rel (%p1449) target = $region36
      $region35: #{image_reconstruction_forward.15} parent=31 // pred_region
        %s1452 = smul.u32 64, %s14
      $region36: #{image_reconstruction_forward.15} parent=31 // pred_fallthru
        _
    $region32: #{image_reconstruction_forward.15} parent=5 // pred_fallthru
      _
    %p1453 = scmp.le.s32.totalorder 2, %s9
    // Predicated region
    $region37: #{image_reconstruction_forward.15} parent=5 // pred_check
      %p1454 = pneg %p1453
    $region38: #{image_reconstruction_forward.15} parent=5 // pred_check_branch
      %1456 = sbr.rel (%p1454) target = $region40
    $region39: #{image_reconstruction_forward.15} parent=5 // pred_region
      %s1457 = ssub.s32 %s9, 2
      // Predicated region
      $region41: #{image_reconstruction_forward.15} parent=39 // pred_check
        %p1458 = pneg %p106
      $region42: #{image_reconstruction_forward.15} parent=39 // pred_check_branch
        %1460 = sbr.rel (%p1458) target = $region44
      $region43: #{image_reconstruction_forward.15} parent=39 // pred_region
        %s1461 = smul.u32 64, %s15
        %p1462 = scmp.lt.s32.totalorder %s1461, 255
        %s1463 = scalar_select %p1462, %s1461, 255
        %s1464 = smul.addr %s1463, 8
        %s1465 = scalar_lea.vmem %s3, %s1464
      $region44: #{image_reconstruction_forward.15} parent=39 // pred_fallthru
        _
    $region40: #{image_reconstruction_forward.15} parent=5 // pred_fallthru
      _
  $region6: #{image_reconstruction_forward.15} parent=0 // loop_footer
    %s13 = sadd.s32 1, %s9
  $region7: #{image_reconstruction_forward.15} parent=0 // loop_footer_branch
    %8 = sbr.rel target = $region3
  $region8: #{image_reconstruction_forward.15} parent=0 // loop_exit
    _

</llo_original>
